<compile_context>
chip_gen: v6e
topology: v6e:2x2x1
jax: 0.10.0
libtpu: 0.0.40
codegen_flags: <defaults>
</compile_context>

<pallas_src>
import jax
import jax.numpy as jnp
import numpy as np
from jax import lax
from jax.experimental import pallas as pl
from jax.experimental.pallas import tpu as pltpu

DILATIONS = (1, 2, 4, 8)
MAX_PAD = 8          # padding required by the largest dilation
KH = KW = 3


def _dblock_kernel(x_ref, w_ref, b_ref, o_ref, pad_ref, col_ref):
    # x_ref:   (1, H, W, C)          one batch element, NHWC
    # w_ref:   (4, 9*C, C)           im2col weights, rows ordered (kh, kw, c_in)
    # b_ref:   (4, C)                biases
    # o_ref:   (1, H, W, C)          output block (doubles as residual accumulator)
    # pad_ref: (H+2P, W+2P, C) f32   zero-padded feature map (channel-minor)
    # col_ref: (H*W, 9*C) f32        im2col buffer for the current dilation
    _, H, W, C = x_ref.shape
    P = MAX_PAD

    x = x_ref[0].astype(jnp.float32)                       # (H, W, C)

    # Residual accumulator lives in the output block: out = x + sum_i feat_i.
    o_ref[0] = x.astype(o_ref.dtype)

    # Zero the padded scratch ONCE per grid step.  Invariant: only the centre
    # [P:P+H, P:P+W, :] is written below, so the border stays zero for all
    # four dilations of this step.
    pad_ref[...] = jnp.zeros(pad_ref.shape, jnp.float32)
    pad_ref[P:P + H, P:P + W, :] = x

    for ci, d in enumerate(DILATIONS):
        # im2col: 9 shifted (H, W, C) taps -> (H*W, 9*C) in col_ref.
        for kh in range(KH):
            for kw in range(KW):
                t = kh * KW + kw
                oh = P + d * (kh - 1)
                ow = P + d * (kw - 1)
                tap = pad_ref[oh:oh + H, ow:ow + W, :].reshape(H * W, C)
                col_ref[:, t * C:(t + 1) * C] = tap

        # One MXU matmul per dilation: (H*W, 9C) x (9C, C), K = 9*C.
        conv = jnp.dot(col_ref[...], w_ref[ci],
                       preferred_element_type=jnp.float32)          # (H*W, C)
        conv = conv + b_ref[ci:ci + 1, :].astype(jnp.float32)       # bias
        feat = jnp.maximum(conv, 0.0).reshape(H, W, C)              # ReLU

        o_ref[0] = o_ref[0] + feat.astype(o_ref.dtype)              # residual sum
        if ci + 1 < len(DILATIONS):
            pad_ref[P:P + H, P:P + W, :] = feat                     # next conv input


def dblock_pallas(x_nhwc, weights, biases):
    """x_nhwc: (B, H, W, C) f32; weights: (4, 3, 3, C, C) (HWIO per conv); biases: (4, C)."""
    B, H, W, C = x_nhwc.shape
    K = KH * KW * C
    # Pre-reshape weights for the im2col contraction: rows ordered (kh, kw, c_in).
    w_r = weights.reshape(4, K, C)
    return pl.pallas_call(
        _dblock_kernel,
        out_shape=jax.ShapeDtypeStruct((B, H, W, C), x_nhwc.dtype),
        grid_spec=pltpu.PrefetchScalarGridSpec(
            num_scalar_prefetch=0,
            grid=(B,),
            in_specs=[
                pl.BlockSpec((1, H, W, C), lambda b: (b, 0, 0, 0)),
                pl.BlockSpec((4, K, C), lambda b: (0, 0, 0)),
                pl.BlockSpec((4, C), lambda b: (0, 0)),
            ],
            out_specs=pl.BlockSpec((1, H, W, C), lambda b: (b, 0, 0, 0)),
            scratch_shapes=[
                pltpu.VMEM((H + 2 * MAX_PAD, W + 2 * MAX_PAD, C), jnp.float32),
                pltpu.VMEM((H * W, K), jnp.float32),
            ],
        ),
        compiler_params=pltpu.CompilerParams(
            dimension_semantics=("parallel",)),
    )(x_nhwc, w_r, biases)


def dblock_reference(x_nhwc, weights, biases):
    """Pure-JAX reference (lax.conv_general_dilated), NHWC."""
    feat = x_nhwc
    acc = x_nhwc
    for ci, d in enumerate(DILATIONS):
        w = weights[ci]  # (3, 3, C_in, C_out) == HWIO
        y = lax.conv_general_dilated(
            feat, w,
            window_strides=(1, 1),
            padding=[(d, d), (d, d)],
            rhs_dilation=(d, d),
            dimension_numbers=("NHWC", "HWIO", "NHWC"),
        )
        y = y + biases[ci][None, None, None, :]
        feat = jnp.maximum(y, 0.0)
        acc = acc + feat
    return acc


if __name__ == "__main__":
    B, C, H, W = 2, 32, 16, 16  # PyTorch-style NCHW shape of the input

    key = jax.random.PRNGKey(0)
    kx, kw = jax.random.split(key)

    x_nchw = jax.random.normal(kx, (B, C, H, W), dtype=jnp.float32)
    # Weights in HWIO-per-conv layout (conv_idx, kh, kw, C_in, C_out); small scale.
    weights = 0.05 * jax.random.normal(kw, (4, 3, 3, C, C), dtype=jnp.float32)
    # Dblock.__init__ zeros conv biases.
    biases = jnp.zeros((4, C), dtype=jnp.float32)

    # NCHW -> NHWC for the TPU kernel.
    x_nhwc = jnp.transpose(x_nchw, (0, 2, 3, 1))

    out_nhwc = dblock_pallas(x_nhwc, weights, biases)
    out_nhwc = jax.block_until_ready(out_nhwc)

    ref_nhwc = dblock_reference(x_nhwc, weights, biases)
    np.testing.assert_allclose(np.asarray(out_nhwc), np.asarray(ref_nhwc),
                               rtol=2e-4, atol=2e-4)

    # Back to NCHW to match the PyTorch module's output convention.
    out_nchw = jnp.transpose(out_nhwc, (0, 3, 1, 2))
    assert out_nchw.shape == (B, C, H, W)

    print("KERNEL_OK")
</pallas_src>

<mosaic_0001>
module attributes {stable_mosaic.version = 11 : i64} {
  func.func @_dblock_kernel(%arg0: i32, %arg1: memref<1x16x16x32xf32, #tpu.memory_space<vmem>>, %arg2: memref<4x288x32xf32, #tpu.memory_space<vmem>>, %arg3: memref<4x32xf32, #tpu.memory_space<vmem>>, %arg4: memref<1x16x16x32xf32, #tpu.memory_space<vmem>>, %arg5: memref<32x32x32xf32, #tpu.memory_space<vmem>>, %arg6: memref<256x288xf32, #tpu.memory_space<vmem>>) attributes {dimension_semantics = [#tpu.dimension_semantics<parallel>], iteration_bounds = array<i64: 2>, scalar_prefetch = 0 : i64, scratch_operands = 2 : i64, tpu.core_type = #tpu.core_type<tc>, window_params = [{transform_indices = @transform_0, window_bounds = array<i64: 1, 16, 16, 32>}, {pipeline_mode = #tpu.pipeline_mode<synchronous>, transform_indices = @transform_1, window_bounds = array<i64: 4, 288, 32>}, {pipeline_mode = #tpu.pipeline_mode<synchronous>, transform_indices = @transform_2, window_bounds = array<i64: 4, 32>}, {transform_indices = @transform_3, window_bounds = array<i64: 1, 16, 16, 32>}]} {
    %c0 = arith.constant 0 : index
    %c0_0 = arith.constant 0 : index
    %c0_1 = arith.constant 0 : index
    %c0_2 = arith.constant 0 : index
    %0 = vector.load %arg1[%c0, %c0_0, %c0_1, %c0_2] : memref<1x16x16x32xf32, #tpu.memory_space<vmem>>, vector<1x16x16x32xf32>
    %1 = vector.shape_cast %0 : vector<1x16x16x32xf32> to vector<16x16x32xf32>
    %c0_3 = arith.constant 0 : index
    %c0_4 = arith.constant 0 : index
    %c0_5 = arith.constant 0 : index
    %c0_6 = arith.constant 0 : index
    %2 = vector.load %arg4[%c0_3, %c0_4, %c0_5, %c0_6] : memref<1x16x16x32xf32, #tpu.memory_space<vmem>>, vector<1x16x16x32xf32>
    %3 = vector.shape_cast %2 : vector<1x16x16x32xf32> to vector<16x16x32xf32>
    %4 = vector.shape_cast %1 : vector<16x16x32xf32> to vector<1x16x16x32xf32>
    tpu.vector_store %arg4[%c0_3, %c0_4, %c0_5, %c0_6], %4 {strides = array<i32>} : memref<1x16x16x32xf32, #tpu.memory_space<vmem>>, vector<1x16x16x32xf32>,
    %cst = arith.constant 0.000000e+00 : f32
    %5 = vector.broadcast %cst : f32 to vector<32x32x32xf32>
    %c0_7 = arith.constant 0 : index
    %c0_8 = arith.constant 0 : index
    %c0_9 = arith.constant 0 : index
    %6 = vector.load %arg5[%c0_7, %c0_8, %c0_9] : memref<32x32x32xf32, #tpu.memory_space<vmem>>, vector<32x32x32xf32>
    tpu.vector_store %arg5[%c0_7, %c0_8, %c0_9], %5 {strides = array<i32>} : memref<32x32x32xf32, #tpu.memory_space<vmem>>, vector<32x32x32xf32>,
    %c8 = arith.constant 8 : index
    %c8_10 = arith.constant 8 : index
    %c0_11 = arith.constant 0 : index
    %7 = vector.load %arg5[%c8, %c8_10, %c0_11] : memref<32x32x32xf32, #tpu.memory_space<vmem>>, vector<16x16x32xf32>
    tpu.vector_store %arg5[%c8, %c8_10, %c0_11], %1 {strides = array<i32>} : memref<32x32x32xf32, #tpu.memory_space<vmem>>, vector<16x16x32xf32>,
    %c7 = arith.constant 7 : index
    %c7_12 = arith.constant 7 : index
    %c0_13 = arith.constant 0 : index
    %8 = vector.load %arg5[%c7, %c7_12, %c0_13] : memref<32x32x32xf32, #tpu.memory_space<vmem>>, vector<16x16x32xf32>
    %9 = vector.shape_cast %8 : vector<16x16x32xf32> to vector<256x32xf32>
    %c0_14 = arith.constant 0 : index
    %c0_15 = arith.constant 0 : index
    %10 = vector.load %arg6[%c0_14, %c0_15] : memref<256x288xf32, #tpu.memory_space<vmem>>, vector<256x32xf32>
    tpu.vector_store %arg6[%c0_14, %c0_15], %9 {strides = array<i32>} : memref<256x288xf32, #tpu.memory_space<vmem>>, vector<256x32xf32>,
    %c7_16 = arith.constant 7 : index
    %c8_17 = arith.constant 8 : index
    %c0_18 = arith.constant 0 : index
    %11 = vector.load %arg5[%c7_16, %c8_17, %c0_18] : memref<32x32x32xf32, #tpu.memory_space<vmem>>, vector<16x16x32xf32>
    %12 = vector.shape_cast %11 : vector<16x16x32xf32> to vector<256x32xf32>
    %c0_19 = arith.constant 0 : index
    %c32 = arith.constant 32 : index
    %13 = vector.load %arg6[%c0_19, %c32] : memref<256x288xf32, #tpu.memory_space<vmem>>, vector<256x32xf32>
    tpu.vector_store %arg6[%c0_19, %c32], %12 {strides = array<i32>} : memref<256x288xf32, #tpu.memory_space<vmem>>, vector<256x32xf32>,
    %c7_20 = arith.constant 7 : index
    %c9 = arith.constant 9 : index
    %c0_21 = arith.constant 0 : index
    %14 = vector.load %arg5[%c7_20, %c9, %c0_21] : memref<32x32x32xf32, #tpu.memory_space<vmem>>, vector<16x16x32xf32>
    %15 = vector.shape_cast %14 : vector<16x16x32xf32> to vector<256x32xf32>
    %c0_22 = arith.constant 0 : index
    %c64 = arith.constant 64 : index
    %16 = vector.load %arg6[%c0_22, %c64] : memref<256x288xf32, #tpu.memory_space<vmem>>, vector<256x32xf32>
    tpu.vector_store %arg6[%c0_22, %c64], %15 {strides = array<i32>} : memref<256x288xf32, #tpu.memory_space<vmem>>, vector<256x32xf32>,
    %c8_23 = arith.constant 8 : index
    %c7_24 = arith.constant 7 : index
    %c0_25 = arith.constant 0 : index
    %17 = vector.load %arg5[%c8_23, %c7_24, %c0_25] : memref<32x32x32xf32, #tpu.memory_space<vmem>>, vector<16x16x32xf32>
    %18 = vector.shape_cast %17 : vector<16x16x32xf32> to vector<256x32xf32>
    %c0_26 = arith.constant 0 : index
    %c96 = arith.constant 96 : index
    %19 = vector.load %arg6[%c0_26, %c96] : memref<256x288xf32, #tpu.memory_space<vmem>>, vector<256x32xf32>
    tpu.vector_store %arg6[%c0_26, %c96], %18 {strides = array<i32>} : memref<256x288xf32, #tpu.memory_space<vmem>>, vector<256x32xf32>,
    %c8_27 = arith.constant 8 : index
    %c8_28 = arith.constant 8 : index
    %c0_29 = arith.constant 0 : index
    %20 = vector.load %arg5[%c8_27, %c8_28, %c0_29] : memref<32x32x32xf32, #tpu.memory_space<vmem>>, vector<16x16x32xf32>
    %21 = vector.shape_cast %20 : vector<16x16x32xf32> to vector<256x32xf32>
    %c0_30 = arith.constant 0 : index
    %c128 = arith.constant 128 : index
    %22 = vector.load %arg6[%c0_30, %c128] : memref<256x288xf32, #tpu.memory_space<vmem>>, vector<256x32xf32>
    tpu.vector_store %arg6[%c0_30, %c128], %21 {strides = array<i32>} : memref<256x288xf32, #tpu.memory_space<vmem>>, vector<256x32xf32>,
    %c8_31 = arith.constant 8 : index
    %c9_32 = arith.constant 9 : index
    %c0_33 = arith.constant 0 : index
    %23 = vector.load %arg5[%c8_31, %c9_32, %c0_33] : memref<32x32x32xf32, #tpu.memory_space<vmem>>, vector<16x16x32xf32>
    %24 = vector.shape_cast %23 : vector<16x16x32xf32> to vector<256x32xf32>
    %c0_34 = arith.constant 0 : index
    %c160 = arith.constant 160 : index
    %25 = vector.load %arg6[%c0_34, %c160] : memref<256x288xf32, #tpu.memory_space<vmem>>, vector<256x32xf32>
    tpu.vector_store %arg6[%c0_34, %c160], %24 {strides = array<i32>} : memref<256x288xf32, #tpu.memory_space<vmem>>, vector<256x32xf32>,
    %c9_35 = arith.constant 9 : index
    %c7_36 = arith.constant 7 : index
    %c0_37 = arith.constant 0 : index
    %26 = vector.load %arg5[%c9_35, %c7_36, %c0_37] : memref<32x32x32xf32, #tpu.memory_space<vmem>>, vector<16x16x32xf32>
    %27 = vector.shape_cast %26 : vector<16x16x32xf32> to vector<256x32xf32>
    %c0_38 = arith.constant 0 : index
    %c192 = arith.constant 192 : index
    %28 = vector.load %arg6[%c0_38, %c192] : memref<256x288xf32, #tpu.memory_space<vmem>>, vector<256x32xf32>
    tpu.vector_store %arg6[%c0_38, %c192], %27 {strides = array<i32>} : memref<256x288xf32, #tpu.memory_space<vmem>>, vector<256x32xf32>,
    %c9_39 = arith.constant 9 : index
    %c8_40 = arith.constant 8 : index
    %c0_41 = arith.constant 0 : index
    %29 = vector.load %arg5[%c9_39, %c8_40, %c0_41] : memref<32x32x32xf32, #tpu.memory_space<vmem>>, vector<16x16x32xf32>
    %30 = vector.shape_cast %29 : vector<16x16x32xf32> to vector<256x32xf32>
    %c0_42 = arith.constant 0 : index
    %c224 = arith.constant 224 : index
    %31 = vector.load %arg6[%c0_42, %c224] : memref<256x288xf32, #tpu.memory_space<vmem>>, vector<256x32xf32>
    tpu.vector_store %arg6[%c0_42, %c224], %30 {strides = array<i32>} : memref<256x288xf32, #tpu.memory_space<vmem>>, vector<256x32xf32>,
    %c9_43 = arith.constant 9 : index
    %c9_44 = arith.constant 9 : index
    %c0_45 = arith.constant 0 : index
    %32 = vector.load %arg5[%c9_43, %c9_44, %c0_45] : memref<32x32x32xf32, #tpu.memory_space<vmem>>, vector<16x16x32xf32>
    %33 = vector.shape_cast %32 : vector<16x16x32xf32> to vector<256x32xf32>
    %c0_46 = arith.constant 0 : index
    %c256 = arith.constant 256 : index
    %34 = vector.load %arg6[%c0_46, %c256] : memref<256x288xf32, #tpu.memory_space<vmem>>, vector<256x32xf32>
    tpu.vector_store %arg6[%c0_46, %c256], %33 {strides = array<i32>} : memref<256x288xf32, #tpu.memory_space<vmem>>, vector<256x32xf32>,
    %c0_47 = arith.constant 0 : index
    %c0_48 = arith.constant 0 : index
    %35 = vector.load %arg6[%c0_47, %c0_48] : memref<256x288xf32, #tpu.memory_space<vmem>>, vector<256x288xf32>
    %c0_49 = arith.constant 0 : index
    %c0_50 = arith.constant 0 : index
    %c0_51 = arith.constant 0 : index
    %36 = vector.load %arg2[%c0_49, %c0_50, %c0_51] : memref<4x288x32xf32, #tpu.memory_space<vmem>>, vector<1x288x32xf32>
    %37 = vector.shape_cast %36 : vector<1x288x32xf32> to vector<288x32xf32>
    %cst_52 = arith.constant dense<0.000000e+00> : vector<256x32xf32>
    %38 = tpu.matmul %35, %37, %cst_52 {dimension_numbers = #tpu.dot_dimension_numbers<[1], [0], [0], [1], [0, 0, 1, 1], [], []>} : vector<256x288xf32>, vector<288x32xf32>, vector<256x32xf32> -> vector<256x32xf32>
    %c0_53 = arith.constant 0 : index
    %c0_54 = arith.constant 0 : index
    %39 = vector.load %arg3[%c0_53, %c0_54] : memref<4x32xf32, #tpu.memory_space<vmem>>, vector<1x32xf32>
    %40 = vector.broadcast %39 : vector<1x32xf32> to vector<256x32xf32>
    %41 = arith.addf %38, %40 : vector<256x32xf32>
    %cst_55 = arith.constant 0.000000e+00 : f32
    %42 = vector.broadcast %cst_55 : f32 to vector<256x32xf32>
    %43 = arith.maximumf %41, %42 : vector<256x32xf32>
    %44 = vector.shape_cast %43 : vector<256x32xf32> to vector<16x16x32xf32>
    %c0_56 = arith.constant 0 : index
    %c0_57 = arith.constant 0 : index
    %c0_58 = arith.constant 0 : index
    %c0_59 = arith.constant 0 : index
    %45 = vector.load %arg4[%c0_56, %c0_57, %c0_58, %c0_59] : memref<1x16x16x32xf32, #tpu.memory_space<vmem>>, vector<1x16x16x32xf32>
    %46 = vector.shape_cast %45 : vector<1x16x16x32xf32> to vector<16x16x32xf32>
    %47 = arith.addf %46, %44 : vector<16x16x32xf32>
    %c0_60 = arith.constant 0 : index
    %c0_61 = arith.constant 0 : index
    %c0_62 = arith.constant 0 : index
    %c0_63 = arith.constant 0 : index
    %48 = vector.load %arg4[%c0_60, %c0_61, %c0_62, %c0_63] : memref<1x16x16x32xf32, #tpu.memory_space<vmem>>, vector<1x16x16x32xf32>
    %49 = vector.shape_cast %48 : vector<1x16x16x32xf32> to vector<16x16x32xf32>
    %50 = vector.shape_cast %47 : vector<16x16x32xf32> to vector<1x16x16x32xf32>
    tpu.vector_store %arg4[%c0_60, %c0_61, %c0_62, %c0_63], %50 {strides = array<i32>} : memref<1x16x16x32xf32, #tpu.memory_space<vmem>>, vector<1x16x16x32xf32>,
    %c8_64 = arith.constant 8 : index
    %c8_65 = arith.constant 8 : index
    %c0_66 = arith.constant 0 : index
    %51 = vector.load %arg5[%c8_64, %c8_65, %c0_66] : memref<32x32x32xf32, #tpu.memory_space<vmem>>, vector<16x16x32xf32>
    tpu.vector_store %arg5[%c8_64, %c8_65, %c0_66], %44 {strides = array<i32>} : memref<32x32x32xf32, #tpu.memory_space<vmem>>, vector<16x16x32xf32>,
    %c6 = arith.constant 6 : index
    %c6_67 = arith.constant 6 : index
    %c0_68 = arith.constant 0 : index
    %52 = vector.load %arg5[%c6, %c6_67, %c0_68] : memref<32x32x32xf32, #tpu.memory_space<vmem>>, vector<16x16x32xf32>
    %53 = vector.shape_cast %52 : vector<16x16x32xf32> to vector<256x32xf32>
    %c0_69 = arith.constant 0 : index
    %c0_70 = arith.constant 0 : index
    %54 = vector.load %arg6[%c0_69, %c0_70] : memref<256x288xf32, #tpu.memory_space<vmem>>, vector<256x32xf32>
    tpu.vector_store %arg6[%c0_69, %c0_70], %53 {strides = array<i32>} : memref<256x288xf32, #tpu.memory_space<vmem>>, vector<256x32xf32>,
    %c6_71 = arith.constant 6 : index
    %c8_72 = arith.constant 8 : index
    %c0_73 = arith.constant 0 : index
    %55 = vector.load %arg5[%c6_71, %c8_72, %c0_73] : memref<32x32x32xf32, #tpu.memory_space<vmem>>, vector<16x16x32xf32>
    %56 = vector.shape_cast %55 : vector<16x16x32xf32> to vector<256x32xf32>
    %c0_74 = arith.constant 0 : index
    %c32_75 = arith.constant 32 : index
    %57 = vector.load %arg6[%c0_74, %c32_75] : memref<256x288xf32, #tpu.memory_space<vmem>>, vector<256x32xf32>
    tpu.vector_store %arg6[%c0_74, %c32_75], %56 {strides = array<i32>} : memref<256x288xf32, #tpu.memory_space<vmem>>, vector<256x32xf32>,
    %c6_76 = arith.constant 6 : index
    %c10 = arith.constant 10 : index
    %c0_77 = arith.constant 0 : index
    %58 = vector.load %arg5[%c6_76, %c10, %c0_77] : memref<32x32x32xf32, #tpu.memory_space<vmem>>, vector<16x16x32xf32>
    %59 = vector.shape_cast %58 : vector<16x16x32xf32> to vector<256x32xf32>
    %c0_78 = arith.constant 0 : index
    %c64_79 = arith.constant 64 : index
    %60 = vector.load %arg6[%c0_78, %c64_79] : memref<256x288xf32, #tpu.memory_space<vmem>>, vector<256x32xf32>
    tpu.vector_store %arg6[%c0_78, %c64_79], %59 {strides = array<i32>} : memref<256x288xf32, #tpu.memory_space<vmem>>, vector<256x32xf32>,
    %c8_80 = arith.constant 8 : index
    %c6_81 = arith.constant 6 : index
    %c0_82 = arith.constant 0 : index
    %61 = vector.load %arg5[%c8_80, %c6_81, %c0_82] : memref<32x32x32xf32, #tpu.memory_space<vmem>>, vector<16x16x32xf32>
    %62 = vector.shape_cast %61 : vector<16x16x32xf32> to vector<256x32xf32>
    %c0_83 = arith.constant 0 : index
    %c96_84 = arith.constant 96 : index
    %63 = vector.load %arg6[%c0_83, %c96_84] : memref<256x288xf32, #tpu.memory_space<vmem>>, vector<256x32xf32>
    tpu.vector_store %arg6[%c0_83, %c96_84], %62 {strides = array<i32>} : memref<256x288xf32, #tpu.memory_space<vmem>>, vector<256x32xf32>,
    %c8_85 = arith.constant 8 : index
    %c8_86 = arith.constant 8 : index
    %c0_87 = arith.constant 0 : index
    %64 = vector.load %arg5[%c8_85, %c8_86, %c0_87] : memref<32x32x32xf32, #tpu.memory_space<vmem>>, vector<16x16x32xf32>
    %65 = vector.shape_cast %64 : vector<16x16x32xf32> to vector<256x32xf32>
    %c0_88 = arith.constant 0 : index
    %c128_89 = arith.constant 128 : index
    %66 = vector.load %arg6[%c0_88, %c128_89] : memref<256x288xf32, #tpu.memory_space<vmem>>, vector<256x32xf32>
    tpu.vector_store %arg6[%c0_88, %c128_89], %65 {strides = array<i32>} : memref<256x288xf32, #tpu.memory_space<vmem>>, vector<256x32xf32>,
    %c8_90 = arith.constant 8 : index
    %c10_91 = arith.constant 10 : index
    %c0_92 = arith.constant 0 : index
    %67 = vector.load %arg5[%c8_90, %c10_91, %c0_92] : memref<32x32x32xf32, #tpu.memory_space<vmem>>, vector<16x16x32xf32>
    %68 = vector.shape_cast %67 : vector<16x16x32xf32> to vector<256x32xf32>
    %c0_93 = arith.constant 0 : index
    %c160_94 = arith.constant 160 : index
    %69 = vector.load %arg6[%c0_93, %c160_94] : memref<256x288xf32, #tpu.memory_space<vmem>>, vector<256x32xf32>
    tpu.vector_store %arg6[%c0_93, %c160_94], %68 {strides = array<i32>} : memref<256x288xf32, #tpu.memory_space<vmem>>, vector<256x32xf32>,
    %c10_95 = arith.constant 10 : index
    %c6_96 = arith.constant 6 : index
    %c0_97 = arith.constant 0 : index
    %70 = vector.load %arg5[%c10_95, %c6_96, %c0_97] : memref<32x32x32xf32, #tpu.memory_space<vmem>>, vector<16x16x32xf32>
    %71 = vector.shape_cast %70 : vector<16x16x32xf32> to vector<256x32xf32>
    %c0_98 = arith.constant 0 : index
    %c192_99 = arith.constant 192 : index
    %72 = vector.load %arg6[%c0_98, %c192_99] : memref<256x288xf32, #tpu.memory_space<vmem>>, vector<256x32xf32>
    tpu.vector_store %arg6[%c0_98, %c192_99], %71 {strides = array<i32>} : memref<256x288xf32, #tpu.memory_space<vmem>>, vector<256x32xf32>,
    %c10_100 = arith.constant 10 : index
    %c8_101 = arith.constant 8 : index
    %c0_102 = arith.constant 0 : index
    %73 = vector.load %arg5[%c10_100, %c8_101, %c0_102] : memref<32x32x32xf32, #tpu.memory_space<vmem>>, vector<16x16x32xf32>
    %74 = vector.shape_cast %73 : vector<16x16x32xf32> to vector<256x32xf32>
    %c0_103 = arith.constant 0 : index
    %c224_104 = arith.constant 224 : index
    %75 = vector.load %arg6[%c0_103, %c224_104] : memref<256x288xf32, #tpu.memory_space<vmem>>, vector<256x32xf32>
    tpu.vector_store %arg6[%c0_103, %c224_104], %74 {strides = array<i32>} : memref<256x288xf32, #tpu.memory_space<vmem>>, vector<256x32xf32>,
    %c10_105 = arith.constant 10 : index
    %c10_106 = arith.constant 10 : index
    %c0_107 = arith.constant 0 : index
    %76 = vector.load %arg5[%c10_105, %c10_106, %c0_107] : memref<32x32x32xf32, #tpu.memory_space<vmem>>, vector<16x16x32xf32>
    %77 = vector.shape_cast %76 : vector<16x16x32xf32> to vector<256x32xf32>
    %c0_108 = arith.constant 0 : index
    %c256_109 = arith.constant 256 : index
    %78 = vector.load %arg6[%c0_108, %c256_109] : memref<256x288xf32, #tpu.memory_space<vmem>>, vector<256x32xf32>
    tpu.vector_store %arg6[%c0_108, %c256_109], %77 {strides = array<i32>} : memref<256x288xf32, #tpu.memory_space<vmem>>, vector<256x32xf32>,
    %c0_110 = arith.constant 0 : index
    %c0_111 = arith.constant 0 : index
    %79 = vector.load %arg6[%c0_110, %c0_111] : memref<256x288xf32, #tpu.memory_space<vmem>>, vector<256x288xf32>
    %c1 = arith.constant 1 : index
    %c0_112 = arith.constant 0 : index
    %c0_113 = arith.constant 0 : index
    %80 = vector.load %arg2[%c1, %c0_112, %c0_113] : memref<4x288x32xf32, #tpu.memory_space<vmem>>, vector<1x288x32xf32>
    %81 = vector.shape_cast %80 : vector<1x288x32xf32> to vector<288x32xf32>
    %cst_114 = arith.constant dense<0.000000e+00> : vector<256x32xf32>
    %82 = tpu.matmul %79, %81, %cst_114 {dimension_numbers = #tpu.dot_dimension_numbers<[1], [0], [0], [1], [0, 0, 1, 1], [], []>} : vector<256x288xf32>, vector<288x32xf32>, vector<256x32xf32> -> vector<256x32xf32>
    %c1_115 = arith.constant 1 : index
    %c0_116 = arith.constant 0 : index
    %83 = vector.load %arg3[%c1_115, %c0_116] : memref<4x32xf32, #tpu.memory_space<vmem>>, vector<1x32xf32>
    %84 = vector.broadcast %83 : vector<1x32xf32> to vector<256x32xf32>
    %85 = arith.addf %82, %84 : vector<256x32xf32>
    %cst_117 = arith.constant 0.000000e+00 : f32
    %86 = vector.broadcast %cst_117 : f32 to vector<256x32xf32>
    %87 = arith.maximumf %85, %86 : vector<256x32xf32>
    %88 = vector.shape_cast %87 : vector<256x32xf32> to vector<16x16x32xf32>
    %c0_118 = arith.constant 0 : index
    %c0_119 = arith.constant 0 : index
    %c0_120 = arith.constant 0 : index
    %c0_121 = arith.constant 0 : index
    %89 = vector.load %arg4[%c0_118, %c0_119, %c0_120, %c0_121] : memref<1x16x16x32xf32, #tpu.memory_space<vmem>>, vector<1x16x16x32xf32>
    %90 = vector.shape_cast %89 : vector<1x16x16x32xf32> to vector<16x16x32xf32>
    %91 = arith.addf %90, %88 : vector<16x16x32xf32>
    %c0_122 = arith.constant 0 : index
    %c0_123 = arith.constant 0 : index
    %c0_124 = arith.constant 0 : index
    %c0_125 = arith.constant 0 : index
    %92 = vector.load %arg4[%c0_122, %c0_123, %c0_124, %c0_125] : memref<1x16x16x32xf32, #tpu.memory_space<vmem>>, vector<1x16x16x32xf32>
    %93 = vector.shape_cast %92 : vector<1x16x16x32xf32> to vector<16x16x32xf32>
    %94 = vector.shape_cast %91 : vector<16x16x32xf32> to vector<1x16x16x32xf32>
    tpu.vector_store %arg4[%c0_122, %c0_123, %c0_124, %c0_125], %94 {strides = array<i32>} : memref<1x16x16x32xf32, #tpu.memory_space<vmem>>, vector<1x16x16x32xf32>,
    %c8_126 = arith.constant 8 : index
    %c8_127 = arith.constant 8 : index
    %c0_128 = arith.constant 0 : index
    %95 = vector.load %arg5[%c8_126, %c8_127, %c0_128] : memref<32x32x32xf32, #tpu.memory_space<vmem>>, vector<16x16x32xf32>
    tpu.vector_store %arg5[%c8_126, %c8_127, %c0_128], %88 {strides = array<i32>} : memref<32x32x32xf32, #tpu.memory_space<vmem>>, vector<16x16x32xf32>,
    %c4 = arith.constant 4 : index
    %c4_129 = arith.constant 4 : index
    %c0_130 = arith.constant 0 : index
    %96 = vector.load %arg5[%c4, %c4_129, %c0_130] : memref<32x32x32xf32, #tpu.memory_space<vmem>>, vector<16x16x32xf32>
    %97 = vector.shape_cast %96 : vector<16x16x32xf32> to vector<256x32xf32>
    %c0_131 = arith.constant 0 : index
    %c0_132 = arith.constant 0 : index
    %98 = vector.load %arg6[%c0_131, %c0_132] : memref<256x288xf32, #tpu.memory_space<vmem>>, vector<256x32xf32>
    tpu.vector_store %arg6[%c0_131, %c0_132], %97 {strides = array<i32>} : memref<256x288xf32, #tpu.memory_space<vmem>>, vector<256x32xf32>,
    %c4_133 = arith.constant 4 : index
    %c8_134 = arith.constant 8 : index
    %c0_135 = arith.constant 0 : index
    %99 = vector.load %arg5[%c4_133, %c8_134, %c0_135] : memref<32x32x32xf32, #tpu.memory_space<vmem>>, vector<16x16x32xf32>
    %100 = vector.shape_cast %99 : vector<16x16x32xf32> to vector<256x32xf32>
    %c0_136 = arith.constant 0 : index
    %c32_137 = arith.constant 32 : index
    %101 = vector.load %arg6[%c0_136, %c32_137] : memref<256x288xf32, #tpu.memory_space<vmem>>, vector<256x32xf32>
    tpu.vector_store %arg6[%c0_136, %c32_137], %100 {strides = array<i32>} : memref<256x288xf32, #tpu.memory_space<vmem>>, vector<256x32xf32>,
    %c4_138 = arith.constant 4 : index
    %c12 = arith.constant 12 : index
    %c0_139 = arith.constant 0 : index
    %102 = vector.load %arg5[%c4_138, %c12, %c0_139] : memref<32x32x32xf32, #tpu.memory_space<vmem>>, vector<16x16x32xf32>
    %103 = vector.shape_cast %102 : vector<16x16x32xf32> to vector<256x32xf32>
    %c0_140 = arith.constant 0 : index
    %c64_141 = arith.constant 64 : index
    %104 = vector.load %arg6[%c0_140, %c64_141] : memref<256x288xf32, #tpu.memory_space<vmem>>, vector<256x32xf32>
    tpu.vector_store %arg6[%c0_140, %c64_141], %103 {strides = array<i32>} : memref<256x288xf32, #tpu.memory_space<vmem>>, vector<256x32xf32>,
    %c8_142 = arith.constant 8 : index
    %c4_143 = arith.constant 4 : index
    %c0_144 = arith.constant 0 : index
    %105 = vector.load %arg5[%c8_142, %c4_143, %c0_144] : memref<32x32x32xf32, #tpu.memory_space<vmem>>, vector<16x16x32xf32>
    %106 = vector.shape_cast %105 : vector<16x16x32xf32> to vector<256x32xf32>
    %c0_145 = arith.constant 0 : index
    %c96_146 = arith.constant 96 : index
    %107 = vector.load %arg6[%c0_145, %c96_146] : memref<256x288xf32, #tpu.memory_space<vmem>>, vector<256x32xf32>
    tpu.vector_store %arg6[%c0_145, %c96_146], %106 {strides = array<i32>} : memref<256x288xf32, #tpu.memory_space<vmem>>, vector<256x32xf32>,
    %c8_147 = arith.constant 8 : index
    %c8_148 = arith.constant 8 : index
    %c0_149 = arith.constant 0 : index
    %108 = vector.load %arg5[%c8_147, %c8_148, %c0_149] : memref<32x32x32xf32, #tpu.memory_space<vmem>>, vector<16x16x32xf32>
    %109 = vector.shape_cast %108 : vector<16x16x32xf32> to vector<256x32xf32>
    %c0_150 = arith.constant 0 : index
    %c128_151 = arith.constant 128 : index
    %110 = vector.load %arg6[%c0_150, %c128_151] : memref<256x288xf32, #tpu.memory_space<vmem>>, vector<256x32xf32>
    tpu.vector_store %arg6[%c0_150, %c128_151], %109 {strides = array<i32>} : memref<256x288xf32, #tpu.memory_space<vmem>>, vector<256x32xf32>,
    %c8_152 = arith.constant 8 : index
    %c12_153 = arith.constant 12 : index
    %c0_154 = arith.constant 0 : index
    %111 = vector.load %arg5[%c8_152, %c12_153, %c0_154] : memref<32x32x32xf32, #tpu.memory_space<vmem>>, vector<16x16x32xf32>
    %112 = vector.shape_cast %111 : vector<16x16x32xf32> to vector<256x32xf32>
    %c0_155 = arith.constant 0 : index
    %c160_156 = arith.constant 160 : index
    %113 = vector.load %arg6[%c0_155, %c160_156] : memref<256x288xf32, #tpu.memory_space<vmem>>, vector<256x32xf32>
    tpu.vector_store %arg6[%c0_155, %c160_156], %112 {strides = array<i32>} : memref<256x288xf32, #tpu.memory_space<vmem>>, vector<256x32xf32>,
    %c12_157 = arith.constant 12 : index
    %c4_158 = arith.constant 4 : index
    %c0_159 = arith.constant 0 : index
    %114 = vector.load %arg5[%c12_157, %c4_158, %c0_159] : memref<32x32x32xf32, #tpu.memory_space<vmem>>, vector<16x16x32xf32>
    %115 = vector.shape_cast %114 : vector<16x16x32xf32> to vector<256x32xf32>
    %c0_160 = arith.constant 0 : index
    %c192_161 = arith.constant 192 : index
    %116 = vector.load %arg6[%c0_160, %c192_161] : memref<256x288xf32, #tpu.memory_space<vmem>>, vector<256x32xf32>
    tpu.vector_store %arg6[%c0_160, %c192_161], %115 {strides = array<i32>} : memref<256x288xf32, #tpu.memory_space<vmem>>, vector<256x32xf32>,
    %c12_162 = arith.constant 12 : index
    %c8_163 = arith.constant 8 : index
    %c0_164 = arith.constant 0 : index
    %117 = vector.load %arg5[%c12_162, %c8_163, %c0_164] : memref<32x32x32xf32, #tpu.memory_space<vmem>>, vector<16x16x32xf32>
    %118 = vector.shape_cast %117 : vector<16x16x32xf32> to vector<256x32xf32>
    %c0_165 = arith.constant 0 : index
    %c224_166 = arith.constant 224 : index
    %119 = vector.load %arg6[%c0_165, %c224_166] : memref<256x288xf32, #tpu.memory_space<vmem>>, vector<256x32xf32>
    tpu.vector_store %arg6[%c0_165, %c224_166], %118 {strides = array<i32>} : memref<256x288xf32, #tpu.memory_space<vmem>>, vector<256x32xf32>,
    %c12_167 = arith.constant 12 : index
    %c12_168 = arith.constant 12 : index
    %c0_169 = arith.constant 0 : index
    %120 = vector.load %arg5[%c12_167, %c12_168, %c0_169] : memref<32x32x32xf32, #tpu.memory_space<vmem>>, vector<16x16x32xf32>
    %121 = vector.shape_cast %120 : vector<16x16x32xf32> to vector<256x32xf32>
    %c0_170 = arith.constant 0 : index
    %c256_171 = arith.constant 256 : index
    %122 = vector.load %arg6[%c0_170, %c256_171] : memref<256x288xf32, #tpu.memory_space<vmem>>, vector<256x32xf32>
    tpu.vector_store %arg6[%c0_170, %c256_171], %121 {strides = array<i32>} : memref<256x288xf32, #tpu.memory_space<vmem>>, vector<256x32xf32>,
    %c0_172 = arith.constant 0 : index
    %c0_173 = arith.constant 0 : index
    %123 = vector.load %arg6[%c0_172, %c0_173] : memref<256x288xf32, #tpu.memory_space<vmem>>, vector<256x288xf32>
    %c2 = arith.constant 2 : index
    %c0_174 = arith.constant 0 : index
    %c0_175 = arith.constant 0 : index
    %124 = vector.load %arg2[%c2, %c0_174, %c0_175] : memref<4x288x32xf32, #tpu.memory_space<vmem>>, vector<1x288x32xf32>
    %125 = vector.shape_cast %124 : vector<1x288x32xf32> to vector<288x32xf32>
    %cst_176 = arith.constant dense<0.000000e+00> : vector<256x32xf32>
    %126 = tpu.matmul %123, %125, %cst_176 {dimension_numbers = #tpu.dot_dimension_numbers<[1], [0], [0], [1], [0, 0, 1, 1], [], []>} : vector<256x288xf32>, vector<288x32xf32>, vector<256x32xf32> -> vector<256x32xf32>
    %c2_177 = arith.constant 2 : index
    %c0_178 = arith.constant 0 : index
    %127 = vector.load %arg3[%c2_177, %c0_178] : memref<4x32xf32, #tpu.memory_space<vmem>>, vector<1x32xf32>
    %128 = vector.broadcast %127 : vector<1x32xf32> to vector<256x32xf32>
    %129 = arith.addf %126, %128 : vector<256x32xf32>
    %cst_179 = arith.constant 0.000000e+00 : f32
    %130 = vector.broadcast %cst_179 : f32 to vector<256x32xf32>
    %131 = arith.maximumf %129, %130 : vector<256x32xf32>
    %132 = vector.shape_cast %131 : vector<256x32xf32> to vector<16x16x32xf32>
    %c0_180 = arith.constant 0 : index
    %c0_181 = arith.constant 0 : index
    %c0_182 = arith.constant 0 : index
    %c0_183 = arith.constant 0 : index
    %133 = vector.load %arg4[%c0_180, %c0_181, %c0_182, %c0_183] : memref<1x16x16x32xf32, #tpu.memory_space<vmem>>, vector<1x16x16x32xf32>
    %134 = vector.shape_cast %133 : vector<1x16x16x32xf32> to vector<16x16x32xf32>
    %135 = arith.addf %134, %132 : vector<16x16x32xf32>
    %c0_184 = arith.constant 0 : index
    %c0_185 = arith.constant 0 : index
    %c0_186 = arith.constant 0 : index
    %c0_187 = arith.constant 0 : index
    %136 = vector.load %arg4[%c0_184, %c0_185, %c0_186, %c0_187] : memref<1x16x16x32xf32, #tpu.memory_space<vmem>>, vector<1x16x16x32xf32>
    %137 = vector.shape_cast %136 : vector<1x16x16x32xf32> to vector<16x16x32xf32>
    %138 = vector.shape_cast %135 : vector<16x16x32xf32> to vector<1x16x16x32xf32>
    tpu.vector_store %arg4[%c0_184, %c0_185, %c0_186, %c0_187], %138 {strides = array<i32>} : memref<1x16x16x32xf32, #tpu.memory_space<vmem>>, vector<1x16x16x32xf32>,
    %c8_188 = arith.constant 8 : index
    %c8_189 = arith.constant 8 : index
    %c0_190 = arith.constant 0 : index
    %139 = vector.load %arg5[%c8_188, %c8_189, %c0_190] : memref<32x32x32xf32, #tpu.memory_space<vmem>>, vector<16x16x32xf32>
    tpu.vector_store %arg5[%c8_188, %c8_189, %c0_190], %132 {strides = array<i32>} : memref<32x32x32xf32, #tpu.memory_space<vmem>>, vector<16x16x32xf32>,
    %c0_191 = arith.constant 0 : index
    %c0_192 = arith.constant 0 : index
    %c0_193 = arith.constant 0 : index
    %140 = vector.load %arg5[%c0_191, %c0_192, %c0_193] : memref<32x32x32xf32, #tpu.memory_space<vmem>>, vector<16x16x32xf32>
    %141 = vector.shape_cast %140 : vector<16x16x32xf32> to vector<256x32xf32>
    %c0_194 = arith.constant 0 : index
    %c0_195 = arith.constant 0 : index
    %142 = vector.load %arg6[%c0_194, %c0_195] : memref<256x288xf32, #tpu.memory_space<vmem>>, vector<256x32xf32>
    tpu.vector_store %arg6[%c0_194, %c0_195], %141 {strides = array<i32>} : memref<256x288xf32, #tpu.memory_space<vmem>>, vector<256x32xf32>,
    %c0_196 = arith.constant 0 : index
    %c8_197 = arith.constant 8 : index
    %c0_198 = arith.constant 0 : index
    %143 = vector.load %arg5[%c0_196, %c8_197, %c0_198] : memref<32x32x32xf32, #tpu.memory_space<vmem>>, vector<16x16x32xf32>
    %144 = vector.shape_cast %143 : vector<16x16x32xf32> to vector<256x32xf32>
    %c0_199 = arith.constant 0 : index
    %c32_200 = arith.constant 32 : index
    %145 = vector.load %arg6[%c0_199, %c32_200] : memref<256x288xf32, #tpu.memory_space<vmem>>, vector<256x32xf32>
    tpu.vector_store %arg6[%c0_199, %c32_200], %144 {strides = array<i32>} : memref<256x288xf32, #tpu.memory_space<vmem>>, vector<256x32xf32>,
    %c0_201 = arith.constant 0 : index
    %c16 = arith.constant 16 : index
    %c0_202 = arith.constant 0 : index
    %146 = vector.load %arg5[%c0_201, %c16, %c0_202] : memref<32x32x32xf32, #tpu.memory_space<vmem>>, vector<16x16x32xf32>
    %147 = vector.shape_cast %146 : vector<16x16x32xf32> to vector<256x32xf32>
    %c0_203 = arith.constant 0 : index
    %c64_204 = arith.constant 64 : index
    %148 = vector.load %arg6[%c0_203, %c64_204] : memref<256x288xf32, #tpu.memory_space<vmem>>, vector<256x32xf32>
    tpu.vector_store %arg6[%c0_203, %c64_204], %147 {strides = array<i32>} : memref<256x288xf32, #tpu.memory_space<vmem>>, vector<256x32xf32>,
    %c8_205 = arith.constant 8 : index
    %c0_206 = arith.constant 0 : index
    %c0_207 = arith.constant 0 : index
    %149 = vector.load %arg5[%c8_205, %c0_206, %c0_207] : memref<32x32x32xf32, #tpu.memory_space<vmem>>, vector<16x16x32xf32>
    %150 = vector.shape_cast %149 : vector<16x16x32xf32> to vector<256x32xf32>
    %c0_208 = arith.constant 0 : index
    %c96_209 = arith.constant 96 : index
    %151 = vector.load %arg6[%c0_208, %c96_209] : memref<256x288xf32, #tpu.memory_space<vmem>>, vector<256x32xf32>
    tpu.vector_store %arg6[%c0_208, %c96_209], %150 {strides = array<i32>} : memref<256x288xf32, #tpu.memory_space<vmem>>, vector<256x32xf32>,
    %c8_210 = arith.constant 8 : index
    %c8_211 = arith.constant 8 : index
    %c0_212 = arith.constant 0 : index
    %152 = vector.load %arg5[%c8_210, %c8_211, %c0_212] : memref<32x32x32xf32, #tpu.memory_space<vmem>>, vector<16x16x32xf32>
    %153 = vector.shape_cast %152 : vector<16x16x32xf32> to vector<256x32xf32>
    %c0_213 = arith.constant 0 : index
    %c128_214 = arith.constant 128 : index
    %154 = vector.load %arg6[%c0_213, %c128_214] : memref<256x288xf32, #tpu.memory_space<vmem>>, vector<256x32xf32>
    tpu.vector_store %arg6[%c0_213, %c128_214], %153 {strides = array<i32>} : memref<256x288xf32, #tpu.memory_space<vmem>>, vector<256x32xf32>,
    %c8_215 = arith.constant 8 : index
    %c16_216 = arith.constant 16 : index
    %c0_217 = arith.constant 0 : index
    %155 = vector.load %arg5[%c8_215, %c16_216, %c0_217] : memref<32x32x32xf32, #tpu.memory_space<vmem>>, vector<16x16x32xf32>
    %156 = vector.shape_cast %155 : vector<16x16x32xf32> to vector<256x32xf32>
    %c0_218 = arith.constant 0 : index
    %c160_219 = arith.constant 160 : index
    %157 = vector.load %arg6[%c0_218, %c160_219] : memref<256x288xf32, #tpu.memory_space<vmem>>, vector<256x32xf32>
    tpu.vector_store %arg6[%c0_218, %c160_219], %156 {strides = array<i32>} : memref<256x288xf32, #tpu.memory_space<vmem>>, vector<256x32xf32>,
    %c16_220 = arith.constant 16 : index
    %c0_221 = arith.constant 0 : index
    %c0_222 = arith.constant 0 : index
    %158 = vector.load %arg5[%c16_220, %c0_221, %c0_222] : memref<32x32x32xf32, #tpu.memory_space<vmem>>, vector<16x16x32xf32>
    %159 = vector.shape_cast %158 : vector<16x16x32xf32> to vector<256x32xf32>
    %c0_223 = arith.constant 0 : index
    %c192_224 = arith.constant 192 : index
    %160 = vector.load %arg6[%c0_223, %c192_224] : memref<256x288xf32, #tpu.memory_space<vmem>>, vector<256x32xf32>
    tpu.vector_store %arg6[%c0_223, %c192_224], %159 {strides = array<i32>} : memref<256x288xf32, #tpu.memory_space<vmem>>, vector<256x32xf32>,
    %c16_225 = arith.constant 16 : index
    %c8_226 = arith.constant 8 : index
    %c0_227 = arith.constant 0 : index
    %161 = vector.load %arg5[%c16_225, %c8_226, %c0_227] : memref<32x32x32xf32, #tpu.memory_space<vmem>>, vector<16x16x32xf32>
    %162 = vector.shape_cast %161 : vector<16x16x32xf32> to vector<256x32xf32>
    %c0_228 = arith.constant 0 : index
    %c224_229 = arith.constant 224 : index
    %163 = vector.load %arg6[%c0_228, %c224_229] : memref<256x288xf32, #tpu.memory_space<vmem>>, vector<256x32xf32>
    tpu.vector_store %arg6[%c0_228, %c224_229], %162 {strides = array<i32>} : memref<256x288xf32, #tpu.memory_space<vmem>>, vector<256x32xf32>,
    %c16_230 = arith.constant 16 : index
    %c16_231 = arith.constant 16 : index
    %c0_232 = arith.constant 0 : index
    %164 = vector.load %arg5[%c16_230, %c16_231, %c0_232] : memref<32x32x32xf32, #tpu.memory_space<vmem>>, vector<16x16x32xf32>
    %165 = vector.shape_cast %164 : vector<16x16x32xf32> to vector<256x32xf32>
    %c0_233 = arith.constant 0 : index
    %c256_234 = arith.constant 256 : index
    %166 = vector.load %arg6[%c0_233, %c256_234] : memref<256x288xf32, #tpu.memory_space<vmem>>, vector<256x32xf32>
    tpu.vector_store %arg6[%c0_233, %c256_234], %165 {strides = array<i32>} : memref<256x288xf32, #tpu.memory_space<vmem>>, vector<256x32xf32>,
    %c0_235 = arith.constant 0 : index
    %c0_236 = arith.constant 0 : index
    %167 = vector.load %arg6[%c0_235, %c0_236] : memref<256x288xf32, #tpu.memory_space<vmem>>, vector<256x288xf32>
    %c3 = arith.constant 3 : index
    %c0_237 = arith.constant 0 : index
    %c0_238 = arith.constant 0 : index
    %168 = vector.load %arg2[%c3, %c0_237, %c0_238] : memref<4x288x32xf32, #tpu.memory_space<vmem>>, vector<1x288x32xf32>
    %169 = vector.shape_cast %168 : vector<1x288x32xf32> to vector<288x32xf32>
    %cst_239 = arith.constant dense<0.000000e+00> : vector<256x32xf32>
    %170 = tpu.matmul %167, %169, %cst_239 {dimension_numbers = #tpu.dot_dimension_numbers<[1], [0], [0], [1], [0, 0, 1, 1], [], []>} : vector<256x288xf32>, vector<288x32xf32>, vector<256x32xf32> -> vector<256x32xf32>
    %c3_240 = arith.constant 3 : index
    %c0_241 = arith.constant 0 : index
    %171 = vector.load %arg3[%c3_240, %c0_241] : memref<4x32xf32, #tpu.memory_space<vmem>>, vector<1x32xf32>
    %172 = vector.broadcast %171 : vector<1x32xf32> to vector<256x32xf32>
    %173 = arith.addf %170, %172 : vector<256x32xf32>
    %cst_242 = arith.constant 0.000000e+00 : f32
    %174 = vector.broadcast %cst_242 : f32 to vector<256x32xf32>
    %175 = arith.maximumf %173, %174 : vector<256x32xf32>
    %176 = vector.shape_cast %175 : vector<256x32xf32> to vector<16x16x32xf32>
    %c0_243 = arith.constant 0 : index
    %c0_244 = arith.constant 0 : index
    %c0_245 = arith.constant 0 : index
    %c0_246 = arith.constant 0 : index
    %177 = vector.load %arg4[%c0_243, %c0_244, %c0_245, %c0_246] : memref<1x16x16x32xf32, #tpu.memory_space<vmem>>, vector<1x16x16x32xf32>
    %178 = vector.shape_cast %177 : vector<1x16x16x32xf32> to vector<16x16x32xf32>
    %179 = arith.addf %178, %176 : vector<16x16x32xf32>
    %c0_247 = arith.constant 0 : index
    %c0_248 = arith.constant 0 : index
    %c0_249 = arith.constant 0 : index
    %c0_250 = arith.constant 0 : index
    %180 = vector.load %arg4[%c0_247, %c0_248, %c0_249, %c0_250] : memref<1x16x16x32xf32, #tpu.memory_space<vmem>>, vector<1x16x16x32xf32>
    %181 = vector.shape_cast %180 : vector<1x16x16x32xf32> to vector<16x16x32xf32>
    %182 = vector.shape_cast %179 : vector<16x16x32xf32> to vector<1x16x16x32xf32>
    tpu.vector_store %arg4[%c0_247, %c0_248, %c0_249, %c0_250], %182 {strides = array<i32>} : memref<1x16x16x32xf32, #tpu.memory_space<vmem>>, vector<1x16x16x32xf32>,
    return
  }
  func.func @transform_0(%arg0: i32) -> (i32, i32, i32, i32) {
    %c0_i32 = arith.constant 0 : i32
    %c0_i32_0 = arith.constant 0 : i32
    %c0_i32_1 = arith.constant 0 : i32
    %c0_i32_2 = arith.constant 0 : i32
    return %arg0, %c0_i32, %c0_i32_0, %c0_i32_1 : i32, i32, i32, i32
  }
  func.func @transform_1(%arg0: i32) -> (i32, i32, i32) {
    %c0_i32 = arith.constant 0 : i32
    %c0_i32_0 = arith.constant 0 : i32
    %c0_i32_1 = arith.constant 0 : i32
    %c0_i32_2 = arith.constant 0 : i32
    return %c0_i32, %c0_i32_0, %c0_i32_1 : i32, i32, i32
  }
  func.func @transform_2(%arg0: i32) -> (i32, i32) {
    %c0_i32 = arith.constant 0 : i32
    %c0_i32_0 = arith.constant 0 : i32
    %c0_i32_1 = arith.constant 0 : i32
    return %c0_i32, %c0_i32_0 : i32, i32
  }
  func.func @transform_3(%arg0: i32) -> (i32, i32, i32, i32) {
    %c0_i32 = arith.constant 0 : i32
    %c0_i32_0 = arith.constant 0 : i32
    %c0_i32_1 = arith.constant 0 : i32
    %c0_i32_2 = arith.constant 0 : i32
    return %arg0, %c0_i32, %c0_i32_0, %c0_i32_1 : i32, i32, i32, i32
  }
}

</mosaic_0001>

<llo_original>
// kernel: tpu_custom_call.1
$region0: #{tpu_custom_call.1}
  #allocation0 [shape = 'u32[]', space=smem, size = 0x4, offset = 0x4, fixed_abs, tag = 'smem constant byte address 0x4 - core index']
  #allocation1 [shape = 'u32[144,128]{1,0:T(1,128)}', space=vmem, size = 0x12000, scoped, tag = 'internal scratch']
  #allocation2 [shape = 'f32[32,32,32]{2,1,0:T(8,128)}', space=vmem, size = 0x80000, scoped, tag = 'scratch operand']
  #allocation3 [shape = 'f32[256,288]{1,0:T(8,128)}', space=vmem, size = 0x60000, scoped, tag = 'scratch operand']
  %s0 = inlined_call_operand.vmem [shape: f32[2,16,16,32], index: 0, kind: input, shape index: {}]
  %s1 = inlined_call_operand.vmem [shape: f32[4,288,32], index: 1, kind: input, shape index: {}]
  %s2 = inlined_call_operand.vmem [shape: f32[4,32], index: 2, kind: input, shape index: {}]
  %s3 = inlined_call_operand.hbm [shape: f32[2,16,16,32], index: 3, kind: output, shape index: {}]
  %s4 = sld [smem:[#allocation0]]
  $region45: #{tpu_custom_call.1} parent=0
    _
  %s6 = ssub.s32 1, %s4
  %s7 = scalar_select 0, %s6, %s4
  $region1: #{tpu_custom_call.1} parent=0
    #allocation4 [shape = 'u8[262144]{0}', space=vmem, size = 0x40000, scoped, tag = 'output window, operand 0']
    #allocation5 [shape = 's32[2]{0}', space=sflag, size = 0x8, scoped, tag = 'scoped memory for tpu_custom_call.1']
    %8 = vsyncpa [#allocation5], 0
    %s9 = scalar_lea.sflag [#allocation5], 1
    %10 = vsyncpa %s9, 0
    loop: start=0, step=1, limit=4
    $region2: #{tpu_custom_call.1} parent=1 // loop_pre_header
      _
    $region3: #{tpu_custom_call.1} parent=1 // loop_header
      %s12 = sphi 0, %s16
      %p13 = scmp.ge.s32.totalorder %s12, 4
      %s22 = sphi 0, %s24
      %s25 = sphi 0, %s22
      %s26 = sphi 0, %s25
      %s42 = sphi 0, %s26
      %s46 = sphi 0, %s46
      %s48 = sphi 0, %s46
      %s49 = sphi 0, %s48
      %s63 = sphi 0, %s49
      %s67 = sphi 0, %s67
      %s69 = sphi 0, %s67
      %s70 = sphi 0, %s69
      %s84 = sphi 0, %s70
      %s90 = sphi 0, %s92
      %s93 = sphi 0, %s90
      %s94 = sphi 0, %s93
      %s110 = sphi 0, %s94
    $region4: #{tpu_custom_call.1} parent=1 // loop_header_branch
      %15 = sbr.rel (%p13) target = $region8
    $region5: #{tpu_custom_call.1} parent=1 // loop_body
      %s17 = ssub.s32 %s12, 1
      %s18 = ssub.s32 %s12, 2
      %s19 = sadd.s32 %s12, 1
      %s20 = ssub.s32 %s12, %s19
      %p21 = scmp.eq.s32.totalorder %s20, 0
      %s23 = sadd.s32 %s22, 1
      %s24 = scalar_select %p21, %s22, %s23
      %p27 = pneg %p21
      %p28 = scmp.eq.s32.totalorder %s12, 1
      %p29 = por %p27, %p28
      %p30 = scmp.ne.s32.totalorder %s22, %s25
      %p31 = scmp.eq.s32.totalorder %s12, 0
      %p32 = por %p30, %p31
      %p33 = scmp.ne.s32.totalorder %s22, %s25
      %p34 = scmp.eq.s32.totalorder %s17, 1
      %p35 = por %p33, %p34
      %p36 = scmp.ne.s32.totalorder %s25, %s26
      %p37 = scmp.eq.s32.totalorder %s17, 0
      %p38 = por %p36, %p37
      %p39 = scmp.ne.s32.totalorder %s25, %s26
      %p40 = scmp.eq.s32.totalorder %s18, 1
      %p41 = por %p39, %p40
      %p43 = scmp.ne.s32.totalorder %s26, %s42
      %p44 = scmp.eq.s32.totalorder %s18, 0
      %p45 = por %p43, %p44
      %s47 = sadd.s32 %s46, 1
      %p50 = scmp.eq.s32.totalorder %s12, 1
      %p51 = scmp.ne.s32.totalorder %s46, %s48
      %p52 = scmp.eq.s32.totalorder %s12, 0
      %p53 = por %p51, %p52
      %p54 = scmp.ne.s32.totalorder %s46, %s48
      %p55 = scmp.eq.s32.totalorder %s17, 1
      %p56 = por %p54, %p55
      %p57 = scmp.ne.s32.totalorder %s48, %s49
      %p58 = scmp.eq.s32.totalorder %s17, 0
      %p59 = por %p57, %p58
      %p60 = scmp.ne.s32.totalorder %s48, %s49
      %p61 = scmp.eq.s32.totalorder %s18, 1
      %p62 = por %p60, %p61
      %p64 = scmp.ne.s32.totalorder %s49, %s63
      %p65 = scmp.eq.s32.totalorder %s18, 0
      %p66 = por %p64, %p65
      %s68 = sadd.s32 %s67, 1
      %p71 = scmp.eq.s32.totalorder %s12, 1
      %p72 = scmp.ne.s32.totalorder %s67, %s69
      %p73 = scmp.eq.s32.totalorder %s12, 0
      %p74 = por %p72, %p73
      %p75 = scmp.ne.s32.totalorder %s67, %s69
      %p76 = scmp.eq.s32.totalorder %s17, 1
      %p77 = por %p75, %p76
      %p78 = scmp.ne.s32.totalorder %s69, %s70
      %p79 = scmp.eq.s32.totalorder %s17, 0
      %p80 = por %p78, %p79
      %p81 = scmp.ne.s32.totalorder %s69, %s70
      %p82 = scmp.eq.s32.totalorder %s18, 1
      %p83 = por %p81, %p82
      %p85 = scmp.ne.s32.totalorder %s70, %s84
      %p86 = scmp.eq.s32.totalorder %s18, 0
      %p87 = por %p85, %p86
      %s88 = ssub.s32 %s12, %s19
      %p89 = scmp.eq.s32.totalorder %s88, 0
      %s91 = sadd.s32 %s90, 1
      %s92 = scalar_select %p89, %s90, %s91
      %p95 = pneg %p89
      %p96 = scmp.eq.s32.totalorder %s12, 1
      %p97 = por %p95, %p96
      %p98 = scmp.ne.s32.totalorder %s90, %s93
      %p99 = scmp.eq.s32.totalorder %s12, 0
      %p100 = por %p98, %p99
      %p101 = scmp.ne.s32.totalorder %s90, %s93
      %p102 = scmp.eq.s32.totalorder %s17, 1
      %p103 = por %p101, %p102
      %p104 = scmp.ne.s32.totalorder %s93, %s94
      %p105 = scmp.eq.s32.totalorder %s17, 0
      %p106 = por %p104, %p105
      %p107 = scmp.ne.s32.totalorder %s93, %s94
      %p108 = scmp.eq.s32.totalorder %s18, 1
      %p109 = por %p107, %p108
      %p111 = scmp.ne.s32.totalorder %s94, %s110
      %p112 = scmp.eq.s32.totalorder %s18, 0
      %p113 = por %p111, %p112
      %p114 = scmp.le.s32.totalorder 1, %s12
      %p115 = scmp.lt.s32.totalorder %s12, 3
      %p116 = pnand %p114, %p115
      %p117 = pneg %p116
      // Predicated region
      $region9: #{tpu_custom_call.1} parent=5 // pred_check
        _
      $region10: #{tpu_custom_call.1} parent=5 // pred_check_branch
        %119 = sbr.rel (%p116) target = $region12
      $region11: #{tpu_custom_call.1} parent=5 // pred_region
        %s120 = ssub.s32 %s12, 1
        // Predicated region
        $region13: #{tpu_custom_call.1} parent=11 // pred_check
          %p121 = pneg %p59
        $region14: #{tpu_custom_call.1} parent=11 // pred_check_branch
          %123 = sbr.rel (%p121) target = $region16
        $region15: #{tpu_custom_call.1} parent=11 // pred_region
          _
        $region16: #{tpu_custom_call.1} parent=11 // pred_fallthru
          _
        // Predicated region
        $region17: #{tpu_custom_call.1} parent=11 // pred_check
          %p124 = pneg %p80
        $region18: #{tpu_custom_call.1} parent=11 // pred_check_branch
          %126 = sbr.rel (%p124) target = $region20
        $region19: #{tpu_custom_call.1} parent=11 // pred_region
          _
        $region20: #{tpu_custom_call.1} parent=11 // pred_fallthru
          _
      $region12: #{tpu_custom_call.1} parent=5 // pred_fallthru
        _
      %p127 = scmp.lt.s32.totalorder %s12, 2
      // Predicated region
      $region21: #{tpu_custom_call.1} parent=5 // pred_check
        %p128 = pneg %p127
      $region22: #{tpu_custom_call.1} parent=5 // pred_check_branch
        %130 = sbr.rel (%p128) target = $region24
      $region23: #{tpu_custom_call.1} parent=5 // pred_region
        // Predicated region
        $region25: #{tpu_custom_call.1} parent=23 // pred_check
          %p131 = pneg %p32
        $region26: #{tpu_custom_call.1} parent=23 // pred_check_branch
          %133 = sbr.rel (%p131) target = $region28
        $region27: #{tpu_custom_call.1} parent=23 // pred_region
          %p134 = scmp.lt.s32.totalorder %s12, 1
          %s135 = scalar_select %p134, %s12, 1
          %s136 = smul.addr %s135, 32
          %s137 = smul.addr %s136, 8
          %s138 = scalar_lea.vmem %s0, %s137
        $region28: #{tpu_custom_call.1} parent=23 // pred_fallthru
          _
      $region24: #{tpu_custom_call.1} parent=5 // pred_fallthru
        _
      %p139 = scmp.le.s32.totalorder 1, %s12
      %p140 = scmp.lt.s32.totalorder %s12, 3
      %p141 = pnand %p139, %p140
      %p142 = pneg %p141
      // Predicated region
      $region29: #{tpu_custom_call.1} parent=5 // pred_check
        _
      $region30: #{tpu_custom_call.1} parent=5 // pred_check_branch
        %144 = sbr.rel (%p141) target = $region32
      $region31: #{tpu_custom_call.1} parent=5 // pred_region
        %s145 = ssub.s32 %s12, 1
        %p146 = scmp.lt.s32.totalorder %s17, 1
        %s147 = scalar_select %p146, %s17, 1
        %s148 = smul.addr %s147, 32
        %s149 = smul.addr %s148, 8
        %s150 = scalar_lea.vmem %s0, %s149
        %p151 = pneg %p38
        %p152 = pneg %p35
        %p153 = pneg %p59
        %p154 = pneg %p56
        %p155 = pneg %p80
        %p156 = pneg %p77
        %p157 = pneg %p106
        %p158 = pneg %p103
        %s159 = sand.u32 %s93, 1
        %s160 = scalar_lea.sflag [#allocation5], %s159
        %s161 = sand.u32 %s93, 1
        %s162 = smul.addr %s161, 256
        %s163 = scalar_lea.vmem [#allocation4], %s162
        %p164 = scmp.lt.s32.totalorder %s17, 1
        %s165 = scalar_select %p164, %s17, 1
        %s166 = smul.addr %s165, 32
        %s167 = smul.addr %s166, 8
        %s168 = scalar_lea.vmem %s0, %s167
        %v169 = vld [vmem:[%s168] sm:$0xff]
        %v170 = vld [vmem:[%s168 + $0x8] sm:$0xff]
        %v171 = vld [vmem:[%s168 + $0x10] sm:$0xff]
        %v172 = vld [vmem:[%s168 + $0x18] sm:$0xff]
        %v173 = vld [vmem:[%s168 + $0x20] sm:$0xff]
        %v174 = vld [vmem:[%s168 + $0x28] sm:$0xff]
        %v175 = vld [vmem:[%s168 + $0x30] sm:$0xff]
        %v176 = vld [vmem:[%s168 + $0x38] sm:$0xff]
        %v177 = vld [vmem:[%s168 + $0x40] sm:$0xff]
        %v178 = vld [vmem:[%s168 + $0x48] sm:$0xff]
        %v179 = vld [vmem:[%s168 + $0x50] sm:$0xff]
        %v180 = vld [vmem:[%s168 + $0x58] sm:$0xff]
        %v181 = vld [vmem:[%s168 + $0x60] sm:$0xff]
        %v182 = vld [vmem:[%s168 + $0x68] sm:$0xff]
        %v183 = vld [vmem:[%s168 + $0x70] sm:$0xff]
        %v184 = vld [vmem:[%s168 + $0x78] sm:$0xff]
        %v185 = vld [vmem:[%s168 + $0x80] sm:$0xff]
        %v186 = vld [vmem:[%s168 + $0x88] sm:$0xff]
        %v187 = vld [vmem:[%s168 + $0x90] sm:$0xff]
        %v188 = vld [vmem:[%s168 + $0x98] sm:$0xff]
        %v189 = vld [vmem:[%s168 + $0xa0] sm:$0xff]
        %v190 = vld [vmem:[%s168 + $0xa8] sm:$0xff]
        %v191 = vld [vmem:[%s168 + $0xb0] sm:$0xff]
        %v192 = vld [vmem:[%s168 + $0xb8] sm:$0xff]
        %v193 = vld [vmem:[%s168 + $0xc0] sm:$0xff]
        %v194 = vld [vmem:[%s168 + $0xc8] sm:$0xff]
        %v195 = vld [vmem:[%s168 + $0xd0] sm:$0xff]
        %v196 = vld [vmem:[%s168 + $0xd8] sm:$0xff]
        %v197 = vld [vmem:[%s168 + $0xe0] sm:$0xff]
        %v198 = vld [vmem:[%s168 + $0xe8] sm:$0xff]
        %v199 = vld [vmem:[%s168 + $0xf0] sm:$0xff]
        %v200 = vld [vmem:[%s168 + $0xf8] sm:$0xff]
        %vm201 = vcmask 261120
        %202 = vst.msk [vmem:[%s163] sm:$0xff] %vm201, %v169
        %203 = vst.msk [vmem:[%s163 + $0x8] sm:$0xff] %vm201, %v170
        %204 = vst.msk [vmem:[%s163 + $0x10] sm:$0xff] %vm201, %v171
        %205 = vst.msk [vmem:[%s163 + $0x18] sm:$0xff] %vm201, %v172
        %206 = vst.msk [vmem:[%s163 + $0x20] sm:$0xff] %vm201, %v173
        %207 = vst.msk [vmem:[%s163 + $0x28] sm:$0xff] %vm201, %v174
        %208 = vst.msk [vmem:[%s163 + $0x30] sm:$0xff] %vm201, %v175
        %209 = vst.msk [vmem:[%s163 + $0x38] sm:$0xff] %vm201, %v176
        %210 = vst.msk [vmem:[%s163 + $0x40] sm:$0xff] %vm201, %v177
        %211 = vst.msk [vmem:[%s163 + $0x48] sm:$0xff] %vm201, %v178
        %212 = vst.msk [vmem:[%s163 + $0x50] sm:$0xff] %vm201, %v179
        %213 = vst.msk [vmem:[%s163 + $0x58] sm:$0xff] %vm201, %v180
        %214 = vst.msk [vmem:[%s163 + $0x60] sm:$0xff] %vm201, %v181
        %215 = vst.msk [vmem:[%s163 + $0x68] sm:$0xff] %vm201, %v182
        %216 = vst.msk [vmem:[%s163 + $0x70] sm:$0xff] %vm201, %v183
        %217 = vst.msk [vmem:[%s163 + $0x78] sm:$0xff] %vm201, %v184
        %218 = vst.msk [vmem:[%s163 + $0x80] sm:$0xff] %vm201, %v185
        %219 = vst.msk [vmem:[%s163 + $0x88] sm:$0xff] %vm201, %v186
        %220 = vst.msk [vmem:[%s163 + $0x90] sm:$0xff] %vm201, %v187
        %221 = vst.msk [vmem:[%s163 + $0x98] sm:$0xff] %vm201, %v188
        %222 = vst.msk [vmem:[%s163 + $0xa0] sm:$0xff] %vm201, %v189
        %223 = vst.msk [vmem:[%s163 + $0xa8] sm:$0xff] %vm201, %v190
        %224 = vst.msk [vmem:[%s163 + $0xb0] sm:$0xff] %vm201, %v191
        %225 = vst.msk [vmem:[%s163 + $0xb8] sm:$0xff] %vm201, %v192
        %226 = vst.msk [vmem:[%s163 + $0xc0] sm:$0xff] %vm201, %v193
        %227 = vst.msk [vmem:[%s163 + $0xc8] sm:$0xff] %vm201, %v194
        %228 = vst.msk [vmem:[%s163 + $0xd0] sm:$0xff] %vm201, %v195
        %229 = vst.msk [vmem:[%s163 + $0xd8] sm:$0xff] %vm201, %v196
        %230 = vst.msk [vmem:[%s163 + $0xe0] sm:$0xff] %vm201, %v197
        %231 = vst.msk [vmem:[%s163 + $0xe8] sm:$0xff] %vm201, %v198
        %232 = vst.msk [vmem:[%s163 + $0xf0] sm:$0xff] %vm201, %v199
        %233 = vst.msk [vmem:[%s163 + $0xf8] sm:$0xff] %vm201, %v200
        %234 = vst.msk [vmem:[#allocation2] sm:$0xff] %vm201, 0.0
        %235 = vst.msk [vmem:[#allocation2 + $0x8] sm:$0xff] %vm201, 0.0
        %236 = vst.msk [vmem:[#allocation2 + $0x10] sm:$0xff] %vm201, 0.0
        %237 = vst.msk [vmem:[#allocation2 + $0x18] sm:$0xff] %vm201, 0.0
        %238 = vst.msk [vmem:[#allocation2 + $0x20] sm:$0xff] %vm201, 0.0
        %239 = vst.msk [vmem:[#allocation2 + $0x28] sm:$0xff] %vm201, 0.0
        %240 = vst.msk [vmem:[#allocation2 + $0x30] sm:$0xff] %vm201, 0.0
        %241 = vst.msk [vmem:[#allocation2 + $0x38] sm:$0xff] %vm201, 0.0
        %242 = vst.msk [vmem:[#allocation2 + $0x40] sm:$0xff] %vm201, 0.0
        %243 = vst.msk [vmem:[#allocation2 + $0x48] sm:$0xff] %vm201, 0.0
        %244 = vst.msk [vmem:[#allocation2 + $0x50] sm:$0xff] %vm201, 0.0
        %245 = vst.msk [vmem:[#allocation2 + $0x58] sm:$0xff] %vm201, 0.0
        %246 = vst.msk [vmem:[#allocation2 + $0x60] sm:$0xff] %vm201, 0.0
        %247 = vst.msk [vmem:[#allocation2 + $0x68] sm:$0xff] %vm201, 0.0
        %248 = vst.msk [vmem:[#allocation2 + $0x70] sm:$0xff] %vm201, 0.0
        %249 = vst.msk [vmem:[#allocation2 + $0x78] sm:$0xff] %vm201, 0.0
        %250 = vst.msk [vmem:[#allocation2 + $0x80] sm:$0xff] %vm201, 0.0
        %251 = vst.msk [vmem:[#allocation2 + $0x88] sm:$0xff] %vm201, 0.0
        %252 = vst.msk [vmem:[#allocation2 + $0x90] sm:$0xff] %vm201, 0.0
        %253 = vst.msk [vmem:[#allocation2 + $0x98] sm:$0xff] %vm201, 0.0
        %254 = vst.msk [vmem:[#allocation2 + $0xa0] sm:$0xff] %vm201, 0.0
        %255 = vst.msk [vmem:[#allocation2 + $0xa8] sm:$0xff] %vm201, 0.0
        %256 = vst.msk [vmem:[#allocation2 + $0xb0] sm:$0xff] %vm201, 0.0
        %257 = vst.msk [vmem:[#allocation2 + $0xb8] sm:$0xff] %vm201, 0.0
        %258 = vst.msk [vmem:[#allocation2 + $0xc0] sm:$0xff] %vm201, 0.0
        %259 = vst.msk [vmem:[#allocation2 + $0xc8] sm:$0xff] %vm201, 0.0
        %260 = vst.msk [vmem:[#allocation2 + $0xd0] sm:$0xff] %vm201, 0.0
        %261 = vst.msk [vmem:[#allocation2 + $0xd8] sm:$0xff] %vm201, 0.0
        %262 = vst.msk [vmem:[#allocation2 + $0xe0] sm:$0xff] %vm201, 0.0
        %263 = vst.msk [vmem:[#allocation2 + $0xe8] sm:$0xff] %vm201, 0.0
        %264 = vst.msk [vmem:[#allocation2 + $0xf0] sm:$0xff] %vm201, 0.0
        %265 = vst.msk [vmem:[#allocation2 + $0xf8] sm:$0xff] %vm201, 0.0
        %266 = vst.msk [vmem:[#allocation2 + $0x100] sm:$0xff] %vm201, 0.0
        %267 = vst.msk [vmem:[#allocation2 + $0x108] sm:$0xff] %vm201, 0.0
        %268 = vst.msk [vmem:[#allocation2 + $0x110] sm:$0xff] %vm201, 0.0
        %269 = vst.msk [vmem:[#allocation2 + $0x118] sm:$0xff] %vm201, 0.0
        %270 = vst.msk [vmem:[#allocation2 + $0x120] sm:$0xff] %vm201, 0.0
        %271 = vst.msk [vmem:[#allocation2 + $0x128] sm:$0xff] %vm201, 0.0
        %272 = vst.msk [vmem:[#allocation2 + $0x130] sm:$0xff] %vm201, 0.0
        %273 = vst.msk [vmem:[#allocation2 + $0x138] sm:$0xff] %vm201, 0.0
        %274 = vst.msk [vmem:[#allocation2 + $0x140] sm:$0xff] %vm201, 0.0
        %275 = vst.msk [vmem:[#allocation2 + $0x148] sm:$0xff] %vm201, 0.0
        %276 = vst.msk [vmem:[#allocation2 + $0x150] sm:$0xff] %vm201, 0.0
        %277 = vst.msk [vmem:[#allocation2 + $0x158] sm:$0xff] %vm201, 0.0
        %278 = vst.msk [vmem:[#allocation2 + $0x160] sm:$0xff] %vm201, 0.0
        %279 = vst.msk [vmem:[#allocation2 + $0x168] sm:$0xff] %vm201, 0.0
        %280 = vst.msk [vmem:[#allocation2 + $0x170] sm:$0xff] %vm201, 0.0
        %281 = vst.msk [vmem:[#allocation2 + $0x178] sm:$0xff] %vm201, 0.0
        %282 = vst.msk [vmem:[#allocation2 + $0x180] sm:$0xff] %vm201, 0.0
        %283 = vst.msk [vmem:[#allocation2 + $0x188] sm:$0xff] %vm201, 0.0
        %284 = vst.msk [vmem:[#allocation2 + $0x190] sm:$0xff] %vm201, 0.0
        %285 = vst.msk [vmem:[#allocation2 + $0x198] sm:$0xff] %vm201, 0.0
        %286 = vst.msk [vmem:[#allocation2 + $0x1a0] sm:$0xff] %vm201, 0.0
        %287 = vst.msk [vmem:[#allocation2 + $0x1a8] sm:$0xff] %vm201, 0.0
        %288 = vst.msk [vmem:[#allocation2 + $0x1b0] sm:$0xff] %vm201, 0.0
        %289 = vst.msk [vmem:[#allocation2 + $0x1b8] sm:$0xff] %vm201, 0.0
        %290 = vst.msk [vmem:[#allocation2 + $0x1c0] sm:$0xff] %vm201, 0.0
        %291 = vst.msk [vmem:[#allocation2 + $0x1c8] sm:$0xff] %vm201, 0.0
        %292 = vst.msk [vmem:[#allocation2 + $0x1d0] sm:$0xff] %vm201, 0.0
        %293 = vst.msk [vmem:[#allocation2 + $0x1d8] sm:$0xff] %vm201, 0.0
        %294 = vst.msk [vmem:[#allocation2 + $0x1e0] sm:$0xff] %vm201, 0.0
        %295 = vst.msk [vmem:[#allocation2 + $0x1e8] sm:$0xff] %vm201, 0.0
        %296 = vst.msk [vmem:[#allocation2 + $0x1f0] sm:$0xff] %vm201, 0.0
        %297 = vst.msk [vmem:[#allocation2 + $0x1f8] sm:$0xff] %vm201, 0.0
        %298 = vst.msk [vmem:[#allocation2 + $0x200] sm:$0xff] %vm201, 0.0
        %299 = vst.msk [vmem:[#allocation2 + $0x208] sm:$0xff] %vm201, 0.0
        %300 = vst.msk [vmem:[#allocation2 + $0x210] sm:$0xff] %vm201, 0.0
        %301 = vst.msk [vmem:[#allocation2 + $0x218] sm:$0xff] %vm201, 0.0
        %302 = vst.msk [vmem:[#allocation2 + $0x220] sm:$0xff] %vm201, 0.0
        %303 = vst.msk [vmem:[#allocation2 + $0x228] sm:$0xff] %vm201, 0.0
        %304 = vst.msk [vmem:[#allocation2 + $0x230] sm:$0xff] %vm201, 0.0
        %305 = vst.msk [vmem:[#allocation2 + $0x238] sm:$0xff] %vm201, 0.0
        %306 = vst.msk [vmem:[#allocation2 + $0x240] sm:$0xff] %vm201, 0.0
        %307 = vst.msk [vmem:[#allocation2 + $0x248] sm:$0xff] %vm201, 0.0
        %308 = vst.msk [vmem:[#allocation2 + $0x250] sm:$0xff] %vm201, 0.0
        %309 = vst.msk [vmem:[#allocation2 + $0x258] sm:$0xff] %vm201, 0.0
        %310 = vst.msk [vmem:[#allocation2 + $0x260] sm:$0xff] %vm201, 0.0
        %311 = vst.msk [vmem:[#allocation2 + $0x268] sm:$0xff] %vm201, 0.0
        %312 = vst.msk [vmem:[#allocation2 + $0x270] sm:$0xff] %vm201, 0.0
        %313 = vst.msk [vmem:[#allocation2 + $0x278] sm:$0xff] %vm201, 0.0
        %314 = vst.msk [vmem:[#allocation2 + $0x280] sm:$0xff] %vm201, 0.0
        %315 = vst.msk [vmem:[#allocation2 + $0x288] sm:$0xff] %vm201, 0.0
        %316 = vst.msk [vmem:[#allocation2 + $0x290] sm:$0xff] %vm201, 0.0
        %317 = vst.msk [vmem:[#allocation2 + $0x298] sm:$0xff] %vm201, 0.0
        %318 = vst.msk [vmem:[#allocation2 + $0x2a0] sm:$0xff] %vm201, 0.0
        %319 = vst.msk [vmem:[#allocation2 + $0x2a8] sm:$0xff] %vm201, 0.0
        %320 = vst.msk [vmem:[#allocation2 + $0x2b0] sm:$0xff] %vm201, 0.0
        %321 = vst.msk [vmem:[#allocation2 + $0x2b8] sm:$0xff] %vm201, 0.0
        %322 = vst.msk [vmem:[#allocation2 + $0x2c0] sm:$0xff] %vm201, 0.0
        %323 = vst.msk [vmem:[#allocation2 + $0x2c8] sm:$0xff] %vm201, 0.0
        %324 = vst.msk [vmem:[#allocation2 + $0x2d0] sm:$0xff] %vm201, 0.0
        %325 = vst.msk [vmem:[#allocation2 + $0x2d8] sm:$0xff] %vm201, 0.0
        %326 = vst.msk [vmem:[#allocation2 + $0x2e0] sm:$0xff] %vm201, 0.0
        %327 = vst.msk [vmem:[#allocation2 + $0x2e8] sm:$0xff] %vm201, 0.0
        %328 = vst.msk [vmem:[#allocation2 + $0x2f0] sm:$0xff] %vm201, 0.0
        %329 = vst.msk [vmem:[#allocation2 + $0x2f8] sm:$0xff] %vm201, 0.0
        %330 = vst.msk [vmem:[#allocation2 + $0x300] sm:$0xff] %vm201, 0.0
        %331 = vst.msk [vmem:[#allocation2 + $0x308] sm:$0xff] %vm201, 0.0
        %332 = vst.msk [vmem:[#allocation2 + $0x310] sm:$0xff] %vm201, 0.0
        %333 = vst.msk [vmem:[#allocation2 + $0x318] sm:$0xff] %vm201, 0.0
        %334 = vst.msk [vmem:[#allocation2 + $0x320] sm:$0xff] %vm201, 0.0
        %335 = vst.msk [vmem:[#allocation2 + $0x328] sm:$0xff] %vm201, 0.0
        %336 = vst.msk [vmem:[#allocation2 + $0x330] sm:$0xff] %vm201, 0.0
        %337 = vst.msk [vmem:[#allocation2 + $0x338] sm:$0xff] %vm201, 0.0
        %338 = vst.msk [vmem:[#allocation2 + $0x340] sm:$0xff] %vm201, 0.0
        %339 = vst.msk [vmem:[#allocation2 + $0x348] sm:$0xff] %vm201, 0.0
        %340 = vst.msk [vmem:[#allocation2 + $0x350] sm:$0xff] %vm201, 0.0
        %341 = vst.msk [vmem:[#allocation2 + $0x358] sm:$0xff] %vm201, 0.0
        %342 = vst.msk [vmem:[#allocation2 + $0x360] sm:$0xff] %vm201, 0.0
        %343 = vst.msk [vmem:[#allocation2 + $0x368] sm:$0xff] %vm201, 0.0
        %344 = vst.msk [vmem:[#allocation2 + $0x370] sm:$0xff] %vm201, 0.0
        %345 = vst.msk [vmem:[#allocation2 + $0x378] sm:$0xff] %vm201, 0.0
        %346 = vst.msk [vmem:[#allocation2 + $0x380] sm:$0xff] %vm201, 0.0
        %347 = vst.msk [vmem:[#allocation2 + $0x388] sm:$0xff] %vm201, 0.0
        %348 = vst.msk [vmem:[#allocation2 + $0x390] sm:$0xff] %vm201, 0.0
        %349 = vst.msk [vmem:[#allocation2 + $0x398] sm:$0xff] %vm201, 0.0
        %350 = vst.msk [vmem:[#allocation2 + $0x3a0] sm:$0xff] %vm201, 0.0
        %351 = vst.msk [vmem:[#allocation2 + $0x3a8] sm:$0xff] %vm201, 0.0
        %352 = vst.msk [vmem:[#allocation2 + $0x3b0] sm:$0xff] %vm201, 0.0
        %353 = vst.msk [vmem:[#allocation2 + $0x3b8] sm:$0xff] %vm201, 0.0
        %354 = vst.msk [vmem:[#allocation2 + $0x3c0] sm:$0xff] %vm201, 0.0
        %355 = vst.msk [vmem:[#allocation2 + $0x3c8] sm:$0xff] %vm201, 0.0
        %356 = vst.msk [vmem:[#allocation2 + $0x3d0] sm:$0xff] %vm201, 0.0
        %357 = vst.msk [vmem:[#allocation2 + $0x3d8] sm:$0xff] %vm201, 0.0
        %358 = vst.msk [vmem:[#allocation2 + $0x3e0] sm:$0xff] %vm201, 0.0
        %359 = vst.msk [vmem:[#allocation2 + $0x3e8] sm:$0xff] %vm201, 0.0
        %360 = vst.msk [vmem:[#allocation2 + $0x3f0] sm:$0xff] %vm201, 0.0
        %361 = vst.msk [vmem:[#allocation2 + $0x3f8] sm:$0xff] %vm201, 0.0
        %s362 = scalar_lea.vmem [#allocation2], 256
        %363 = vst.msk [vmem:[%s362 + $0x8] sm:$0xff] %vm201, %v169
        %364 = vst.msk [vmem:[%s362 + $0x10] sm:$0xff] %vm201, %v170
        %365 = vst.msk [vmem:[%s362 + $0x28] sm:$0xff] %vm201, %v171
        %366 = vst.msk [vmem:[%s362 + $0x30] sm:$0xff] %vm201, %v172
        %367 = vst.msk [vmem:[%s362 + $0x48] sm:$0xff] %vm201, %v173
        %368 = vst.msk [vmem:[%s362 + $0x50] sm:$0xff] %vm201, %v174
        %369 = vst.msk [vmem:[%s362 + $0x68] sm:$0xff] %vm201, %v175
        %370 = vst.msk [vmem:[%s362 + $0x70] sm:$0xff] %vm201, %v176
        %371 = vst.msk [vmem:[%s362 + $0x88] sm:$0xff] %vm201, %v177
        %372 = vst.msk [vmem:[%s362 + $0x90] sm:$0xff] %vm201, %v178
        %373 = vst.msk [vmem:[%s362 + $0xa8] sm:$0xff] %vm201, %v179
        %374 = vst.msk [vmem:[%s362 + $0xb0] sm:$0xff] %vm201, %v180
        %375 = vst.msk [vmem:[%s362 + $0xc8] sm:$0xff] %vm201, %v181
        %376 = vst.msk [vmem:[%s362 + $0xd0] sm:$0xff] %vm201, %v182
        %377 = vst.msk [vmem:[%s362 + $0xe8] sm:$0xff] %vm201, %v183
        %378 = vst.msk [vmem:[%s362 + $0xf0] sm:$0xff] %vm201, %v184
        %379 = vst.msk [vmem:[%s362 + $0x108] sm:$0xff] %vm201, %v185
        %380 = vst.msk [vmem:[%s362 + $0x110] sm:$0xff] %vm201, %v186
        %381 = vst.msk [vmem:[%s362 + $0x128] sm:$0xff] %vm201, %v187
        %382 = vst.msk [vmem:[%s362 + $0x130] sm:$0xff] %vm201, %v188
        %383 = vst.msk [vmem:[%s362 + $0x148] sm:$0xff] %vm201, %v189
        %384 = vst.msk [vmem:[%s362 + $0x150] sm:$0xff] %vm201, %v190
        %385 = vst.msk [vmem:[%s362 + $0x168] sm:$0xff] %vm201, %v191
        %386 = vst.msk [vmem:[%s362 + $0x170] sm:$0xff] %vm201, %v192
        %387 = vst.msk [vmem:[%s362 + $0x188] sm:$0xff] %vm201, %v193
        %388 = vst.msk [vmem:[%s362 + $0x190] sm:$0xff] %vm201, %v194
        %389 = vst.msk [vmem:[%s362 + $0x1a8] sm:$0xff] %vm201, %v195
        %390 = vst.msk [vmem:[%s362 + $0x1b0] sm:$0xff] %vm201, %v196
        %391 = vst.msk [vmem:[%s362 + $0x1c8] sm:$0xff] %vm201, %v197
        %392 = vst.msk [vmem:[%s362 + $0x1d0] sm:$0xff] %vm201, %v198
        %393 = vst.msk [vmem:[%s362 + $0x1e8] sm:$0xff] %vm201, %v199
        %394 = vst.msk [vmem:[%s362 + $0x1f0] sm:$0xff] %vm201, %v200
        %s395 = scalar_lea.vmem [#allocation2], 224
        %v396 = vld [vmem:[%s395 + $0x7] sm:$0xff]
        %v397 = vld [vmem:[%s395 + $0xf] sm:$0xff]
        %v398 = vld [vmem:[%s395 + $0x27] sm:$0xff]
        %v399 = vld [vmem:[%s395 + $0x2f] sm:$0xff]
        %v400 = vld [vmem:[%s395 + $0x47] sm:$0xff]
        %v401 = vld [vmem:[%s395 + $0x4f] sm:$0xff]
        %v402 = vld [vmem:[%s395 + $0x67] sm:$0xff]
        %v403 = vld [vmem:[%s395 + $0x6f] sm:$0xff]
        %v404 = vld [vmem:[%s395 + $0x87] sm:$0xff]
        %v405 = vld [vmem:[%s395 + $0x8f] sm:$0xff]
        %v406 = vld [vmem:[%s395 + $0xa7] sm:$0xff]
        %v407 = vld [vmem:[%s395 + $0xaf] sm:$0xff]
        %v408 = vld [vmem:[%s395 + $0xc7] sm:$0xff]
        %v409 = vld [vmem:[%s395 + $0xcf] sm:$0xff]
        %v410 = vld [vmem:[%s395 + $0xe7] sm:$0xff]
        %v411 = vld [vmem:[%s395 + $0xef] sm:$0xff]
        %v412 = vld [vmem:[%s395 + $0x107] sm:$0xff]
        %v413 = vld [vmem:[%s395 + $0x10f] sm:$0xff]
        %v414 = vld [vmem:[%s395 + $0x127] sm:$0xff]
        %v415 = vld [vmem:[%s395 + $0x12f] sm:$0xff]
        %v416 = vld [vmem:[%s395 + $0x147] sm:$0xff]
        %v417 = vld [vmem:[%s395 + $0x14f] sm:$0xff]
        %v418 = vld [vmem:[%s395 + $0x167] sm:$0xff]
        %v419 = vld [vmem:[%s395 + $0x16f] sm:$0xff]
        %v420 = vld [vmem:[%s395 + $0x187] sm:$0xff]
        %v421 = vld [vmem:[%s395 + $0x18f] sm:$0xff]
        %v422 = vld [vmem:[%s395 + $0x1a7] sm:$0xff]
        %v423 = vld [vmem:[%s395 + $0x1af] sm:$0xff]
        %v424 = vld [vmem:[%s395 + $0x1c7] sm:$0xff]
        %v425 = vld [vmem:[%s395 + $0x1cf] sm:$0xff]
        %v426 = vld [vmem:[%s395 + $0x1e7] sm:$0xff]
        %v427 = vld [vmem:[%s395 + $0x1ef] sm:$0xff]
        %428 = vst.msk [vmem:[#allocation3] sm:$0xff] %vm201, %v396
        %429 = vst.msk [vmem:[#allocation3 + $0x18] sm:$0xff] %vm201, %v397
        %430 = vst.msk [vmem:[#allocation3 + $0x30] sm:$0xff] %vm201, %v398
        %431 = vst.msk [vmem:[#allocation3 + $0x48] sm:$0xff] %vm201, %v399
        %432 = vst.msk [vmem:[#allocation3 + $0x60] sm:$0xff] %vm201, %v400
        %433 = vst.msk [vmem:[#allocation3 + $0x78] sm:$0xff] %vm201, %v401
        %434 = vst.msk [vmem:[#allocation3 + $0x90] sm:$0xff] %vm201, %v402
        %435 = vst.msk [vmem:[#allocation3 + $0xa8] sm:$0xff] %vm201, %v403
        %436 = vst.msk [vmem:[#allocation3 + $0xc0] sm:$0xff] %vm201, %v404
        %437 = vst.msk [vmem:[#allocation3 + $0xd8] sm:$0xff] %vm201, %v405
        %438 = vst.msk [vmem:[#allocation3 + $0xf0] sm:$0xff] %vm201, %v406
        %439 = vst.msk [vmem:[#allocation3 + $0x108] sm:$0xff] %vm201, %v407
        %440 = vst.msk [vmem:[#allocation3 + $0x120] sm:$0xff] %vm201, %v408
        %441 = vst.msk [vmem:[#allocation3 + $0x138] sm:$0xff] %vm201, %v409
        %442 = vst.msk [vmem:[#allocation3 + $0x150] sm:$0xff] %vm201, %v410
        %443 = vst.msk [vmem:[#allocation3 + $0x168] sm:$0xff] %vm201, %v411
        %444 = vst.msk [vmem:[#allocation3 + $0x180] sm:$0xff] %vm201, %v412
        %445 = vst.msk [vmem:[#allocation3 + $0x198] sm:$0xff] %vm201, %v413
        %446 = vst.msk [vmem:[#allocation3 + $0x1b0] sm:$0xff] %vm201, %v414
        %447 = vst.msk [vmem:[#allocation3 + $0x1c8] sm:$0xff] %vm201, %v415
        %448 = vst.msk [vmem:[#allocation3 + $0x1e0] sm:$0xff] %vm201, %v416
        %449 = vst.msk [vmem:[#allocation3 + $0x1f8] sm:$0xff] %vm201, %v417
        %450 = vst.msk [vmem:[#allocation3 + $0x210] sm:$0xff] %vm201, %v418
        %451 = vst.msk [vmem:[#allocation3 + $0x228] sm:$0xff] %vm201, %v419
        %452 = vst.msk [vmem:[#allocation3 + $0x240] sm:$0xff] %vm201, %v420
        %453 = vst.msk [vmem:[#allocation3 + $0x258] sm:$0xff] %vm201, %v421
        %454 = vst.msk [vmem:[#allocation3 + $0x270] sm:$0xff] %vm201, %v422
        %455 = vst.msk [vmem:[#allocation3 + $0x288] sm:$0xff] %vm201, %v423
        %456 = vst.msk [vmem:[#allocation3 + $0x2a0] sm:$0xff] %vm201, %v424
        %457 = vst.msk [vmem:[#allocation3 + $0x2b8] sm:$0xff] %vm201, %v425
        %458 = vst.msk [vmem:[#allocation3 + $0x2d0] sm:$0xff] %vm201, %v426
        %459 = vst.msk [vmem:[#allocation3 + $0x2e8] sm:$0xff] %vm201, %v427
        %v460 = vld [vmem:[%s395 + $0x8] sm:$0xff]
        %v461 = vld [vmem:[%s395 + $0x10] sm:$0xff]
        %v462 = vld [vmem:[%s395 + $0x28] sm:$0xff]
        %v463 = vld [vmem:[%s395 + $0x30] sm:$0xff]
        %v464 = vld [vmem:[%s395 + $0x48] sm:$0xff]
        %v465 = vld [vmem:[%s395 + $0x50] sm:$0xff]
        %v466 = vld [vmem:[%s395 + $0x68] sm:$0xff]
        %v467 = vld [vmem:[%s395 + $0x70] sm:$0xff]
        %v468 = vld [vmem:[%s395 + $0x88] sm:$0xff]
        %v469 = vld [vmem:[%s395 + $0x90] sm:$0xff]
        %v470 = vld [vmem:[%s395 + $0xa8] sm:$0xff]
        %v471 = vld [vmem:[%s395 + $0xb0] sm:$0xff]
        %v472 = vld [vmem:[%s395 + $0xc8] sm:$0xff]
        %v473 = vld [vmem:[%s395 + $0xd0] sm:$0xff]
        %v474 = vld [vmem:[%s395 + $0xe8] sm:$0xff]
        %v475 = vld [vmem:[%s395 + $0xf0] sm:$0xff]
        %v476 = vld [vmem:[%s395 + $0x108] sm:$0xff]
        %v477 = vld [vmem:[%s395 + $0x110] sm:$0xff]
        %v478 = vld [vmem:[%s395 + $0x128] sm:$0xff]
        %v479 = vld [vmem:[%s395 + $0x130] sm:$0xff]
        %v480 = vld [vmem:[%s395 + $0x148] sm:$0xff]
        %v481 = vld [vmem:[%s395 + $0x150] sm:$0xff]
        %v482 = vld [vmem:[%s395 + $0x168] sm:$0xff]
        %v483 = vld [vmem:[%s395 + $0x170] sm:$0xff]
        %v484 = vld [vmem:[%s395 + $0x188] sm:$0xff]
        %v485 = vld [vmem:[%s395 + $0x190] sm:$0xff]
        %v486 = vld [vmem:[%s395 + $0x1a8] sm:$0xff]
        %v487 = vld [vmem:[%s395 + $0x1b0] sm:$0xff]
        %v488 = vld [vmem:[%s395 + $0x1c8] sm:$0xff]
        %v489 = vld [vmem:[%s395 + $0x1d0] sm:$0xff]
        %v490 = vld [vmem:[%s395 + $0x1e8] sm:$0xff]
        %v491 = vld [vmem:[%s395 + $0x1f0] sm:$0xff]
        %524 = vrot.lane.b32.xlu0 %v460, 32
        %v525 = vpop.permute.xlu0 %524
        %526 = vrot.lane.b32.xlu0 %v461, 32
        %v527 = vpop.permute.xlu0 %526
        %528 = vrot.lane.b32.xlu0 %v462, 32
        %v529 = vpop.permute.xlu0 %528
        %530 = vrot.lane.b32.xlu0 %v463, 32
        %v531 = vpop.permute.xlu0 %530
        %532 = vrot.lane.b32.xlu0 %v464, 32
        %v533 = vpop.permute.xlu0 %532
        %534 = vrot.lane.b32.xlu0 %v465, 32
        %v535 = vpop.permute.xlu0 %534
        %536 = vrot.lane.b32.xlu0 %v466, 32
        %v537 = vpop.permute.xlu0 %536
        %538 = vrot.lane.b32.xlu0 %v467, 32
        %v539 = vpop.permute.xlu0 %538
        %540 = vrot.lane.b32.xlu0 %v468, 32
        %v541 = vpop.permute.xlu0 %540
        %542 = vrot.lane.b32.xlu0 %v469, 32
        %v543 = vpop.permute.xlu0 %542
        %544 = vrot.lane.b32.xlu0 %v470, 32
        %v545 = vpop.permute.xlu0 %544
        %546 = vrot.lane.b32.xlu0 %v471, 32
        %v547 = vpop.permute.xlu0 %546
        %548 = vrot.lane.b32.xlu0 %v472, 32
        %v549 = vpop.permute.xlu0 %548
        %550 = vrot.lane.b32.xlu0 %v473, 32
        %v551 = vpop.permute.xlu0 %550
        %552 = vrot.lane.b32.xlu0 %v474, 32
        %v553 = vpop.permute.xlu0 %552
        %554 = vrot.lane.b32.xlu0 %v475, 32
        %v555 = vpop.permute.xlu0 %554
        %556 = vrot.lane.b32.xlu0 %v476, 32
        %v557 = vpop.permute.xlu0 %556
        %558 = vrot.lane.b32.xlu0 %v477, 32
        %v559 = vpop.permute.xlu0 %558
        %560 = vrot.lane.b32.xlu0 %v478, 32
        %v561 = vpop.permute.xlu0 %560
        %562 = vrot.lane.b32.xlu0 %v479, 32
        %v563 = vpop.permute.xlu0 %562
        %564 = vrot.lane.b32.xlu0 %v480, 32
        %v565 = vpop.permute.xlu0 %564
        %566 = vrot.lane.b32.xlu0 %v481, 32
        %v567 = vpop.permute.xlu0 %566
        %568 = vrot.lane.b32.xlu0 %v482, 32
        %v569 = vpop.permute.xlu0 %568
        %570 = vrot.lane.b32.xlu0 %v483, 32
        %v571 = vpop.permute.xlu0 %570
        %572 = vrot.lane.b32.xlu0 %v484, 32
        %v573 = vpop.permute.xlu0 %572
        %574 = vrot.lane.b32.xlu0 %v485, 32
        %v575 = vpop.permute.xlu0 %574
        %576 = vrot.lane.b32.xlu0 %v486, 32
        %v577 = vpop.permute.xlu0 %576
        %578 = vrot.lane.b32.xlu0 %v487, 32
        %v579 = vpop.permute.xlu0 %578
        %580 = vrot.lane.b32.xlu0 %v488, 32
        %v581 = vpop.permute.xlu0 %580
        %582 = vrot.lane.b32.xlu0 %v489, 32
        %v583 = vpop.permute.xlu0 %582
        %584 = vrot.lane.b32.xlu0 %v490, 32
        %v585 = vpop.permute.xlu0 %584
        %586 = vrot.lane.b32.xlu0 %v491, 32
        %v587 = vpop.permute.xlu0 %586
        %vm620 = vcmask 523520
        %621 = vst.msk [vmem:[#allocation3] sm:$0xff] %vm620, %v525
        %622 = vst.msk [vmem:[#allocation3 + $0x18] sm:$0xff] %vm620, %v527
        %623 = vst.msk [vmem:[#allocation3 + $0x30] sm:$0xff] %vm620, %v529
        %624 = vst.msk [vmem:[#allocation3 + $0x48] sm:$0xff] %vm620, %v531
        %625 = vst.msk [vmem:[#allocation3 + $0x60] sm:$0xff] %vm620, %v533
        %626 = vst.msk [vmem:[#allocation3 + $0x78] sm:$0xff] %vm620, %v535
        %627 = vst.msk [vmem:[#allocation3 + $0x90] sm:$0xff] %vm620, %v537
        %628 = vst.msk [vmem:[#allocation3 + $0xa8] sm:$0xff] %vm620, %v539
        %629 = vst.msk [vmem:[#allocation3 + $0xc0] sm:$0xff] %vm620, %v541
        %630 = vst.msk [vmem:[#allocation3 + $0xd8] sm:$0xff] %vm620, %v543
        %631 = vst.msk [vmem:[#allocation3 + $0xf0] sm:$0xff] %vm620, %v545
        %632 = vst.msk [vmem:[#allocation3 + $0x108] sm:$0xff] %vm620, %v547
        %633 = vst.msk [vmem:[#allocation3 + $0x120] sm:$0xff] %vm620, %v549
        %634 = vst.msk [vmem:[#allocation3 + $0x138] sm:$0xff] %vm620, %v551
        %635 = vst.msk [vmem:[#allocation3 + $0x150] sm:$0xff] %vm620, %v553
        %636 = vst.msk [vmem:[#allocation3 + $0x168] sm:$0xff] %vm620, %v555
        %637 = vst.msk [vmem:[#allocation3 + $0x180] sm:$0xff] %vm620, %v557
        %638 = vst.msk [vmem:[#allocation3 + $0x198] sm:$0xff] %vm620, %v559
        %639 = vst.msk [vmem:[#allocation3 + $0x1b0] sm:$0xff] %vm620, %v561
        %640 = vst.msk [vmem:[#allocation3 + $0x1c8] sm:$0xff] %vm620, %v563
        %641 = vst.msk [vmem:[#allocation3 + $0x1e0] sm:$0xff] %vm620, %v565
        %642 = vst.msk [vmem:[#allocation3 + $0x1f8] sm:$0xff] %vm620, %v567
        %643 = vst.msk [vmem:[#allocation3 + $0x210] sm:$0xff] %vm620, %v569
        %644 = vst.msk [vmem:[#allocation3 + $0x228] sm:$0xff] %vm620, %v571
        %645 = vst.msk [vmem:[#allocation3 + $0x240] sm:$0xff] %vm620, %v573
        %646 = vst.msk [vmem:[#allocation3 + $0x258] sm:$0xff] %vm620, %v575
        %647 = vst.msk [vmem:[#allocation3 + $0x270] sm:$0xff] %vm620, %v577
        %648 = vst.msk [vmem:[#allocation3 + $0x288] sm:$0xff] %vm620, %v579
        %649 = vst.msk [vmem:[#allocation3 + $0x2a0] sm:$0xff] %vm620, %v581
        %650 = vst.msk [vmem:[#allocation3 + $0x2b8] sm:$0xff] %vm620, %v583
        %651 = vst.msk [vmem:[#allocation3 + $0x2d0] sm:$0xff] %vm620, %v585
        %652 = vst.msk [vmem:[#allocation3 + $0x2e8] sm:$0xff] %vm620, %v587
        %v653 = vld [vmem:[%s395 + $0x9] sm:$0xff]
        %v654 = vld [vmem:[%s395 + $0x11] sm:$0xff]
        %v655 = vld [vmem:[%s395 + $0x29] sm:$0xff]
        %v656 = vld [vmem:[%s395 + $0x31] sm:$0xff]
        %v657 = vld [vmem:[%s395 + $0x49] sm:$0xff]
        %v658 = vld [vmem:[%s395 + $0x51] sm:$0xff]
        %v659 = vld [vmem:[%s395 + $0x69] sm:$0xff]
        %v660 = vld [vmem:[%s395 + $0x71] sm:$0xff]
        %v661 = vld [vmem:[%s395 + $0x89] sm:$0xff]
        %v662 = vld [vmem:[%s395 + $0x91] sm:$0xff]
        %v663 = vld [vmem:[%s395 + $0xa9] sm:$0xff]
        %v664 = vld [vmem:[%s395 + $0xb1] sm:$0xff]
        %v665 = vld [vmem:[%s395 + $0xc9] sm:$0xff]
        %v666 = vld [vmem:[%s395 + $0xd1] sm:$0xff]
        %v667 = vld [vmem:[%s395 + $0xe9] sm:$0xff]
        %v668 = vld [vmem:[%s395 + $0xf1] sm:$0xff]
        %v669 = vld [vmem:[%s395 + $0x109] sm:$0xff]
        %v670 = vld [vmem:[%s395 + $0x111] sm:$0xff]
        %v671 = vld [vmem:[%s395 + $0x129] sm:$0xff]
        %v672 = vld [vmem:[%s395 + $0x131] sm:$0xff]
        %v673 = vld [vmem:[%s395 + $0x149] sm:$0xff]
        %v674 = vld [vmem:[%s395 + $0x151] sm:$0xff]
        %v675 = vld [vmem:[%s395 + $0x169] sm:$0xff]
        %v676 = vld [vmem:[%s395 + $0x171] sm:$0xff]
        %v677 = vld [vmem:[%s395 + $0x189] sm:$0xff]
        %v678 = vld [vmem:[%s395 + $0x191] sm:$0xff]
        %v679 = vld [vmem:[%s395 + $0x1a9] sm:$0xff]
        %v680 = vld [vmem:[%s395 + $0x1b1] sm:$0xff]
        %v681 = vld [vmem:[%s395 + $0x1c9] sm:$0xff]
        %v682 = vld [vmem:[%s395 + $0x1d1] sm:$0xff]
        %v683 = vld [vmem:[%s395 + $0x1e9] sm:$0xff]
        %v684 = vld [vmem:[%s395 + $0x1f1] sm:$0xff]
        %717 = vrot.lane.b32.xlu0 %v653, 64
        %v718 = vpop.permute.xlu0 %717
        %719 = vrot.lane.b32.xlu0 %v654, 64
        %v720 = vpop.permute.xlu0 %719
        %721 = vrot.lane.b32.xlu0 %v655, 64
        %v722 = vpop.permute.xlu0 %721
        %723 = vrot.lane.b32.xlu0 %v656, 64
        %v724 = vpop.permute.xlu0 %723
        %725 = vrot.lane.b32.xlu0 %v657, 64
        %v726 = vpop.permute.xlu0 %725
        %727 = vrot.lane.b32.xlu0 %v658, 64
        %v728 = vpop.permute.xlu0 %727
        %729 = vrot.lane.b32.xlu0 %v659, 64
        %v730 = vpop.permute.xlu0 %729
        %731 = vrot.lane.b32.xlu0 %v660, 64
        %v732 = vpop.permute.xlu0 %731
        %733 = vrot.lane.b32.xlu0 %v661, 64
        %v734 = vpop.permute.xlu0 %733
        %735 = vrot.lane.b32.xlu0 %v662, 64
        %v736 = vpop.permute.xlu0 %735
        %737 = vrot.lane.b32.xlu0 %v663, 64
        %v738 = vpop.permute.xlu0 %737
        %739 = vrot.lane.b32.xlu0 %v664, 64
        %v740 = vpop.permute.xlu0 %739
        %741 = vrot.lane.b32.xlu0 %v665, 64
        %v742 = vpop.permute.xlu0 %741
        %743 = vrot.lane.b32.xlu0 %v666, 64
        %v744 = vpop.permute.xlu0 %743
        %745 = vrot.lane.b32.xlu0 %v667, 64
        %v746 = vpop.permute.xlu0 %745
        %747 = vrot.lane.b32.xlu0 %v668, 64
        %v748 = vpop.permute.xlu0 %747
        %749 = vrot.lane.b32.xlu0 %v669, 64
        %v750 = vpop.permute.xlu0 %749
        %751 = vrot.lane.b32.xlu0 %v670, 64
        %v752 = vpop.permute.xlu0 %751
        %753 = vrot.lane.b32.xlu0 %v671, 64
        %v754 = vpop.permute.xlu0 %753
        %755 = vrot.lane.b32.xlu0 %v672, 64
        %v756 = vpop.permute.xlu0 %755
        %757 = vrot.lane.b32.xlu0 %v673, 64
        %v758 = vpop.permute.xlu0 %757
        %759 = vrot.lane.b32.xlu0 %v674, 64
        %v760 = vpop.permute.xlu0 %759
        %761 = vrot.lane.b32.xlu0 %v675, 64
        %v762 = vpop.permute.xlu0 %761
        %763 = vrot.lane.b32.xlu0 %v676, 64
        %v764 = vpop.permute.xlu0 %763
        %765 = vrot.lane.b32.xlu0 %v677, 64
        %v766 = vpop.permute.xlu0 %765
        %767 = vrot.lane.b32.xlu0 %v678, 64
        %v768 = vpop.permute.xlu0 %767
        %769 = vrot.lane.b32.xlu0 %v679, 64
        %v770 = vpop.permute.xlu0 %769
        %771 = vrot.lane.b32.xlu0 %v680, 64
        %v772 = vpop.permute.xlu0 %771
        %773 = vrot.lane.b32.xlu0 %v681, 64
        %v774 = vpop.permute.xlu0 %773
        %775 = vrot.lane.b32.xlu0 %v682, 64
        %v776 = vpop.permute.xlu0 %775
        %777 = vrot.lane.b32.xlu0 %v683, 64
        %v778 = vpop.permute.xlu0 %777
        %779 = vrot.lane.b32.xlu0 %v684, 64
        %v780 = vpop.permute.xlu0 %779
        %vm813 = vcmask 785920
        %814 = vst.msk [vmem:[#allocation3] sm:$0xff] %vm813, %v718
        %815 = vst.msk [vmem:[#allocation3 + $0x18] sm:$0xff] %vm813, %v720
        %816 = vst.msk [vmem:[#allocation3 + $0x30] sm:$0xff] %vm813, %v722
        %817 = vst.msk [vmem:[#allocation3 + $0x48] sm:$0xff] %vm813, %v724
        %818 = vst.msk [vmem:[#allocation3 + $0x60] sm:$0xff] %vm813, %v726
        %819 = vst.msk [vmem:[#allocation3 + $0x78] sm:$0xff] %vm813, %v728
        %820 = vst.msk [vmem:[#allocation3 + $0x90] sm:$0xff] %vm813, %v730
        %821 = vst.msk [vmem:[#allocation3 + $0xa8] sm:$0xff] %vm813, %v732
        %822 = vst.msk [vmem:[#allocation3 + $0xc0] sm:$0xff] %vm813, %v734
        %823 = vst.msk [vmem:[#allocation3 + $0xd8] sm:$0xff] %vm813, %v736
        %824 = vst.msk [vmem:[#allocation3 + $0xf0] sm:$0xff] %vm813, %v738
        %825 = vst.msk [vmem:[#allocation3 + $0x108] sm:$0xff] %vm813, %v740
        %826 = vst.msk [vmem:[#allocation3 + $0x120] sm:$0xff] %vm813, %v742
        %827 = vst.msk [vmem:[#allocation3 + $0x138] sm:$0xff] %vm813, %v744
        %828 = vst.msk [vmem:[#allocation3 + $0x150] sm:$0xff] %vm813, %v746
        %829 = vst.msk [vmem:[#allocation3 + $0x168] sm:$0xff] %vm813, %v748
        %830 = vst.msk [vmem:[#allocation3 + $0x180] sm:$0xff] %vm813, %v750
        %831 = vst.msk [vmem:[#allocation3 + $0x198] sm:$0xff] %vm813, %v752
        %832 = vst.msk [vmem:[#allocation3 + $0x1b0] sm:$0xff] %vm813, %v754
        %833 = vst.msk [vmem:[#allocation3 + $0x1c8] sm:$0xff] %vm813, %v756
        %834 = vst.msk [vmem:[#allocation3 + $0x1e0] sm:$0xff] %vm813, %v758
        %835 = vst.msk [vmem:[#allocation3 + $0x1f8] sm:$0xff] %vm813, %v760
        %836 = vst.msk [vmem:[#allocation3 + $0x210] sm:$0xff] %vm813, %v762
        %837 = vst.msk [vmem:[#allocation3 + $0x228] sm:$0xff] %vm813, %v764
        %838 = vst.msk [vmem:[#allocation3 + $0x240] sm:$0xff] %vm813, %v766
        %839 = vst.msk [vmem:[#allocation3 + $0x258] sm:$0xff] %vm813, %v768
        %840 = vst.msk [vmem:[#allocation3 + $0x270] sm:$0xff] %vm813, %v770
        %841 = vst.msk [vmem:[#allocation3 + $0x288] sm:$0xff] %vm813, %v772
        %842 = vst.msk [vmem:[#allocation3 + $0x2a0] sm:$0xff] %vm813, %v774
        %843 = vst.msk [vmem:[#allocation3 + $0x2b8] sm:$0xff] %vm813, %v776
        %844 = vst.msk [vmem:[#allocation3 + $0x2d0] sm:$0xff] %vm813, %v778
        %845 = vst.msk [vmem:[#allocation3 + $0x2e8] sm:$0xff] %vm813, %v780
        %v846 = vld [vmem:[%s362 + $0x7] sm:$0xff]
        %v847 = vld [vmem:[%s362 + $0xf] sm:$0xff]
        %v848 = vld [vmem:[%s362 + $0x27] sm:$0xff]
        %v849 = vld [vmem:[%s362 + $0x2f] sm:$0xff]
        %v850 = vld [vmem:[%s362 + $0x47] sm:$0xff]
        %v851 = vld [vmem:[%s362 + $0x4f] sm:$0xff]
        %v852 = vld [vmem:[%s362 + $0x67] sm:$0xff]
        %v853 = vld [vmem:[%s362 + $0x6f] sm:$0xff]
        %v854 = vld [vmem:[%s362 + $0x87] sm:$0xff]
        %v855 = vld [vmem:[%s362 + $0x8f] sm:$0xff]
        %v856 = vld [vmem:[%s362 + $0xa7] sm:$0xff]
        %v857 = vld [vmem:[%s362 + $0xaf] sm:$0xff]
        %v858 = vld [vmem:[%s362 + $0xc7] sm:$0xff]
        %v859 = vld [vmem:[%s362 + $0xcf] sm:$0xff]
        %v860 = vld [vmem:[%s362 + $0xe7] sm:$0xff]
        %v861 = vld [vmem:[%s362 + $0xef] sm:$0xff]
        %v862 = vld [vmem:[%s362 + $0x107] sm:$0xff]
        %v863 = vld [vmem:[%s362 + $0x10f] sm:$0xff]
        %v864 = vld [vmem:[%s362 + $0x127] sm:$0xff]
        %v865 = vld [vmem:[%s362 + $0x12f] sm:$0xff]
        %v866 = vld [vmem:[%s362 + $0x147] sm:$0xff]
        %v867 = vld [vmem:[%s362 + $0x14f] sm:$0xff]
        %v868 = vld [vmem:[%s362 + $0x167] sm:$0xff]
        %v869 = vld [vmem:[%s362 + $0x16f] sm:$0xff]
        %v870 = vld [vmem:[%s362 + $0x187] sm:$0xff]
        %v871 = vld [vmem:[%s362 + $0x18f] sm:$0xff]
        %v872 = vld [vmem:[%s362 + $0x1a7] sm:$0xff]
        %v873 = vld [vmem:[%s362 + $0x1af] sm:$0xff]
        %v874 = vld [vmem:[%s362 + $0x1c7] sm:$0xff]
        %v875 = vld [vmem:[%s362 + $0x1cf] sm:$0xff]
        %v876 = vld [vmem:[%s362 + $0x1e7] sm:$0xff]
        %v877 = vld [vmem:[%s362 + $0x1ef] sm:$0xff]
        %910 = vrot.lane.b32.xlu0 %v846, 96
        %v911 = vpop.permute.xlu0 %910
        %912 = vrot.lane.b32.xlu0 %v847, 96
        %v913 = vpop.permute.xlu0 %912
        %914 = vrot.lane.b32.xlu0 %v848, 96
        %v915 = vpop.permute.xlu0 %914
        %916 = vrot.lane.b32.xlu0 %v849, 96
        %v917 = vpop.permute.xlu0 %916
        %918 = vrot.lane.b32.xlu0 %v850, 96
        %v919 = vpop.permute.xlu0 %918
        %920 = vrot.lane.b32.xlu0 %v851, 96
        %v921 = vpop.permute.xlu0 %920
        %922 = vrot.lane.b32.xlu0 %v852, 96
        %v923 = vpop.permute.xlu0 %922
        %924 = vrot.lane.b32.xlu0 %v853, 96
        %v925 = vpop.permute.xlu0 %924
        %926 = vrot.lane.b32.xlu0 %v854, 96
        %v927 = vpop.permute.xlu0 %926
        %928 = vrot.lane.b32.xlu0 %v855, 96
        %v929 = vpop.permute.xlu0 %928
        %930 = vrot.lane.b32.xlu0 %v856, 96
        %v931 = vpop.permute.xlu0 %930
        %932 = vrot.lane.b32.xlu0 %v857, 96
        %v933 = vpop.permute.xlu0 %932
        %934 = vrot.lane.b32.xlu0 %v858, 96
        %v935 = vpop.permute.xlu0 %934
        %936 = vrot.lane.b32.xlu0 %v859, 96
        %v937 = vpop.permute.xlu0 %936
        %938 = vrot.lane.b32.xlu0 %v860, 96
        %v939 = vpop.permute.xlu0 %938
        %940 = vrot.lane.b32.xlu0 %v861, 96
        %v941 = vpop.permute.xlu0 %940
        %942 = vrot.lane.b32.xlu0 %v862, 96
        %v943 = vpop.permute.xlu0 %942
        %944 = vrot.lane.b32.xlu0 %v863, 96
        %v945 = vpop.permute.xlu0 %944
        %946 = vrot.lane.b32.xlu0 %v864, 96
        %v947 = vpop.permute.xlu0 %946
        %948 = vrot.lane.b32.xlu0 %v865, 96
        %v949 = vpop.permute.xlu0 %948
        %950 = vrot.lane.b32.xlu0 %v866, 96
        %v951 = vpop.permute.xlu0 %950
        %952 = vrot.lane.b32.xlu0 %v867, 96
        %v953 = vpop.permute.xlu0 %952
        %954 = vrot.lane.b32.xlu0 %v868, 96
        %v955 = vpop.permute.xlu0 %954
        %956 = vrot.lane.b32.xlu0 %v869, 96
        %v957 = vpop.permute.xlu0 %956
        %958 = vrot.lane.b32.xlu0 %v870, 96
        %v959 = vpop.permute.xlu0 %958
        %960 = vrot.lane.b32.xlu0 %v871, 96
        %v961 = vpop.permute.xlu0 %960
        %962 = vrot.lane.b32.xlu0 %v872, 96
        %v963 = vpop.permute.xlu0 %962
        %964 = vrot.lane.b32.xlu0 %v873, 96
        %v965 = vpop.permute.xlu0 %964
        %966 = vrot.lane.b32.xlu0 %v874, 96
        %v967 = vpop.permute.xlu0 %966
        %968 = vrot.lane.b32.xlu0 %v875, 96
        %v969 = vpop.permute.xlu0 %968
        %970 = vrot.lane.b32.xlu0 %v876, 96
        %v971 = vpop.permute.xlu0 %970
        %972 = vrot.lane.b32.xlu0 %v877, 96
        %v973 = vpop.permute.xlu0 %972
        %vm1006 = vcmask 1048320
        %1007 = vst.msk [vmem:[#allocation3] sm:$0xff] %vm1006, %v911
        %1008 = vst.msk [vmem:[#allocation3 + $0x18] sm:$0xff] %vm1006, %v913
        %1009 = vst.msk [vmem:[#allocation3 + $0x30] sm:$0xff] %vm1006, %v915
        %1010 = vst.msk [vmem:[#allocation3 + $0x48] sm:$0xff] %vm1006, %v917
        %1011 = vst.msk [vmem:[#allocation3 + $0x60] sm:$0xff] %vm1006, %v919
        %1012 = vst.msk [vmem:[#allocation3 + $0x78] sm:$0xff] %vm1006, %v921
        %1013 = vst.msk [vmem:[#allocation3 + $0x90] sm:$0xff] %vm1006, %v923
        %1014 = vst.msk [vmem:[#allocation3 + $0xa8] sm:$0xff] %vm1006, %v925
        %1015 = vst.msk [vmem:[#allocation3 + $0xc0] sm:$0xff] %vm1006, %v927
        %1016 = vst.msk [vmem:[#allocation3 + $0xd8] sm:$0xff] %vm1006, %v929
        %1017 = vst.msk [vmem:[#allocation3 + $0xf0] sm:$0xff] %vm1006, %v931
        %1018 = vst.msk [vmem:[#allocation3 + $0x108] sm:$0xff] %vm1006, %v933
        %1019 = vst.msk [vmem:[#allocation3 + $0x120] sm:$0xff] %vm1006, %v935
        %1020 = vst.msk [vmem:[#allocation3 + $0x138] sm:$0xff] %vm1006, %v937
        %1021 = vst.msk [vmem:[#allocation3 + $0x150] sm:$0xff] %vm1006, %v939
        %1022 = vst.msk [vmem:[#allocation3 + $0x168] sm:$0xff] %vm1006, %v941
        %1023 = vst.msk [vmem:[#allocation3 + $0x180] sm:$0xff] %vm1006, %v943
        %1024 = vst.msk [vmem:[#allocation3 + $0x198] sm:$0xff] %vm1006, %v945
        %1025 = vst.msk [vmem:[#allocation3 + $0x1b0] sm:$0xff] %vm1006, %v947
        %1026 = vst.msk [vmem:[#allocation3 + $0x1c8] sm:$0xff] %vm1006, %v949
        %1027 = vst.msk [vmem:[#allocation3 + $0x1e0] sm:$0xff] %vm1006, %v951
        %1028 = vst.msk [vmem:[#allocation3 + $0x1f8] sm:$0xff] %vm1006, %v953
        %1029 = vst.msk [vmem:[#allocation3 + $0x210] sm:$0xff] %vm1006, %v955
        %1030 = vst.msk [vmem:[#allocation3 + $0x228] sm:$0xff] %vm1006, %v957
        %1031 = vst.msk [vmem:[#allocation3 + $0x240] sm:$0xff] %vm1006, %v959
        %1032 = vst.msk [vmem:[#allocation3 + $0x258] sm:$0xff] %vm1006, %v961
        %1033 = vst.msk [vmem:[#allocation3 + $0x270] sm:$0xff] %vm1006, %v963
        %1034 = vst.msk [vmem:[#allocation3 + $0x288] sm:$0xff] %vm1006, %v965
        %1035 = vst.msk [vmem:[#allocation3 + $0x2a0] sm:$0xff] %vm1006, %v967
        %1036 = vst.msk [vmem:[#allocation3 + $0x2b8] sm:$0xff] %vm1006, %v969
        %1037 = vst.msk [vmem:[#allocation3 + $0x2d0] sm:$0xff] %vm1006, %v971
        %1038 = vst.msk [vmem:[#allocation3 + $0x2e8] sm:$0xff] %vm1006, %v973
        %v1039 = vld [vmem:[%s362 + $0x8] sm:$0xff]
        %v1040 = vld [vmem:[%s362 + $0x10] sm:$0xff]
        %v1041 = vld [vmem:[%s362 + $0x28] sm:$0xff]
        %v1042 = vld [vmem:[%s362 + $0x30] sm:$0xff]
        %v1043 = vld [vmem:[%s362 + $0x48] sm:$0xff]
        %v1044 = vld [vmem:[%s362 + $0x50] sm:$0xff]
        %v1045 = vld [vmem:[%s362 + $0x68] sm:$0xff]
        %v1046 = vld [vmem:[%s362 + $0x70] sm:$0xff]
        %v1047 = vld [vmem:[%s362 + $0x88] sm:$0xff]
        %v1048 = vld [vmem:[%s362 + $0x90] sm:$0xff]
        %v1049 = vld [vmem:[%s362 + $0xa8] sm:$0xff]
        %v1050 = vld [vmem:[%s362 + $0xb0] sm:$0xff]
        %v1051 = vld [vmem:[%s362 + $0xc8] sm:$0xff]
        %v1052 = vld [vmem:[%s362 + $0xd0] sm:$0xff]
        %v1053 = vld [vmem:[%s362 + $0xe8] sm:$0xff]
        %v1054 = vld [vmem:[%s362 + $0xf0] sm:$0xff]
        %v1055 = vld [vmem:[%s362 + $0x108] sm:$0xff]
        %v1056 = vld [vmem:[%s362 + $0x110] sm:$0xff]
        %v1057 = vld [vmem:[%s362 + $0x128] sm:$0xff]
        %v1058 = vld [vmem:[%s362 + $0x130] sm:$0xff]
        %v1059 = vld [vmem:[%s362 + $0x148] sm:$0xff]
        %v1060 = vld [vmem:[%s362 + $0x150] sm:$0xff]
        %v1061 = vld [vmem:[%s362 + $0x168] sm:$0xff]
        %v1062 = vld [vmem:[%s362 + $0x170] sm:$0xff]
        %v1063 = vld [vmem:[%s362 + $0x188] sm:$0xff]
        %v1064 = vld [vmem:[%s362 + $0x190] sm:$0xff]
        %v1065 = vld [vmem:[%s362 + $0x1a8] sm:$0xff]
        %v1066 = vld [vmem:[%s362 + $0x1b0] sm:$0xff]
        %v1067 = vld [vmem:[%s362 + $0x1c8] sm:$0xff]
        %v1068 = vld [vmem:[%s362 + $0x1d0] sm:$0xff]
        %v1069 = vld [vmem:[%s362 + $0x1e8] sm:$0xff]
        %v1070 = vld [vmem:[%s362 + $0x1f0] sm:$0xff]
        %1071 = vst.msk [vmem:[#allocation3 + $0x8] sm:$0xff] %vm201, %v1039
        %1072 = vst.msk [vmem:[#allocation3 + $0x20] sm:$0xff] %vm201, %v1040
        %1073 = vst.msk [vmem:[#allocation3 + $0x38] sm:$0xff] %vm201, %v1041
        %1074 = vst.msk [vmem:[#allocation3 + $0x50] sm:$0xff] %vm201, %v1042
        %1075 = vst.msk [vmem:[#allocation3 + $0x68] sm:$0xff] %vm201, %v1043
        %1076 = vst.msk [vmem:[#allocation3 + $0x80] sm:$0xff] %vm201, %v1044
        %1077 = vst.msk [vmem:[#allocation3 + $0x98] sm:$0xff] %vm201, %v1045
        %1078 = vst.msk [vmem:[#allocation3 + $0xb0] sm:$0xff] %vm201, %v1046
        %1079 = vst.msk [vmem:[#allocation3 + $0xc8] sm:$0xff] %vm201, %v1047
        %1080 = vst.msk [vmem:[#allocation3 + $0xe0] sm:$0xff] %vm201, %v1048
        %1081 = vst.msk [vmem:[#allocation3 + $0xf8] sm:$0xff] %vm201, %v1049
        %1082 = vst.msk [vmem:[#allocation3 + $0x110] sm:$0xff] %vm201, %v1050
        %1083 = vst.msk [vmem:[#allocation3 + $0x128] sm:$0xff] %vm201, %v1051
        %1084 = vst.msk [vmem:[#allocation3 + $0x140] sm:$0xff] %vm201, %v1052
        %1085 = vst.msk [vmem:[#allocation3 + $0x158] sm:$0xff] %vm201, %v1053
        %1086 = vst.msk [vmem:[#allocation3 + $0x170] sm:$0xff] %vm201, %v1054
        %1087 = vst.msk [vmem:[#allocation3 + $0x188] sm:$0xff] %vm201, %v1055
        %1088 = vst.msk [vmem:[#allocation3 + $0x1a0] sm:$0xff] %vm201, %v1056
        %1089 = vst.msk [vmem:[#allocation3 + $0x1b8] sm:$0xff] %vm201, %v1057
        %1090 = vst.msk [vmem:[#allocation3 + $0x1d0] sm:$0xff] %vm201, %v1058
        %1091 = vst.msk [vmem:[#allocation3 + $0x1e8] sm:$0xff] %vm201, %v1059
        %1092 = vst.msk [vmem:[#allocation3 + $0x200] sm:$0xff] %vm201, %v1060
        %1093 = vst.msk [vmem:[#allocation3 + $0x218] sm:$0xff] %vm201, %v1061
        %1094 = vst.msk [vmem:[#allocation3 + $0x230] sm:$0xff] %vm201, %v1062
        %1095 = vst.msk [vmem:[#allocation3 + $0x248] sm:$0xff] %vm201, %v1063
        %1096 = vst.msk [vmem:[#allocation3 + $0x260] sm:$0xff] %vm201, %v1064
        %1097 = vst.msk [vmem:[#allocation3 + $0x278] sm:$0xff] %vm201, %v1065
        %1098 = vst.msk [vmem:[#allocation3 + $0x290] sm:$0xff] %vm201, %v1066
        %1099 = vst.msk [vmem:[#allocation3 + $0x2a8] sm:$0xff] %vm201, %v1067
        %1100 = vst.msk [vmem:[#allocation3 + $0x2c0] sm:$0xff] %vm201, %v1068
        %1101 = vst.msk [vmem:[#allocation3 + $0x2d8] sm:$0xff] %vm201, %v1069
        %1102 = vst.msk [vmem:[#allocation3 + $0x2f0] sm:$0xff] %vm201, %v1070
        %v1103 = vld [vmem:[%s362 + $0x9] sm:$0xff]
        %v1104 = vld [vmem:[%s362 + $0x11] sm:$0xff]
        %v1105 = vld [vmem:[%s362 + $0x29] sm:$0xff]
        %v1106 = vld [vmem:[%s362 + $0x31] sm:$0xff]
        %v1107 = vld [vmem:[%s362 + $0x49] sm:$0xff]
        %v1108 = vld [vmem:[%s362 + $0x51] sm:$0xff]
        %v1109 = vld [vmem:[%s362 + $0x69] sm:$0xff]
        %v1110 = vld [vmem:[%s362 + $0x71] sm:$0xff]
        %v1111 = vld [vmem:[%s362 + $0x89] sm:$0xff]
        %v1112 = vld [vmem:[%s362 + $0x91] sm:$0xff]
        %v1113 = vld [vmem:[%s362 + $0xa9] sm:$0xff]
        %v1114 = vld [vmem:[%s362 + $0xb1] sm:$0xff]
        %v1115 = vld [vmem:[%s362 + $0xc9] sm:$0xff]
        %v1116 = vld [vmem:[%s362 + $0xd1] sm:$0xff]
        %v1117 = vld [vmem:[%s362 + $0xe9] sm:$0xff]
        %v1118 = vld [vmem:[%s362 + $0xf1] sm:$0xff]
        %v1119 = vld [vmem:[%s362 + $0x109] sm:$0xff]
        %v1120 = vld [vmem:[%s362 + $0x111] sm:$0xff]
        %v1121 = vld [vmem:[%s362 + $0x129] sm:$0xff]
        %v1122 = vld [vmem:[%s362 + $0x131] sm:$0xff]
        %v1123 = vld [vmem:[%s362 + $0x149] sm:$0xff]
        %v1124 = vld [vmem:[%s362 + $0x151] sm:$0xff]
        %v1125 = vld [vmem:[%s362 + $0x169] sm:$0xff]
        %v1126 = vld [vmem:[%s362 + $0x171] sm:$0xff]
        %v1127 = vld [vmem:[%s362 + $0x189] sm:$0xff]
        %v1128 = vld [vmem:[%s362 + $0x191] sm:$0xff]
        %v1129 = vld [vmem:[%s362 + $0x1a9] sm:$0xff]
        %v1130 = vld [vmem:[%s362 + $0x1b1] sm:$0xff]
        %v1131 = vld [vmem:[%s362 + $0x1c9] sm:$0xff]
        %v1132 = vld [vmem:[%s362 + $0x1d1] sm:$0xff]
        %v1133 = vld [vmem:[%s362 + $0x1e9] sm:$0xff]
        %v1134 = vld [vmem:[%s362 + $0x1f1] sm:$0xff]
        %1167 = vrot.lane.b32.xlu0 %v1103, 32
        %v1168 = vpop.permute.xlu0 %1167
        %1169 = vrot.lane.b32.xlu0 %v1104, 32
        %v1170 = vpop.permute.xlu0 %1169
        %1171 = vrot.lane.b32.xlu0 %v1105, 32
        %v1172 = vpop.permute.xlu0 %1171
        %1173 = vrot.lane.b32.xlu0 %v1106, 32
        %v1174 = vpop.permute.xlu0 %1173
        %1175 = vrot.lane.b32.xlu0 %v1107, 32
        %v1176 = vpop.permute.xlu0 %1175
        %1177 = vrot.lane.b32.xlu0 %v1108, 32
        %v1178 = vpop.permute.xlu0 %1177
        %1179 = vrot.lane.b32.xlu0 %v1109, 32
        %v1180 = vpop.permute.xlu0 %1179
        %1181 = vrot.lane.b32.xlu0 %v1110, 32
        %v1182 = vpop.permute.xlu0 %1181
        %1183 = vrot.lane.b32.xlu0 %v1111, 32
        %v1184 = vpop.permute.xlu0 %1183
        %1185 = vrot.lane.b32.xlu0 %v1112, 32
        %v1186 = vpop.permute.xlu0 %1185
        %1187 = vrot.lane.b32.xlu0 %v1113, 32
        %v1188 = vpop.permute.xlu0 %1187
        %1189 = vrot.lane.b32.xlu0 %v1114, 32
        %v1190 = vpop.permute.xlu0 %1189
        %1191 = vrot.lane.b32.xlu0 %v1115, 32
        %v1192 = vpop.permute.xlu0 %1191
        %1193 = vrot.lane.b32.xlu0 %v1116, 32
        %v1194 = vpop.permute.xlu0 %1193
        %1195 = vrot.lane.b32.xlu0 %v1117, 32
        %v1196 = vpop.permute.xlu0 %1195
        %1197 = vrot.lane.b32.xlu0 %v1118, 32
        %v1198 = vpop.permute.xlu0 %1197
        %1199 = vrot.lane.b32.xlu0 %v1119, 32
        %v1200 = vpop.permute.xlu0 %1199
        %1201 = vrot.lane.b32.xlu0 %v1120, 32
        %v1202 = vpop.permute.xlu0 %1201
        %1203 = vrot.lane.b32.xlu0 %v1121, 32
        %v1204 = vpop.permute.xlu0 %1203
        %1205 = vrot.lane.b32.xlu0 %v1122, 32
        %v1206 = vpop.permute.xlu0 %1205
        %1207 = vrot.lane.b32.xlu0 %v1123, 32
        %v1208 = vpop.permute.xlu0 %1207
        %1209 = vrot.lane.b32.xlu0 %v1124, 32
        %v1210 = vpop.permute.xlu0 %1209
        %1211 = vrot.lane.b32.xlu0 %v1125, 32
        %v1212 = vpop.permute.xlu0 %1211
        %1213 = vrot.lane.b32.xlu0 %v1126, 32
        %v1214 = vpop.permute.xlu0 %1213
        %1215 = vrot.lane.b32.xlu0 %v1127, 32
        %v1216 = vpop.permute.xlu0 %1215
        %1217 = vrot.lane.b32.xlu0 %v1128, 32
        %v1218 = vpop.permute.xlu0 %1217
        %1219 = vrot.lane.b32.xlu0 %v1129, 32
        %v1220 = vpop.permute.xlu0 %1219
        %1221 = vrot.lane.b32.xlu0 %v1130, 32
        %v1222 = vpop.permute.xlu0 %1221
        %1223 = vrot.lane.b32.xlu0 %v1131, 32
        %v1224 = vpop.permute.xlu0 %1223
        %1225 = vrot.lane.b32.xlu0 %v1132, 32
        %v1226 = vpop.permute.xlu0 %1225
        %1227 = vrot.lane.b32.xlu0 %v1133, 32
        %v1228 = vpop.permute.xlu0 %1227
        %1229 = vrot.lane.b32.xlu0 %v1134, 32
        %v1230 = vpop.permute.xlu0 %1229
        %1263 = vst.msk [vmem:[#allocation3 + $0x8] sm:$0xff] %vm620, %v1168
        %1264 = vst.msk [vmem:[#allocation3 + $0x20] sm:$0xff] %vm620, %v1170
        %1265 = vst.msk [vmem:[#allocation3 + $0x38] sm:$0xff] %vm620, %v1172
        %1266 = vst.msk [vmem:[#allocation3 + $0x50] sm:$0xff] %vm620, %v1174
        %1267 = vst.msk [vmem:[#allocation3 + $0x68] sm:$0xff] %vm620, %v1176
        %1268 = vst.msk [vmem:[#allocation3 + $0x80] sm:$0xff] %vm620, %v1178
        %1269 = vst.msk [vmem:[#allocation3 + $0x98] sm:$0xff] %vm620, %v1180
        %1270 = vst.msk [vmem:[#allocation3 + $0xb0] sm:$0xff] %vm620, %v1182
        %1271 = vst.msk [vmem:[#allocation3 + $0xc8] sm:$0xff] %vm620, %v1184
        %1272 = vst.msk [vmem:[#allocation3 + $0xe0] sm:$0xff] %vm620, %v1186
        %1273 = vst.msk [vmem:[#allocation3 + $0xf8] sm:$0xff] %vm620, %v1188
        %1274 = vst.msk [vmem:[#allocation3 + $0x110] sm:$0xff] %vm620, %v1190
        %1275 = vst.msk [vmem:[#allocation3 + $0x128] sm:$0xff] %vm620, %v1192
        %1276 = vst.msk [vmem:[#allocation3 + $0x140] sm:$0xff] %vm620, %v1194
        %1277 = vst.msk [vmem:[#allocation3 + $0x158] sm:$0xff] %vm620, %v1196
        %1278 = vst.msk [vmem:[#allocation3 + $0x170] sm:$0xff] %vm620, %v1198
        %1279 = vst.msk [vmem:[#allocation3 + $0x188] sm:$0xff] %vm620, %v1200
        %1280 = vst.msk [vmem:[#allocation3 + $0x1a0] sm:$0xff] %vm620, %v1202
        %1281 = vst.msk [vmem:[#allocation3 + $0x1b8] sm:$0xff] %vm620, %v1204
        %1282 = vst.msk [vmem:[#allocation3 + $0x1d0] sm:$0xff] %vm620, %v1206
        %1283 = vst.msk [vmem:[#allocation3 + $0x1e8] sm:$0xff] %vm620, %v1208
        %1284 = vst.msk [vmem:[#allocation3 + $0x200] sm:$0xff] %vm620, %v1210
        %1285 = vst.msk [vmem:[#allocation3 + $0x218] sm:$0xff] %vm620, %v1212
        %1286 = vst.msk [vmem:[#allocation3 + $0x230] sm:$0xff] %vm620, %v1214
        %1287 = vst.msk [vmem:[#allocation3 + $0x248] sm:$0xff] %vm620, %v1216
        %1288 = vst.msk [vmem:[#allocation3 + $0x260] sm:$0xff] %vm620, %v1218
        %1289 = vst.msk [vmem:[#allocation3 + $0x278] sm:$0xff] %vm620, %v1220
        %1290 = vst.msk [vmem:[#allocation3 + $0x290] sm:$0xff] %vm620, %v1222
        %1291 = vst.msk [vmem:[#allocation3 + $0x2a8] sm:$0xff] %vm620, %v1224
        %1292 = vst.msk [vmem:[#allocation3 + $0x2c0] sm:$0xff] %vm620, %v1226
        %1293 = vst.msk [vmem:[#allocation3 + $0x2d8] sm:$0xff] %vm620, %v1228
        %1294 = vst.msk [vmem:[#allocation3 + $0x2f0] sm:$0xff] %vm620, %v1230
        %s1295 = scalar_lea.vmem [#allocation2], 288
        %v1296 = vld [vmem:[%s1295 + $0x7] sm:$0xff]
        %v1297 = vld [vmem:[%s1295 + $0xf] sm:$0xff]
        %v1298 = vld [vmem:[%s1295 + $0x27] sm:$0xff]
        %v1299 = vld [vmem:[%s1295 + $0x2f] sm:$0xff]
        %v1300 = vld [vmem:[%s1295 + $0x47] sm:$0xff]
        %v1301 = vld [vmem:[%s1295 + $0x4f] sm:$0xff]
        %v1302 = vld [vmem:[%s1295 + $0x67] sm:$0xff]
        %v1303 = vld [vmem:[%s1295 + $0x6f] sm:$0xff]
        %v1304 = vld [vmem:[%s1295 + $0x87] sm:$0xff]
        %v1305 = vld [vmem:[%s1295 + $0x8f] sm:$0xff]
        %v1306 = vld [vmem:[%s1295 + $0xa7] sm:$0xff]
        %v1307 = vld [vmem:[%s1295 + $0xaf] sm:$0xff]
        %v1308 = vld [vmem:[%s1295 + $0xc7] sm:$0xff]
        %v1309 = vld [vmem:[%s1295 + $0xcf] sm:$0xff]
        %v1310 = vld [vmem:[%s1295 + $0xe7] sm:$0xff]
        %v1311 = vld [vmem:[%s1295 + $0xef] sm:$0xff]
        %v1312 = vld [vmem:[%s1295 + $0x107] sm:$0xff]
        %v1313 = vld [vmem:[%s1295 + $0x10f] sm:$0xff]
        %v1314 = vld [vmem:[%s1295 + $0x127] sm:$0xff]
        %v1315 = vld [vmem:[%s1295 + $0x12f] sm:$0xff]
        %v1316 = vld [vmem:[%s1295 + $0x147] sm:$0xff]
        %v1317 = vld [vmem:[%s1295 + $0x14f] sm:$0xff]
        %v1318 = vld [vmem:[%s1295 + $0x167] sm:$0xff]
        %v1319 = vld [vmem:[%s1295 + $0x16f] sm:$0xff]
        %v1320 = vld [vmem:[%s1295 + $0x187] sm:$0xff]
        %v1321 = vld [vmem:[%s1295 + $0x18f] sm:$0xff]
        %v1322 = vld [vmem:[%s1295 + $0x1a7] sm:$0xff]
        %v1323 = vld [vmem:[%s1295 + $0x1af] sm:$0xff]
        %v1324 = vld [vmem:[%s1295 + $0x1c7] sm:$0xff]
        %v1325 = vld [vmem:[%s1295 + $0x1cf] sm:$0xff]
        %v1326 = vld [vmem:[%s1295 + $0x1e7] sm:$0xff]
        %v1327 = vld [vmem:[%s1295 + $0x1ef] sm:$0xff]
        %1360 = vrot.lane.b32.xlu0 %v1296, 64
        %v1361 = vpop.permute.xlu0 %1360
        %1362 = vrot.lane.b32.xlu0 %v1297, 64
        %v1363 = vpop.permute.xlu0 %1362
        %1364 = vrot.lane.b32.xlu0 %v1298, 64
        %v1365 = vpop.permute.xlu0 %1364
        %1366 = vrot.lane.b32.xlu0 %v1299, 64
        %v1367 = vpop.permute.xlu0 %1366
        %1368 = vrot.lane.b32.xlu0 %v1300, 64
        %v1369 = vpop.permute.xlu0 %1368
        %1370 = vrot.lane.b32.xlu0 %v1301, 64
        %v1371 = vpop.permute.xlu0 %1370
        %1372 = vrot.lane.b32.xlu0 %v1302, 64
        %v1373 = vpop.permute.xlu0 %1372
        %1374 = vrot.lane.b32.xlu0 %v1303, 64
        %v1375 = vpop.permute.xlu0 %1374
        %1376 = vrot.lane.b32.xlu0 %v1304, 64
        %v1377 = vpop.permute.xlu0 %1376
        %1378 = vrot.lane.b32.xlu0 %v1305, 64
        %v1379 = vpop.permute.xlu0 %1378
        %1380 = vrot.lane.b32.xlu0 %v1306, 64
        %v1381 = vpop.permute.xlu0 %1380
        %1382 = vrot.lane.b32.xlu0 %v1307, 64
        %v1383 = vpop.permute.xlu0 %1382
        %1384 = vrot.lane.b32.xlu0 %v1308, 64
        %v1385 = vpop.permute.xlu0 %1384
        %1386 = vrot.lane.b32.xlu0 %v1309, 64
        %v1387 = vpop.permute.xlu0 %1386
        %1388 = vrot.lane.b32.xlu0 %v1310, 64
        %v1389 = vpop.permute.xlu0 %1388
        %1390 = vrot.lane.b32.xlu0 %v1311, 64
        %v1391 = vpop.permute.xlu0 %1390
        %1392 = vrot.lane.b32.xlu0 %v1312, 64
        %v1393 = vpop.permute.xlu0 %1392
        %1394 = vrot.lane.b32.xlu0 %v1313, 64
        %v1395 = vpop.permute.xlu0 %1394
        %1396 = vrot.lane.b32.xlu0 %v1314, 64
        %v1397 = vpop.permute.xlu0 %1396
        %1398 = vrot.lane.b32.xlu0 %v1315, 64
        %v1399 = vpop.permute.xlu0 %1398
        %1400 = vrot.lane.b32.xlu0 %v1316, 64
        %v1401 = vpop.permute.xlu0 %1400
        %1402 = vrot.lane.b32.xlu0 %v1317, 64
        %v1403 = vpop.permute.xlu0 %1402
        %1404 = vrot.lane.b32.xlu0 %v1318, 64
        %v1405 = vpop.permute.xlu0 %1404
        %1406 = vrot.lane.b32.xlu0 %v1319, 64
        %v1407 = vpop.permute.xlu0 %1406
        %1408 = vrot.lane.b32.xlu0 %v1320, 64
        %v1409 = vpop.permute.xlu0 %1408
        %1410 = vrot.lane.b32.xlu0 %v1321, 64
        %v1411 = vpop.permute.xlu0 %1410
        %1412 = vrot.lane.b32.xlu0 %v1322, 64
        %v1413 = vpop.permute.xlu0 %1412
        %1414 = vrot.lane.b32.xlu0 %v1323, 64
        %v1415 = vpop.permute.xlu0 %1414
        %1416 = vrot.lane.b32.xlu0 %v1324, 64
        %v1417 = vpop.permute.xlu0 %1416
        %1418 = vrot.lane.b32.xlu0 %v1325, 64
        %v1419 = vpop.permute.xlu0 %1418
        %1420 = vrot.lane.b32.xlu0 %v1326, 64
        %v1421 = vpop.permute.xlu0 %1420
        %1422 = vrot.lane.b32.xlu0 %v1327, 64
        %v1423 = vpop.permute.xlu0 %1422
        %1456 = vst.msk [vmem:[#allocation3 + $0x8] sm:$0xff] %vm813, %v1361
        %1457 = vst.msk [vmem:[#allocation3 + $0x20] sm:$0xff] %vm813, %v1363
        %1458 = vst.msk [vmem:[#allocation3 + $0x38] sm:$0xff] %vm813, %v1365
        %1459 = vst.msk [vmem:[#allocation3 + $0x50] sm:$0xff] %vm813, %v1367
        %1460 = vst.msk [vmem:[#allocation3 + $0x68] sm:$0xff] %vm813, %v1369
        %1461 = vst.msk [vmem:[#allocation3 + $0x80] sm:$0xff] %vm813, %v1371
        %1462 = vst.msk [vmem:[#allocation3 + $0x98] sm:$0xff] %vm813, %v1373
        %1463 = vst.msk [vmem:[#allocation3 + $0xb0] sm:$0xff] %vm813, %v1375
        %1464 = vst.msk [vmem:[#allocation3 + $0xc8] sm:$0xff] %vm813, %v1377
        %1465 = vst.msk [vmem:[#allocation3 + $0xe0] sm:$0xff] %vm813, %v1379
        %1466 = vst.msk [vmem:[#allocation3 + $0xf8] sm:$0xff] %vm813, %v1381
        %1467 = vst.msk [vmem:[#allocation3 + $0x110] sm:$0xff] %vm813, %v1383
        %1468 = vst.msk [vmem:[#allocation3 + $0x128] sm:$0xff] %vm813, %v1385
        %1469 = vst.msk [vmem:[#allocation3 + $0x140] sm:$0xff] %vm813, %v1387
        %1470 = vst.msk [vmem:[#allocation3 + $0x158] sm:$0xff] %vm813, %v1389
        %1471 = vst.msk [vmem:[#allocation3 + $0x170] sm:$0xff] %vm813, %v1391
        %1472 = vst.msk [vmem:[#allocation3 + $0x188] sm:$0xff] %vm813, %v1393
        %1473 = vst.msk [vmem:[#allocation3 + $0x1a0] sm:$0xff] %vm813, %v1395
        %1474 = vst.msk [vmem:[#allocation3 + $0x1b8] sm:$0xff] %vm813, %v1397
        %1475 = vst.msk [vmem:[#allocation3 + $0x1d0] sm:$0xff] %vm813, %v1399
        %1476 = vst.msk [vmem:[#allocation3 + $0x1e8] sm:$0xff] %vm813, %v1401
        %1477 = vst.msk [vmem:[#allocation3 + $0x200] sm:$0xff] %vm813, %v1403
        %1478 = vst.msk [vmem:[#allocation3 + $0x218] sm:$0xff] %vm813, %v1405
        %1479 = vst.msk [vmem:[#allocation3 + $0x230] sm:$0xff] %vm813, %v1407
        %1480 = vst.msk [vmem:[#allocation3 + $0x248] sm:$0xff] %vm813, %v1409
        %1481 = vst.msk [vmem:[#allocation3 + $0x260] sm:$0xff] %vm813, %v1411
        %1482 = vst.msk [vmem:[#allocation3 + $0x278] sm:$0xff] %vm813, %v1413
        %1483 = vst.msk [vmem:[#allocation3 + $0x290] sm:$0xff] %vm813, %v1415
        %1484 = vst.msk [vmem:[#allocation3 + $0x2a8] sm:$0xff] %vm813, %v1417
        %1485 = vst.msk [vmem:[#allocation3 + $0x2c0] sm:$0xff] %vm813, %v1419
        %1486 = vst.msk [vmem:[#allocation3 + $0x2d8] sm:$0xff] %vm813, %v1421
        %1487 = vst.msk [vmem:[#allocation3 + $0x2f0] sm:$0xff] %vm813, %v1423
        %v1488 = vld [vmem:[%s1295 + $0x8] sm:$0xff]
        %v1489 = vld [vmem:[%s1295 + $0x10] sm:$0xff]
        %v1490 = vld [vmem:[%s1295 + $0x28] sm:$0xff]
        %v1491 = vld [vmem:[%s1295 + $0x30] sm:$0xff]
        %v1492 = vld [vmem:[%s1295 + $0x48] sm:$0xff]
        %v1493 = vld [vmem:[%s1295 + $0x50] sm:$0xff]
        %v1494 = vld [vmem:[%s1295 + $0x68] sm:$0xff]
        %v1495 = vld [vmem:[%s1295 + $0x70] sm:$0xff]
        %v1496 = vld [vmem:[%s1295 + $0x88] sm:$0xff]
        %v1497 = vld [vmem:[%s1295 + $0x90] sm:$0xff]
        %v1498 = vld [vmem:[%s1295 + $0xa8] sm:$0xff]
        %v1499 = vld [vmem:[%s1295 + $0xb0] sm:$0xff]
        %v1500 = vld [vmem:[%s1295 + $0xc8] sm:$0xff]
        %v1501 = vld [vmem:[%s1295 + $0xd0] sm:$0xff]
        %v1502 = vld [vmem:[%s1295 + $0xe8] sm:$0xff]
        %v1503 = vld [vmem:[%s1295 + $0xf0] sm:$0xff]
        %v1504 = vld [vmem:[%s1295 + $0x108] sm:$0xff]
        %v1505 = vld [vmem:[%s1295 + $0x110] sm:$0xff]
        %v1506 = vld [vmem:[%s1295 + $0x128] sm:$0xff]
        %v1507 = vld [vmem:[%s1295 + $0x130] sm:$0xff]
        %v1508 = vld [vmem:[%s1295 + $0x148] sm:$0xff]
        %v1509 = vld [vmem:[%s1295 + $0x150] sm:$0xff]
        %v1510 = vld [vmem:[%s1295 + $0x168] sm:$0xff]
        %v1511 = vld [vmem:[%s1295 + $0x170] sm:$0xff]
        %v1512 = vld [vmem:[%s1295 + $0x188] sm:$0xff]
        %v1513 = vld [vmem:[%s1295 + $0x190] sm:$0xff]
        %v1514 = vld [vmem:[%s1295 + $0x1a8] sm:$0xff]
        %v1515 = vld [vmem:[%s1295 + $0x1b0] sm:$0xff]
        %v1516 = vld [vmem:[%s1295 + $0x1c8] sm:$0xff]
        %v1517 = vld [vmem:[%s1295 + $0x1d0] sm:$0xff]
        %v1518 = vld [vmem:[%s1295 + $0x1e8] sm:$0xff]
        %v1519 = vld [vmem:[%s1295 + $0x1f0] sm:$0xff]
        %1552 = vrot.lane.b32.xlu0 %v1488, 96
        %v1553 = vpop.permute.xlu0 %1552
        %1554 = vrot.lane.b32.xlu0 %v1489, 96
        %v1555 = vpop.permute.xlu0 %1554
        %1556 = vrot.lane.b32.xlu0 %v1490, 96
        %v1557 = vpop.permute.xlu0 %1556
        %1558 = vrot.lane.b32.xlu0 %v1491, 96
        %v1559 = vpop.permute.xlu0 %1558
        %1560 = vrot.lane.b32.xlu0 %v1492, 96
        %v1561 = vpop.permute.xlu0 %1560
        %1562 = vrot.lane.b32.xlu0 %v1493, 96
        %v1563 = vpop.permute.xlu0 %1562
        %1564 = vrot.lane.b32.xlu0 %v1494, 96
        %v1565 = vpop.permute.xlu0 %1564
        %1566 = vrot.lane.b32.xlu0 %v1495, 96
        %v1567 = vpop.permute.xlu0 %1566
        %1568 = vrot.lane.b32.xlu0 %v1496, 96
        %v1569 = vpop.permute.xlu0 %1568
        %1570 = vrot.lane.b32.xlu0 %v1497, 96
        %v1571 = vpop.permute.xlu0 %1570
        %1572 = vrot.lane.b32.xlu0 %v1498, 96
        %v1573 = vpop.permute.xlu0 %1572
        %1574 = vrot.lane.b32.xlu0 %v1499, 96
        %v1575 = vpop.permute.xlu0 %1574
        %1576 = vrot.lane.b32.xlu0 %v1500, 96
        %v1577 = vpop.permute.xlu0 %1576
        %1578 = vrot.lane.b32.xlu0 %v1501, 96
        %v1579 = vpop.permute.xlu0 %1578
        %1580 = vrot.lane.b32.xlu0 %v1502, 96
        %v1581 = vpop.permute.xlu0 %1580
        %1582 = vrot.lane.b32.xlu0 %v1503, 96
        %v1583 = vpop.permute.xlu0 %1582
        %1584 = vrot.lane.b32.xlu0 %v1504, 96
        %v1585 = vpop.permute.xlu0 %1584
        %1586 = vrot.lane.b32.xlu0 %v1505, 96
        %v1587 = vpop.permute.xlu0 %1586
        %1588 = vrot.lane.b32.xlu0 %v1506, 96
        %v1589 = vpop.permute.xlu0 %1588
        %1590 = vrot.lane.b32.xlu0 %v1507, 96
        %v1591 = vpop.permute.xlu0 %1590
        %1592 = vrot.lane.b32.xlu0 %v1508, 96
        %v1593 = vpop.permute.xlu0 %1592
        %1594 = vrot.lane.b32.xlu0 %v1509, 96
        %v1595 = vpop.permute.xlu0 %1594
        %1596 = vrot.lane.b32.xlu0 %v1510, 96
        %v1597 = vpop.permute.xlu0 %1596
        %1598 = vrot.lane.b32.xlu0 %v1511, 96
        %v1599 = vpop.permute.xlu0 %1598
        %1600 = vrot.lane.b32.xlu0 %v1512, 96
        %v1601 = vpop.permute.xlu0 %1600
        %1602 = vrot.lane.b32.xlu0 %v1513, 96
        %v1603 = vpop.permute.xlu0 %1602
        %1604 = vrot.lane.b32.xlu0 %v1514, 96
        %v1605 = vpop.permute.xlu0 %1604
        %1606 = vrot.lane.b32.xlu0 %v1515, 96
        %v1607 = vpop.permute.xlu0 %1606
        %1608 = vrot.lane.b32.xlu0 %v1516, 96
        %v1609 = vpop.permute.xlu0 %1608
        %1610 = vrot.lane.b32.xlu0 %v1517, 96
        %v1611 = vpop.permute.xlu0 %1610
        %1612 = vrot.lane.b32.xlu0 %v1518, 96
        %v1613 = vpop.permute.xlu0 %1612
        %1614 = vrot.lane.b32.xlu0 %v1519, 96
        %v1615 = vpop.permute.xlu0 %1614
        %1648 = vst.msk [vmem:[#allocation3 + $0x8] sm:$0xff] %vm1006, %v1553
        %1649 = vst.msk [vmem:[#allocation3 + $0x20] sm:$0xff] %vm1006, %v1555
        %1650 = vst.msk [vmem:[#allocation3 + $0x38] sm:$0xff] %vm1006, %v1557
        %1651 = vst.msk [vmem:[#allocation3 + $0x50] sm:$0xff] %vm1006, %v1559
        %1652 = vst.msk [vmem:[#allocation3 + $0x68] sm:$0xff] %vm1006, %v1561
        %1653 = vst.msk [vmem:[#allocation3 + $0x80] sm:$0xff] %vm1006, %v1563
        %1654 = vst.msk [vmem:[#allocation3 + $0x98] sm:$0xff] %vm1006, %v1565
        %1655 = vst.msk [vmem:[#allocation3 + $0xb0] sm:$0xff] %vm1006, %v1567
        %1656 = vst.msk [vmem:[#allocation3 + $0xc8] sm:$0xff] %vm1006, %v1569
        %1657 = vst.msk [vmem:[#allocation3 + $0xe0] sm:$0xff] %vm1006, %v1571
        %1658 = vst.msk [vmem:[#allocation3 + $0xf8] sm:$0xff] %vm1006, %v1573
        %1659 = vst.msk [vmem:[#allocation3 + $0x110] sm:$0xff] %vm1006, %v1575
        %1660 = vst.msk [vmem:[#allocation3 + $0x128] sm:$0xff] %vm1006, %v1577
        %1661 = vst.msk [vmem:[#allocation3 + $0x140] sm:$0xff] %vm1006, %v1579
        %1662 = vst.msk [vmem:[#allocation3 + $0x158] sm:$0xff] %vm1006, %v1581
        %1663 = vst.msk [vmem:[#allocation3 + $0x170] sm:$0xff] %vm1006, %v1583
        %1664 = vst.msk [vmem:[#allocation3 + $0x188] sm:$0xff] %vm1006, %v1585
        %1665 = vst.msk [vmem:[#allocation3 + $0x1a0] sm:$0xff] %vm1006, %v1587
        %1666 = vst.msk [vmem:[#allocation3 + $0x1b8] sm:$0xff] %vm1006, %v1589
        %1667 = vst.msk [vmem:[#allocation3 + $0x1d0] sm:$0xff] %vm1006, %v1591
        %1668 = vst.msk [vmem:[#allocation3 + $0x1e8] sm:$0xff] %vm1006, %v1593
        %1669 = vst.msk [vmem:[#allocation3 + $0x200] sm:$0xff] %vm1006, %v1595
        %1670 = vst.msk [vmem:[#allocation3 + $0x218] sm:$0xff] %vm1006, %v1597
        %1671 = vst.msk [vmem:[#allocation3 + $0x230] sm:$0xff] %vm1006, %v1599
        %1672 = vst.msk [vmem:[#allocation3 + $0x248] sm:$0xff] %vm1006, %v1601
        %1673 = vst.msk [vmem:[#allocation3 + $0x260] sm:$0xff] %vm1006, %v1603
        %1674 = vst.msk [vmem:[#allocation3 + $0x278] sm:$0xff] %vm1006, %v1605
        %1675 = vst.msk [vmem:[#allocation3 + $0x290] sm:$0xff] %vm1006, %v1607
        %1676 = vst.msk [vmem:[#allocation3 + $0x2a8] sm:$0xff] %vm1006, %v1609
        %1677 = vst.msk [vmem:[#allocation3 + $0x2c0] sm:$0xff] %vm1006, %v1611
        %1678 = vst.msk [vmem:[#allocation3 + $0x2d8] sm:$0xff] %vm1006, %v1613
        %1679 = vst.msk [vmem:[#allocation3 + $0x2f0] sm:$0xff] %vm1006, %v1615
        %v1680 = vld [vmem:[%s1295 + $0x9] sm:$0xff]
        %v1681 = vld [vmem:[%s1295 + $0x11] sm:$0xff]
        %v1682 = vld [vmem:[%s1295 + $0x29] sm:$0xff]
        %v1683 = vld [vmem:[%s1295 + $0x31] sm:$0xff]
        %v1684 = vld [vmem:[%s1295 + $0x49] sm:$0xff]
        %v1685 = vld [vmem:[%s1295 + $0x51] sm:$0xff]
        %v1686 = vld [vmem:[%s1295 + $0x69] sm:$0xff]
        %v1687 = vld [vmem:[%s1295 + $0x71] sm:$0xff]
        %v1688 = vld [vmem:[%s1295 + $0x89] sm:$0xff]
        %v1689 = vld [vmem:[%s1295 + $0x91] sm:$0xff]
        %v1690 = vld [vmem:[%s1295 + $0xa9] sm:$0xff]
        %v1691 = vld [vmem:[%s1295 + $0xb1] sm:$0xff]
        %v1692 = vld [vmem:[%s1295 + $0xc9] sm:$0xff]
        %v1693 = vld [vmem:[%s1295 + $0xd1] sm:$0xff]
        %v1694 = vld [vmem:[%s1295 + $0xe9] sm:$0xff]
        %v1695 = vld [vmem:[%s1295 + $0xf1] sm:$0xff]
        %v1696 = vld [vmem:[%s1295 + $0x109] sm:$0xff]
        %v1697 = vld [vmem:[%s1295 + $0x111] sm:$0xff]
        %v1698 = vld [vmem:[%s1295 + $0x129] sm:$0xff]
        %v1699 = vld [vmem:[%s1295 + $0x131] sm:$0xff]
        %v1700 = vld [vmem:[%s1295 + $0x149] sm:$0xff]
        %v1701 = vld [vmem:[%s1295 + $0x151] sm:$0xff]
        %v1702 = vld [vmem:[%s1295 + $0x169] sm:$0xff]
        %v1703 = vld [vmem:[%s1295 + $0x171] sm:$0xff]
        %v1704 = vld [vmem:[%s1295 + $0x189] sm:$0xff]
        %v1705 = vld [vmem:[%s1295 + $0x191] sm:$0xff]
        %v1706 = vld [vmem:[%s1295 + $0x1a9] sm:$0xff]
        %v1707 = vld [vmem:[%s1295 + $0x1b1] sm:$0xff]
        %v1708 = vld [vmem:[%s1295 + $0x1c9] sm:$0xff]
        %v1709 = vld [vmem:[%s1295 + $0x1d1] sm:$0xff]
        %v1710 = vld [vmem:[%s1295 + $0x1e9] sm:$0xff]
        %v1711 = vld [vmem:[%s1295 + $0x1f1] sm:$0xff]
        %1712 = vst.msk [vmem:[#allocation3 + $0x10] sm:$0xff] %vm201, %v1680
        %1713 = vst.msk [vmem:[#allocation3 + $0x28] sm:$0xff] %vm201, %v1681
        %1714 = vst.msk [vmem:[#allocation3 + $0x40] sm:$0xff] %vm201, %v1682
        %1715 = vst.msk [vmem:[#allocation3 + $0x58] sm:$0xff] %vm201, %v1683
        %1716 = vst.msk [vmem:[#allocation3 + $0x70] sm:$0xff] %vm201, %v1684
        %1717 = vst.msk [vmem:[#allocation3 + $0x88] sm:$0xff] %vm201, %v1685
        %1718 = vst.msk [vmem:[#allocation3 + $0xa0] sm:$0xff] %vm201, %v1686
        %1719 = vst.msk [vmem:[#allocation3 + $0xb8] sm:$0xff] %vm201, %v1687
        %1720 = vst.msk [vmem:[#allocation3 + $0xd0] sm:$0xff] %vm201, %v1688
        %1721 = vst.msk [vmem:[#allocation3 + $0xe8] sm:$0xff] %vm201, %v1689
        %1722 = vst.msk [vmem:[#allocation3 + $0x100] sm:$0xff] %vm201, %v1690
        %1723 = vst.msk [vmem:[#allocation3 + $0x118] sm:$0xff] %vm201, %v1691
        %1724 = vst.msk [vmem:[#allocation3 + $0x130] sm:$0xff] %vm201, %v1692
        %1725 = vst.msk [vmem:[#allocation3 + $0x148] sm:$0xff] %vm201, %v1693
        %1726 = vst.msk [vmem:[#allocation3 + $0x160] sm:$0xff] %vm201, %v1694
        %1727 = vst.msk [vmem:[#allocation3 + $0x178] sm:$0xff] %vm201, %v1695
        %1728 = vst.msk [vmem:[#allocation3 + $0x190] sm:$0xff] %vm201, %v1696
        %1729 = vst.msk [vmem:[#allocation3 + $0x1a8] sm:$0xff] %vm201, %v1697
        %1730 = vst.msk [vmem:[#allocation3 + $0x1c0] sm:$0xff] %vm201, %v1698
        %1731 = vst.msk [vmem:[#allocation3 + $0x1d8] sm:$0xff] %vm201, %v1699
        %1732 = vst.msk [vmem:[#allocation3 + $0x1f0] sm:$0xff] %vm201, %v1700
        %1733 = vst.msk [vmem:[#allocation3 + $0x208] sm:$0xff] %vm201, %v1701
        %1734 = vst.msk [vmem:[#allocation3 + $0x220] sm:$0xff] %vm201, %v1702
        %1735 = vst.msk [vmem:[#allocation3 + $0x238] sm:$0xff] %vm201, %v1703
        %1736 = vst.msk [vmem:[#allocation3 + $0x250] sm:$0xff] %vm201, %v1704
        %1737 = vst.msk [vmem:[#allocation3 + $0x268] sm:$0xff] %vm201, %v1705
        %1738 = vst.msk [vmem:[#allocation3 + $0x280] sm:$0xff] %vm201, %v1706
        %1739 = vst.msk [vmem:[#allocation3 + $0x298] sm:$0xff] %vm201, %v1707
        %1740 = vst.msk [vmem:[#allocation3 + $0x2b0] sm:$0xff] %vm201, %v1708
        %1741 = vst.msk [vmem:[#allocation3 + $0x2c8] sm:$0xff] %vm201, %v1709
        %1742 = vst.msk [vmem:[#allocation3 + $0x2e0] sm:$0xff] %vm201, %v1710
        %1743 = vst.msk [vmem:[#allocation3 + $0x2f8] sm:$0xff] %vm201, %v1711
        %v1744 = vld [vmem:[#allocation3] sm:$0xff]
        %v1745 = vld [vmem:[#allocation3 + $0x8] sm:$0xff]
        %v1746 = vld [vmem:[#allocation3 + $0x10] sm:$0xff]
        %v1747 = vld [vmem:[#allocation3 + $0x18] sm:$0xff]
        %v1748 = vld [vmem:[#allocation3 + $0x20] sm:$0xff]
        %v1749 = vld [vmem:[#allocation3 + $0x28] sm:$0xff]
        %v1750 = vld [vmem:[#allocation3 + $0x30] sm:$0xff]
        %v1751 = vld [vmem:[#allocation3 + $0x38] sm:$0xff]
        %v1752 = vld [vmem:[#allocation3 + $0x40] sm:$0xff]
        %v1753 = vld [vmem:[#allocation3 + $0x48] sm:$0xff]
        %v1754 = vld [vmem:[#allocation3 + $0x50] sm:$0xff]
        %v1755 = vld [vmem:[#allocation3 + $0x58] sm:$0xff]
        %v1756 = vld [vmem:[#allocation3 + $0x60] sm:$0xff]
        %v1757 = vld [vmem:[#allocation3 + $0x68] sm:$0xff]
        %v1758 = vld [vmem:[#allocation3 + $0x70] sm:$0xff]
        %v1759 = vld [vmem:[#allocation3 + $0x78] sm:$0xff]
        %v1760 = vld [vmem:[#allocation3 + $0x80] sm:$0xff]
        %v1761 = vld [vmem:[#allocation3 + $0x88] sm:$0xff]
        %v1762 = vld [vmem:[#allocation3 + $0x90] sm:$0xff]
        %v1763 = vld [vmem:[#allocation3 + $0x98] sm:$0xff]
        %v1764 = vld [vmem:[#allocation3 + $0xa0] sm:$0xff]
        %v1765 = vld [vmem:[#allocation3 + $0xa8] sm:$0xff]
        %v1766 = vld [vmem:[#allocation3 + $0xb0] sm:$0xff]
        %v1767 = vld [vmem:[#allocation3 + $0xb8] sm:$0xff]
        %v1768 = vld [vmem:[#allocation3 + $0xc0] sm:$0xff]
        %v1769 = vld [vmem:[#allocation3 + $0xc8] sm:$0xff]
        %v1770 = vld [vmem:[#allocation3 + $0xd0] sm:$0xff]
        %v1771 = vld [vmem:[#allocation3 + $0xd8] sm:$0xff]
        %v1772 = vld [vmem:[#allocation3 + $0xe0] sm:$0xff]
        %v1773 = vld [vmem:[#allocation3 + $0xe8] sm:$0xff]
        %v1774 = vld [vmem:[#allocation3 + $0xf0] sm:$0xff]
        %v1775 = vld [vmem:[#allocation3 + $0xf8] sm:$0xff]
        %v1776 = vld [vmem:[#allocation3 + $0x100] sm:$0xff]
        %v1777 = vld [vmem:[#allocation3 + $0x108] sm:$0xff]
        %v1778 = vld [vmem:[#allocation3 + $0x110] sm:$0xff]
        %v1779 = vld [vmem:[#allocation3 + $0x118] sm:$0xff]
        %v1780 = vld [vmem:[#allocation3 + $0x120] sm:$0xff]
        %v1781 = vld [vmem:[#allocation3 + $0x128] sm:$0xff]
        %v1782 = vld [vmem:[#allocation3 + $0x130] sm:$0xff]
        %v1783 = vld [vmem:[#allocation3 + $0x138] sm:$0xff]
        %v1784 = vld [vmem:[#allocation3 + $0x140] sm:$0xff]
        %v1785 = vld [vmem:[#allocation3 + $0x148] sm:$0xff]
        %v1786 = vld [vmem:[#allocation3 + $0x150] sm:$0xff]
        %v1787 = vld [vmem:[#allocation3 + $0x158] sm:$0xff]
        %v1788 = vld [vmem:[#allocation3 + $0x160] sm:$0xff]
        %v1789 = vld [vmem:[#allocation3 + $0x168] sm:$0xff]
        %v1790 = vld [vmem:[#allocation3 + $0x170] sm:$0xff]
        %v1791 = vld [vmem:[#allocation3 + $0x178] sm:$0xff]
        %v1792 = vld [vmem:[#allocation3 + $0x180] sm:$0xff]
        %v1793 = vld [vmem:[#allocation3 + $0x188] sm:$0xff]
        %v1794 = vld [vmem:[#allocation3 + $0x190] sm:$0xff]
        %v1795 = vld [vmem:[#allocation3 + $0x198] sm:$0xff]
        %v1796 = vld [vmem:[#allocation3 + $0x1a0] sm:$0xff]
        %v1797 = vld [vmem:[#allocation3 + $0x1a8] sm:$0xff]
        %v1798 = vld [vmem:[#allocation3 + $0x1b0] sm:$0xff]
        %v1799 = vld [vmem:[#allocation3 + $0x1b8] sm:$0xff]
        %v1800 = vld [vmem:[#allocation3 + $0x1c0] sm:$0xff]
        %v1801 = vld [vmem:[#allocation3 + $0x1c8] sm:$0xff]
        %v1802 = vld [vmem:[#allocation3 + $0x1d0] sm:$0xff]
        %v1803 = vld [vmem:[#allocation3 + $0x1d8] sm:$0xff]
        %v1804 = vld [vmem:[#allocation3 + $0x1e0] sm:$0xff]
        %v1805 = vld [vmem:[#allocation3 + $0x1e8] sm:$0xff]
        %v1806 = vld [vmem:[#allocation3 + $0x1f0] sm:$0xff]
        %v1807 = vld [vmem:[#allocation3 + $0x1f8] sm:$0xff]
        %v1808 = vld [vmem:[#allocation3 + $0x200] sm:$0xff]
        %v1809 = vld [vmem:[#allocation3 + $0x208] sm:$0xff]
        %v1810 = vld [vmem:[#allocation3 + $0x210] sm:$0xff]
        %v1811 = vld [vmem:[#allocation3 + $0x218] sm:$0xff]
        %v1812 = vld [vmem:[#allocation3 + $0x220] sm:$0xff]
        %v1813 = vld [vmem:[#allocation3 + $0x228] sm:$0xff]
        %v1814 = vld [vmem:[#allocation3 + $0x230] sm:$0xff]
        %v1815 = vld [vmem:[#allocation3 + $0x238] sm:$0xff]
        %v1816 = vld [vmem:[#allocation3 + $0x240] sm:$0xff]
        %v1817 = vld [vmem:[#allocation3 + $0x248] sm:$0xff]
        %v1818 = vld [vmem:[#allocation3 + $0x250] sm:$0xff]
        %v1819 = vld [vmem:[#allocation3 + $0x258] sm:$0xff]
        %v1820 = vld [vmem:[#allocation3 + $0x260] sm:$0xff]
        %v1821 = vld [vmem:[#allocation3 + $0x268] sm:$0xff]
        %v1822 = vld [vmem:[#allocation3 + $0x270] sm:$0xff]
        %v1823 = vld [vmem:[#allocation3 + $0x278] sm:$0xff]
        %v1824 = vld [vmem:[#allocation3 + $0x280] sm:$0xff]
        %v1825 = vld [vmem:[#allocation3 + $0x288] sm:$0xff]
        %v1826 = vld [vmem:[#allocation3 + $0x290] sm:$0xff]
        %v1827 = vld [vmem:[#allocation3 + $0x298] sm:$0xff]
        %v1828 = vld [vmem:[#allocation3 + $0x2a0] sm:$0xff]
        %v1829 = vld [vmem:[#allocation3 + $0x2a8] sm:$0xff]
        %v1830 = vld [vmem:[#allocation3 + $0x2b0] sm:$0xff]
        %v1831 = vld [vmem:[#allocation3 + $0x2b8] sm:$0xff]
        %v1832 = vld [vmem:[#allocation3 + $0x2c0] sm:$0xff]
        %v1833 = vld [vmem:[#allocation3 + $0x2c8] sm:$0xff]
        %v1834 = vld [vmem:[#allocation3 + $0x2d0] sm:$0xff]
        %v1835 = vld [vmem:[#allocation3 + $0x2d8] sm:$0xff]
        %v1836 = vld [vmem:[#allocation3 + $0x2e0] sm:$0xff]
        %v1837 = vld [vmem:[#allocation3 + $0x2e8] sm:$0xff]
        %v1838 = vld [vmem:[#allocation3 + $0x2f0] sm:$0xff]
        %v1839 = vld [vmem:[#allocation3 + $0x2f8] sm:$0xff]
        %v1840 = vld [vmem:[%s1] sm:$0xff]
        %v1841 = vld [vmem:[%s1 + $0x8] sm:$0xff]
        %v1842 = vld [vmem:[%s1 + $0x10] sm:$0xff]
        %v1843 = vld [vmem:[%s1 + $0x18] sm:$0xff]
        %v1844 = vld [vmem:[%s1 + $0x20] sm:$0xff]
        %v1845 = vld [vmem:[%s1 + $0x28] sm:$0xff]
        %v1846 = vld [vmem:[%s1 + $0x30] sm:$0xff]
        %v1847 = vld [vmem:[%s1 + $0x38] sm:$0xff]
        %v1848 = vld [vmem:[%s1 + $0x40] sm:$0xff]
        %v1849 = vld [vmem:[%s1 + $0x48] sm:$0xff]
        %v1850 = vld [vmem:[%s1 + $0x50] sm:$0xff]
        %v1851 = vld [vmem:[%s1 + $0x58] sm:$0xff]
        %v1852 = vld [vmem:[%s1 + $0x60] sm:$0xff]
        %v1853 = vld [vmem:[%s1 + $0x68] sm:$0xff]
        %v1854 = vld [vmem:[%s1 + $0x70] sm:$0xff]
        %v1855 = vld [vmem:[%s1 + $0x78] sm:$0xff]
        %v1856 = vld [vmem:[%s1 + $0x80] sm:$0xff]
        %v1857 = vld [vmem:[%s1 + $0x88] sm:$0xff]
        %v1858 = vld [vmem:[%s1 + $0x90] sm:$0xff]
        %v1859 = vld [vmem:[%s1 + $0x98] sm:$0xff]
        %v1860 = vld [vmem:[%s1 + $0xa0] sm:$0xff]
        %v1861 = vld [vmem:[%s1 + $0xa8] sm:$0xff]
        %v1862 = vld [vmem:[%s1 + $0xb0] sm:$0xff]
        %v1863 = vld [vmem:[%s1 + $0xb8] sm:$0xff]
        %v1864 = vld [vmem:[%s1 + $0xc0] sm:$0xff]
        %v1865 = vld [vmem:[%s1 + $0xc8] sm:$0xff]
        %v1866 = vld [vmem:[%s1 + $0xd0] sm:$0xff]
        %v1867 = vld [vmem:[%s1 + $0xd8] sm:$0xff]
        %v1868 = vld [vmem:[%s1 + $0xe0] sm:$0xff]
        %v1869 = vld [vmem:[%s1 + $0xe8] sm:$0xff]
        %v1870 = vld [vmem:[%s1 + $0xf0] sm:$0xff]
        %v1871 = vld [vmem:[%s1 + $0xf8] sm:$0xff]
        %v1872 = vld [vmem:[%s1 + $0x100] sm:$0xff]
        %v1873 = vld [vmem:[%s1 + $0x108] sm:$0xff]
        %v1874 = vld [vmem:[%s1 + $0x110] sm:$0xff]
        %v1875 = vld [vmem:[%s1 + $0x118] sm:$0xff]
        %v1876 = vld [vmem:[%s2] sm:$0x1]
        %v1877 = vlaneseq
        %v1878 = vshrl.u32 %v1877, 7
        %v1879 = vsub.s32 0, %v1878
        %v1880 = vrot.slane %v1876, %v1879
        %v1882 = vsel %vm201, %v1746, 0
        %v1885 = vsel %vm201, %v1749, 0
        %v1888 = vsel %vm201, %v1752, 0
        %v1891 = vsel %vm201, %v1755, 0
        %v1894 = vsel %vm201, %v1758, 0
        %v1897 = vsel %vm201, %v1761, 0
        %v1900 = vsel %vm201, %v1764, 0
        %v1903 = vsel %vm201, %v1767, 0
        %v1906 = vsel %vm201, %v1770, 0
        %v1909 = vsel %vm201, %v1773, 0
        %v1912 = vsel %vm201, %v1776, 0
        %v1915 = vsel %vm201, %v1779, 0
        %v1918 = vsel %vm201, %v1782, 0
        %v1921 = vsel %vm201, %v1785, 0
        %v1924 = vsel %vm201, %v1788, 0
        %v1927 = vsel %vm201, %v1791, 0
        %v1930 = vsel %vm201, %v1794, 0
        %v1933 = vsel %vm201, %v1797, 0
        %v1936 = vsel %vm201, %v1800, 0
        %v1939 = vsel %vm201, %v1803, 0
        %v1942 = vsel %vm201, %v1806, 0
        %v1945 = vsel %vm201, %v1809, 0
        %v1948 = vsel %vm201, %v1812, 0
        %v1951 = vsel %vm201, %v1815, 0
        %v1954 = vsel %vm201, %v1818, 0
        %v1957 = vsel %vm201, %v1821, 0
        %v1960 = vsel %vm201, %v1824, 0
        %v1963 = vsel %vm201, %v1827, 0
        %v1966 = vsel %vm201, %v1830, 0
        %v1969 = vsel %vm201, %v1833, 0
        %v1972 = vsel %vm201, %v1836, 0
        %v1975 = vsel %vm201, %v1839, 0
        %1977 = vmatprep.subr.mxu0 0.0
        %1978 = vmatpush1.msra.mxu0 %v1855
        %1979 = vmatprep.subr.mxu0 0.0
        %1980 = vmatpush1.msra.mxu0 %v1854
        %1981 = vmatprep.subr.mxu0 0.0
        %1982 = vmatpush1.msra.mxu0 %v1853
        %1983 = vmatprep.subr.mxu0 0.0
        %1984 = vmatpush1.msra.mxu0 %v1852
        %1985 = vmatprep.subr.mxu0 0.0
        %1986 = vmatpush1.msra.mxu0 %v1851
        %1987 = vmatprep.subr.mxu0 0.0
        %1988 = vmatpush1.msra.mxu0 %v1850
        %1989 = vmatprep.subr.mxu0 0.0
        %1990 = vmatpush1.msra.mxu0 %v1849
        %1991 = vmatprep.subr.mxu0 0.0
        %1992 = vmatpush1.msra.mxu0 %v1848
        %1993 = vmatprep.subr.mxu0 0.0
        %1994 = vmatpush1.msra.mxu0 %v1847
        %1995 = vmatprep.subr.mxu0 0.0
        %1996 = vmatpush1.msra.mxu0 %v1846
        %1997 = vmatprep.subr.mxu0 0.0
        %1998 = vmatpush1.msra.mxu0 %v1845
        %1999 = vmatprep.subr.mxu0 0.0
        %2000 = vmatpush1.msra.mxu0 %v1844
        %2001 = vmatprep.subr.mxu0 0.0
        %2002 = vmatpush1.msra.mxu0 %v1843
        %2003 = vmatprep.subr.mxu0 0.0
        %2004 = vmatpush1.msra.mxu0 %v1842
        %2005 = vmatprep.subr.mxu0 0.0
        %2006 = vmatpush1.msra.mxu0 %v1841
        %2007 = vmatprep.subr.mxu0 0.0
        %2008 = vmatpush1.msra.mxu0 %v1840
        %2009 = vmatprep.subr.mxu0 0.0
        %2010 = vmatpush2.msra.mxu0 %v1871
        %2011 = vmatprep.subr.mxu0 0.0
        %2012 = vmatpush2.msra.mxu0 %v1870
        %2013 = vmatprep.subr.mxu0 0.0
        %2014 = vmatpush2.msra.mxu0 %v1869
        %2015 = vmatprep.subr.mxu0 0.0
        %2016 = vmatpush2.msra.mxu0 %v1868
        %2017 = vmatprep.subr.mxu0 0.0
        %2018 = vmatpush2.msra.mxu0 %v1867
        %2019 = vmatprep.subr.mxu0 0.0
        %2020 = vmatpush2.msra.mxu0 %v1866
        %2021 = vmatprep.subr.mxu0 0.0
        %2022 = vmatpush2.msra.mxu0 %v1865
        %2023 = vmatprep.subr.mxu0 0.0
        %2024 = vmatpush2.msra.mxu0 %v1864
        %2025 = vmatprep.subr.mxu0 0.0
        %2026 = vmatpush2.msra.mxu0 %v1863
        %2027 = vmatprep.subr.mxu0 0.0
        %2028 = vmatpush2.msra.mxu0 %v1862
        %2029 = vmatprep.subr.mxu0 0.0
        %2030 = vmatpush2.msra.mxu0 %v1861
        %2031 = vmatprep.subr.mxu0 0.0
        %2032 = vmatpush2.msra.mxu0 %v1860
        %2033 = vmatprep.subr.mxu0 0.0
        %2034 = vmatpush2.msra.mxu0 %v1859
        %2035 = vmatprep.subr.mxu0 0.0
        %2036 = vmatpush2.msra.mxu0 %v1858
        %2037 = vmatprep.subr.mxu0 0.0
        %2038 = vmatpush2.msra.mxu0 %v1857
        %2039 = vmatprep.subr.mxu0 0.0
        %2040 = vmatpush2.msra.mxu0 %v1856
        %2041 = vmatprep.mubr.f32.mxu0 %v1745
        %2042 = vmatmul.mubr.f32.gmra.mxu0 %v1744
        %v2043 = vpop.f32.mrf.mxu0
        %v2044 = vadd.f32 %v1880, %v2043
        %v2045 = vpop.f32.mrf.mxu0
        %2046 = vmatprep.mubr.f32.mxu0 %v1748
        %2047 = vmatmul.mubr.f32.gmra.mxu0 %v1747
        %v2048 = vpop.f32.mrf.mxu0
        %v2049 = vadd.f32 %v1880, %v2048
        %v2050 = vpop.f32.mrf.mxu0
        %2051 = vmatprep.mubr.f32.mxu0 %v1751
        %2052 = vmatmul.mubr.f32.gmra.mxu0 %v1750
        %v2053 = vpop.f32.mrf.mxu0
        %v2054 = vadd.f32 %v1880, %v2053
        %v2055 = vpop.f32.mrf.mxu0
        %2056 = vmatprep.mubr.f32.mxu0 %v1754
        %2057 = vmatmul.mubr.f32.gmra.mxu0 %v1753
        %v2058 = vpop.f32.mrf.mxu0
        %v2059 = vadd.f32 %v1880, %v2058
        %v2060 = vpop.f32.mrf.mxu0
        %2061 = vmatprep.mubr.f32.mxu0 %v1757
        %2062 = vmatmul.mubr.f32.gmra.mxu0 %v1756
        %v2063 = vpop.f32.mrf.mxu0
        %v2064 = vadd.f32 %v1880, %v2063
        %v2065 = vpop.f32.mrf.mxu0
        %2066 = vmatprep.mubr.f32.mxu0 %v1760
        %2067 = vmatmul.mubr.f32.gmra.mxu0 %v1759
        %v2068 = vpop.f32.mrf.mxu0
        %v2069 = vadd.f32 %v1880, %v2068
        %v2070 = vpop.f32.mrf.mxu0
        %2071 = vmatprep.mubr.f32.mxu0 %v1763
        %2072 = vmatmul.mubr.f32.gmra.mxu0 %v1762
        %v2073 = vpop.f32.mrf.mxu0
        %v2074 = vadd.f32 %v1880, %v2073
        %v2075 = vpop.f32.mrf.mxu0
        %2076 = vmatprep.mubr.f32.mxu0 %v1766
        %2077 = vmatmul.mubr.f32.gmra.mxu0 %v1765
        %v2078 = vpop.f32.mrf.mxu0
        %v2079 = vadd.f32 %v1880, %v2078
        %v2080 = vpop.f32.mrf.mxu0
        %2081 = vmatprep.mubr.f32.mxu0 %v1769
        %2082 = vmatmul.mubr.f32.gmra.mxu0 %v1768
        %v2083 = vpop.f32.mrf.mxu0
        %v2084 = vadd.f32 %v1880, %v2083
        %v2085 = vpop.f32.mrf.mxu0
        %2086 = vmatprep.mubr.f32.mxu0 %v1772
        %2087 = vmatmul.mubr.f32.gmra.mxu0 %v1771
        %v2088 = vpop.f32.mrf.mxu0
        %v2089 = vadd.f32 %v1880, %v2088
        %v2090 = vpop.f32.mrf.mxu0
        %2091 = vmatprep.mubr.f32.mxu0 %v1775
        %2092 = vmatmul.mubr.f32.gmra.mxu0 %v1774
        %v2093 = vpop.f32.mrf.mxu0
        %v2094 = vadd.f32 %v1880, %v2093
        %v2095 = vpop.f32.mrf.mxu0
        %2096 = vmatprep.mubr.f32.mxu0 %v1778
        %2097 = vmatmul.mubr.f32.gmra.mxu0 %v1777
        %v2098 = vpop.f32.mrf.mxu0
        %v2099 = vadd.f32 %v1880, %v2098
        %v2100 = vpop.f32.mrf.mxu0
        %2101 = vmatprep.mubr.f32.mxu0 %v1781
        %2102 = vmatmul.mubr.f32.gmra.mxu0 %v1780
        %v2103 = vpop.f32.mrf.mxu0
        %v2104 = vadd.f32 %v1880, %v2103
        %v2105 = vpop.f32.mrf.mxu0
        %2106 = vmatprep.mubr.f32.mxu0 %v1784
        %2107 = vmatmul.mubr.f32.gmra.mxu0 %v1783
        %v2108 = vpop.f32.mrf.mxu0
        %v2109 = vadd.f32 %v1880, %v2108
        %v2110 = vpop.f32.mrf.mxu0
        %2111 = vmatprep.mubr.f32.mxu0 %v1787
        %2112 = vmatmul.mubr.f32.gmra.mxu0 %v1786
        %v2113 = vpop.f32.mrf.mxu0
        %v2114 = vadd.f32 %v1880, %v2113
        %v2115 = vpop.f32.mrf.mxu0
        %2116 = vmatprep.mubr.f32.mxu0 %v1790
        %2117 = vmatmul.mubr.f32.gmra.mxu0 %v1789
        %v2118 = vpop.f32.mrf.mxu0
        %v2119 = vadd.f32 %v1880, %v2118
        %v2120 = vpop.f32.mrf.mxu0
        %2121 = vmatprep.mubr.f32.mxu0 %v1793
        %2122 = vmatmul.mubr.f32.gmra.mxu0 %v1792
        %v2123 = vpop.f32.mrf.mxu0
        %v2124 = vadd.f32 %v1880, %v2123
        %v2125 = vpop.f32.mrf.mxu0
        %2126 = vmatprep.mubr.f32.mxu0 %v1796
        %2127 = vmatmul.mubr.f32.gmra.mxu0 %v1795
        %v2128 = vpop.f32.mrf.mxu0
        %v2129 = vadd.f32 %v1880, %v2128
        %v2130 = vpop.f32.mrf.mxu0
        %2131 = vmatprep.mubr.f32.mxu0 %v1799
        %2132 = vmatmul.mubr.f32.gmra.mxu0 %v1798
        %v2133 = vpop.f32.mrf.mxu0
        %v2134 = vadd.f32 %v1880, %v2133
        %v2135 = vpop.f32.mrf.mxu0
        %2136 = vmatprep.mubr.f32.mxu0 %v1802
        %2137 = vmatmul.mubr.f32.gmra.mxu0 %v1801
        %v2138 = vpop.f32.mrf.mxu0
        %v2139 = vadd.f32 %v1880, %v2138
        %v2140 = vpop.f32.mrf.mxu0
        %2141 = vmatprep.mubr.f32.mxu0 %v1805
        %2142 = vmatmul.mubr.f32.gmra.mxu0 %v1804
        %v2143 = vpop.f32.mrf.mxu0
        %v2144 = vadd.f32 %v1880, %v2143
        %v2145 = vpop.f32.mrf.mxu0
        %2146 = vmatprep.mubr.f32.mxu0 %v1808
        %2147 = vmatmul.mubr.f32.gmra.mxu0 %v1807
        %v2148 = vpop.f32.mrf.mxu0
        %v2149 = vadd.f32 %v1880, %v2148
        %v2150 = vpop.f32.mrf.mxu0
        %2151 = vmatprep.mubr.f32.mxu0 %v1811
        %2152 = vmatmul.mubr.f32.gmra.mxu0 %v1810
        %v2153 = vpop.f32.mrf.mxu0
        %v2154 = vadd.f32 %v1880, %v2153
        %v2155 = vpop.f32.mrf.mxu0
        %2156 = vmatprep.mubr.f32.mxu0 %v1814
        %2157 = vmatmul.mubr.f32.gmra.mxu0 %v1813
        %v2158 = vpop.f32.mrf.mxu0
        %v2159 = vadd.f32 %v1880, %v2158
        %v2160 = vpop.f32.mrf.mxu0
        %2161 = vmatprep.mubr.f32.mxu0 %v1817
        %2162 = vmatmul.mubr.f32.gmra.mxu0 %v1816
        %v2163 = vpop.f32.mrf.mxu0
        %v2164 = vadd.f32 %v1880, %v2163
        %v2165 = vpop.f32.mrf.mxu0
        %2166 = vmatprep.mubr.f32.mxu0 %v1820
        %2167 = vmatmul.mubr.f32.gmra.mxu0 %v1819
        %v2168 = vpop.f32.mrf.mxu0
        %v2169 = vadd.f32 %v1880, %v2168
        %v2170 = vpop.f32.mrf.mxu0
        %2171 = vmatprep.mubr.f32.mxu0 %v1823
        %2172 = vmatmul.mubr.f32.gmra.mxu0 %v1822
        %v2173 = vpop.f32.mrf.mxu0
        %v2174 = vadd.f32 %v1880, %v2173
        %v2175 = vpop.f32.mrf.mxu0
        %2176 = vmatprep.mubr.f32.mxu0 %v1826
        %2177 = vmatmul.mubr.f32.gmra.mxu0 %v1825
        %v2178 = vpop.f32.mrf.mxu0
        %v2179 = vadd.f32 %v1880, %v2178
        %v2180 = vpop.f32.mrf.mxu0
        %2181 = vmatprep.mubr.f32.mxu0 %v1829
        %2182 = vmatmul.mubr.f32.gmra.mxu0 %v1828
        %v2183 = vpop.f32.mrf.mxu0
        %v2184 = vadd.f32 %v1880, %v2183
        %v2185 = vpop.f32.mrf.mxu0
        %2186 = vmatprep.mubr.f32.mxu0 %v1832
        %2187 = vmatmul.mubr.f32.gmra.mxu0 %v1831
        %v2188 = vpop.f32.mrf.mxu0
        %v2189 = vadd.f32 %v1880, %v2188
        %v2190 = vpop.f32.mrf.mxu0
        %2191 = vmatprep.mubr.f32.mxu0 %v1835
        %2192 = vmatmul.mubr.f32.gmra.mxu0 %v1834
        %v2193 = vpop.f32.mrf.mxu0
        %v2194 = vadd.f32 %v1880, %v2193
        %v2195 = vpop.f32.mrf.mxu0
        %2196 = vmatprep.mubr.f32.mxu0 %v1838
        %2197 = vmatmul.mubr.f32.gmra.mxu0 %v1837
        %v2198 = vpop.f32.mrf.mxu0
        %v2199 = vadd.f32 %v1880, %v2198
        %v2200 = vpop.f32.mrf.mxu0
        %2201 = vdwg.mxu0
        %2202 = vmatprep.subr.mxu0 0.0
        %2203 = vmatpush1.msra.mxu0 0.0
        %2204 = vmatprep.subr.mxu0 0.0
        %2205 = vmatpush1.msra.mxu0 0.0
        %2206 = vmatprep.subr.mxu0 0.0
        %2207 = vmatpush1.msra.mxu0 0.0
        %2208 = vmatprep.subr.mxu0 0.0
        %2209 = vmatpush1.msra.mxu0 0.0
        %2210 = vmatprep.subr.mxu0 0.0
        %2211 = vmatpush1.msra.mxu0 0.0
        %2212 = vmatprep.subr.mxu0 0.0
        %2213 = vmatpush1.msra.mxu0 0.0
        %2214 = vmatprep.subr.mxu0 0.0
        %2215 = vmatpush1.msra.mxu0 0.0
        %2216 = vmatprep.subr.mxu0 0.0
        %2217 = vmatpush1.msra.mxu0 0.0
        %2218 = vmatprep.subr.mxu0 0.0
        %2219 = vmatpush1.msra.mxu0 0.0
        %2220 = vmatprep.subr.mxu0 0.0
        %2221 = vmatpush1.msra.mxu0 0.0
        %2222 = vmatprep.subr.mxu0 0.0
        %2223 = vmatpush1.msra.mxu0 0.0
        %2224 = vmatprep.subr.mxu0 0.0
        %2225 = vmatpush1.msra.mxu0 0.0
        %2226 = vmatprep.subr.mxu0 0.0
        %2227 = vmatpush1.msra.mxu0 %v1875
        %2228 = vmatprep.subr.mxu0 0.0
        %2229 = vmatpush1.msra.mxu0 %v1874
        %2230 = vmatprep.subr.mxu0 0.0
        %2231 = vmatpush1.msra.mxu0 %v1873
        %2232 = vmatprep.subr.mxu0 0.0
        %2233 = vmatpush1.msra.mxu0 %v1872
        %2234 = vmatprep.subr.mxu0 0.0
        %2235 = vmatpush2.msra.mxu0 0.0
        %2236 = vmatprep.subr.mxu0 0.0
        %2237 = vmatpush2.msra.mxu0 0.0
        %2238 = vmatprep.subr.mxu0 0.0
        %2239 = vmatpush2.msra.mxu0 0.0
        %2240 = vmatprep.subr.mxu0 0.0
        %2241 = vmatpush2.msra.mxu0 0.0
        %2242 = vmatprep.subr.mxu0 0.0
        %2243 = vmatpush2.msra.mxu0 0.0
        %2244 = vmatprep.subr.mxu0 0.0
        %2245 = vmatpush2.msra.mxu0 0.0
        %2246 = vmatprep.subr.mxu0 0.0
        %2247 = vmatpush2.msra.mxu0 0.0
        %2248 = vmatprep.subr.mxu0 0.0
        %2249 = vmatpush2.msra.mxu0 0.0
        %2250 = vmatprep.subr.mxu0 0.0
        %2251 = vmatpush2.msra.mxu0 0.0
        %2252 = vmatprep.subr.mxu0 0.0
        %2253 = vmatpush2.msra.mxu0 0.0
        %2254 = vmatprep.subr.mxu0 0.0
        %2255 = vmatpush2.msra.mxu0 0.0
        %2256 = vmatprep.subr.mxu0 0.0
        %2257 = vmatpush2.msra.mxu0 0.0
        %2258 = vmatprep.subr.mxu0 0.0
        %2259 = vmatpush2.msra.mxu0 0.0
        %2260 = vmatprep.subr.mxu0 0.0
        %2261 = vmatpush2.msra.mxu0 0.0
        %2262 = vmatprep.subr.mxu0 0.0
        %2263 = vmatpush2.msra.mxu0 0.0
        %2264 = vmatprep.subr.mxu0 0.0
        %2265 = vmatpush2.msra.mxu0 0.0
        %2266 = vmatprep.mubr.f32.mxu0 0.0
        %2267 = vmatmul.mubr.f32.gmra.mxu0 %v1882
        %v2268 = vpop.f32.mrf.mxu0
        %v2269 = vadd.f32 %v2044, %v2268
        %v2270 = vpop.f32.mrf.mxu0
        %2271 = vmatprep.mubr.f32.mxu0 0.0
        %2272 = vmatmul.mubr.f32.gmra.mxu0 %v1885
        %v2273 = vpop.f32.mrf.mxu0
        %v2274 = vadd.f32 %v2049, %v2273
        %v2275 = vpop.f32.mrf.mxu0
        %2276 = vmatprep.mubr.f32.mxu0 0.0
        %2277 = vmatmul.mubr.f32.gmra.mxu0 %v1888
        %v2278 = vpop.f32.mrf.mxu0
        %v2279 = vadd.f32 %v2054, %v2278
        %v2280 = vpop.f32.mrf.mxu0
        %2281 = vmatprep.mubr.f32.mxu0 0.0
        %2282 = vmatmul.mubr.f32.gmra.mxu0 %v1891
        %v2283 = vpop.f32.mrf.mxu0
        %v2284 = vadd.f32 %v2059, %v2283
        %v2285 = vpop.f32.mrf.mxu0
        %2286 = vmatprep.mubr.f32.mxu0 0.0
        %2287 = vmatmul.mubr.f32.gmra.mxu0 %v1894
        %v2288 = vpop.f32.mrf.mxu0
        %v2289 = vadd.f32 %v2064, %v2288
        %v2290 = vpop.f32.mrf.mxu0
        %2291 = vmatprep.mubr.f32.mxu0 0.0
        %2292 = vmatmul.mubr.f32.gmra.mxu0 %v1897
        %v2293 = vpop.f32.mrf.mxu0
        %v2294 = vadd.f32 %v2069, %v2293
        %v2295 = vpop.f32.mrf.mxu0
        %2296 = vmatprep.mubr.f32.mxu0 0.0
        %2297 = vmatmul.mubr.f32.gmra.mxu0 %v1900
        %v2298 = vpop.f32.mrf.mxu0
        %v2299 = vadd.f32 %v2074, %v2298
        %v2300 = vpop.f32.mrf.mxu0
        %2301 = vmatprep.mubr.f32.mxu0 0.0
        %2302 = vmatmul.mubr.f32.gmra.mxu0 %v1903
        %v2303 = vpop.f32.mrf.mxu0
        %v2304 = vadd.f32 %v2079, %v2303
        %v2305 = vpop.f32.mrf.mxu0
        %2306 = vmatprep.mubr.f32.mxu0 0.0
        %2307 = vmatmul.mubr.f32.gmra.mxu0 %v1906
        %v2308 = vpop.f32.mrf.mxu0
        %v2309 = vadd.f32 %v2084, %v2308
        %v2310 = vpop.f32.mrf.mxu0
        %2311 = vmatprep.mubr.f32.mxu0 0.0
        %2312 = vmatmul.mubr.f32.gmra.mxu0 %v1909
        %v2313 = vpop.f32.mrf.mxu0
        %v2314 = vadd.f32 %v2089, %v2313
        %v2315 = vpop.f32.mrf.mxu0
        %2316 = vmatprep.mubr.f32.mxu0 0.0
        %2317 = vmatmul.mubr.f32.gmra.mxu0 %v1912
        %v2318 = vpop.f32.mrf.mxu0
        %v2319 = vadd.f32 %v2094, %v2318
        %v2320 = vpop.f32.mrf.mxu0
        %2321 = vmatprep.mubr.f32.mxu0 0.0
        %2322 = vmatmul.mubr.f32.gmra.mxu0 %v1915
        %v2323 = vpop.f32.mrf.mxu0
        %v2324 = vadd.f32 %v2099, %v2323
        %v2325 = vpop.f32.mrf.mxu0
        %2326 = vmatprep.mubr.f32.mxu0 0.0
        %2327 = vmatmul.mubr.f32.gmra.mxu0 %v1918
        %v2328 = vpop.f32.mrf.mxu0
        %v2329 = vadd.f32 %v2104, %v2328
        %v2330 = vpop.f32.mrf.mxu0
        %2331 = vmatprep.mubr.f32.mxu0 0.0
        %2332 = vmatmul.mubr.f32.gmra.mxu0 %v1921
        %v2333 = vpop.f32.mrf.mxu0
        %v2334 = vadd.f32 %v2109, %v2333
        %v2335 = vpop.f32.mrf.mxu0
        %2336 = vmatprep.mubr.f32.mxu0 0.0
        %2337 = vmatmul.mubr.f32.gmra.mxu0 %v1924
        %v2338 = vpop.f32.mrf.mxu0
        %v2339 = vadd.f32 %v2114, %v2338
        %v2340 = vpop.f32.mrf.mxu0
        %2341 = vmatprep.mubr.f32.mxu0 0.0
        %2342 = vmatmul.mubr.f32.gmra.mxu0 %v1927
        %v2343 = vpop.f32.mrf.mxu0
        %v2344 = vadd.f32 %v2119, %v2343
        %v2345 = vpop.f32.mrf.mxu0
        %2346 = vmatprep.mubr.f32.mxu0 0.0
        %2347 = vmatmul.mubr.f32.gmra.mxu0 %v1930
        %v2348 = vpop.f32.mrf.mxu0
        %v2349 = vadd.f32 %v2124, %v2348
        %v2350 = vpop.f32.mrf.mxu0
        %2351 = vmatprep.mubr.f32.mxu0 0.0
        %2352 = vmatmul.mubr.f32.gmra.mxu0 %v1933
        %v2353 = vpop.f32.mrf.mxu0
        %v2354 = vadd.f32 %v2129, %v2353
        %v2355 = vpop.f32.mrf.mxu0
        %2356 = vmatprep.mubr.f32.mxu0 0.0
        %2357 = vmatmul.mubr.f32.gmra.mxu0 %v1936
        %v2358 = vpop.f32.mrf.mxu0
        %v2359 = vadd.f32 %v2134, %v2358
        %v2360 = vpop.f32.mrf.mxu0
        %2361 = vmatprep.mubr.f32.mxu0 0.0
        %2362 = vmatmul.mubr.f32.gmra.mxu0 %v1939
        %v2363 = vpop.f32.mrf.mxu0
        %v2364 = vadd.f32 %v2139, %v2363
        %v2365 = vpop.f32.mrf.mxu0
        %2366 = vmatprep.mubr.f32.mxu0 0.0
        %2367 = vmatmul.mubr.f32.gmra.mxu0 %v1942
        %v2368 = vpop.f32.mrf.mxu0
        %v2369 = vadd.f32 %v2144, %v2368
        %v2370 = vpop.f32.mrf.mxu0
        %2371 = vmatprep.mubr.f32.mxu0 0.0
        %2372 = vmatmul.mubr.f32.gmra.mxu0 %v1945
        %v2373 = vpop.f32.mrf.mxu0
        %v2374 = vadd.f32 %v2149, %v2373
        %v2375 = vpop.f32.mrf.mxu0
        %2376 = vmatprep.mubr.f32.mxu0 0.0
        %2377 = vmatmul.mubr.f32.gmra.mxu0 %v1948
        %v2378 = vpop.f32.mrf.mxu0
        %v2379 = vadd.f32 %v2154, %v2378
        %v2380 = vpop.f32.mrf.mxu0
        %2381 = vmatprep.mubr.f32.mxu0 0.0
        %2382 = vmatmul.mubr.f32.gmra.mxu0 %v1951
        %v2383 = vpop.f32.mrf.mxu0
        %v2384 = vadd.f32 %v2159, %v2383
        %v2385 = vpop.f32.mrf.mxu0
        %2386 = vmatprep.mubr.f32.mxu0 0.0
        %2387 = vmatmul.mubr.f32.gmra.mxu0 %v1954
        %v2388 = vpop.f32.mrf.mxu0
        %v2389 = vadd.f32 %v2164, %v2388
        %v2390 = vpop.f32.mrf.mxu0
        %2391 = vmatprep.mubr.f32.mxu0 0.0
        %2392 = vmatmul.mubr.f32.gmra.mxu0 %v1957
        %v2393 = vpop.f32.mrf.mxu0
        %v2394 = vadd.f32 %v2169, %v2393
        %v2395 = vpop.f32.mrf.mxu0
        %2396 = vmatprep.mubr.f32.mxu0 0.0
        %2397 = vmatmul.mubr.f32.gmra.mxu0 %v1960
        %v2398 = vpop.f32.mrf.mxu0
        %v2399 = vadd.f32 %v2174, %v2398
        %v2400 = vpop.f32.mrf.mxu0
        %2401 = vmatprep.mubr.f32.mxu0 0.0
        %2402 = vmatmul.mubr.f32.gmra.mxu0 %v1963
        %v2403 = vpop.f32.mrf.mxu0
        %v2404 = vadd.f32 %v2179, %v2403
        %v2405 = vpop.f32.mrf.mxu0
        %2406 = vmatprep.mubr.f32.mxu0 0.0
        %2407 = vmatmul.mubr.f32.gmra.mxu0 %v1966
        %v2408 = vpop.f32.mrf.mxu0
        %v2409 = vadd.f32 %v2184, %v2408
        %v2410 = vpop.f32.mrf.mxu0
        %2411 = vmatprep.mubr.f32.mxu0 0.0
        %2412 = vmatmul.mubr.f32.gmra.mxu0 %v1969
        %v2413 = vpop.f32.mrf.mxu0
        %v2414 = vadd.f32 %v2189, %v2413
        %v2415 = vpop.f32.mrf.mxu0
        %2416 = vmatprep.mubr.f32.mxu0 0.0
        %2417 = vmatmul.mubr.f32.gmra.mxu0 %v1972
        %v2418 = vpop.f32.mrf.mxu0
        %v2419 = vadd.f32 %v2194, %v2418
        %v2420 = vpop.f32.mrf.mxu0
        %2421 = vmatprep.mubr.f32.mxu0 0.0
        %2422 = vmatmul.mubr.f32.gmra.mxu0 %v1975
        %v2423 = vpop.f32.mrf.mxu0
        %v2424 = vadd.f32 %v2199, %v2423
        %v2425 = vpop.f32.mrf.mxu0
        %2426 = vdwg.mxu0
        %v2427 = vmax.f32 %v2269, 0.0
        %v2428 = vmax.f32 %v2274, 0.0
        %v2429 = vmax.f32 %v2279, 0.0
        %v2430 = vmax.f32 %v2284, 0.0
        %v2431 = vmax.f32 %v2289, 0.0
        %v2432 = vmax.f32 %v2294, 0.0
        %v2433 = vmax.f32 %v2299, 0.0
        %v2434 = vmax.f32 %v2304, 0.0
        %v2435 = vmax.f32 %v2309, 0.0
        %v2436 = vmax.f32 %v2314, 0.0
        %v2437 = vmax.f32 %v2319, 0.0
        %v2438 = vmax.f32 %v2324, 0.0
        %v2439 = vmax.f32 %v2329, 0.0
        %v2440 = vmax.f32 %v2334, 0.0
        %v2441 = vmax.f32 %v2339, 0.0
        %v2442 = vmax.f32 %v2344, 0.0
        %v2443 = vmax.f32 %v2349, 0.0
        %v2444 = vmax.f32 %v2354, 0.0
        %v2445 = vmax.f32 %v2359, 0.0
        %v2446 = vmax.f32 %v2364, 0.0
        %v2447 = vmax.f32 %v2369, 0.0
        %v2448 = vmax.f32 %v2374, 0.0
        %v2449 = vmax.f32 %v2379, 0.0
        %v2450 = vmax.f32 %v2384, 0.0
        %v2451 = vmax.f32 %v2389, 0.0
        %v2452 = vmax.f32 %v2394, 0.0
        %v2453 = vmax.f32 %v2399, 0.0
        %v2454 = vmax.f32 %v2404, 0.0
        %v2455 = vmax.f32 %v2409, 0.0
        %v2456 = vmax.f32 %v2414, 0.0
        %v2457 = vmax.f32 %v2419, 0.0
        %v2458 = vmax.f32 %v2424, 0.0
        %v2459 = vld [vmem:[%s163] sm:$0xff]
        %v2460 = vld [vmem:[%s163 + $0x8] sm:$0xff]
        %v2461 = vld [vmem:[%s163 + $0x10] sm:$0xff]
        %v2462 = vld [vmem:[%s163 + $0x18] sm:$0xff]
        %v2463 = vld [vmem:[%s163 + $0x20] sm:$0xff]
        %v2464 = vld [vmem:[%s163 + $0x28] sm:$0xff]
        %v2465 = vld [vmem:[%s163 + $0x30] sm:$0xff]
        %v2466 = vld [vmem:[%s163 + $0x38] sm:$0xff]
        %v2467 = vld [vmem:[%s163 + $0x40] sm:$0xff]
        %v2468 = vld [vmem:[%s163 + $0x48] sm:$0xff]
        %v2469 = vld [vmem:[%s163 + $0x50] sm:$0xff]
        %v2470 = vld [vmem:[%s163 + $0x58] sm:$0xff]
        %v2471 = vld [vmem:[%s163 + $0x60] sm:$0xff]
        %v2472 = vld [vmem:[%s163 + $0x68] sm:$0xff]
        %v2473 = vld [vmem:[%s163 + $0x70] sm:$0xff]
        %v2474 = vld [vmem:[%s163 + $0x78] sm:$0xff]
        %v2475 = vld [vmem:[%s163 + $0x80] sm:$0xff]
        %v2476 = vld [vmem:[%s163 + $0x88] sm:$0xff]
        %v2477 = vld [vmem:[%s163 + $0x90] sm:$0xff]
        %v2478 = vld [vmem:[%s163 + $0x98] sm:$0xff]
        %v2479 = vld [vmem:[%s163 + $0xa0] sm:$0xff]
        %v2480 = vld [vmem:[%s163 + $0xa8] sm:$0xff]
        %v2481 = vld [vmem:[%s163 + $0xb0] sm:$0xff]
        %v2482 = vld [vmem:[%s163 + $0xb8] sm:$0xff]
        %v2483 = vld [vmem:[%s163 + $0xc0] sm:$0xff]
        %v2484 = vld [vmem:[%s163 + $0xc8] sm:$0xff]
        %v2485 = vld [vmem:[%s163 + $0xd0] sm:$0xff]
        %v2486 = vld [vmem:[%s163 + $0xd8] sm:$0xff]
        %v2487 = vld [vmem:[%s163 + $0xe0] sm:$0xff]
        %v2488 = vld [vmem:[%s163 + $0xe8] sm:$0xff]
        %v2489 = vld [vmem:[%s163 + $0xf0] sm:$0xff]
        %v2490 = vld [vmem:[%s163 + $0xf8] sm:$0xff]
        %v2491 = vadd.f32 %v2459, %v2427
        %v2492 = vadd.f32 %v2460, %v2428
        %v2493 = vadd.f32 %v2461, %v2429
        %v2494 = vadd.f32 %v2462, %v2430
        %v2495 = vadd.f32 %v2463, %v2431
        %v2496 = vadd.f32 %v2464, %v2432
        %v2497 = vadd.f32 %v2465, %v2433
        %v2498 = vadd.f32 %v2466, %v2434
        %v2499 = vadd.f32 %v2467, %v2435
        %v2500 = vadd.f32 %v2468, %v2436
        %v2501 = vadd.f32 %v2469, %v2437
        %v2502 = vadd.f32 %v2470, %v2438
        %v2503 = vadd.f32 %v2471, %v2439
        %v2504 = vadd.f32 %v2472, %v2440
        %v2505 = vadd.f32 %v2473, %v2441
        %v2506 = vadd.f32 %v2474, %v2442
        %v2507 = vadd.f32 %v2475, %v2443
        %v2508 = vadd.f32 %v2476, %v2444
        %v2509 = vadd.f32 %v2477, %v2445
        %v2510 = vadd.f32 %v2478, %v2446
        %v2511 = vadd.f32 %v2479, %v2447
        %v2512 = vadd.f32 %v2480, %v2448
        %v2513 = vadd.f32 %v2481, %v2449
        %v2514 = vadd.f32 %v2482, %v2450
        %v2515 = vadd.f32 %v2483, %v2451
        %v2516 = vadd.f32 %v2484, %v2452
        %v2517 = vadd.f32 %v2485, %v2453
        %v2518 = vadd.f32 %v2486, %v2454
        %v2519 = vadd.f32 %v2487, %v2455
        %v2520 = vadd.f32 %v2488, %v2456
        %v2521 = vadd.f32 %v2489, %v2457
        %v2522 = vadd.f32 %v2490, %v2458
        %2523 = vst.msk [vmem:[%s163] sm:$0xff] %vm201, %v2491
        %2524 = vst.msk [vmem:[%s163 + $0x8] sm:$0xff] %vm201, %v2492
        %2525 = vst.msk [vmem:[%s163 + $0x10] sm:$0xff] %vm201, %v2493
        %2526 = vst.msk [vmem:[%s163 + $0x18] sm:$0xff] %vm201, %v2494
        %2527 = vst.msk [vmem:[%s163 + $0x20] sm:$0xff] %vm201, %v2495
        %2528 = vst.msk [vmem:[%s163 + $0x28] sm:$0xff] %vm201, %v2496
        %2529 = vst.msk [vmem:[%s163 + $0x30] sm:$0xff] %vm201, %v2497
        %2530 = vst.msk [vmem:[%s163 + $0x38] sm:$0xff] %vm201, %v2498
        %2531 = vst.msk [vmem:[%s163 + $0x40] sm:$0xff] %vm201, %v2499
        %2532 = vst.msk [vmem:[%s163 + $0x48] sm:$0xff] %vm201, %v2500
        %2533 = vst.msk [vmem:[%s163 + $0x50] sm:$0xff] %vm201, %v2501
        %2534 = vst.msk [vmem:[%s163 + $0x58] sm:$0xff] %vm201, %v2502
        %2535 = vst.msk [vmem:[%s163 + $0x60] sm:$0xff] %vm201, %v2503
        %2536 = vst.msk [vmem:[%s163 + $0x68] sm:$0xff] %vm201, %v2504
        %2537 = vst.msk [vmem:[%s163 + $0x70] sm:$0xff] %vm201, %v2505
        %2538 = vst.msk [vmem:[%s163 + $0x78] sm:$0xff] %vm201, %v2506
        %2539 = vst.msk [vmem:[%s163 + $0x80] sm:$0xff] %vm201, %v2507
        %2540 = vst.msk [vmem:[%s163 + $0x88] sm:$0xff] %vm201, %v2508
        %2541 = vst.msk [vmem:[%s163 + $0x90] sm:$0xff] %vm201, %v2509
        %2542 = vst.msk [vmem:[%s163 + $0x98] sm:$0xff] %vm201, %v2510
        %2543 = vst.msk [vmem:[%s163 + $0xa0] sm:$0xff] %vm201, %v2511
        %2544 = vst.msk [vmem:[%s163 + $0xa8] sm:$0xff] %vm201, %v2512
        %2545 = vst.msk [vmem:[%s163 + $0xb0] sm:$0xff] %vm201, %v2513
        %2546 = vst.msk [vmem:[%s163 + $0xb8] sm:$0xff] %vm201, %v2514
        %2547 = vst.msk [vmem:[%s163 + $0xc0] sm:$0xff] %vm201, %v2515
        %2548 = vst.msk [vmem:[%s163 + $0xc8] sm:$0xff] %vm201, %v2516
        %2549 = vst.msk [vmem:[%s163 + $0xd0] sm:$0xff] %vm201, %v2517
        %2550 = vst.msk [vmem:[%s163 + $0xd8] sm:$0xff] %vm201, %v2518
        %2551 = vst.msk [vmem:[%s163 + $0xe0] sm:$0xff] %vm201, %v2519
        %2552 = vst.msk [vmem:[%s163 + $0xe8] sm:$0xff] %vm201, %v2520
        %2553 = vst.msk [vmem:[%s163 + $0xf0] sm:$0xff] %vm201, %v2521
        %2554 = vst.msk [vmem:[%s163 + $0xf8] sm:$0xff] %vm201, %v2522
        %2555 = vst.msk [vmem:[%s362 + $0x8] sm:$0xff] %vm201, %v2427
        %2556 = vst.msk [vmem:[%s362 + $0x10] sm:$0xff] %vm201, %v2428
        %2557 = vst.msk [vmem:[%s362 + $0x28] sm:$0xff] %vm201, %v2429
        %2558 = vst.msk [vmem:[%s362 + $0x30] sm:$0xff] %vm201, %v2430
        %2559 = vst.msk [vmem:[%s362 + $0x48] sm:$0xff] %vm201, %v2431
        %2560 = vst.msk [vmem:[%s362 + $0x50] sm:$0xff] %vm201, %v2432
        %2561 = vst.msk [vmem:[%s362 + $0x68] sm:$0xff] %vm201, %v2433
        %2562 = vst.msk [vmem:[%s362 + $0x70] sm:$0xff] %vm201, %v2434
        %2563 = vst.msk [vmem:[%s362 + $0x88] sm:$0xff] %vm201, %v2435
        %2564 = vst.msk [vmem:[%s362 + $0x90] sm:$0xff] %vm201, %v2436
        %2565 = vst.msk [vmem:[%s362 + $0xa8] sm:$0xff] %vm201, %v2437
        %2566 = vst.msk [vmem:[%s362 + $0xb0] sm:$0xff] %vm201, %v2438
        %2567 = vst.msk [vmem:[%s362 + $0xc8] sm:$0xff] %vm201, %v2439
        %2568 = vst.msk [vmem:[%s362 + $0xd0] sm:$0xff] %vm201, %v2440
        %2569 = vst.msk [vmem:[%s362 + $0xe8] sm:$0xff] %vm201, %v2441
        %2570 = vst.msk [vmem:[%s362 + $0xf0] sm:$0xff] %vm201, %v2442
        %2571 = vst.msk [vmem:[%s362 + $0x108] sm:$0xff] %vm201, %v2443
        %2572 = vst.msk [vmem:[%s362 + $0x110] sm:$0xff] %vm201, %v2444
        %2573 = vst.msk [vmem:[%s362 + $0x128] sm:$0xff] %vm201, %v2445
        %2574 = vst.msk [vmem:[%s362 + $0x130] sm:$0xff] %vm201, %v2446
        %2575 = vst.msk [vmem:[%s362 + $0x148] sm:$0xff] %vm201, %v2447
        %2576 = vst.msk [vmem:[%s362 + $0x150] sm:$0xff] %vm201, %v2448
        %2577 = vst.msk [vmem:[%s362 + $0x168] sm:$0xff] %vm201, %v2449
        %2578 = vst.msk [vmem:[%s362 + $0x170] sm:$0xff] %vm201, %v2450
        %2579 = vst.msk [vmem:[%s362 + $0x188] sm:$0xff] %vm201, %v2451
        %2580 = vst.msk [vmem:[%s362 + $0x190] sm:$0xff] %vm201, %v2452
        %2581 = vst.msk [vmem:[%s362 + $0x1a8] sm:$0xff] %vm201, %v2453
        %2582 = vst.msk [vmem:[%s362 + $0x1b0] sm:$0xff] %vm201, %v2454
        %2583 = vst.msk [vmem:[%s362 + $0x1c8] sm:$0xff] %vm201, %v2455
        %2584 = vst.msk [vmem:[%s362 + $0x1d0] sm:$0xff] %vm201, %v2456
        %2585 = vst.msk [vmem:[%s362 + $0x1e8] sm:$0xff] %vm201, %v2457
        %2586 = vst.msk [vmem:[%s362 + $0x1f0] sm:$0xff] %vm201, %v2458
        %s2587 = scalar_lea.vmem [#allocation2], 192
        %v2588 = vld [vmem:[%s2587 + $0x6] sm:$0xff]
        %v2589 = vld [vmem:[%s2587 + $0xe] sm:$0xff]
        %v2590 = vld [vmem:[%s2587 + $0x26] sm:$0xff]
        %v2591 = vld [vmem:[%s2587 + $0x2e] sm:$0xff]
        %v2592 = vld [vmem:[%s2587 + $0x46] sm:$0xff]
        %v2593 = vld [vmem:[%s2587 + $0x4e] sm:$0xff]
        %v2594 = vld [vmem:[%s2587 + $0x66] sm:$0xff]
        %v2595 = vld [vmem:[%s2587 + $0x6e] sm:$0xff]
        %v2596 = vld [vmem:[%s2587 + $0x86] sm:$0xff]
        %v2597 = vld [vmem:[%s2587 + $0x8e] sm:$0xff]
        %v2598 = vld [vmem:[%s2587 + $0xa6] sm:$0xff]
        %v2599 = vld [vmem:[%s2587 + $0xae] sm:$0xff]
        %v2600 = vld [vmem:[%s2587 + $0xc6] sm:$0xff]
        %v2601 = vld [vmem:[%s2587 + $0xce] sm:$0xff]
        %v2602 = vld [vmem:[%s2587 + $0xe6] sm:$0xff]
        %v2603 = vld [vmem:[%s2587 + $0xee] sm:$0xff]
        %v2604 = vld [vmem:[%s2587 + $0x106] sm:$0xff]
        %v2605 = vld [vmem:[%s2587 + $0x10e] sm:$0xff]
        %v2606 = vld [vmem:[%s2587 + $0x126] sm:$0xff]
        %v2607 = vld [vmem:[%s2587 + $0x12e] sm:$0xff]
        %v2608 = vld [vmem:[%s2587 + $0x146] sm:$0xff]
        %v2609 = vld [vmem:[%s2587 + $0x14e] sm:$0xff]
        %v2610 = vld [vmem:[%s2587 + $0x166] sm:$0xff]
        %v2611 = vld [vmem:[%s2587 + $0x16e] sm:$0xff]
        %v2612 = vld [vmem:[%s2587 + $0x186] sm:$0xff]
        %v2613 = vld [vmem:[%s2587 + $0x18e] sm:$0xff]
        %v2614 = vld [vmem:[%s2587 + $0x1a6] sm:$0xff]
        %v2615 = vld [vmem:[%s2587 + $0x1ae] sm:$0xff]
        %v2616 = vld [vmem:[%s2587 + $0x1c6] sm:$0xff]
        %v2617 = vld [vmem:[%s2587 + $0x1ce] sm:$0xff]
        %v2618 = vld [vmem:[%s2587 + $0x1e6] sm:$0xff]
        %v2619 = vld [vmem:[%s2587 + $0x1ee] sm:$0xff]
        %2620 = vst.msk [vmem:[#allocation3] sm:$0xff] %vm201, %v2588
        %2621 = vst.msk [vmem:[#allocation3 + $0x18] sm:$0xff] %vm201, %v2589
        %2622 = vst.msk [vmem:[#allocation3 + $0x30] sm:$0xff] %vm201, %v2590
        %2623 = vst.msk [vmem:[#allocation3 + $0x48] sm:$0xff] %vm201, %v2591
        %2624 = vst.msk [vmem:[#allocation3 + $0x60] sm:$0xff] %vm201, %v2592
        %2625 = vst.msk [vmem:[#allocation3 + $0x78] sm:$0xff] %vm201, %v2593
        %2626 = vst.msk [vmem:[#allocation3 + $0x90] sm:$0xff] %vm201, %v2594
        %2627 = vst.msk [vmem:[#allocation3 + $0xa8] sm:$0xff] %vm201, %v2595
        %2628 = vst.msk [vmem:[#allocation3 + $0xc0] sm:$0xff] %vm201, %v2596
        %2629 = vst.msk [vmem:[#allocation3 + $0xd8] sm:$0xff] %vm201, %v2597
        %2630 = vst.msk [vmem:[#allocation3 + $0xf0] sm:$0xff] %vm201, %v2598
        %2631 = vst.msk [vmem:[#allocation3 + $0x108] sm:$0xff] %vm201, %v2599
        %2632 = vst.msk [vmem:[#allocation3 + $0x120] sm:$0xff] %vm201, %v2600
        %2633 = vst.msk [vmem:[#allocation3 + $0x138] sm:$0xff] %vm201, %v2601
        %2634 = vst.msk [vmem:[#allocation3 + $0x150] sm:$0xff] %vm201, %v2602
        %2635 = vst.msk [vmem:[#allocation3 + $0x168] sm:$0xff] %vm201, %v2603
        %2636 = vst.msk [vmem:[#allocation3 + $0x180] sm:$0xff] %vm201, %v2604
        %2637 = vst.msk [vmem:[#allocation3 + $0x198] sm:$0xff] %vm201, %v2605
        %2638 = vst.msk [vmem:[#allocation3 + $0x1b0] sm:$0xff] %vm201, %v2606
        %2639 = vst.msk [vmem:[#allocation3 + $0x1c8] sm:$0xff] %vm201, %v2607
        %2640 = vst.msk [vmem:[#allocation3 + $0x1e0] sm:$0xff] %vm201, %v2608
        %2641 = vst.msk [vmem:[#allocation3 + $0x1f8] sm:$0xff] %vm201, %v2609
        %2642 = vst.msk [vmem:[#allocation3 + $0x210] sm:$0xff] %vm201, %v2610
        %2643 = vst.msk [vmem:[#allocation3 + $0x228] sm:$0xff] %vm201, %v2611
        %2644 = vst.msk [vmem:[#allocation3 + $0x240] sm:$0xff] %vm201, %v2612
        %2645 = vst.msk [vmem:[#allocation3 + $0x258] sm:$0xff] %vm201, %v2613
        %2646 = vst.msk [vmem:[#allocation3 + $0x270] sm:$0xff] %vm201, %v2614
        %2647 = vst.msk [vmem:[#allocation3 + $0x288] sm:$0xff] %vm201, %v2615
        %2648 = vst.msk [vmem:[#allocation3 + $0x2a0] sm:$0xff] %vm201, %v2616
        %2649 = vst.msk [vmem:[#allocation3 + $0x2b8] sm:$0xff] %vm201, %v2617
        %2650 = vst.msk [vmem:[#allocation3 + $0x2d0] sm:$0xff] %vm201, %v2618
        %2651 = vst.msk [vmem:[#allocation3 + $0x2e8] sm:$0xff] %vm201, %v2619
        %v2652 = vld [vmem:[%s2587 + $0x8] sm:$0xff]
        %v2653 = vld [vmem:[%s2587 + $0x10] sm:$0xff]
        %v2654 = vld [vmem:[%s2587 + $0x28] sm:$0xff]
        %v2655 = vld [vmem:[%s2587 + $0x30] sm:$0xff]
        %v2656 = vld [vmem:[%s2587 + $0x48] sm:$0xff]
        %v2657 = vld [vmem:[%s2587 + $0x50] sm:$0xff]
        %v2658 = vld [vmem:[%s2587 + $0x68] sm:$0xff]
        %v2659 = vld [vmem:[%s2587 + $0x70] sm:$0xff]
        %v2660 = vld [vmem:[%s2587 + $0x88] sm:$0xff]
        %v2661 = vld [vmem:[%s2587 + $0x90] sm:$0xff]
        %v2662 = vld [vmem:[%s2587 + $0xa8] sm:$0xff]
        %v2663 = vld [vmem:[%s2587 + $0xb0] sm:$0xff]
        %v2664 = vld [vmem:[%s2587 + $0xc8] sm:$0xff]
        %v2665 = vld [vmem:[%s2587 + $0xd0] sm:$0xff]
        %v2666 = vld [vmem:[%s2587 + $0xe8] sm:$0xff]
        %v2667 = vld [vmem:[%s2587 + $0xf0] sm:$0xff]
        %v2668 = vld [vmem:[%s2587 + $0x108] sm:$0xff]
        %v2669 = vld [vmem:[%s2587 + $0x110] sm:$0xff]
        %v2670 = vld [vmem:[%s2587 + $0x128] sm:$0xff]
        %v2671 = vld [vmem:[%s2587 + $0x130] sm:$0xff]
        %v2672 = vld [vmem:[%s2587 + $0x148] sm:$0xff]
        %v2673 = vld [vmem:[%s2587 + $0x150] sm:$0xff]
        %v2674 = vld [vmem:[%s2587 + $0x168] sm:$0xff]
        %v2675 = vld [vmem:[%s2587 + $0x170] sm:$0xff]
        %v2676 = vld [vmem:[%s2587 + $0x188] sm:$0xff]
        %v2677 = vld [vmem:[%s2587 + $0x190] sm:$0xff]
        %v2678 = vld [vmem:[%s2587 + $0x1a8] sm:$0xff]
        %v2679 = vld [vmem:[%s2587 + $0x1b0] sm:$0xff]
        %v2680 = vld [vmem:[%s2587 + $0x1c8] sm:$0xff]
        %v2681 = vld [vmem:[%s2587 + $0x1d0] sm:$0xff]
        %v2682 = vld [vmem:[%s2587 + $0x1e8] sm:$0xff]
        %v2683 = vld [vmem:[%s2587 + $0x1f0] sm:$0xff]
        %2716 = vrot.lane.b32.xlu0 %v2652, 32
        %v2717 = vpop.permute.xlu0 %2716
        %2718 = vrot.lane.b32.xlu0 %v2653, 32
        %v2719 = vpop.permute.xlu0 %2718
        %2720 = vrot.lane.b32.xlu0 %v2654, 32
        %v2721 = vpop.permute.xlu0 %2720
        %2722 = vrot.lane.b32.xlu0 %v2655, 32
        %v2723 = vpop.permute.xlu0 %2722
        %2724 = vrot.lane.b32.xlu0 %v2656, 32
        %v2725 = vpop.permute.xlu0 %2724
        %2726 = vrot.lane.b32.xlu0 %v2657, 32
        %v2727 = vpop.permute.xlu0 %2726
        %2728 = vrot.lane.b32.xlu0 %v2658, 32
        %v2729 = vpop.permute.xlu0 %2728
        %2730 = vrot.lane.b32.xlu0 %v2659, 32
        %v2731 = vpop.permute.xlu0 %2730
        %2732 = vrot.lane.b32.xlu0 %v2660, 32
        %v2733 = vpop.permute.xlu0 %2732
        %2734 = vrot.lane.b32.xlu0 %v2661, 32
        %v2735 = vpop.permute.xlu0 %2734
        %2736 = vrot.lane.b32.xlu0 %v2662, 32
        %v2737 = vpop.permute.xlu0 %2736
        %2738 = vrot.lane.b32.xlu0 %v2663, 32
        %v2739 = vpop.permute.xlu0 %2738
        %2740 = vrot.lane.b32.xlu0 %v2664, 32
        %v2741 = vpop.permute.xlu0 %2740
        %2742 = vrot.lane.b32.xlu0 %v2665, 32
        %v2743 = vpop.permute.xlu0 %2742
        %2744 = vrot.lane.b32.xlu0 %v2666, 32
        %v2745 = vpop.permute.xlu0 %2744
        %2746 = vrot.lane.b32.xlu0 %v2667, 32
        %v2747 = vpop.permute.xlu0 %2746
        %2748 = vrot.lane.b32.xlu0 %v2668, 32
        %v2749 = vpop.permute.xlu0 %2748
        %2750 = vrot.lane.b32.xlu0 %v2669, 32
        %v2751 = vpop.permute.xlu0 %2750
        %2752 = vrot.lane.b32.xlu0 %v2670, 32
        %v2753 = vpop.permute.xlu0 %2752
        %2754 = vrot.lane.b32.xlu0 %v2671, 32
        %v2755 = vpop.permute.xlu0 %2754
        %2756 = vrot.lane.b32.xlu0 %v2672, 32
        %v2757 = vpop.permute.xlu0 %2756
        %2758 = vrot.lane.b32.xlu0 %v2673, 32
        %v2759 = vpop.permute.xlu0 %2758
        %2760 = vrot.lane.b32.xlu0 %v2674, 32
        %v2761 = vpop.permute.xlu0 %2760
        %2762 = vrot.lane.b32.xlu0 %v2675, 32
        %v2763 = vpop.permute.xlu0 %2762
        %2764 = vrot.lane.b32.xlu0 %v2676, 32
        %v2765 = vpop.permute.xlu0 %2764
        %2766 = vrot.lane.b32.xlu0 %v2677, 32
        %v2767 = vpop.permute.xlu0 %2766
        %2768 = vrot.lane.b32.xlu0 %v2678, 32
        %v2769 = vpop.permute.xlu0 %2768
        %2770 = vrot.lane.b32.xlu0 %v2679, 32
        %v2771 = vpop.permute.xlu0 %2770
        %2772 = vrot.lane.b32.xlu0 %v2680, 32
        %v2773 = vpop.permute.xlu0 %2772
        %2774 = vrot.lane.b32.xlu0 %v2681, 32
        %v2775 = vpop.permute.xlu0 %2774
        %2776 = vrot.lane.b32.xlu0 %v2682, 32
        %v2777 = vpop.permute.xlu0 %2776
        %2778 = vrot.lane.b32.xlu0 %v2683, 32
        %v2779 = vpop.permute.xlu0 %2778
        %2812 = vst.msk [vmem:[#allocation3] sm:$0xff] %vm620, %v2717
        %2813 = vst.msk [vmem:[#allocation3 + $0x18] sm:$0xff] %vm620, %v2719
        %2814 = vst.msk [vmem:[#allocation3 + $0x30] sm:$0xff] %vm620, %v2721
        %2815 = vst.msk [vmem:[#allocation3 + $0x48] sm:$0xff] %vm620, %v2723
        %2816 = vst.msk [vmem:[#allocation3 + $0x60] sm:$0xff] %vm620, %v2725
        %2817 = vst.msk [vmem:[#allocation3 + $0x78] sm:$0xff] %vm620, %v2727
        %2818 = vst.msk [vmem:[#allocation3 + $0x90] sm:$0xff] %vm620, %v2729
        %2819 = vst.msk [vmem:[#allocation3 + $0xa8] sm:$0xff] %vm620, %v2731
        %2820 = vst.msk [vmem:[#allocation3 + $0xc0] sm:$0xff] %vm620, %v2733
        %2821 = vst.msk [vmem:[#allocation3 + $0xd8] sm:$0xff] %vm620, %v2735
        %2822 = vst.msk [vmem:[#allocation3 + $0xf0] sm:$0xff] %vm620, %v2737
        %2823 = vst.msk [vmem:[#allocation3 + $0x108] sm:$0xff] %vm620, %v2739
        %2824 = vst.msk [vmem:[#allocation3 + $0x120] sm:$0xff] %vm620, %v2741
        %2825 = vst.msk [vmem:[#allocation3 + $0x138] sm:$0xff] %vm620, %v2743
        %2826 = vst.msk [vmem:[#allocation3 + $0x150] sm:$0xff] %vm620, %v2745
        %2827 = vst.msk [vmem:[#allocation3 + $0x168] sm:$0xff] %vm620, %v2747
        %2828 = vst.msk [vmem:[#allocation3 + $0x180] sm:$0xff] %vm620, %v2749
        %2829 = vst.msk [vmem:[#allocation3 + $0x198] sm:$0xff] %vm620, %v2751
        %2830 = vst.msk [vmem:[#allocation3 + $0x1b0] sm:$0xff] %vm620, %v2753
        %2831 = vst.msk [vmem:[#allocation3 + $0x1c8] sm:$0xff] %vm620, %v2755
        %2832 = vst.msk [vmem:[#allocation3 + $0x1e0] sm:$0xff] %vm620, %v2757
        %2833 = vst.msk [vmem:[#allocation3 + $0x1f8] sm:$0xff] %vm620, %v2759
        %2834 = vst.msk [vmem:[#allocation3 + $0x210] sm:$0xff] %vm620, %v2761
        %2835 = vst.msk [vmem:[#allocation3 + $0x228] sm:$0xff] %vm620, %v2763
        %2836 = vst.msk [vmem:[#allocation3 + $0x240] sm:$0xff] %vm620, %v2765
        %2837 = vst.msk [vmem:[#allocation3 + $0x258] sm:$0xff] %vm620, %v2767
        %2838 = vst.msk [vmem:[#allocation3 + $0x270] sm:$0xff] %vm620, %v2769
        %2839 = vst.msk [vmem:[#allocation3 + $0x288] sm:$0xff] %vm620, %v2771
        %2840 = vst.msk [vmem:[#allocation3 + $0x2a0] sm:$0xff] %vm620, %v2773
        %2841 = vst.msk [vmem:[#allocation3 + $0x2b8] sm:$0xff] %vm620, %v2775
        %2842 = vst.msk [vmem:[#allocation3 + $0x2d0] sm:$0xff] %vm620, %v2777
        %2843 = vst.msk [vmem:[#allocation3 + $0x2e8] sm:$0xff] %vm620, %v2779
        %v2844 = vld [vmem:[%s2587 + $0xa] sm:$0xff]
        %v2845 = vld [vmem:[%s2587 + $0x12] sm:$0xff]
        %v2846 = vld [vmem:[%s2587 + $0x2a] sm:$0xff]
        %v2847 = vld [vmem:[%s2587 + $0x32] sm:$0xff]
        %v2848 = vld [vmem:[%s2587 + $0x4a] sm:$0xff]
        %v2849 = vld [vmem:[%s2587 + $0x52] sm:$0xff]
        %v2850 = vld [vmem:[%s2587 + $0x6a] sm:$0xff]
        %v2851 = vld [vmem:[%s2587 + $0x72] sm:$0xff]
        %v2852 = vld [vmem:[%s2587 + $0x8a] sm:$0xff]
        %v2853 = vld [vmem:[%s2587 + $0x92] sm:$0xff]
        %v2854 = vld [vmem:[%s2587 + $0xaa] sm:$0xff]
        %v2855 = vld [vmem:[%s2587 + $0xb2] sm:$0xff]
        %v2856 = vld [vmem:[%s2587 + $0xca] sm:$0xff]
        %v2857 = vld [vmem:[%s2587 + $0xd2] sm:$0xff]
        %v2858 = vld [vmem:[%s2587 + $0xea] sm:$0xff]
        %v2859 = vld [vmem:[%s2587 + $0xf2] sm:$0xff]
        %v2860 = vld [vmem:[%s2587 + $0x10a] sm:$0xff]
        %v2861 = vld [vmem:[%s2587 + $0x112] sm:$0xff]
        %v2862 = vld [vmem:[%s2587 + $0x12a] sm:$0xff]
        %v2863 = vld [vmem:[%s2587 + $0x132] sm:$0xff]
        %v2864 = vld [vmem:[%s2587 + $0x14a] sm:$0xff]
        %v2865 = vld [vmem:[%s2587 + $0x152] sm:$0xff]
        %v2866 = vld [vmem:[%s2587 + $0x16a] sm:$0xff]
        %v2867 = vld [vmem:[%s2587 + $0x172] sm:$0xff]
        %v2868 = vld [vmem:[%s2587 + $0x18a] sm:$0xff]
        %v2869 = vld [vmem:[%s2587 + $0x192] sm:$0xff]
        %v2870 = vld [vmem:[%s2587 + $0x1aa] sm:$0xff]
        %v2871 = vld [vmem:[%s2587 + $0x1b2] sm:$0xff]
        %v2872 = vld [vmem:[%s2587 + $0x1ca] sm:$0xff]
        %v2873 = vld [vmem:[%s2587 + $0x1d2] sm:$0xff]
        %v2874 = vld [vmem:[%s2587 + $0x1ea] sm:$0xff]
        %v2875 = vld [vmem:[%s2587 + $0x1f2] sm:$0xff]
        %2908 = vrot.lane.b32.xlu0 %v2844, 64
        %v2909 = vpop.permute.xlu0 %2908
        %2910 = vrot.lane.b32.xlu0 %v2845, 64
        %v2911 = vpop.permute.xlu0 %2910
        %2912 = vrot.lane.b32.xlu0 %v2846, 64
        %v2913 = vpop.permute.xlu0 %2912
        %2914 = vrot.lane.b32.xlu0 %v2847, 64
        %v2915 = vpop.permute.xlu0 %2914
        %2916 = vrot.lane.b32.xlu0 %v2848, 64
        %v2917 = vpop.permute.xlu0 %2916
        %2918 = vrot.lane.b32.xlu0 %v2849, 64
        %v2919 = vpop.permute.xlu0 %2918
        %2920 = vrot.lane.b32.xlu0 %v2850, 64
        %v2921 = vpop.permute.xlu0 %2920
        %2922 = vrot.lane.b32.xlu0 %v2851, 64
        %v2923 = vpop.permute.xlu0 %2922
        %2924 = vrot.lane.b32.xlu0 %v2852, 64
        %v2925 = vpop.permute.xlu0 %2924
        %2926 = vrot.lane.b32.xlu0 %v2853, 64
        %v2927 = vpop.permute.xlu0 %2926
        %2928 = vrot.lane.b32.xlu0 %v2854, 64
        %v2929 = vpop.permute.xlu0 %2928
        %2930 = vrot.lane.b32.xlu0 %v2855, 64
        %v2931 = vpop.permute.xlu0 %2930
        %2932 = vrot.lane.b32.xlu0 %v2856, 64
        %v2933 = vpop.permute.xlu0 %2932
        %2934 = vrot.lane.b32.xlu0 %v2857, 64
        %v2935 = vpop.permute.xlu0 %2934
        %2936 = vrot.lane.b32.xlu0 %v2858, 64
        %v2937 = vpop.permute.xlu0 %2936
        %2938 = vrot.lane.b32.xlu0 %v2859, 64
        %v2939 = vpop.permute.xlu0 %2938
        %2940 = vrot.lane.b32.xlu0 %v2860, 64
        %v2941 = vpop.permute.xlu0 %2940
        %2942 = vrot.lane.b32.xlu0 %v2861, 64
        %v2943 = vpop.permute.xlu0 %2942
        %2944 = vrot.lane.b32.xlu0 %v2862, 64
        %v2945 = vpop.permute.xlu0 %2944
        %2946 = vrot.lane.b32.xlu0 %v2863, 64
        %v2947 = vpop.permute.xlu0 %2946
        %2948 = vrot.lane.b32.xlu0 %v2864, 64
        %v2949 = vpop.permute.xlu0 %2948
        %2950 = vrot.lane.b32.xlu0 %v2865, 64
        %v2951 = vpop.permute.xlu0 %2950
        %2952 = vrot.lane.b32.xlu0 %v2866, 64
        %v2953 = vpop.permute.xlu0 %2952
        %2954 = vrot.lane.b32.xlu0 %v2867, 64
        %v2955 = vpop.permute.xlu0 %2954
        %2956 = vrot.lane.b32.xlu0 %v2868, 64
        %v2957 = vpop.permute.xlu0 %2956
        %2958 = vrot.lane.b32.xlu0 %v2869, 64
        %v2959 = vpop.permute.xlu0 %2958
        %2960 = vrot.lane.b32.xlu0 %v2870, 64
        %v2961 = vpop.permute.xlu0 %2960
        %2962 = vrot.lane.b32.xlu0 %v2871, 64
        %v2963 = vpop.permute.xlu0 %2962
        %2964 = vrot.lane.b32.xlu0 %v2872, 64
        %v2965 = vpop.permute.xlu0 %2964
        %2966 = vrot.lane.b32.xlu0 %v2873, 64
        %v2967 = vpop.permute.xlu0 %2966
        %2968 = vrot.lane.b32.xlu0 %v2874, 64
        %v2969 = vpop.permute.xlu0 %2968
        %2970 = vrot.lane.b32.xlu0 %v2875, 64
        %v2971 = vpop.permute.xlu0 %2970
        %3004 = vst.msk [vmem:[#allocation3] sm:$0xff] %vm813, %v2909
        %3005 = vst.msk [vmem:[#allocation3 + $0x18] sm:$0xff] %vm813, %v2911
        %3006 = vst.msk [vmem:[#allocation3 + $0x30] sm:$0xff] %vm813, %v2913
        %3007 = vst.msk [vmem:[#allocation3 + $0x48] sm:$0xff] %vm813, %v2915
        %3008 = vst.msk [vmem:[#allocation3 + $0x60] sm:$0xff] %vm813, %v2917
        %3009 = vst.msk [vmem:[#allocation3 + $0x78] sm:$0xff] %vm813, %v2919
        %3010 = vst.msk [vmem:[#allocation3 + $0x90] sm:$0xff] %vm813, %v2921
        %3011 = vst.msk [vmem:[#allocation3 + $0xa8] sm:$0xff] %vm813, %v2923
        %3012 = vst.msk [vmem:[#allocation3 + $0xc0] sm:$0xff] %vm813, %v2925
        %3013 = vst.msk [vmem:[#allocation3 + $0xd8] sm:$0xff] %vm813, %v2927
        %3014 = vst.msk [vmem:[#allocation3 + $0xf0] sm:$0xff] %vm813, %v2929
        %3015 = vst.msk [vmem:[#allocation3 + $0x108] sm:$0xff] %vm813, %v2931
        %3016 = vst.msk [vmem:[#allocation3 + $0x120] sm:$0xff] %vm813, %v2933
        %3017 = vst.msk [vmem:[#allocation3 + $0x138] sm:$0xff] %vm813, %v2935
        %3018 = vst.msk [vmem:[#allocation3 + $0x150] sm:$0xff] %vm813, %v2937
        %3019 = vst.msk [vmem:[#allocation3 + $0x168] sm:$0xff] %vm813, %v2939
        %3020 = vst.msk [vmem:[#allocation3 + $0x180] sm:$0xff] %vm813, %v2941
        %3021 = vst.msk [vmem:[#allocation3 + $0x198] sm:$0xff] %vm813, %v2943
        %3022 = vst.msk [vmem:[#allocation3 + $0x1b0] sm:$0xff] %vm813, %v2945
        %3023 = vst.msk [vmem:[#allocation3 + $0x1c8] sm:$0xff] %vm813, %v2947
        %3024 = vst.msk [vmem:[#allocation3 + $0x1e0] sm:$0xff] %vm813, %v2949
        %3025 = vst.msk [vmem:[#allocation3 + $0x1f8] sm:$0xff] %vm813, %v2951
        %3026 = vst.msk [vmem:[#allocation3 + $0x210] sm:$0xff] %vm813, %v2953
        %3027 = vst.msk [vmem:[#allocation3 + $0x228] sm:$0xff] %vm813, %v2955
        %3028 = vst.msk [vmem:[#allocation3 + $0x240] sm:$0xff] %vm813, %v2957
        %3029 = vst.msk [vmem:[#allocation3 + $0x258] sm:$0xff] %vm813, %v2959
        %3030 = vst.msk [vmem:[#allocation3 + $0x270] sm:$0xff] %vm813, %v2961
        %3031 = vst.msk [vmem:[#allocation3 + $0x288] sm:$0xff] %vm813, %v2963
        %3032 = vst.msk [vmem:[#allocation3 + $0x2a0] sm:$0xff] %vm813, %v2965
        %3033 = vst.msk [vmem:[#allocation3 + $0x2b8] sm:$0xff] %vm813, %v2967
        %3034 = vst.msk [vmem:[#allocation3 + $0x2d0] sm:$0xff] %vm813, %v2969
        %3035 = vst.msk [vmem:[#allocation3 + $0x2e8] sm:$0xff] %vm813, %v2971
        %v3036 = vld [vmem:[%s362 + $0x6] sm:$0xff]
        %v3037 = vld [vmem:[%s362 + $0xe] sm:$0xff]
        %v3038 = vld [vmem:[%s362 + $0x26] sm:$0xff]
        %v3039 = vld [vmem:[%s362 + $0x2e] sm:$0xff]
        %v3040 = vld [vmem:[%s362 + $0x46] sm:$0xff]
        %v3041 = vld [vmem:[%s362 + $0x4e] sm:$0xff]
        %v3042 = vld [vmem:[%s362 + $0x66] sm:$0xff]
        %v3043 = vld [vmem:[%s362 + $0x6e] sm:$0xff]
        %v3044 = vld [vmem:[%s362 + $0x86] sm:$0xff]
        %v3045 = vld [vmem:[%s362 + $0x8e] sm:$0xff]
        %v3046 = vld [vmem:[%s362 + $0xa6] sm:$0xff]
        %v3047 = vld [vmem:[%s362 + $0xae] sm:$0xff]
        %v3048 = vld [vmem:[%s362 + $0xc6] sm:$0xff]
        %v3049 = vld [vmem:[%s362 + $0xce] sm:$0xff]
        %v3050 = vld [vmem:[%s362 + $0xe6] sm:$0xff]
        %v3051 = vld [vmem:[%s362 + $0xee] sm:$0xff]
        %v3052 = vld [vmem:[%s362 + $0x106] sm:$0xff]
        %v3053 = vld [vmem:[%s362 + $0x10e] sm:$0xff]
        %v3054 = vld [vmem:[%s362 + $0x126] sm:$0xff]
        %v3055 = vld [vmem:[%s362 + $0x12e] sm:$0xff]
        %v3056 = vld [vmem:[%s362 + $0x146] sm:$0xff]
        %v3057 = vld [vmem:[%s362 + $0x14e] sm:$0xff]
        %v3058 = vld [vmem:[%s362 + $0x166] sm:$0xff]
        %v3059 = vld [vmem:[%s362 + $0x16e] sm:$0xff]
        %v3060 = vld [vmem:[%s362 + $0x186] sm:$0xff]
        %v3061 = vld [vmem:[%s362 + $0x18e] sm:$0xff]
        %v3062 = vld [vmem:[%s362 + $0x1a6] sm:$0xff]
        %v3063 = vld [vmem:[%s362 + $0x1ae] sm:$0xff]
        %v3064 = vld [vmem:[%s362 + $0x1c6] sm:$0xff]
        %v3065 = vld [vmem:[%s362 + $0x1ce] sm:$0xff]
        %v3066 = vld [vmem:[%s362 + $0x1e6] sm:$0xff]
        %v3067 = vld [vmem:[%s362 + $0x1ee] sm:$0xff]
        %3100 = vrot.lane.b32.xlu0 %v3036, 96
        %v3101 = vpop.permute.xlu0 %3100
        %3102 = vrot.lane.b32.xlu0 %v3037, 96
        %v3103 = vpop.permute.xlu0 %3102
        %3104 = vrot.lane.b32.xlu0 %v3038, 96
        %v3105 = vpop.permute.xlu0 %3104
        %3106 = vrot.lane.b32.xlu0 %v3039, 96
        %v3107 = vpop.permute.xlu0 %3106
        %3108 = vrot.lane.b32.xlu0 %v3040, 96
        %v3109 = vpop.permute.xlu0 %3108
        %3110 = vrot.lane.b32.xlu0 %v3041, 96
        %v3111 = vpop.permute.xlu0 %3110
        %3112 = vrot.lane.b32.xlu0 %v3042, 96
        %v3113 = vpop.permute.xlu0 %3112
        %3114 = vrot.lane.b32.xlu0 %v3043, 96
        %v3115 = vpop.permute.xlu0 %3114
        %3116 = vrot.lane.b32.xlu0 %v3044, 96
        %v3117 = vpop.permute.xlu0 %3116
        %3118 = vrot.lane.b32.xlu0 %v3045, 96
        %v3119 = vpop.permute.xlu0 %3118
        %3120 = vrot.lane.b32.xlu0 %v3046, 96
        %v3121 = vpop.permute.xlu0 %3120
        %3122 = vrot.lane.b32.xlu0 %v3047, 96
        %v3123 = vpop.permute.xlu0 %3122
        %3124 = vrot.lane.b32.xlu0 %v3048, 96
        %v3125 = vpop.permute.xlu0 %3124
        %3126 = vrot.lane.b32.xlu0 %v3049, 96
        %v3127 = vpop.permute.xlu0 %3126
        %3128 = vrot.lane.b32.xlu0 %v3050, 96
        %v3129 = vpop.permute.xlu0 %3128
        %3130 = vrot.lane.b32.xlu0 %v3051, 96
        %v3131 = vpop.permute.xlu0 %3130
        %3132 = vrot.lane.b32.xlu0 %v3052, 96
        %v3133 = vpop.permute.xlu0 %3132
        %3134 = vrot.lane.b32.xlu0 %v3053, 96
        %v3135 = vpop.permute.xlu0 %3134
        %3136 = vrot.lane.b32.xlu0 %v3054, 96
        %v3137 = vpop.permute.xlu0 %3136
        %3138 = vrot.lane.b32.xlu0 %v3055, 96
        %v3139 = vpop.permute.xlu0 %3138
        %3140 = vrot.lane.b32.xlu0 %v3056, 96
        %v3141 = vpop.permute.xlu0 %3140
        %3142 = vrot.lane.b32.xlu0 %v3057, 96
        %v3143 = vpop.permute.xlu0 %3142
        %3144 = vrot.lane.b32.xlu0 %v3058, 96
        %v3145 = vpop.permute.xlu0 %3144
        %3146 = vrot.lane.b32.xlu0 %v3059, 96
        %v3147 = vpop.permute.xlu0 %3146
        %3148 = vrot.lane.b32.xlu0 %v3060, 96
        %v3149 = vpop.permute.xlu0 %3148
        %3150 = vrot.lane.b32.xlu0 %v3061, 96
        %v3151 = vpop.permute.xlu0 %3150
        %3152 = vrot.lane.b32.xlu0 %v3062, 96
        %v3153 = vpop.permute.xlu0 %3152
        %3154 = vrot.lane.b32.xlu0 %v3063, 96
        %v3155 = vpop.permute.xlu0 %3154
        %3156 = vrot.lane.b32.xlu0 %v3064, 96
        %v3157 = vpop.permute.xlu0 %3156
        %3158 = vrot.lane.b32.xlu0 %v3065, 96
        %v3159 = vpop.permute.xlu0 %3158
        %3160 = vrot.lane.b32.xlu0 %v3066, 96
        %v3161 = vpop.permute.xlu0 %3160
        %3162 = vrot.lane.b32.xlu0 %v3067, 96
        %v3163 = vpop.permute.xlu0 %3162
        %3196 = vst.msk [vmem:[#allocation3] sm:$0xff] %vm1006, %v3101
        %3197 = vst.msk [vmem:[#allocation3 + $0x18] sm:$0xff] %vm1006, %v3103
        %3198 = vst.msk [vmem:[#allocation3 + $0x30] sm:$0xff] %vm1006, %v3105
        %3199 = vst.msk [vmem:[#allocation3 + $0x48] sm:$0xff] %vm1006, %v3107
        %3200 = vst.msk [vmem:[#allocation3 + $0x60] sm:$0xff] %vm1006, %v3109
        %3201 = vst.msk [vmem:[#allocation3 + $0x78] sm:$0xff] %vm1006, %v3111
        %3202 = vst.msk [vmem:[#allocation3 + $0x90] sm:$0xff] %vm1006, %v3113
        %3203 = vst.msk [vmem:[#allocation3 + $0xa8] sm:$0xff] %vm1006, %v3115
        %3204 = vst.msk [vmem:[#allocation3 + $0xc0] sm:$0xff] %vm1006, %v3117
        %3205 = vst.msk [vmem:[#allocation3 + $0xd8] sm:$0xff] %vm1006, %v3119
        %3206 = vst.msk [vmem:[#allocation3 + $0xf0] sm:$0xff] %vm1006, %v3121
        %3207 = vst.msk [vmem:[#allocation3 + $0x108] sm:$0xff] %vm1006, %v3123
        %3208 = vst.msk [vmem:[#allocation3 + $0x120] sm:$0xff] %vm1006, %v3125
        %3209 = vst.msk [vmem:[#allocation3 + $0x138] sm:$0xff] %vm1006, %v3127
        %3210 = vst.msk [vmem:[#allocation3 + $0x150] sm:$0xff] %vm1006, %v3129
        %3211 = vst.msk [vmem:[#allocation3 + $0x168] sm:$0xff] %vm1006, %v3131
        %3212 = vst.msk [vmem:[#allocation3 + $0x180] sm:$0xff] %vm1006, %v3133
        %3213 = vst.msk [vmem:[#allocation3 + $0x198] sm:$0xff] %vm1006, %v3135
        %3214 = vst.msk [vmem:[#allocation3 + $0x1b0] sm:$0xff] %vm1006, %v3137
        %3215 = vst.msk [vmem:[#allocation3 + $0x1c8] sm:$0xff] %vm1006, %v3139
        %3216 = vst.msk [vmem:[#allocation3 + $0x1e0] sm:$0xff] %vm1006, %v3141
        %3217 = vst.msk [vmem:[#allocation3 + $0x1f8] sm:$0xff] %vm1006, %v3143
        %3218 = vst.msk [vmem:[#allocation3 + $0x210] sm:$0xff] %vm1006, %v3145
        %3219 = vst.msk [vmem:[#allocation3 + $0x228] sm:$0xff] %vm1006, %v3147
        %3220 = vst.msk [vmem:[#allocation3 + $0x240] sm:$0xff] %vm1006, %v3149
        %3221 = vst.msk [vmem:[#allocation3 + $0x258] sm:$0xff] %vm1006, %v3151
        %3222 = vst.msk [vmem:[#allocation3 + $0x270] sm:$0xff] %vm1006, %v3153
        %3223 = vst.msk [vmem:[#allocation3 + $0x288] sm:$0xff] %vm1006, %v3155
        %3224 = vst.msk [vmem:[#allocation3 + $0x2a0] sm:$0xff] %vm1006, %v3157
        %3225 = vst.msk [vmem:[#allocation3 + $0x2b8] sm:$0xff] %vm1006, %v3159
        %3226 = vst.msk [vmem:[#allocation3 + $0x2d0] sm:$0xff] %vm1006, %v3161
        %3227 = vst.msk [vmem:[#allocation3 + $0x2e8] sm:$0xff] %vm1006, %v3163
        %v3228 = vld [vmem:[%s362 + $0x8] sm:$0xff]
        %v3229 = vld [vmem:[%s362 + $0x10] sm:$0xff]
        %v3230 = vld [vmem:[%s362 + $0x28] sm:$0xff]
        %v3231 = vld [vmem:[%s362 + $0x30] sm:$0xff]
        %v3232 = vld [vmem:[%s362 + $0x48] sm:$0xff]
        %v3233 = vld [vmem:[%s362 + $0x50] sm:$0xff]
        %v3234 = vld [vmem:[%s362 + $0x68] sm:$0xff]
        %v3235 = vld [vmem:[%s362 + $0x70] sm:$0xff]
        %v3236 = vld [vmem:[%s362 + $0x88] sm:$0xff]
        %v3237 = vld [vmem:[%s362 + $0x90] sm:$0xff]
        %v3238 = vld [vmem:[%s362 + $0xa8] sm:$0xff]
        %v3239 = vld [vmem:[%s362 + $0xb0] sm:$0xff]
        %v3240 = vld [vmem:[%s362 + $0xc8] sm:$0xff]
        %v3241 = vld [vmem:[%s362 + $0xd0] sm:$0xff]
        %v3242 = vld [vmem:[%s362 + $0xe8] sm:$0xff]
        %v3243 = vld [vmem:[%s362 + $0xf0] sm:$0xff]
        %v3244 = vld [vmem:[%s362 + $0x108] sm:$0xff]
        %v3245 = vld [vmem:[%s362 + $0x110] sm:$0xff]
        %v3246 = vld [vmem:[%s362 + $0x128] sm:$0xff]
        %v3247 = vld [vmem:[%s362 + $0x130] sm:$0xff]
        %v3248 = vld [vmem:[%s362 + $0x148] sm:$0xff]
        %v3249 = vld [vmem:[%s362 + $0x150] sm:$0xff]
        %v3250 = vld [vmem:[%s362 + $0x168] sm:$0xff]
        %v3251 = vld [vmem:[%s362 + $0x170] sm:$0xff]
        %v3252 = vld [vmem:[%s362 + $0x188] sm:$0xff]
        %v3253 = vld [vmem:[%s362 + $0x190] sm:$0xff]
        %v3254 = vld [vmem:[%s362 + $0x1a8] sm:$0xff]
        %v3255 = vld [vmem:[%s362 + $0x1b0] sm:$0xff]
        %v3256 = vld [vmem:[%s362 + $0x1c8] sm:$0xff]
        %v3257 = vld [vmem:[%s362 + $0x1d0] sm:$0xff]
        %v3258 = vld [vmem:[%s362 + $0x1e8] sm:$0xff]
        %v3259 = vld [vmem:[%s362 + $0x1f0] sm:$0xff]
        %3260 = vst.msk [vmem:[#allocation3 + $0x8] sm:$0xff] %vm201, %v3228
        %3261 = vst.msk [vmem:[#allocation3 + $0x20] sm:$0xff] %vm201, %v3229
        %3262 = vst.msk [vmem:[#allocation3 + $0x38] sm:$0xff] %vm201, %v3230
        %3263 = vst.msk [vmem:[#allocation3 + $0x50] sm:$0xff] %vm201, %v3231
        %3264 = vst.msk [vmem:[#allocation3 + $0x68] sm:$0xff] %vm201, %v3232
        %3265 = vst.msk [vmem:[#allocation3 + $0x80] sm:$0xff] %vm201, %v3233
        %3266 = vst.msk [vmem:[#allocation3 + $0x98] sm:$0xff] %vm201, %v3234
        %3267 = vst.msk [vmem:[#allocation3 + $0xb0] sm:$0xff] %vm201, %v3235
        %3268 = vst.msk [vmem:[#allocation3 + $0xc8] sm:$0xff] %vm201, %v3236
        %3269 = vst.msk [vmem:[#allocation3 + $0xe0] sm:$0xff] %vm201, %v3237
        %3270 = vst.msk [vmem:[#allocation3 + $0xf8] sm:$0xff] %vm201, %v3238
        %3271 = vst.msk [vmem:[#allocation3 + $0x110] sm:$0xff] %vm201, %v3239
        %3272 = vst.msk [vmem:[#allocation3 + $0x128] sm:$0xff] %vm201, %v3240
        %3273 = vst.msk [vmem:[#allocation3 + $0x140] sm:$0xff] %vm201, %v3241
        %3274 = vst.msk [vmem:[#allocation3 + $0x158] sm:$0xff] %vm201, %v3242
        %3275 = vst.msk [vmem:[#allocation3 + $0x170] sm:$0xff] %vm201, %v3243
        %3276 = vst.msk [vmem:[#allocation3 + $0x188] sm:$0xff] %vm201, %v3244
        %3277 = vst.msk [vmem:[#allocation3 + $0x1a0] sm:$0xff] %vm201, %v3245
        %3278 = vst.msk [vmem:[#allocation3 + $0x1b8] sm:$0xff] %vm201, %v3246
        %3279 = vst.msk [vmem:[#allocation3 + $0x1d0] sm:$0xff] %vm201, %v3247
        %3280 = vst.msk [vmem:[#allocation3 + $0x1e8] sm:$0xff] %vm201, %v3248
        %3281 = vst.msk [vmem:[#allocation3 + $0x200] sm:$0xff] %vm201, %v3249
        %3282 = vst.msk [vmem:[#allocation3 + $0x218] sm:$0xff] %vm201, %v3250
        %3283 = vst.msk [vmem:[#allocation3 + $0x230] sm:$0xff] %vm201, %v3251
        %3284 = vst.msk [vmem:[#allocation3 + $0x248] sm:$0xff] %vm201, %v3252
        %3285 = vst.msk [vmem:[#allocation3 + $0x260] sm:$0xff] %vm201, %v3253
        %3286 = vst.msk [vmem:[#allocation3 + $0x278] sm:$0xff] %vm201, %v3254
        %3287 = vst.msk [vmem:[#allocation3 + $0x290] sm:$0xff] %vm201, %v3255
        %3288 = vst.msk [vmem:[#allocation3 + $0x2a8] sm:$0xff] %vm201, %v3256
        %3289 = vst.msk [vmem:[#allocation3 + $0x2c0] sm:$0xff] %vm201, %v3257
        %3290 = vst.msk [vmem:[#allocation3 + $0x2d8] sm:$0xff] %vm201, %v3258
        %3291 = vst.msk [vmem:[#allocation3 + $0x2f0] sm:$0xff] %vm201, %v3259
        %v3292 = vld [vmem:[%s362 + $0xa] sm:$0xff]
        %v3293 = vld [vmem:[%s362 + $0x12] sm:$0xff]
        %v3294 = vld [vmem:[%s362 + $0x2a] sm:$0xff]
        %v3295 = vld [vmem:[%s362 + $0x32] sm:$0xff]
        %v3296 = vld [vmem:[%s362 + $0x4a] sm:$0xff]
        %v3297 = vld [vmem:[%s362 + $0x52] sm:$0xff]
        %v3298 = vld [vmem:[%s362 + $0x6a] sm:$0xff]
        %v3299 = vld [vmem:[%s362 + $0x72] sm:$0xff]
        %v3300 = vld [vmem:[%s362 + $0x8a] sm:$0xff]
        %v3301 = vld [vmem:[%s362 + $0x92] sm:$0xff]
        %v3302 = vld [vmem:[%s362 + $0xaa] sm:$0xff]
        %v3303 = vld [vmem:[%s362 + $0xb2] sm:$0xff]
        %v3304 = vld [vmem:[%s362 + $0xca] sm:$0xff]
        %v3305 = vld [vmem:[%s362 + $0xd2] sm:$0xff]
        %v3306 = vld [vmem:[%s362 + $0xea] sm:$0xff]
        %v3307 = vld [vmem:[%s362 + $0xf2] sm:$0xff]
        %v3308 = vld [vmem:[%s362 + $0x10a] sm:$0xff]
        %v3309 = vld [vmem:[%s362 + $0x112] sm:$0xff]
        %v3310 = vld [vmem:[%s362 + $0x12a] sm:$0xff]
        %v3311 = vld [vmem:[%s362 + $0x132] sm:$0xff]
        %v3312 = vld [vmem:[%s362 + $0x14a] sm:$0xff]
        %v3313 = vld [vmem:[%s362 + $0x152] sm:$0xff]
        %v3314 = vld [vmem:[%s362 + $0x16a] sm:$0xff]
        %v3315 = vld [vmem:[%s362 + $0x172] sm:$0xff]
        %v3316 = vld [vmem:[%s362 + $0x18a] sm:$0xff]
        %v3317 = vld [vmem:[%s362 + $0x192] sm:$0xff]
        %v3318 = vld [vmem:[%s362 + $0x1aa] sm:$0xff]
        %v3319 = vld [vmem:[%s362 + $0x1b2] sm:$0xff]
        %v3320 = vld [vmem:[%s362 + $0x1ca] sm:$0xff]
        %v3321 = vld [vmem:[%s362 + $0x1d2] sm:$0xff]
        %v3322 = vld [vmem:[%s362 + $0x1ea] sm:$0xff]
        %v3323 = vld [vmem:[%s362 + $0x1f2] sm:$0xff]
        %3356 = vrot.lane.b32.xlu0 %v3292, 32
        %v3357 = vpop.permute.xlu0 %3356
        %3358 = vrot.lane.b32.xlu0 %v3293, 32
        %v3359 = vpop.permute.xlu0 %3358
        %3360 = vrot.lane.b32.xlu0 %v3294, 32
        %v3361 = vpop.permute.xlu0 %3360
        %3362 = vrot.lane.b32.xlu0 %v3295, 32
        %v3363 = vpop.permute.xlu0 %3362
        %3364 = vrot.lane.b32.xlu0 %v3296, 32
        %v3365 = vpop.permute.xlu0 %3364
        %3366 = vrot.lane.b32.xlu0 %v3297, 32
        %v3367 = vpop.permute.xlu0 %3366
        %3368 = vrot.lane.b32.xlu0 %v3298, 32
        %v3369 = vpop.permute.xlu0 %3368
        %3370 = vrot.lane.b32.xlu0 %v3299, 32
        %v3371 = vpop.permute.xlu0 %3370
        %3372 = vrot.lane.b32.xlu0 %v3300, 32
        %v3373 = vpop.permute.xlu0 %3372
        %3374 = vrot.lane.b32.xlu0 %v3301, 32
        %v3375 = vpop.permute.xlu0 %3374
        %3376 = vrot.lane.b32.xlu0 %v3302, 32
        %v3377 = vpop.permute.xlu0 %3376
        %3378 = vrot.lane.b32.xlu0 %v3303, 32
        %v3379 = vpop.permute.xlu0 %3378
        %3380 = vrot.lane.b32.xlu0 %v3304, 32
        %v3381 = vpop.permute.xlu0 %3380
        %3382 = vrot.lane.b32.xlu0 %v3305, 32
        %v3383 = vpop.permute.xlu0 %3382
        %3384 = vrot.lane.b32.xlu0 %v3306, 32
        %v3385 = vpop.permute.xlu0 %3384
        %3386 = vrot.lane.b32.xlu0 %v3307, 32
        %v3387 = vpop.permute.xlu0 %3386
        %3388 = vrot.lane.b32.xlu0 %v3308, 32
        %v3389 = vpop.permute.xlu0 %3388
        %3390 = vrot.lane.b32.xlu0 %v3309, 32
        %v3391 = vpop.permute.xlu0 %3390
        %3392 = vrot.lane.b32.xlu0 %v3310, 32
        %v3393 = vpop.permute.xlu0 %3392
        %3394 = vrot.lane.b32.xlu0 %v3311, 32
        %v3395 = vpop.permute.xlu0 %3394
        %3396 = vrot.lane.b32.xlu0 %v3312, 32
        %v3397 = vpop.permute.xlu0 %3396
        %3398 = vrot.lane.b32.xlu0 %v3313, 32
        %v3399 = vpop.permute.xlu0 %3398
        %3400 = vrot.lane.b32.xlu0 %v3314, 32
        %v3401 = vpop.permute.xlu0 %3400
        %3402 = vrot.lane.b32.xlu0 %v3315, 32
        %v3403 = vpop.permute.xlu0 %3402
        %3404 = vrot.lane.b32.xlu0 %v3316, 32
        %v3405 = vpop.permute.xlu0 %3404
        %3406 = vrot.lane.b32.xlu0 %v3317, 32
        %v3407 = vpop.permute.xlu0 %3406
        %3408 = vrot.lane.b32.xlu0 %v3318, 32
        %v3409 = vpop.permute.xlu0 %3408
        %3410 = vrot.lane.b32.xlu0 %v3319, 32
        %v3411 = vpop.permute.xlu0 %3410
        %3412 = vrot.lane.b32.xlu0 %v3320, 32
        %v3413 = vpop.permute.xlu0 %3412
        %3414 = vrot.lane.b32.xlu0 %v3321, 32
        %v3415 = vpop.permute.xlu0 %3414
        %3416 = vrot.lane.b32.xlu0 %v3322, 32
        %v3417 = vpop.permute.xlu0 %3416
        %3418 = vrot.lane.b32.xlu0 %v3323, 32
        %v3419 = vpop.permute.xlu0 %3418
        %3452 = vst.msk [vmem:[#allocation3 + $0x8] sm:$0xff] %vm620, %v3357
        %3453 = vst.msk [vmem:[#allocation3 + $0x20] sm:$0xff] %vm620, %v3359
        %3454 = vst.msk [vmem:[#allocation3 + $0x38] sm:$0xff] %vm620, %v3361
        %3455 = vst.msk [vmem:[#allocation3 + $0x50] sm:$0xff] %vm620, %v3363
        %3456 = vst.msk [vmem:[#allocation3 + $0x68] sm:$0xff] %vm620, %v3365
        %3457 = vst.msk [vmem:[#allocation3 + $0x80] sm:$0xff] %vm620, %v3367
        %3458 = vst.msk [vmem:[#allocation3 + $0x98] sm:$0xff] %vm620, %v3369
        %3459 = vst.msk [vmem:[#allocation3 + $0xb0] sm:$0xff] %vm620, %v3371
        %3460 = vst.msk [vmem:[#allocation3 + $0xc8] sm:$0xff] %vm620, %v3373
        %3461 = vst.msk [vmem:[#allocation3 + $0xe0] sm:$0xff] %vm620, %v3375
        %3462 = vst.msk [vmem:[#allocation3 + $0xf8] sm:$0xff] %vm620, %v3377
        %3463 = vst.msk [vmem:[#allocation3 + $0x110] sm:$0xff] %vm620, %v3379
        %3464 = vst.msk [vmem:[#allocation3 + $0x128] sm:$0xff] %vm620, %v3381
        %3465 = vst.msk [vmem:[#allocation3 + $0x140] sm:$0xff] %vm620, %v3383
        %3466 = vst.msk [vmem:[#allocation3 + $0x158] sm:$0xff] %vm620, %v3385
        %3467 = vst.msk [vmem:[#allocation3 + $0x170] sm:$0xff] %vm620, %v3387
        %3468 = vst.msk [vmem:[#allocation3 + $0x188] sm:$0xff] %vm620, %v3389
        %3469 = vst.msk [vmem:[#allocation3 + $0x1a0] sm:$0xff] %vm620, %v3391
        %3470 = vst.msk [vmem:[#allocation3 + $0x1b8] sm:$0xff] %vm620, %v3393
        %3471 = vst.msk [vmem:[#allocation3 + $0x1d0] sm:$0xff] %vm620, %v3395
        %3472 = vst.msk [vmem:[#allocation3 + $0x1e8] sm:$0xff] %vm620, %v3397
        %3473 = vst.msk [vmem:[#allocation3 + $0x200] sm:$0xff] %vm620, %v3399
        %3474 = vst.msk [vmem:[#allocation3 + $0x218] sm:$0xff] %vm620, %v3401
        %3475 = vst.msk [vmem:[#allocation3 + $0x230] sm:$0xff] %vm620, %v3403
        %3476 = vst.msk [vmem:[#allocation3 + $0x248] sm:$0xff] %vm620, %v3405
        %3477 = vst.msk [vmem:[#allocation3 + $0x260] sm:$0xff] %vm620, %v3407
        %3478 = vst.msk [vmem:[#allocation3 + $0x278] sm:$0xff] %vm620, %v3409
        %3479 = vst.msk [vmem:[#allocation3 + $0x290] sm:$0xff] %vm620, %v3411
        %3480 = vst.msk [vmem:[#allocation3 + $0x2a8] sm:$0xff] %vm620, %v3413
        %3481 = vst.msk [vmem:[#allocation3 + $0x2c0] sm:$0xff] %vm620, %v3415
        %3482 = vst.msk [vmem:[#allocation3 + $0x2d8] sm:$0xff] %vm620, %v3417
        %3483 = vst.msk [vmem:[#allocation3 + $0x2f0] sm:$0xff] %vm620, %v3419
        %s3484 = scalar_lea.vmem [#allocation2], 320
        %v3485 = vld [vmem:[%s3484 + $0x6] sm:$0xff]
        %v3486 = vld [vmem:[%s3484 + $0xe] sm:$0xff]
        %v3487 = vld [vmem:[%s3484 + $0x26] sm:$0xff]
        %v3488 = vld [vmem:[%s3484 + $0x2e] sm:$0xff]
        %v3489 = vld [vmem:[%s3484 + $0x46] sm:$0xff]
        %v3490 = vld [vmem:[%s3484 + $0x4e] sm:$0xff]
        %v3491 = vld [vmem:[%s3484 + $0x66] sm:$0xff]
        %v3492 = vld [vmem:[%s3484 + $0x6e] sm:$0xff]
        %v3493 = vld [vmem:[%s3484 + $0x86] sm:$0xff]
        %v3494 = vld [vmem:[%s3484 + $0x8e] sm:$0xff]
        %v3495 = vld [vmem:[%s3484 + $0xa6] sm:$0xff]
        %v3496 = vld [vmem:[%s3484 + $0xae] sm:$0xff]
        %v3497 = vld [vmem:[%s3484 + $0xc6] sm:$0xff]
        %v3498 = vld [vmem:[%s3484 + $0xce] sm:$0xff]
        %v3499 = vld [vmem:[%s3484 + $0xe6] sm:$0xff]
        %v3500 = vld [vmem:[%s3484 + $0xee] sm:$0xff]
        %v3501 = vld [vmem:[%s3484 + $0x106] sm:$0xff]
        %v3502 = vld [vmem:[%s3484 + $0x10e] sm:$0xff]
        %v3503 = vld [vmem:[%s3484 + $0x126] sm:$0xff]
        %v3504 = vld [vmem:[%s3484 + $0x12e] sm:$0xff]
        %v3505 = vld [vmem:[%s3484 + $0x146] sm:$0xff]
        %v3506 = vld [vmem:[%s3484 + $0x14e] sm:$0xff]
        %v3507 = vld [vmem:[%s3484 + $0x166] sm:$0xff]
        %v3508 = vld [vmem:[%s3484 + $0x16e] sm:$0xff]
        %v3509 = vld [vmem:[%s3484 + $0x186] sm:$0xff]
        %v3510 = vld [vmem:[%s3484 + $0x18e] sm:$0xff]
        %v3511 = vld [vmem:[%s3484 + $0x1a6] sm:$0xff]
        %v3512 = vld [vmem:[%s3484 + $0x1ae] sm:$0xff]
        %v3513 = vld [vmem:[%s3484 + $0x1c6] sm:$0xff]
        %v3514 = vld [vmem:[%s3484 + $0x1ce] sm:$0xff]
        %v3515 = vld [vmem:[%s3484 + $0x1e6] sm:$0xff]
        %v3516 = vld [vmem:[%s3484 + $0x1ee] sm:$0xff]
        %3549 = vrot.lane.b32.xlu0 %v3485, 64
        %v3550 = vpop.permute.xlu0 %3549
        %3551 = vrot.lane.b32.xlu0 %v3486, 64
        %v3552 = vpop.permute.xlu0 %3551
        %3553 = vrot.lane.b32.xlu0 %v3487, 64
        %v3554 = vpop.permute.xlu0 %3553
        %3555 = vrot.lane.b32.xlu0 %v3488, 64
        %v3556 = vpop.permute.xlu0 %3555
        %3557 = vrot.lane.b32.xlu0 %v3489, 64
        %v3558 = vpop.permute.xlu0 %3557
        %3559 = vrot.lane.b32.xlu0 %v3490, 64
        %v3560 = vpop.permute.xlu0 %3559
        %3561 = vrot.lane.b32.xlu0 %v3491, 64
        %v3562 = vpop.permute.xlu0 %3561
        %3563 = vrot.lane.b32.xlu0 %v3492, 64
        %v3564 = vpop.permute.xlu0 %3563
        %3565 = vrot.lane.b32.xlu0 %v3493, 64
        %v3566 = vpop.permute.xlu0 %3565
        %3567 = vrot.lane.b32.xlu0 %v3494, 64
        %v3568 = vpop.permute.xlu0 %3567
        %3569 = vrot.lane.b32.xlu0 %v3495, 64
        %v3570 = vpop.permute.xlu0 %3569
        %3571 = vrot.lane.b32.xlu0 %v3496, 64
        %v3572 = vpop.permute.xlu0 %3571
        %3573 = vrot.lane.b32.xlu0 %v3497, 64
        %v3574 = vpop.permute.xlu0 %3573
        %3575 = vrot.lane.b32.xlu0 %v3498, 64
        %v3576 = vpop.permute.xlu0 %3575
        %3577 = vrot.lane.b32.xlu0 %v3499, 64
        %v3578 = vpop.permute.xlu0 %3577
        %3579 = vrot.lane.b32.xlu0 %v3500, 64
        %v3580 = vpop.permute.xlu0 %3579
        %3581 = vrot.lane.b32.xlu0 %v3501, 64
        %v3582 = vpop.permute.xlu0 %3581
        %3583 = vrot.lane.b32.xlu0 %v3502, 64
        %v3584 = vpop.permute.xlu0 %3583
        %3585 = vrot.lane.b32.xlu0 %v3503, 64
        %v3586 = vpop.permute.xlu0 %3585
        %3587 = vrot.lane.b32.xlu0 %v3504, 64
        %v3588 = vpop.permute.xlu0 %3587
        %3589 = vrot.lane.b32.xlu0 %v3505, 64
        %v3590 = vpop.permute.xlu0 %3589
        %3591 = vrot.lane.b32.xlu0 %v3506, 64
        %v3592 = vpop.permute.xlu0 %3591
        %3593 = vrot.lane.b32.xlu0 %v3507, 64
        %v3594 = vpop.permute.xlu0 %3593
        %3595 = vrot.lane.b32.xlu0 %v3508, 64
        %v3596 = vpop.permute.xlu0 %3595
        %3597 = vrot.lane.b32.xlu0 %v3509, 64
        %v3598 = vpop.permute.xlu0 %3597
        %3599 = vrot.lane.b32.xlu0 %v3510, 64
        %v3600 = vpop.permute.xlu0 %3599
        %3601 = vrot.lane.b32.xlu0 %v3511, 64
        %v3602 = vpop.permute.xlu0 %3601
        %3603 = vrot.lane.b32.xlu0 %v3512, 64
        %v3604 = vpop.permute.xlu0 %3603
        %3605 = vrot.lane.b32.xlu0 %v3513, 64
        %v3606 = vpop.permute.xlu0 %3605
        %3607 = vrot.lane.b32.xlu0 %v3514, 64
        %v3608 = vpop.permute.xlu0 %3607
        %3609 = vrot.lane.b32.xlu0 %v3515, 64
        %v3610 = vpop.permute.xlu0 %3609
        %3611 = vrot.lane.b32.xlu0 %v3516, 64
        %v3612 = vpop.permute.xlu0 %3611
        %3645 = vst.msk [vmem:[#allocation3 + $0x8] sm:$0xff] %vm813, %v3550
        %3646 = vst.msk [vmem:[#allocation3 + $0x20] sm:$0xff] %vm813, %v3552
        %3647 = vst.msk [vmem:[#allocation3 + $0x38] sm:$0xff] %vm813, %v3554
        %3648 = vst.msk [vmem:[#allocation3 + $0x50] sm:$0xff] %vm813, %v3556
        %3649 = vst.msk [vmem:[#allocation3 + $0x68] sm:$0xff] %vm813, %v3558
        %3650 = vst.msk [vmem:[#allocation3 + $0x80] sm:$0xff] %vm813, %v3560
        %3651 = vst.msk [vmem:[#allocation3 + $0x98] sm:$0xff] %vm813, %v3562
        %3652 = vst.msk [vmem:[#allocation3 + $0xb0] sm:$0xff] %vm813, %v3564
        %3653 = vst.msk [vmem:[#allocation3 + $0xc8] sm:$0xff] %vm813, %v3566
        %3654 = vst.msk [vmem:[#allocation3 + $0xe0] sm:$0xff] %vm813, %v3568
        %3655 = vst.msk [vmem:[#allocation3 + $0xf8] sm:$0xff] %vm813, %v3570
        %3656 = vst.msk [vmem:[#allocation3 + $0x110] sm:$0xff] %vm813, %v3572
        %3657 = vst.msk [vmem:[#allocation3 + $0x128] sm:$0xff] %vm813, %v3574
        %3658 = vst.msk [vmem:[#allocation3 + $0x140] sm:$0xff] %vm813, %v3576
        %3659 = vst.msk [vmem:[#allocation3 + $0x158] sm:$0xff] %vm813, %v3578
        %3660 = vst.msk [vmem:[#allocation3 + $0x170] sm:$0xff] %vm813, %v3580
        %3661 = vst.msk [vmem:[#allocation3 + $0x188] sm:$0xff] %vm813, %v3582
        %3662 = vst.msk [vmem:[#allocation3 + $0x1a0] sm:$0xff] %vm813, %v3584
        %3663 = vst.msk [vmem:[#allocation3 + $0x1b8] sm:$0xff] %vm813, %v3586
        %3664 = vst.msk [vmem:[#allocation3 + $0x1d0] sm:$0xff] %vm813, %v3588
        %3665 = vst.msk [vmem:[#allocation3 + $0x1e8] sm:$0xff] %vm813, %v3590
        %3666 = vst.msk [vmem:[#allocation3 + $0x200] sm:$0xff] %vm813, %v3592
        %3667 = vst.msk [vmem:[#allocation3 + $0x218] sm:$0xff] %vm813, %v3594
        %3668 = vst.msk [vmem:[#allocation3 + $0x230] sm:$0xff] %vm813, %v3596
        %3669 = vst.msk [vmem:[#allocation3 + $0x248] sm:$0xff] %vm813, %v3598
        %3670 = vst.msk [vmem:[#allocation3 + $0x260] sm:$0xff] %vm813, %v3600
        %3671 = vst.msk [vmem:[#allocation3 + $0x278] sm:$0xff] %vm813, %v3602
        %3672 = vst.msk [vmem:[#allocation3 + $0x290] sm:$0xff] %vm813, %v3604
        %3673 = vst.msk [vmem:[#allocation3 + $0x2a8] sm:$0xff] %vm813, %v3606
        %3674 = vst.msk [vmem:[#allocation3 + $0x2c0] sm:$0xff] %vm813, %v3608
        %3675 = vst.msk [vmem:[#allocation3 + $0x2d8] sm:$0xff] %vm813, %v3610
        %3676 = vst.msk [vmem:[#allocation3 + $0x2f0] sm:$0xff] %vm813, %v3612
        %v3677 = vld [vmem:[%s3484 + $0x8] sm:$0xff]
        %v3678 = vld [vmem:[%s3484 + $0x10] sm:$0xff]
        %v3679 = vld [vmem:[%s3484 + $0x28] sm:$0xff]
        %v3680 = vld [vmem:[%s3484 + $0x30] sm:$0xff]
        %v3681 = vld [vmem:[%s3484 + $0x48] sm:$0xff]
        %v3682 = vld [vmem:[%s3484 + $0x50] sm:$0xff]
        %v3683 = vld [vmem:[%s3484 + $0x68] sm:$0xff]
        %v3684 = vld [vmem:[%s3484 + $0x70] sm:$0xff]
        %v3685 = vld [vmem:[%s3484 + $0x88] sm:$0xff]
        %v3686 = vld [vmem:[%s3484 + $0x90] sm:$0xff]
        %v3687 = vld [vmem:[%s3484 + $0xa8] sm:$0xff]
        %v3688 = vld [vmem:[%s3484 + $0xb0] sm:$0xff]
        %v3689 = vld [vmem:[%s3484 + $0xc8] sm:$0xff]
        %v3690 = vld [vmem:[%s3484 + $0xd0] sm:$0xff]
        %v3691 = vld [vmem:[%s3484 + $0xe8] sm:$0xff]
        %v3692 = vld [vmem:[%s3484 + $0xf0] sm:$0xff]
        %v3693 = vld [vmem:[%s3484 + $0x108] sm:$0xff]
        %v3694 = vld [vmem:[%s3484 + $0x110] sm:$0xff]
        %v3695 = vld [vmem:[%s3484 + $0x128] sm:$0xff]
        %v3696 = vld [vmem:[%s3484 + $0x130] sm:$0xff]
        %v3697 = vld [vmem:[%s3484 + $0x148] sm:$0xff]
        %v3698 = vld [vmem:[%s3484 + $0x150] sm:$0xff]
        %v3699 = vld [vmem:[%s3484 + $0x168] sm:$0xff]
        %v3700 = vld [vmem:[%s3484 + $0x170] sm:$0xff]
        %v3701 = vld [vmem:[%s3484 + $0x188] sm:$0xff]
        %v3702 = vld [vmem:[%s3484 + $0x190] sm:$0xff]
        %v3703 = vld [vmem:[%s3484 + $0x1a8] sm:$0xff]
        %v3704 = vld [vmem:[%s3484 + $0x1b0] sm:$0xff]
        %v3705 = vld [vmem:[%s3484 + $0x1c8] sm:$0xff]
        %v3706 = vld [vmem:[%s3484 + $0x1d0] sm:$0xff]
        %v3707 = vld [vmem:[%s3484 + $0x1e8] sm:$0xff]
        %v3708 = vld [vmem:[%s3484 + $0x1f0] sm:$0xff]
        %3741 = vrot.lane.b32.xlu0 %v3677, 96
        %v3742 = vpop.permute.xlu0 %3741
        %3743 = vrot.lane.b32.xlu0 %v3678, 96
        %v3744 = vpop.permute.xlu0 %3743
        %3745 = vrot.lane.b32.xlu0 %v3679, 96
        %v3746 = vpop.permute.xlu0 %3745
        %3747 = vrot.lane.b32.xlu0 %v3680, 96
        %v3748 = vpop.permute.xlu0 %3747
        %3749 = vrot.lane.b32.xlu0 %v3681, 96
        %v3750 = vpop.permute.xlu0 %3749
        %3751 = vrot.lane.b32.xlu0 %v3682, 96
        %v3752 = vpop.permute.xlu0 %3751
        %3753 = vrot.lane.b32.xlu0 %v3683, 96
        %v3754 = vpop.permute.xlu0 %3753
        %3755 = vrot.lane.b32.xlu0 %v3684, 96
        %v3756 = vpop.permute.xlu0 %3755
        %3757 = vrot.lane.b32.xlu0 %v3685, 96
        %v3758 = vpop.permute.xlu0 %3757
        %3759 = vrot.lane.b32.xlu0 %v3686, 96
        %v3760 = vpop.permute.xlu0 %3759
        %3761 = vrot.lane.b32.xlu0 %v3687, 96
        %v3762 = vpop.permute.xlu0 %3761
        %3763 = vrot.lane.b32.xlu0 %v3688, 96
        %v3764 = vpop.permute.xlu0 %3763
        %3765 = vrot.lane.b32.xlu0 %v3689, 96
        %v3766 = vpop.permute.xlu0 %3765
        %3767 = vrot.lane.b32.xlu0 %v3690, 96
        %v3768 = vpop.permute.xlu0 %3767
        %3769 = vrot.lane.b32.xlu0 %v3691, 96
        %v3770 = vpop.permute.xlu0 %3769
        %3771 = vrot.lane.b32.xlu0 %v3692, 96
        %v3772 = vpop.permute.xlu0 %3771
        %3773 = vrot.lane.b32.xlu0 %v3693, 96
        %v3774 = vpop.permute.xlu0 %3773
        %3775 = vrot.lane.b32.xlu0 %v3694, 96
        %v3776 = vpop.permute.xlu0 %3775
        %3777 = vrot.lane.b32.xlu0 %v3695, 96
        %v3778 = vpop.permute.xlu0 %3777
        %3779 = vrot.lane.b32.xlu0 %v3696, 96
        %v3780 = vpop.permute.xlu0 %3779
        %3781 = vrot.lane.b32.xlu0 %v3697, 96
        %v3782 = vpop.permute.xlu0 %3781
        %3783 = vrot.lane.b32.xlu0 %v3698, 96
        %v3784 = vpop.permute.xlu0 %3783
        %3785 = vrot.lane.b32.xlu0 %v3699, 96
        %v3786 = vpop.permute.xlu0 %3785
        %3787 = vrot.lane.b32.xlu0 %v3700, 96
        %v3788 = vpop.permute.xlu0 %3787
        %3789 = vrot.lane.b32.xlu0 %v3701, 96
        %v3790 = vpop.permute.xlu0 %3789
        %3791 = vrot.lane.b32.xlu0 %v3702, 96
        %v3792 = vpop.permute.xlu0 %3791
        %3793 = vrot.lane.b32.xlu0 %v3703, 96
        %v3794 = vpop.permute.xlu0 %3793
        %3795 = vrot.lane.b32.xlu0 %v3704, 96
        %v3796 = vpop.permute.xlu0 %3795
        %3797 = vrot.lane.b32.xlu0 %v3705, 96
        %v3798 = vpop.permute.xlu0 %3797
        %3799 = vrot.lane.b32.xlu0 %v3706, 96
        %v3800 = vpop.permute.xlu0 %3799
        %3801 = vrot.lane.b32.xlu0 %v3707, 96
        %v3802 = vpop.permute.xlu0 %3801
        %3803 = vrot.lane.b32.xlu0 %v3708, 96
        %v3804 = vpop.permute.xlu0 %3803
        %3837 = vst.msk [vmem:[#allocation3 + $0x8] sm:$0xff] %vm1006, %v3742
        %3838 = vst.msk [vmem:[#allocation3 + $0x20] sm:$0xff] %vm1006, %v3744
        %3839 = vst.msk [vmem:[#allocation3 + $0x38] sm:$0xff] %vm1006, %v3746
        %3840 = vst.msk [vmem:[#allocation3 + $0x50] sm:$0xff] %vm1006, %v3748
        %3841 = vst.msk [vmem:[#allocation3 + $0x68] sm:$0xff] %vm1006, %v3750
        %3842 = vst.msk [vmem:[#allocation3 + $0x80] sm:$0xff] %vm1006, %v3752
        %3843 = vst.msk [vmem:[#allocation3 + $0x98] sm:$0xff] %vm1006, %v3754
        %3844 = vst.msk [vmem:[#allocation3 + $0xb0] sm:$0xff] %vm1006, %v3756
        %3845 = vst.msk [vmem:[#allocation3 + $0xc8] sm:$0xff] %vm1006, %v3758
        %3846 = vst.msk [vmem:[#allocation3 + $0xe0] sm:$0xff] %vm1006, %v3760
        %3847 = vst.msk [vmem:[#allocation3 + $0xf8] sm:$0xff] %vm1006, %v3762
        %3848 = vst.msk [vmem:[#allocation3 + $0x110] sm:$0xff] %vm1006, %v3764
        %3849 = vst.msk [vmem:[#allocation3 + $0x128] sm:$0xff] %vm1006, %v3766
        %3850 = vst.msk [vmem:[#allocation3 + $0x140] sm:$0xff] %vm1006, %v3768
        %3851 = vst.msk [vmem:[#allocation3 + $0x158] sm:$0xff] %vm1006, %v3770
        %3852 = vst.msk [vmem:[#allocation3 + $0x170] sm:$0xff] %vm1006, %v3772
        %3853 = vst.msk [vmem:[#allocation3 + $0x188] sm:$0xff] %vm1006, %v3774
        %3854 = vst.msk [vmem:[#allocation3 + $0x1a0] sm:$0xff] %vm1006, %v3776
        %3855 = vst.msk [vmem:[#allocation3 + $0x1b8] sm:$0xff] %vm1006, %v3778
        %3856 = vst.msk [vmem:[#allocation3 + $0x1d0] sm:$0xff] %vm1006, %v3780
        %3857 = vst.msk [vmem:[#allocation3 + $0x1e8] sm:$0xff] %vm1006, %v3782
        %3858 = vst.msk [vmem:[#allocation3 + $0x200] sm:$0xff] %vm1006, %v3784
        %3859 = vst.msk [vmem:[#allocation3 + $0x218] sm:$0xff] %vm1006, %v3786
        %3860 = vst.msk [vmem:[#allocation3 + $0x230] sm:$0xff] %vm1006, %v3788
        %3861 = vst.msk [vmem:[#allocation3 + $0x248] sm:$0xff] %vm1006, %v3790
        %3862 = vst.msk [vmem:[#allocation3 + $0x260] sm:$0xff] %vm1006, %v3792
        %3863 = vst.msk [vmem:[#allocation3 + $0x278] sm:$0xff] %vm1006, %v3794
        %3864 = vst.msk [vmem:[#allocation3 + $0x290] sm:$0xff] %vm1006, %v3796
        %3865 = vst.msk [vmem:[#allocation3 + $0x2a8] sm:$0xff] %vm1006, %v3798
        %3866 = vst.msk [vmem:[#allocation3 + $0x2c0] sm:$0xff] %vm1006, %v3800
        %3867 = vst.msk [vmem:[#allocation3 + $0x2d8] sm:$0xff] %vm1006, %v3802
        %3868 = vst.msk [vmem:[#allocation3 + $0x2f0] sm:$0xff] %vm1006, %v3804
        %v3869 = vld [vmem:[%s3484 + $0xa] sm:$0xff]
        %v3870 = vld [vmem:[%s3484 + $0x12] sm:$0xff]
        %v3871 = vld [vmem:[%s3484 + $0x2a] sm:$0xff]
        %v3872 = vld [vmem:[%s3484 + $0x32] sm:$0xff]
        %v3873 = vld [vmem:[%s3484 + $0x4a] sm:$0xff]
        %v3874 = vld [vmem:[%s3484 + $0x52] sm:$0xff]
        %v3875 = vld [vmem:[%s3484 + $0x6a] sm:$0xff]
        %v3876 = vld [vmem:[%s3484 + $0x72] sm:$0xff]
        %v3877 = vld [vmem:[%s3484 + $0x8a] sm:$0xff]
        %v3878 = vld [vmem:[%s3484 + $0x92] sm:$0xff]
        %v3879 = vld [vmem:[%s3484 + $0xaa] sm:$0xff]
        %v3880 = vld [vmem:[%s3484 + $0xb2] sm:$0xff]
        %v3881 = vld [vmem:[%s3484 + $0xca] sm:$0xff]
        %v3882 = vld [vmem:[%s3484 + $0xd2] sm:$0xff]
        %v3883 = vld [vmem:[%s3484 + $0xea] sm:$0xff]
        %v3884 = vld [vmem:[%s3484 + $0xf2] sm:$0xff]
        %v3885 = vld [vmem:[%s3484 + $0x10a] sm:$0xff]
        %v3886 = vld [vmem:[%s3484 + $0x112] sm:$0xff]
        %v3887 = vld [vmem:[%s3484 + $0x12a] sm:$0xff]
        %v3888 = vld [vmem:[%s3484 + $0x132] sm:$0xff]
        %v3889 = vld [vmem:[%s3484 + $0x14a] sm:$0xff]
        %v3890 = vld [vmem:[%s3484 + $0x152] sm:$0xff]
        %v3891 = vld [vmem:[%s3484 + $0x16a] sm:$0xff]
        %v3892 = vld [vmem:[%s3484 + $0x172] sm:$0xff]
        %v3893 = vld [vmem:[%s3484 + $0x18a] sm:$0xff]
        %v3894 = vld [vmem:[%s3484 + $0x192] sm:$0xff]
        %v3895 = vld [vmem:[%s3484 + $0x1aa] sm:$0xff]
        %v3896 = vld [vmem:[%s3484 + $0x1b2] sm:$0xff]
        %v3897 = vld [vmem:[%s3484 + $0x1ca] sm:$0xff]
        %v3898 = vld [vmem:[%s3484 + $0x1d2] sm:$0xff]
        %v3899 = vld [vmem:[%s3484 + $0x1ea] sm:$0xff]
        %v3900 = vld [vmem:[%s3484 + $0x1f2] sm:$0xff]
        %3901 = vst.msk [vmem:[#allocation3 + $0x10] sm:$0xff] %vm201, %v3869
        %3902 = vst.msk [vmem:[#allocation3 + $0x28] sm:$0xff] %vm201, %v3870
        %3903 = vst.msk [vmem:[#allocation3 + $0x40] sm:$0xff] %vm201, %v3871
        %3904 = vst.msk [vmem:[#allocation3 + $0x58] sm:$0xff] %vm201, %v3872
        %3905 = vst.msk [vmem:[#allocation3 + $0x70] sm:$0xff] %vm201, %v3873
        %3906 = vst.msk [vmem:[#allocation3 + $0x88] sm:$0xff] %vm201, %v3874
        %3907 = vst.msk [vmem:[#allocation3 + $0xa0] sm:$0xff] %vm201, %v3875
        %3908 = vst.msk [vmem:[#allocation3 + $0xb8] sm:$0xff] %vm201, %v3876
        %3909 = vst.msk [vmem:[#allocation3 + $0xd0] sm:$0xff] %vm201, %v3877
        %3910 = vst.msk [vmem:[#allocation3 + $0xe8] sm:$0xff] %vm201, %v3878
        %3911 = vst.msk [vmem:[#allocation3 + $0x100] sm:$0xff] %vm201, %v3879
        %3912 = vst.msk [vmem:[#allocation3 + $0x118] sm:$0xff] %vm201, %v3880
        %3913 = vst.msk [vmem:[#allocation3 + $0x130] sm:$0xff] %vm201, %v3881
        %3914 = vst.msk [vmem:[#allocation3 + $0x148] sm:$0xff] %vm201, %v3882
        %3915 = vst.msk [vmem:[#allocation3 + $0x160] sm:$0xff] %vm201, %v3883
        %3916 = vst.msk [vmem:[#allocation3 + $0x178] sm:$0xff] %vm201, %v3884
        %3917 = vst.msk [vmem:[#allocation3 + $0x190] sm:$0xff] %vm201, %v3885
        %3918 = vst.msk [vmem:[#allocation3 + $0x1a8] sm:$0xff] %vm201, %v3886
        %3919 = vst.msk [vmem:[#allocation3 + $0x1c0] sm:$0xff] %vm201, %v3887
        %3920 = vst.msk [vmem:[#allocation3 + $0x1d8] sm:$0xff] %vm201, %v3888
        %3921 = vst.msk [vmem:[#allocation3 + $0x1f0] sm:$0xff] %vm201, %v3889
        %3922 = vst.msk [vmem:[#allocation3 + $0x208] sm:$0xff] %vm201, %v3890
        %3923 = vst.msk [vmem:[#allocation3 + $0x220] sm:$0xff] %vm201, %v3891
        %3924 = vst.msk [vmem:[#allocation3 + $0x238] sm:$0xff] %vm201, %v3892
        %3925 = vst.msk [vmem:[#allocation3 + $0x250] sm:$0xff] %vm201, %v3893
        %3926 = vst.msk [vmem:[#allocation3 + $0x268] sm:$0xff] %vm201, %v3894
        %3927 = vst.msk [vmem:[#allocation3 + $0x280] sm:$0xff] %vm201, %v3895
        %3928 = vst.msk [vmem:[#allocation3 + $0x298] sm:$0xff] %vm201, %v3896
        %3929 = vst.msk [vmem:[#allocation3 + $0x2b0] sm:$0xff] %vm201, %v3897
        %3930 = vst.msk [vmem:[#allocation3 + $0x2c8] sm:$0xff] %vm201, %v3898
        %3931 = vst.msk [vmem:[#allocation3 + $0x2e0] sm:$0xff] %vm201, %v3899
        %3932 = vst.msk [vmem:[#allocation3 + $0x2f8] sm:$0xff] %vm201, %v3900
        %v3933 = vld [vmem:[#allocation3] sm:$0xff]
        %v3934 = vld [vmem:[#allocation3 + $0x8] sm:$0xff]
        %v3935 = vld [vmem:[#allocation3 + $0x10] sm:$0xff]
        %v3936 = vld [vmem:[#allocation3 + $0x18] sm:$0xff]
        %v3937 = vld [vmem:[#allocation3 + $0x20] sm:$0xff]
        %v3938 = vld [vmem:[#allocation3 + $0x28] sm:$0xff]
        %v3939 = vld [vmem:[#allocation3 + $0x30] sm:$0xff]
        %v3940 = vld [vmem:[#allocation3 + $0x38] sm:$0xff]
        %v3941 = vld [vmem:[#allocation3 + $0x40] sm:$0xff]
        %v3942 = vld [vmem:[#allocation3 + $0x48] sm:$0xff]
        %v3943 = vld [vmem:[#allocation3 + $0x50] sm:$0xff]
        %v3944 = vld [vmem:[#allocation3 + $0x58] sm:$0xff]
        %v3945 = vld [vmem:[#allocation3 + $0x60] sm:$0xff]
        %v3946 = vld [vmem:[#allocation3 + $0x68] sm:$0xff]
        %v3947 = vld [vmem:[#allocation3 + $0x70] sm:$0xff]
        %v3948 = vld [vmem:[#allocation3 + $0x78] sm:$0xff]
        %v3949 = vld [vmem:[#allocation3 + $0x80] sm:$0xff]
        %v3950 = vld [vmem:[#allocation3 + $0x88] sm:$0xff]
        %v3951 = vld [vmem:[#allocation3 + $0x90] sm:$0xff]
        %v3952 = vld [vmem:[#allocation3 + $0x98] sm:$0xff]
        %v3953 = vld [vmem:[#allocation3 + $0xa0] sm:$0xff]
        %v3954 = vld [vmem:[#allocation3 + $0xa8] sm:$0xff]
        %v3955 = vld [vmem:[#allocation3 + $0xb0] sm:$0xff]
        %v3956 = vld [vmem:[#allocation3 + $0xb8] sm:$0xff]
        %v3957 = vld [vmem:[#allocation3 + $0xc0] sm:$0xff]
        %v3958 = vld [vmem:[#allocation3 + $0xc8] sm:$0xff]
        %v3959 = vld [vmem:[#allocation3 + $0xd0] sm:$0xff]
        %v3960 = vld [vmem:[#allocation3 + $0xd8] sm:$0xff]
        %v3961 = vld [vmem:[#allocation3 + $0xe0] sm:$0xff]
        %v3962 = vld [vmem:[#allocation3 + $0xe8] sm:$0xff]
        %v3963 = vld [vmem:[#allocation3 + $0xf0] sm:$0xff]
        %v3964 = vld [vmem:[#allocation3 + $0xf8] sm:$0xff]
        %v3965 = vld [vmem:[#allocation3 + $0x100] sm:$0xff]
        %v3966 = vld [vmem:[#allocation3 + $0x108] sm:$0xff]
        %v3967 = vld [vmem:[#allocation3 + $0x110] sm:$0xff]
        %v3968 = vld [vmem:[#allocation3 + $0x118] sm:$0xff]
        %v3969 = vld [vmem:[#allocation3 + $0x120] sm:$0xff]
        %v3970 = vld [vmem:[#allocation3 + $0x128] sm:$0xff]
        %v3971 = vld [vmem:[#allocation3 + $0x130] sm:$0xff]
        %v3972 = vld [vmem:[#allocation3 + $0x138] sm:$0xff]
        %v3973 = vld [vmem:[#allocation3 + $0x140] sm:$0xff]
        %v3974 = vld [vmem:[#allocation3 + $0x148] sm:$0xff]
        %v3975 = vld [vmem:[#allocation3 + $0x150] sm:$0xff]
        %v3976 = vld [vmem:[#allocation3 + $0x158] sm:$0xff]
        %v3977 = vld [vmem:[#allocation3 + $0x160] sm:$0xff]
        %v3978 = vld [vmem:[#allocation3 + $0x168] sm:$0xff]
        %v3979 = vld [vmem:[#allocation3 + $0x170] sm:$0xff]
        %v3980 = vld [vmem:[#allocation3 + $0x178] sm:$0xff]
        %v3981 = vld [vmem:[#allocation3 + $0x180] sm:$0xff]
        %v3982 = vld [vmem:[#allocation3 + $0x188] sm:$0xff]
        %v3983 = vld [vmem:[#allocation3 + $0x190] sm:$0xff]
        %v3984 = vld [vmem:[#allocation3 + $0x198] sm:$0xff]
        %v3985 = vld [vmem:[#allocation3 + $0x1a0] sm:$0xff]
        %v3986 = vld [vmem:[#allocation3 + $0x1a8] sm:$0xff]
        %v3987 = vld [vmem:[#allocation3 + $0x1b0] sm:$0xff]
        %v3988 = vld [vmem:[#allocation3 + $0x1b8] sm:$0xff]
        %v3989 = vld [vmem:[#allocation3 + $0x1c0] sm:$0xff]
        %v3990 = vld [vmem:[#allocation3 + $0x1c8] sm:$0xff]
        %v3991 = vld [vmem:[#allocation3 + $0x1d0] sm:$0xff]
        %v3992 = vld [vmem:[#allocation3 + $0x1d8] sm:$0xff]
        %v3993 = vld [vmem:[#allocation3 + $0x1e0] sm:$0xff]
        %v3994 = vld [vmem:[#allocation3 + $0x1e8] sm:$0xff]
        %v3995 = vld [vmem:[#allocation3 + $0x1f0] sm:$0xff]
        %v3996 = vld [vmem:[#allocation3 + $0x1f8] sm:$0xff]
        %v3997 = vld [vmem:[#allocation3 + $0x200] sm:$0xff]
        %v3998 = vld [vmem:[#allocation3 + $0x208] sm:$0xff]
        %v3999 = vld [vmem:[#allocation3 + $0x210] sm:$0xff]
        %v4000 = vld [vmem:[#allocation3 + $0x218] sm:$0xff]
        %v4001 = vld [vmem:[#allocation3 + $0x220] sm:$0xff]
        %v4002 = vld [vmem:[#allocation3 + $0x228] sm:$0xff]
        %v4003 = vld [vmem:[#allocation3 + $0x230] sm:$0xff]
        %v4004 = vld [vmem:[#allocation3 + $0x238] sm:$0xff]
        %v4005 = vld [vmem:[#allocation3 + $0x240] sm:$0xff]
        %v4006 = vld [vmem:[#allocation3 + $0x248] sm:$0xff]
        %v4007 = vld [vmem:[#allocation3 + $0x250] sm:$0xff]
        %v4008 = vld [vmem:[#allocation3 + $0x258] sm:$0xff]
        %v4009 = vld [vmem:[#allocation3 + $0x260] sm:$0xff]
        %v4010 = vld [vmem:[#allocation3 + $0x268] sm:$0xff]
        %v4011 = vld [vmem:[#allocation3 + $0x270] sm:$0xff]
        %v4012 = vld [vmem:[#allocation3 + $0x278] sm:$0xff]
        %v4013 = vld [vmem:[#allocation3 + $0x280] sm:$0xff]
        %v4014 = vld [vmem:[#allocation3 + $0x288] sm:$0xff]
        %v4015 = vld [vmem:[#allocation3 + $0x290] sm:$0xff]
        %v4016 = vld [vmem:[#allocation3 + $0x298] sm:$0xff]
        %v4017 = vld [vmem:[#allocation3 + $0x2a0] sm:$0xff]
        %v4018 = vld [vmem:[#allocation3 + $0x2a8] sm:$0xff]
        %v4019 = vld [vmem:[#allocation3 + $0x2b0] sm:$0xff]
        %v4020 = vld [vmem:[#allocation3 + $0x2b8] sm:$0xff]
        %v4021 = vld [vmem:[#allocation3 + $0x2c0] sm:$0xff]
        %v4022 = vld [vmem:[#allocation3 + $0x2c8] sm:$0xff]
        %v4023 = vld [vmem:[#allocation3 + $0x2d0] sm:$0xff]
        %v4024 = vld [vmem:[#allocation3 + $0x2d8] sm:$0xff]
        %v4025 = vld [vmem:[#allocation3 + $0x2e0] sm:$0xff]
        %v4026 = vld [vmem:[#allocation3 + $0x2e8] sm:$0xff]
        %v4027 = vld [vmem:[#allocation3 + $0x2f0] sm:$0xff]
        %v4028 = vld [vmem:[#allocation3 + $0x2f8] sm:$0xff]
        %s4029 = scalar_lea.vmem %s1, 288
        %v4030 = vld [vmem:[%s4029] sm:$0xff]
        %v4031 = vld [vmem:[%s4029 + $0x8] sm:$0xff]
        %v4032 = vld [vmem:[%s4029 + $0x10] sm:$0xff]
        %v4033 = vld [vmem:[%s4029 + $0x18] sm:$0xff]
        %v4034 = vld [vmem:[%s4029 + $0x20] sm:$0xff]
        %v4035 = vld [vmem:[%s4029 + $0x28] sm:$0xff]
        %v4036 = vld [vmem:[%s4029 + $0x30] sm:$0xff]
        %v4037 = vld [vmem:[%s4029 + $0x38] sm:$0xff]
        %v4038 = vld [vmem:[%s4029 + $0x40] sm:$0xff]
        %v4039 = vld [vmem:[%s4029 + $0x48] sm:$0xff]
        %v4040 = vld [vmem:[%s4029 + $0x50] sm:$0xff]
        %v4041 = vld [vmem:[%s4029 + $0x58] sm:$0xff]
        %v4042 = vld [vmem:[%s4029 + $0x60] sm:$0xff]
        %v4043 = vld [vmem:[%s4029 + $0x68] sm:$0xff]
        %v4044 = vld [vmem:[%s4029 + $0x70] sm:$0xff]
        %v4045 = vld [vmem:[%s4029 + $0x78] sm:$0xff]
        %v4046 = vld [vmem:[%s4029 + $0x80] sm:$0xff]
        %v4047 = vld [vmem:[%s4029 + $0x88] sm:$0xff]
        %v4048 = vld [vmem:[%s4029 + $0x90] sm:$0xff]
        %v4049 = vld [vmem:[%s4029 + $0x98] sm:$0xff]
        %v4050 = vld [vmem:[%s4029 + $0xa0] sm:$0xff]
        %v4051 = vld [vmem:[%s4029 + $0xa8] sm:$0xff]
        %v4052 = vld [vmem:[%s4029 + $0xb0] sm:$0xff]
        %v4053 = vld [vmem:[%s4029 + $0xb8] sm:$0xff]
        %v4054 = vld [vmem:[%s4029 + $0xc0] sm:$0xff]
        %v4055 = vld [vmem:[%s4029 + $0xc8] sm:$0xff]
        %v4056 = vld [vmem:[%s4029 + $0xd0] sm:$0xff]
        %v4057 = vld [vmem:[%s4029 + $0xd8] sm:$0xff]
        %v4058 = vld [vmem:[%s4029 + $0xe0] sm:$0xff]
        %v4059 = vld [vmem:[%s4029 + $0xe8] sm:$0xff]
        %v4060 = vld [vmem:[%s4029 + $0xf0] sm:$0xff]
        %v4061 = vld [vmem:[%s4029 + $0xf8] sm:$0xff]
        %v4062 = vld [vmem:[%s4029 + $0x100] sm:$0xff]
        %v4063 = vld [vmem:[%s4029 + $0x108] sm:$0xff]
        %v4064 = vld [vmem:[%s4029 + $0x110] sm:$0xff]
        %v4065 = vld [vmem:[%s4029 + $0x118] sm:$0xff]
        %v4066 = vld [vmem:[%s2 + $0x1] sm:$0x1]
        %v4067 = vlaneseq
        %v4068 = vshrl.u32 %v4067, 7
        %v4069 = vsub.s32 0, %v4068
        %v4070 = vrot.slane %v4066, %v4069
        %v4072 = vsel %vm201, %v3935, 0
        %v4075 = vsel %vm201, %v3938, 0
        %v4078 = vsel %vm201, %v3941, 0
        %v4081 = vsel %vm201, %v3944, 0
        %v4084 = vsel %vm201, %v3947, 0
        %v4087 = vsel %vm201, %v3950, 0
        %v4090 = vsel %vm201, %v3953, 0
        %v4093 = vsel %vm201, %v3956, 0
        %v4096 = vsel %vm201, %v3959, 0
        %v4099 = vsel %vm201, %v3962, 0
        %v4102 = vsel %vm201, %v3965, 0
        %v4105 = vsel %vm201, %v3968, 0
        %v4108 = vsel %vm201, %v3971, 0
        %v4111 = vsel %vm201, %v3974, 0
        %v4114 = vsel %vm201, %v3977, 0
        %v4117 = vsel %vm201, %v3980, 0
        %v4120 = vsel %vm201, %v3983, 0
        %v4123 = vsel %vm201, %v3986, 0
        %v4126 = vsel %vm201, %v3989, 0
        %v4129 = vsel %vm201, %v3992, 0
        %v4132 = vsel %vm201, %v3995, 0
        %v4135 = vsel %vm201, %v3998, 0
        %v4138 = vsel %vm201, %v4001, 0
        %v4141 = vsel %vm201, %v4004, 0
        %v4144 = vsel %vm201, %v4007, 0
        %v4147 = vsel %vm201, %v4010, 0
        %v4150 = vsel %vm201, %v4013, 0
        %v4153 = vsel %vm201, %v4016, 0
        %v4156 = vsel %vm201, %v4019, 0
        %v4159 = vsel %vm201, %v4022, 0
        %v4162 = vsel %vm201, %v4025, 0
        %v4165 = vsel %vm201, %v4028, 0
        %4167 = vmatprep.subr.mxu0 0.0
        %4168 = vmatpush1.msra.mxu0 %v4045
        %4169 = vmatprep.subr.mxu0 0.0
        %4170 = vmatpush1.msra.mxu0 %v4044
        %4171 = vmatprep.subr.mxu0 0.0
        %4172 = vmatpush1.msra.mxu0 %v4043
        %4173 = vmatprep.subr.mxu0 0.0
        %4174 = vmatpush1.msra.mxu0 %v4042
        %4175 = vmatprep.subr.mxu0 0.0
        %4176 = vmatpush1.msra.mxu0 %v4041
        %4177 = vmatprep.subr.mxu0 0.0
        %4178 = vmatpush1.msra.mxu0 %v4040
        %4179 = vmatprep.subr.mxu0 0.0
        %4180 = vmatpush1.msra.mxu0 %v4039
        %4181 = vmatprep.subr.mxu0 0.0
        %4182 = vmatpush1.msra.mxu0 %v4038
        %4183 = vmatprep.subr.mxu0 0.0
        %4184 = vmatpush1.msra.mxu0 %v4037
        %4185 = vmatprep.subr.mxu0 0.0
        %4186 = vmatpush1.msra.mxu0 %v4036
        %4187 = vmatprep.subr.mxu0 0.0
        %4188 = vmatpush1.msra.mxu0 %v4035
        %4189 = vmatprep.subr.mxu0 0.0
        %4190 = vmatpush1.msra.mxu0 %v4034
        %4191 = vmatprep.subr.mxu0 0.0
        %4192 = vmatpush1.msra.mxu0 %v4033
        %4193 = vmatprep.subr.mxu0 0.0
        %4194 = vmatpush1.msra.mxu0 %v4032
        %4195 = vmatprep.subr.mxu0 0.0
        %4196 = vmatpush1.msra.mxu0 %v4031
        %4197 = vmatprep.subr.mxu0 0.0
        %4198 = vmatpush1.msra.mxu0 %v4030
        %4199 = vmatprep.subr.mxu0 0.0
        %4200 = vmatpush2.msra.mxu0 %v4061
        %4201 = vmatprep.subr.mxu0 0.0
        %4202 = vmatpush2.msra.mxu0 %v4060
        %4203 = vmatprep.subr.mxu0 0.0
        %4204 = vmatpush2.msra.mxu0 %v4059
        %4205 = vmatprep.subr.mxu0 0.0
        %4206 = vmatpush2.msra.mxu0 %v4058
        %4207 = vmatprep.subr.mxu0 0.0
        %4208 = vmatpush2.msra.mxu0 %v4057
        %4209 = vmatprep.subr.mxu0 0.0
        %4210 = vmatpush2.msra.mxu0 %v4056
        %4211 = vmatprep.subr.mxu0 0.0
        %4212 = vmatpush2.msra.mxu0 %v4055
        %4213 = vmatprep.subr.mxu0 0.0
        %4214 = vmatpush2.msra.mxu0 %v4054
        %4215 = vmatprep.subr.mxu0 0.0
        %4216 = vmatpush2.msra.mxu0 %v4053
        %4217 = vmatprep.subr.mxu0 0.0
        %4218 = vmatpush2.msra.mxu0 %v4052
        %4219 = vmatprep.subr.mxu0 0.0
        %4220 = vmatpush2.msra.mxu0 %v4051
        %4221 = vmatprep.subr.mxu0 0.0
        %4222 = vmatpush2.msra.mxu0 %v4050
        %4223 = vmatprep.subr.mxu0 0.0
        %4224 = vmatpush2.msra.mxu0 %v4049
        %4225 = vmatprep.subr.mxu0 0.0
        %4226 = vmatpush2.msra.mxu0 %v4048
        %4227 = vmatprep.subr.mxu0 0.0
        %4228 = vmatpush2.msra.mxu0 %v4047
        %4229 = vmatprep.subr.mxu0 0.0
        %4230 = vmatpush2.msra.mxu0 %v4046
        %4231 = vmatprep.mubr.f32.mxu0 %v3934
        %4232 = vmatmul.mubr.f32.gmra.mxu0 %v3933
        %v4233 = vpop.f32.mrf.mxu0
        %v4234 = vadd.f32 %v4070, %v4233
        %v4235 = vpop.f32.mrf.mxu0
        %4236 = vmatprep.mubr.f32.mxu0 %v3937
        %4237 = vmatmul.mubr.f32.gmra.mxu0 %v3936
        %v4238 = vpop.f32.mrf.mxu0
        %v4239 = vadd.f32 %v4070, %v4238
        %v4240 = vpop.f32.mrf.mxu0
        %4241 = vmatprep.mubr.f32.mxu0 %v3940
        %4242 = vmatmul.mubr.f32.gmra.mxu0 %v3939
        %v4243 = vpop.f32.mrf.mxu0
        %v4244 = vadd.f32 %v4070, %v4243
        %v4245 = vpop.f32.mrf.mxu0
        %4246 = vmatprep.mubr.f32.mxu0 %v3943
        %4247 = vmatmul.mubr.f32.gmra.mxu0 %v3942
        %v4248 = vpop.f32.mrf.mxu0
        %v4249 = vadd.f32 %v4070, %v4248
        %v4250 = vpop.f32.mrf.mxu0
        %4251 = vmatprep.mubr.f32.mxu0 %v3946
        %4252 = vmatmul.mubr.f32.gmra.mxu0 %v3945
        %v4253 = vpop.f32.mrf.mxu0
        %v4254 = vadd.f32 %v4070, %v4253
        %v4255 = vpop.f32.mrf.mxu0
        %4256 = vmatprep.mubr.f32.mxu0 %v3949
        %4257 = vmatmul.mubr.f32.gmra.mxu0 %v3948
        %v4258 = vpop.f32.mrf.mxu0
        %v4259 = vadd.f32 %v4070, %v4258
        %v4260 = vpop.f32.mrf.mxu0
        %4261 = vmatprep.mubr.f32.mxu0 %v3952
        %4262 = vmatmul.mubr.f32.gmra.mxu0 %v3951
        %v4263 = vpop.f32.mrf.mxu0
        %v4264 = vadd.f32 %v4070, %v4263
        %v4265 = vpop.f32.mrf.mxu0
        %4266 = vmatprep.mubr.f32.mxu0 %v3955
        %4267 = vmatmul.mubr.f32.gmra.mxu0 %v3954
        %v4268 = vpop.f32.mrf.mxu0
        %v4269 = vadd.f32 %v4070, %v4268
        %v4270 = vpop.f32.mrf.mxu0
        %4271 = vmatprep.mubr.f32.mxu0 %v3958
        %4272 = vmatmul.mubr.f32.gmra.mxu0 %v3957
        %v4273 = vpop.f32.mrf.mxu0
        %v4274 = vadd.f32 %v4070, %v4273
        %v4275 = vpop.f32.mrf.mxu0
        %4276 = vmatprep.mubr.f32.mxu0 %v3961
        %4277 = vmatmul.mubr.f32.gmra.mxu0 %v3960
        %v4278 = vpop.f32.mrf.mxu0
        %v4279 = vadd.f32 %v4070, %v4278
        %v4280 = vpop.f32.mrf.mxu0
        %4281 = vmatprep.mubr.f32.mxu0 %v3964
        %4282 = vmatmul.mubr.f32.gmra.mxu0 %v3963
        %v4283 = vpop.f32.mrf.mxu0
        %v4284 = vadd.f32 %v4070, %v4283
        %v4285 = vpop.f32.mrf.mxu0
        %4286 = vmatprep.mubr.f32.mxu0 %v3967
        %4287 = vmatmul.mubr.f32.gmra.mxu0 %v3966
        %v4288 = vpop.f32.mrf.mxu0
        %v4289 = vadd.f32 %v4070, %v4288
        %v4290 = vpop.f32.mrf.mxu0
        %4291 = vmatprep.mubr.f32.mxu0 %v3970
        %4292 = vmatmul.mubr.f32.gmra.mxu0 %v3969
        %v4293 = vpop.f32.mrf.mxu0
        %v4294 = vadd.f32 %v4070, %v4293
        %v4295 = vpop.f32.mrf.mxu0
        %4296 = vmatprep.mubr.f32.mxu0 %v3973
        %4297 = vmatmul.mubr.f32.gmra.mxu0 %v3972
        %v4298 = vpop.f32.mrf.mxu0
        %v4299 = vadd.f32 %v4070, %v4298
        %v4300 = vpop.f32.mrf.mxu0
        %4301 = vmatprep.mubr.f32.mxu0 %v3976
        %4302 = vmatmul.mubr.f32.gmra.mxu0 %v3975
        %v4303 = vpop.f32.mrf.mxu0
        %v4304 = vadd.f32 %v4070, %v4303
        %v4305 = vpop.f32.mrf.mxu0
        %4306 = vmatprep.mubr.f32.mxu0 %v3979
        %4307 = vmatmul.mubr.f32.gmra.mxu0 %v3978
        %v4308 = vpop.f32.mrf.mxu0
        %v4309 = vadd.f32 %v4070, %v4308
        %v4310 = vpop.f32.mrf.mxu0
        %4311 = vmatprep.mubr.f32.mxu0 %v3982
        %4312 = vmatmul.mubr.f32.gmra.mxu0 %v3981
        %v4313 = vpop.f32.mrf.mxu0
        %v4314 = vadd.f32 %v4070, %v4313
        %v4315 = vpop.f32.mrf.mxu0
        %4316 = vmatprep.mubr.f32.mxu0 %v3985
        %4317 = vmatmul.mubr.f32.gmra.mxu0 %v3984
        %v4318 = vpop.f32.mrf.mxu0
        %v4319 = vadd.f32 %v4070, %v4318
        %v4320 = vpop.f32.mrf.mxu0
        %4321 = vmatprep.mubr.f32.mxu0 %v3988
        %4322 = vmatmul.mubr.f32.gmra.mxu0 %v3987
        %v4323 = vpop.f32.mrf.mxu0
        %v4324 = vadd.f32 %v4070, %v4323
        %v4325 = vpop.f32.mrf.mxu0
        %4326 = vmatprep.mubr.f32.mxu0 %v3991
        %4327 = vmatmul.mubr.f32.gmra.mxu0 %v3990
        %v4328 = vpop.f32.mrf.mxu0
        %v4329 = vadd.f32 %v4070, %v4328
        %v4330 = vpop.f32.mrf.mxu0
        %4331 = vmatprep.mubr.f32.mxu0 %v3994
        %4332 = vmatmul.mubr.f32.gmra.mxu0 %v3993
        %v4333 = vpop.f32.mrf.mxu0
        %v4334 = vadd.f32 %v4070, %v4333
        %v4335 = vpop.f32.mrf.mxu0
        %4336 = vmatprep.mubr.f32.mxu0 %v3997
        %4337 = vmatmul.mubr.f32.gmra.mxu0 %v3996
        %v4338 = vpop.f32.mrf.mxu0
        %v4339 = vadd.f32 %v4070, %v4338
        %v4340 = vpop.f32.mrf.mxu0
        %4341 = vmatprep.mubr.f32.mxu0 %v4000
        %4342 = vmatmul.mubr.f32.gmra.mxu0 %v3999
        %v4343 = vpop.f32.mrf.mxu0
        %v4344 = vadd.f32 %v4070, %v4343
        %v4345 = vpop.f32.mrf.mxu0
        %4346 = vmatprep.mubr.f32.mxu0 %v4003
        %4347 = vmatmul.mubr.f32.gmra.mxu0 %v4002
        %v4348 = vpop.f32.mrf.mxu0
        %v4349 = vadd.f32 %v4070, %v4348
        %v4350 = vpop.f32.mrf.mxu0
        %4351 = vmatprep.mubr.f32.mxu0 %v4006
        %4352 = vmatmul.mubr.f32.gmra.mxu0 %v4005
        %v4353 = vpop.f32.mrf.mxu0
        %v4354 = vadd.f32 %v4070, %v4353
        %v4355 = vpop.f32.mrf.mxu0
        %4356 = vmatprep.mubr.f32.mxu0 %v4009
        %4357 = vmatmul.mubr.f32.gmra.mxu0 %v4008
        %v4358 = vpop.f32.mrf.mxu0
        %v4359 = vadd.f32 %v4070, %v4358
        %v4360 = vpop.f32.mrf.mxu0
        %4361 = vmatprep.mubr.f32.mxu0 %v4012
        %4362 = vmatmul.mubr.f32.gmra.mxu0 %v4011
        %v4363 = vpop.f32.mrf.mxu0
        %v4364 = vadd.f32 %v4070, %v4363
        %v4365 = vpop.f32.mrf.mxu0
        %4366 = vmatprep.mubr.f32.mxu0 %v4015
        %4367 = vmatmul.mubr.f32.gmra.mxu0 %v4014
        %v4368 = vpop.f32.mrf.mxu0
        %v4369 = vadd.f32 %v4070, %v4368
        %v4370 = vpop.f32.mrf.mxu0
        %4371 = vmatprep.mubr.f32.mxu0 %v4018
        %4372 = vmatmul.mubr.f32.gmra.mxu0 %v4017
        %v4373 = vpop.f32.mrf.mxu0
        %v4374 = vadd.f32 %v4070, %v4373
        %v4375 = vpop.f32.mrf.mxu0
        %4376 = vmatprep.mubr.f32.mxu0 %v4021
        %4377 = vmatmul.mubr.f32.gmra.mxu0 %v4020
        %v4378 = vpop.f32.mrf.mxu0
        %v4379 = vadd.f32 %v4070, %v4378
        %v4380 = vpop.f32.mrf.mxu0
        %4381 = vmatprep.mubr.f32.mxu0 %v4024
        %4382 = vmatmul.mubr.f32.gmra.mxu0 %v4023
        %v4383 = vpop.f32.mrf.mxu0
        %v4384 = vadd.f32 %v4070, %v4383
        %v4385 = vpop.f32.mrf.mxu0
        %4386 = vmatprep.mubr.f32.mxu0 %v4027
        %4387 = vmatmul.mubr.f32.gmra.mxu0 %v4026
        %v4388 = vpop.f32.mrf.mxu0
        %v4389 = vadd.f32 %v4070, %v4388
        %v4390 = vpop.f32.mrf.mxu0
        %4391 = vdwg.mxu0
        %4392 = vmatprep.subr.mxu0 0.0
        %4393 = vmatpush1.msra.mxu0 0.0
        %4394 = vmatprep.subr.mxu0 0.0
        %4395 = vmatpush1.msra.mxu0 0.0
        %4396 = vmatprep.subr.mxu0 0.0
        %4397 = vmatpush1.msra.mxu0 0.0
        %4398 = vmatprep.subr.mxu0 0.0
        %4399 = vmatpush1.msra.mxu0 0.0
        %4400 = vmatprep.subr.mxu0 0.0
        %4401 = vmatpush1.msra.mxu0 0.0
        %4402 = vmatprep.subr.mxu0 0.0
        %4403 = vmatpush1.msra.mxu0 0.0
        %4404 = vmatprep.subr.mxu0 0.0
        %4405 = vmatpush1.msra.mxu0 0.0
        %4406 = vmatprep.subr.mxu0 0.0
        %4407 = vmatpush1.msra.mxu0 0.0
        %4408 = vmatprep.subr.mxu0 0.0
        %4409 = vmatpush1.msra.mxu0 0.0
        %4410 = vmatprep.subr.mxu0 0.0
        %4411 = vmatpush1.msra.mxu0 0.0
        %4412 = vmatprep.subr.mxu0 0.0
        %4413 = vmatpush1.msra.mxu0 0.0
        %4414 = vmatprep.subr.mxu0 0.0
        %4415 = vmatpush1.msra.mxu0 0.0
        %4416 = vmatprep.subr.mxu0 0.0
        %4417 = vmatpush1.msra.mxu0 %v4065
        %4418 = vmatprep.subr.mxu0 0.0
        %4419 = vmatpush1.msra.mxu0 %v4064
        %4420 = vmatprep.subr.mxu0 0.0
        %4421 = vmatpush1.msra.mxu0 %v4063
        %4422 = vmatprep.subr.mxu0 0.0
        %4423 = vmatpush1.msra.mxu0 %v4062
        %4424 = vmatprep.subr.mxu0 0.0
        %4425 = vmatpush2.msra.mxu0 0.0
        %4426 = vmatprep.subr.mxu0 0.0
        %4427 = vmatpush2.msra.mxu0 0.0
        %4428 = vmatprep.subr.mxu0 0.0
        %4429 = vmatpush2.msra.mxu0 0.0
        %4430 = vmatprep.subr.mxu0 0.0
        %4431 = vmatpush2.msra.mxu0 0.0
        %4432 = vmatprep.subr.mxu0 0.0
        %4433 = vmatpush2.msra.mxu0 0.0
        %4434 = vmatprep.subr.mxu0 0.0
        %4435 = vmatpush2.msra.mxu0 0.0
        %4436 = vmatprep.subr.mxu0 0.0
        %4437 = vmatpush2.msra.mxu0 0.0
        %4438 = vmatprep.subr.mxu0 0.0
        %4439 = vmatpush2.msra.mxu0 0.0
        %4440 = vmatprep.subr.mxu0 0.0
        %4441 = vmatpush2.msra.mxu0 0.0
        %4442 = vmatprep.subr.mxu0 0.0
        %4443 = vmatpush2.msra.mxu0 0.0
        %4444 = vmatprep.subr.mxu0 0.0
        %4445 = vmatpush2.msra.mxu0 0.0
        %4446 = vmatprep.subr.mxu0 0.0
        %4447 = vmatpush2.msra.mxu0 0.0
        %4448 = vmatprep.subr.mxu0 0.0
        %4449 = vmatpush2.msra.mxu0 0.0
        %4450 = vmatprep.subr.mxu0 0.0
        %4451 = vmatpush2.msra.mxu0 0.0
        %4452 = vmatprep.subr.mxu0 0.0
        %4453 = vmatpush2.msra.mxu0 0.0
        %4454 = vmatprep.subr.mxu0 0.0
        %4455 = vmatpush2.msra.mxu0 0.0
        %4456 = vmatprep.mubr.f32.mxu0 0.0
        %4457 = vmatmul.mubr.f32.gmra.mxu0 %v4072
        %v4458 = vpop.f32.mrf.mxu0
        %v4459 = vadd.f32 %v4234, %v4458
        %v4460 = vpop.f32.mrf.mxu0
        %4461 = vmatprep.mubr.f32.mxu0 0.0
        %4462 = vmatmul.mubr.f32.gmra.mxu0 %v4075
        %v4463 = vpop.f32.mrf.mxu0
        %v4464 = vadd.f32 %v4239, %v4463
        %v4465 = vpop.f32.mrf.mxu0
        %4466 = vmatprep.mubr.f32.mxu0 0.0
        %4467 = vmatmul.mubr.f32.gmra.mxu0 %v4078
        %v4468 = vpop.f32.mrf.mxu0
        %v4469 = vadd.f32 %v4244, %v4468
        %v4470 = vpop.f32.mrf.mxu0
        %4471 = vmatprep.mubr.f32.mxu0 0.0
        %4472 = vmatmul.mubr.f32.gmra.mxu0 %v4081
        %v4473 = vpop.f32.mrf.mxu0
        %v4474 = vadd.f32 %v4249, %v4473
        %v4475 = vpop.f32.mrf.mxu0
        %4476 = vmatprep.mubr.f32.mxu0 0.0
        %4477 = vmatmul.mubr.f32.gmra.mxu0 %v4084
        %v4478 = vpop.f32.mrf.mxu0
        %v4479 = vadd.f32 %v4254, %v4478
        %v4480 = vpop.f32.mrf.mxu0
        %4481 = vmatprep.mubr.f32.mxu0 0.0
        %4482 = vmatmul.mubr.f32.gmra.mxu0 %v4087
        %v4483 = vpop.f32.mrf.mxu0
        %v4484 = vadd.f32 %v4259, %v4483
        %v4485 = vpop.f32.mrf.mxu0
        %4486 = vmatprep.mubr.f32.mxu0 0.0
        %4487 = vmatmul.mubr.f32.gmra.mxu0 %v4090
        %v4488 = vpop.f32.mrf.mxu0
        %v4489 = vadd.f32 %v4264, %v4488
        %v4490 = vpop.f32.mrf.mxu0
        %4491 = vmatprep.mubr.f32.mxu0 0.0
        %4492 = vmatmul.mubr.f32.gmra.mxu0 %v4093
        %v4493 = vpop.f32.mrf.mxu0
        %v4494 = vadd.f32 %v4269, %v4493
        %v4495 = vpop.f32.mrf.mxu0
        %4496 = vmatprep.mubr.f32.mxu0 0.0
        %4497 = vmatmul.mubr.f32.gmra.mxu0 %v4096
        %v4498 = vpop.f32.mrf.mxu0
        %v4499 = vadd.f32 %v4274, %v4498
        %v4500 = vpop.f32.mrf.mxu0
        %4501 = vmatprep.mubr.f32.mxu0 0.0
        %4502 = vmatmul.mubr.f32.gmra.mxu0 %v4099
        %v4503 = vpop.f32.mrf.mxu0
        %v4504 = vadd.f32 %v4279, %v4503
        %v4505 = vpop.f32.mrf.mxu0
        %4506 = vmatprep.mubr.f32.mxu0 0.0
        %4507 = vmatmul.mubr.f32.gmra.mxu0 %v4102
        %v4508 = vpop.f32.mrf.mxu0
        %v4509 = vadd.f32 %v4284, %v4508
        %v4510 = vpop.f32.mrf.mxu0
        %4511 = vmatprep.mubr.f32.mxu0 0.0
        %4512 = vmatmul.mubr.f32.gmra.mxu0 %v4105
        %v4513 = vpop.f32.mrf.mxu0
        %v4514 = vadd.f32 %v4289, %v4513
        %v4515 = vpop.f32.mrf.mxu0
        %4516 = vmatprep.mubr.f32.mxu0 0.0
        %4517 = vmatmul.mubr.f32.gmra.mxu0 %v4108
        %v4518 = vpop.f32.mrf.mxu0
        %v4519 = vadd.f32 %v4294, %v4518
        %v4520 = vpop.f32.mrf.mxu0
        %4521 = vmatprep.mubr.f32.mxu0 0.0
        %4522 = vmatmul.mubr.f32.gmra.mxu0 %v4111
        %v4523 = vpop.f32.mrf.mxu0
        %v4524 = vadd.f32 %v4299, %v4523
        %v4525 = vpop.f32.mrf.mxu0
        %4526 = vmatprep.mubr.f32.mxu0 0.0
        %4527 = vmatmul.mubr.f32.gmra.mxu0 %v4114
        %v4528 = vpop.f32.mrf.mxu0
        %v4529 = vadd.f32 %v4304, %v4528
        %v4530 = vpop.f32.mrf.mxu0
        %4531 = vmatprep.mubr.f32.mxu0 0.0
        %4532 = vmatmul.mubr.f32.gmra.mxu0 %v4117
        %v4533 = vpop.f32.mrf.mxu0
        %v4534 = vadd.f32 %v4309, %v4533
        %v4535 = vpop.f32.mrf.mxu0
        %4536 = vmatprep.mubr.f32.mxu0 0.0
        %4537 = vmatmul.mubr.f32.gmra.mxu0 %v4120
        %v4538 = vpop.f32.mrf.mxu0
        %v4539 = vadd.f32 %v4314, %v4538
        %v4540 = vpop.f32.mrf.mxu0
        %4541 = vmatprep.mubr.f32.mxu0 0.0
        %4542 = vmatmul.mubr.f32.gmra.mxu0 %v4123
        %v4543 = vpop.f32.mrf.mxu0
        %v4544 = vadd.f32 %v4319, %v4543
        %v4545 = vpop.f32.mrf.mxu0
        %4546 = vmatprep.mubr.f32.mxu0 0.0
        %4547 = vmatmul.mubr.f32.gmra.mxu0 %v4126
        %v4548 = vpop.f32.mrf.mxu0
        %v4549 = vadd.f32 %v4324, %v4548
        %v4550 = vpop.f32.mrf.mxu0
        %4551 = vmatprep.mubr.f32.mxu0 0.0
        %4552 = vmatmul.mubr.f32.gmra.mxu0 %v4129
        %v4553 = vpop.f32.mrf.mxu0
        %v4554 = vadd.f32 %v4329, %v4553
        %v4555 = vpop.f32.mrf.mxu0
        %4556 = vmatprep.mubr.f32.mxu0 0.0
        %4557 = vmatmul.mubr.f32.gmra.mxu0 %v4132
        %v4558 = vpop.f32.mrf.mxu0
        %v4559 = vadd.f32 %v4334, %v4558
        %v4560 = vpop.f32.mrf.mxu0
        %4561 = vmatprep.mubr.f32.mxu0 0.0
        %4562 = vmatmul.mubr.f32.gmra.mxu0 %v4135
        %v4563 = vpop.f32.mrf.mxu0
        %v4564 = vadd.f32 %v4339, %v4563
        %v4565 = vpop.f32.mrf.mxu0
        %4566 = vmatprep.mubr.f32.mxu0 0.0
        %4567 = vmatmul.mubr.f32.gmra.mxu0 %v4138
        %v4568 = vpop.f32.mrf.mxu0
        %v4569 = vadd.f32 %v4344, %v4568
        %v4570 = vpop.f32.mrf.mxu0
        %4571 = vmatprep.mubr.f32.mxu0 0.0
        %4572 = vmatmul.mubr.f32.gmra.mxu0 %v4141
        %v4573 = vpop.f32.mrf.mxu0
        %v4574 = vadd.f32 %v4349, %v4573
        %v4575 = vpop.f32.mrf.mxu0
        %4576 = vmatprep.mubr.f32.mxu0 0.0
        %4577 = vmatmul.mubr.f32.gmra.mxu0 %v4144
        %v4578 = vpop.f32.mrf.mxu0
        %v4579 = vadd.f32 %v4354, %v4578
        %v4580 = vpop.f32.mrf.mxu0
        %4581 = vmatprep.mubr.f32.mxu0 0.0
        %4582 = vmatmul.mubr.f32.gmra.mxu0 %v4147
        %v4583 = vpop.f32.mrf.mxu0
        %v4584 = vadd.f32 %v4359, %v4583
        %v4585 = vpop.f32.mrf.mxu0
        %4586 = vmatprep.mubr.f32.mxu0 0.0
        %4587 = vmatmul.mubr.f32.gmra.mxu0 %v4150
        %v4588 = vpop.f32.mrf.mxu0
        %v4589 = vadd.f32 %v4364, %v4588
        %v4590 = vpop.f32.mrf.mxu0
        %4591 = vmatprep.mubr.f32.mxu0 0.0
        %4592 = vmatmul.mubr.f32.gmra.mxu0 %v4153
        %v4593 = vpop.f32.mrf.mxu0
        %v4594 = vadd.f32 %v4369, %v4593
        %v4595 = vpop.f32.mrf.mxu0
        %4596 = vmatprep.mubr.f32.mxu0 0.0
        %4597 = vmatmul.mubr.f32.gmra.mxu0 %v4156
        %v4598 = vpop.f32.mrf.mxu0
        %v4599 = vadd.f32 %v4374, %v4598
        %v4600 = vpop.f32.mrf.mxu0
        %4601 = vmatprep.mubr.f32.mxu0 0.0
        %4602 = vmatmul.mubr.f32.gmra.mxu0 %v4159
        %v4603 = vpop.f32.mrf.mxu0
        %v4604 = vadd.f32 %v4379, %v4603
        %v4605 = vpop.f32.mrf.mxu0
        %4606 = vmatprep.mubr.f32.mxu0 0.0
        %4607 = vmatmul.mubr.f32.gmra.mxu0 %v4162
        %v4608 = vpop.f32.mrf.mxu0
        %v4609 = vadd.f32 %v4384, %v4608
        %v4610 = vpop.f32.mrf.mxu0
        %4611 = vmatprep.mubr.f32.mxu0 0.0
        %4612 = vmatmul.mubr.f32.gmra.mxu0 %v4165
        %v4613 = vpop.f32.mrf.mxu0
        %v4614 = vadd.f32 %v4389, %v4613
        %v4615 = vpop.f32.mrf.mxu0
        %4616 = vdwg.mxu0
        %v4617 = vmax.f32 %v4459, 0.0
        %v4618 = vmax.f32 %v4464, 0.0
        %v4619 = vmax.f32 %v4469, 0.0
        %v4620 = vmax.f32 %v4474, 0.0
        %v4621 = vmax.f32 %v4479, 0.0
        %v4622 = vmax.f32 %v4484, 0.0
        %v4623 = vmax.f32 %v4489, 0.0
        %v4624 = vmax.f32 %v4494, 0.0
        %v4625 = vmax.f32 %v4499, 0.0
        %v4626 = vmax.f32 %v4504, 0.0
        %v4627 = vmax.f32 %v4509, 0.0
        %v4628 = vmax.f32 %v4514, 0.0
        %v4629 = vmax.f32 %v4519, 0.0
        %v4630 = vmax.f32 %v4524, 0.0
        %v4631 = vmax.f32 %v4529, 0.0
        %v4632 = vmax.f32 %v4534, 0.0
        %v4633 = vmax.f32 %v4539, 0.0
        %v4634 = vmax.f32 %v4544, 0.0
        %v4635 = vmax.f32 %v4549, 0.0
        %v4636 = vmax.f32 %v4554, 0.0
        %v4637 = vmax.f32 %v4559, 0.0
        %v4638 = vmax.f32 %v4564, 0.0
        %v4639 = vmax.f32 %v4569, 0.0
        %v4640 = vmax.f32 %v4574, 0.0
        %v4641 = vmax.f32 %v4579, 0.0
        %v4642 = vmax.f32 %v4584, 0.0
        %v4643 = vmax.f32 %v4589, 0.0
        %v4644 = vmax.f32 %v4594, 0.0
        %v4645 = vmax.f32 %v4599, 0.0
        %v4646 = vmax.f32 %v4604, 0.0
        %v4647 = vmax.f32 %v4609, 0.0
        %v4648 = vmax.f32 %v4614, 0.0
        %v4649 = vld [vmem:[%s163] sm:$0xff]
        %v4650 = vld [vmem:[%s163 + $0x8] sm:$0xff]
        %v4651 = vld [vmem:[%s163 + $0x10] sm:$0xff]
        %v4652 = vld [vmem:[%s163 + $0x18] sm:$0xff]
        %v4653 = vld [vmem:[%s163 + $0x20] sm:$0xff]
        %v4654 = vld [vmem:[%s163 + $0x28] sm:$0xff]
        %v4655 = vld [vmem:[%s163 + $0x30] sm:$0xff]
        %v4656 = vld [vmem:[%s163 + $0x38] sm:$0xff]
        %v4657 = vld [vmem:[%s163 + $0x40] sm:$0xff]
        %v4658 = vld [vmem:[%s163 + $0x48] sm:$0xff]
        %v4659 = vld [vmem:[%s163 + $0x50] sm:$0xff]
        %v4660 = vld [vmem:[%s163 + $0x58] sm:$0xff]
        %v4661 = vld [vmem:[%s163 + $0x60] sm:$0xff]
        %v4662 = vld [vmem:[%s163 + $0x68] sm:$0xff]
        %v4663 = vld [vmem:[%s163 + $0x70] sm:$0xff]
        %v4664 = vld [vmem:[%s163 + $0x78] sm:$0xff]
        %v4665 = vld [vmem:[%s163 + $0x80] sm:$0xff]
        %v4666 = vld [vmem:[%s163 + $0x88] sm:$0xff]
        %v4667 = vld [vmem:[%s163 + $0x90] sm:$0xff]
        %v4668 = vld [vmem:[%s163 + $0x98] sm:$0xff]
        %v4669 = vld [vmem:[%s163 + $0xa0] sm:$0xff]
        %v4670 = vld [vmem:[%s163 + $0xa8] sm:$0xff]
        %v4671 = vld [vmem:[%s163 + $0xb0] sm:$0xff]
        %v4672 = vld [vmem:[%s163 + $0xb8] sm:$0xff]
        %v4673 = vld [vmem:[%s163 + $0xc0] sm:$0xff]
        %v4674 = vld [vmem:[%s163 + $0xc8] sm:$0xff]
        %v4675 = vld [vmem:[%s163 + $0xd0] sm:$0xff]
        %v4676 = vld [vmem:[%s163 + $0xd8] sm:$0xff]
        %v4677 = vld [vmem:[%s163 + $0xe0] sm:$0xff]
        %v4678 = vld [vmem:[%s163 + $0xe8] sm:$0xff]
        %v4679 = vld [vmem:[%s163 + $0xf0] sm:$0xff]
        %v4680 = vld [vmem:[%s163 + $0xf8] sm:$0xff]
        %v4681 = vadd.f32 %v4649, %v4617
        %v4682 = vadd.f32 %v4650, %v4618
        %v4683 = vadd.f32 %v4651, %v4619
        %v4684 = vadd.f32 %v4652, %v4620
        %v4685 = vadd.f32 %v4653, %v4621
        %v4686 = vadd.f32 %v4654, %v4622
        %v4687 = vadd.f32 %v4655, %v4623
        %v4688 = vadd.f32 %v4656, %v4624
        %v4689 = vadd.f32 %v4657, %v4625
        %v4690 = vadd.f32 %v4658, %v4626
        %v4691 = vadd.f32 %v4659, %v4627
        %v4692 = vadd.f32 %v4660, %v4628
        %v4693 = vadd.f32 %v4661, %v4629
        %v4694 = vadd.f32 %v4662, %v4630
        %v4695 = vadd.f32 %v4663, %v4631
        %v4696 = vadd.f32 %v4664, %v4632
        %v4697 = vadd.f32 %v4665, %v4633
        %v4698 = vadd.f32 %v4666, %v4634
        %v4699 = vadd.f32 %v4667, %v4635
        %v4700 = vadd.f32 %v4668, %v4636
        %v4701 = vadd.f32 %v4669, %v4637
        %v4702 = vadd.f32 %v4670, %v4638
        %v4703 = vadd.f32 %v4671, %v4639
        %v4704 = vadd.f32 %v4672, %v4640
        %v4705 = vadd.f32 %v4673, %v4641
        %v4706 = vadd.f32 %v4674, %v4642
        %v4707 = vadd.f32 %v4675, %v4643
        %v4708 = vadd.f32 %v4676, %v4644
        %v4709 = vadd.f32 %v4677, %v4645
        %v4710 = vadd.f32 %v4678, %v4646
        %v4711 = vadd.f32 %v4679, %v4647
        %v4712 = vadd.f32 %v4680, %v4648
        %4713 = vst.msk [vmem:[%s163] sm:$0xff] %vm201, %v4681
        %4714 = vst.msk [vmem:[%s163 + $0x8] sm:$0xff] %vm201, %v4682
        %4715 = vst.msk [vmem:[%s163 + $0x10] sm:$0xff] %vm201, %v4683
        %4716 = vst.msk [vmem:[%s163 + $0x18] sm:$0xff] %vm201, %v4684
        %4717 = vst.msk [vmem:[%s163 + $0x20] sm:$0xff] %vm201, %v4685
        %4718 = vst.msk [vmem:[%s163 + $0x28] sm:$0xff] %vm201, %v4686
        %4719 = vst.msk [vmem:[%s163 + $0x30] sm:$0xff] %vm201, %v4687
        %4720 = vst.msk [vmem:[%s163 + $0x38] sm:$0xff] %vm201, %v4688
        %4721 = vst.msk [vmem:[%s163 + $0x40] sm:$0xff] %vm201, %v4689
        %4722 = vst.msk [vmem:[%s163 + $0x48] sm:$0xff] %vm201, %v4690
        %4723 = vst.msk [vmem:[%s163 + $0x50] sm:$0xff] %vm201, %v4691
        %4724 = vst.msk [vmem:[%s163 + $0x58] sm:$0xff] %vm201, %v4692
        %4725 = vst.msk [vmem:[%s163 + $0x60] sm:$0xff] %vm201, %v4693
        %4726 = vst.msk [vmem:[%s163 + $0x68] sm:$0xff] %vm201, %v4694
        %4727 = vst.msk [vmem:[%s163 + $0x70] sm:$0xff] %vm201, %v4695
        %4728 = vst.msk [vmem:[%s163 + $0x78] sm:$0xff] %vm201, %v4696
        %4729 = vst.msk [vmem:[%s163 + $0x80] sm:$0xff] %vm201, %v4697
        %4730 = vst.msk [vmem:[%s163 + $0x88] sm:$0xff] %vm201, %v4698
        %4731 = vst.msk [vmem:[%s163 + $0x90] sm:$0xff] %vm201, %v4699
        %4732 = vst.msk [vmem:[%s163 + $0x98] sm:$0xff] %vm201, %v4700
        %4733 = vst.msk [vmem:[%s163 + $0xa0] sm:$0xff] %vm201, %v4701
        %4734 = vst.msk [vmem:[%s163 + $0xa8] sm:$0xff] %vm201, %v4702
        %4735 = vst.msk [vmem:[%s163 + $0xb0] sm:$0xff] %vm201, %v4703
        %4736 = vst.msk [vmem:[%s163 + $0xb8] sm:$0xff] %vm201, %v4704
        %4737 = vst.msk [vmem:[%s163 + $0xc0] sm:$0xff] %vm201, %v4705
        %4738 = vst.msk [vmem:[%s163 + $0xc8] sm:$0xff] %vm201, %v4706
        %4739 = vst.msk [vmem:[%s163 + $0xd0] sm:$0xff] %vm201, %v4707
        %4740 = vst.msk [vmem:[%s163 + $0xd8] sm:$0xff] %vm201, %v4708
        %4741 = vst.msk [vmem:[%s163 + $0xe0] sm:$0xff] %vm201, %v4709
        %4742 = vst.msk [vmem:[%s163 + $0xe8] sm:$0xff] %vm201, %v4710
        %4743 = vst.msk [vmem:[%s163 + $0xf0] sm:$0xff] %vm201, %v4711
        %4744 = vst.msk [vmem:[%s163 + $0xf8] sm:$0xff] %vm201, %v4712
        %4745 = vst.msk [vmem:[%s362 + $0x8] sm:$0xff] %vm201, %v4617
        %4746 = vst.msk [vmem:[%s362 + $0x10] sm:$0xff] %vm201, %v4618
        %4747 = vst.msk [vmem:[%s362 + $0x28] sm:$0xff] %vm201, %v4619
        %4748 = vst.msk [vmem:[%s362 + $0x30] sm:$0xff] %vm201, %v4620
        %4749 = vst.msk [vmem:[%s362 + $0x48] sm:$0xff] %vm201, %v4621
        %4750 = vst.msk [vmem:[%s362 + $0x50] sm:$0xff] %vm201, %v4622
        %4751 = vst.msk [vmem:[%s362 + $0x68] sm:$0xff] %vm201, %v4623
        %4752 = vst.msk [vmem:[%s362 + $0x70] sm:$0xff] %vm201, %v4624
        %4753 = vst.msk [vmem:[%s362 + $0x88] sm:$0xff] %vm201, %v4625
        %4754 = vst.msk [vmem:[%s362 + $0x90] sm:$0xff] %vm201, %v4626
        %4755 = vst.msk [vmem:[%s362 + $0xa8] sm:$0xff] %vm201, %v4627
        %4756 = vst.msk [vmem:[%s362 + $0xb0] sm:$0xff] %vm201, %v4628
        %4757 = vst.msk [vmem:[%s362 + $0xc8] sm:$0xff] %vm201, %v4629
        %4758 = vst.msk [vmem:[%s362 + $0xd0] sm:$0xff] %vm201, %v4630
        %4759 = vst.msk [vmem:[%s362 + $0xe8] sm:$0xff] %vm201, %v4631
        %4760 = vst.msk [vmem:[%s362 + $0xf0] sm:$0xff] %vm201, %v4632
        %4761 = vst.msk [vmem:[%s362 + $0x108] sm:$0xff] %vm201, %v4633
        %4762 = vst.msk [vmem:[%s362 + $0x110] sm:$0xff] %vm201, %v4634
        %4763 = vst.msk [vmem:[%s362 + $0x128] sm:$0xff] %vm201, %v4635
        %4764 = vst.msk [vmem:[%s362 + $0x130] sm:$0xff] %vm201, %v4636
        %4765 = vst.msk [vmem:[%s362 + $0x148] sm:$0xff] %vm201, %v4637
        %4766 = vst.msk [vmem:[%s362 + $0x150] sm:$0xff] %vm201, %v4638
        %4767 = vst.msk [vmem:[%s362 + $0x168] sm:$0xff] %vm201, %v4639
        %4768 = vst.msk [vmem:[%s362 + $0x170] sm:$0xff] %vm201, %v4640
        %4769 = vst.msk [vmem:[%s362 + $0x188] sm:$0xff] %vm201, %v4641
        %4770 = vst.msk [vmem:[%s362 + $0x190] sm:$0xff] %vm201, %v4642
        %4771 = vst.msk [vmem:[%s362 + $0x1a8] sm:$0xff] %vm201, %v4643
        %4772 = vst.msk [vmem:[%s362 + $0x1b0] sm:$0xff] %vm201, %v4644
        %4773 = vst.msk [vmem:[%s362 + $0x1c8] sm:$0xff] %vm201, %v4645
        %4774 = vst.msk [vmem:[%s362 + $0x1d0] sm:$0xff] %vm201, %v4646
        %4775 = vst.msk [vmem:[%s362 + $0x1e8] sm:$0xff] %vm201, %v4647
        %4776 = vst.msk [vmem:[%s362 + $0x1f0] sm:$0xff] %vm201, %v4648
        %s4777 = scalar_lea.vmem [#allocation2], 128
        %v4778 = vld [vmem:[%s4777 + $0x4] sm:$0xff]
        %v4779 = vld [vmem:[%s4777 + $0xc] sm:$0xff]
        %v4780 = vld [vmem:[%s4777 + $0x24] sm:$0xff]
        %v4781 = vld [vmem:[%s4777 + $0x2c] sm:$0xff]
        %v4782 = vld [vmem:[%s4777 + $0x44] sm:$0xff]
        %v4783 = vld [vmem:[%s4777 + $0x4c] sm:$0xff]
        %v4784 = vld [vmem:[%s4777 + $0x64] sm:$0xff]
        %v4785 = vld [vmem:[%s4777 + $0x6c] sm:$0xff]
        %v4786 = vld [vmem:[%s4777 + $0x84] sm:$0xff]
        %v4787 = vld [vmem:[%s4777 + $0x8c] sm:$0xff]
        %v4788 = vld [vmem:[%s4777 + $0xa4] sm:$0xff]
        %v4789 = vld [vmem:[%s4777 + $0xac] sm:$0xff]
        %v4790 = vld [vmem:[%s4777 + $0xc4] sm:$0xff]
        %v4791 = vld [vmem:[%s4777 + $0xcc] sm:$0xff]
        %v4792 = vld [vmem:[%s4777 + $0xe4] sm:$0xff]
        %v4793 = vld [vmem:[%s4777 + $0xec] sm:$0xff]
        %v4794 = vld [vmem:[%s4777 + $0x104] sm:$0xff]
        %v4795 = vld [vmem:[%s4777 + $0x10c] sm:$0xff]
        %v4796 = vld [vmem:[%s4777 + $0x124] sm:$0xff]
        %v4797 = vld [vmem:[%s4777 + $0x12c] sm:$0xff]
        %v4798 = vld [vmem:[%s4777 + $0x144] sm:$0xff]
        %v4799 = vld [vmem:[%s4777 + $0x14c] sm:$0xff]
        %v4800 = vld [vmem:[%s4777 + $0x164] sm:$0xff]
        %v4801 = vld [vmem:[%s4777 + $0x16c] sm:$0xff]
        %v4802 = vld [vmem:[%s4777 + $0x184] sm:$0xff]
        %v4803 = vld [vmem:[%s4777 + $0x18c] sm:$0xff]
        %v4804 = vld [vmem:[%s4777 + $0x1a4] sm:$0xff]
        %v4805 = vld [vmem:[%s4777 + $0x1ac] sm:$0xff]
        %v4806 = vld [vmem:[%s4777 + $0x1c4] sm:$0xff]
        %v4807 = vld [vmem:[%s4777 + $0x1cc] sm:$0xff]
        %v4808 = vld [vmem:[%s4777 + $0x1e4] sm:$0xff]
        %v4809 = vld [vmem:[%s4777 + $0x1ec] sm:$0xff]
        %4810 = vst.msk [vmem:[#allocation3] sm:$0xff] %vm201, %v4778
        %4811 = vst.msk [vmem:[#allocation3 + $0x18] sm:$0xff] %vm201, %v4779
        %4812 = vst.msk [vmem:[#allocation3 + $0x30] sm:$0xff] %vm201, %v4780
        %4813 = vst.msk [vmem:[#allocation3 + $0x48] sm:$0xff] %vm201, %v4781
        %4814 = vst.msk [vmem:[#allocation3 + $0x60] sm:$0xff] %vm201, %v4782
        %4815 = vst.msk [vmem:[#allocation3 + $0x78] sm:$0xff] %vm201, %v4783
        %4816 = vst.msk [vmem:[#allocation3 + $0x90] sm:$0xff] %vm201, %v4784
        %4817 = vst.msk [vmem:[#allocation3 + $0xa8] sm:$0xff] %vm201, %v4785
        %4818 = vst.msk [vmem:[#allocation3 + $0xc0] sm:$0xff] %vm201, %v4786
        %4819 = vst.msk [vmem:[#allocation3 + $0xd8] sm:$0xff] %vm201, %v4787
        %4820 = vst.msk [vmem:[#allocation3 + $0xf0] sm:$0xff] %vm201, %v4788
        %4821 = vst.msk [vmem:[#allocation3 + $0x108] sm:$0xff] %vm201, %v4789
        %4822 = vst.msk [vmem:[#allocation3 + $0x120] sm:$0xff] %vm201, %v4790
        %4823 = vst.msk [vmem:[#allocation3 + $0x138] sm:$0xff] %vm201, %v4791
        %4824 = vst.msk [vmem:[#allocation3 + $0x150] sm:$0xff] %vm201, %v4792
        %4825 = vst.msk [vmem:[#allocation3 + $0x168] sm:$0xff] %vm201, %v4793
        %4826 = vst.msk [vmem:[#allocation3 + $0x180] sm:$0xff] %vm201, %v4794
        %4827 = vst.msk [vmem:[#allocation3 + $0x198] sm:$0xff] %vm201, %v4795
        %4828 = vst.msk [vmem:[#allocation3 + $0x1b0] sm:$0xff] %vm201, %v4796
        %4829 = vst.msk [vmem:[#allocation3 + $0x1c8] sm:$0xff] %vm201, %v4797
        %4830 = vst.msk [vmem:[#allocation3 + $0x1e0] sm:$0xff] %vm201, %v4798
        %4831 = vst.msk [vmem:[#allocation3 + $0x1f8] sm:$0xff] %vm201, %v4799
        %4832 = vst.msk [vmem:[#allocation3 + $0x210] sm:$0xff] %vm201, %v4800
        %4833 = vst.msk [vmem:[#allocation3 + $0x228] sm:$0xff] %vm201, %v4801
        %4834 = vst.msk [vmem:[#allocation3 + $0x240] sm:$0xff] %vm201, %v4802
        %4835 = vst.msk [vmem:[#allocation3 + $0x258] sm:$0xff] %vm201, %v4803
        %4836 = vst.msk [vmem:[#allocation3 + $0x270] sm:$0xff] %vm201, %v4804
        %4837 = vst.msk [vmem:[#allocation3 + $0x288] sm:$0xff] %vm201, %v4805
        %4838 = vst.msk [vmem:[#allocation3 + $0x2a0] sm:$0xff] %vm201, %v4806
        %4839 = vst.msk [vmem:[#allocation3 + $0x2b8] sm:$0xff] %vm201, %v4807
        %4840 = vst.msk [vmem:[#allocation3 + $0x2d0] sm:$0xff] %vm201, %v4808
        %4841 = vst.msk [vmem:[#allocation3 + $0x2e8] sm:$0xff] %vm201, %v4809
        %v4842 = vld [vmem:[%s4777 + $0x8] sm:$0xff]
        %v4843 = vld [vmem:[%s4777 + $0x10] sm:$0xff]
        %v4844 = vld [vmem:[%s4777 + $0x28] sm:$0xff]
        %v4845 = vld [vmem:[%s4777 + $0x30] sm:$0xff]
        %v4846 = vld [vmem:[%s4777 + $0x48] sm:$0xff]
        %v4847 = vld [vmem:[%s4777 + $0x50] sm:$0xff]
        %v4848 = vld [vmem:[%s4777 + $0x68] sm:$0xff]
        %v4849 = vld [vmem:[%s4777 + $0x70] sm:$0xff]
        %v4850 = vld [vmem:[%s4777 + $0x88] sm:$0xff]
        %v4851 = vld [vmem:[%s4777 + $0x90] sm:$0xff]
        %v4852 = vld [vmem:[%s4777 + $0xa8] sm:$0xff]
        %v4853 = vld [vmem:[%s4777 + $0xb0] sm:$0xff]
        %v4854 = vld [vmem:[%s4777 + $0xc8] sm:$0xff]
        %v4855 = vld [vmem:[%s4777 + $0xd0] sm:$0xff]
        %v4856 = vld [vmem:[%s4777 + $0xe8] sm:$0xff]
        %v4857 = vld [vmem:[%s4777 + $0xf0] sm:$0xff]
        %v4858 = vld [vmem:[%s4777 + $0x108] sm:$0xff]
        %v4859 = vld [vmem:[%s4777 + $0x110] sm:$0xff]
        %v4860 = vld [vmem:[%s4777 + $0x128] sm:$0xff]
        %v4861 = vld [vmem:[%s4777 + $0x130] sm:$0xff]
        %v4862 = vld [vmem:[%s4777 + $0x148] sm:$0xff]
        %v4863 = vld [vmem:[%s4777 + $0x150] sm:$0xff]
        %v4864 = vld [vmem:[%s4777 + $0x168] sm:$0xff]
        %v4865 = vld [vmem:[%s4777 + $0x170] sm:$0xff]
        %v4866 = vld [vmem:[%s4777 + $0x188] sm:$0xff]
        %v4867 = vld [vmem:[%s4777 + $0x190] sm:$0xff]
        %v4868 = vld [vmem:[%s4777 + $0x1a8] sm:$0xff]
        %v4869 = vld [vmem:[%s4777 + $0x1b0] sm:$0xff]
        %v4870 = vld [vmem:[%s4777 + $0x1c8] sm:$0xff]
        %v4871 = vld [vmem:[%s4777 + $0x1d0] sm:$0xff]
        %v4872 = vld [vmem:[%s4777 + $0x1e8] sm:$0xff]
        %v4873 = vld [vmem:[%s4777 + $0x1f0] sm:$0xff]
        %4906 = vrot.lane.b32.xlu0 %v4842, 32
        %v4907 = vpop.permute.xlu0 %4906
        %4908 = vrot.lane.b32.xlu0 %v4843, 32
        %v4909 = vpop.permute.xlu0 %4908
        %4910 = vrot.lane.b32.xlu0 %v4844, 32
        %v4911 = vpop.permute.xlu0 %4910
        %4912 = vrot.lane.b32.xlu0 %v4845, 32
        %v4913 = vpop.permute.xlu0 %4912
        %4914 = vrot.lane.b32.xlu0 %v4846, 32
        %v4915 = vpop.permute.xlu0 %4914
        %4916 = vrot.lane.b32.xlu0 %v4847, 32
        %v4917 = vpop.permute.xlu0 %4916
        %4918 = vrot.lane.b32.xlu0 %v4848, 32
        %v4919 = vpop.permute.xlu0 %4918
        %4920 = vrot.lane.b32.xlu0 %v4849, 32
        %v4921 = vpop.permute.xlu0 %4920
        %4922 = vrot.lane.b32.xlu0 %v4850, 32
        %v4923 = vpop.permute.xlu0 %4922
        %4924 = vrot.lane.b32.xlu0 %v4851, 32
        %v4925 = vpop.permute.xlu0 %4924
        %4926 = vrot.lane.b32.xlu0 %v4852, 32
        %v4927 = vpop.permute.xlu0 %4926
        %4928 = vrot.lane.b32.xlu0 %v4853, 32
        %v4929 = vpop.permute.xlu0 %4928
        %4930 = vrot.lane.b32.xlu0 %v4854, 32
        %v4931 = vpop.permute.xlu0 %4930
        %4932 = vrot.lane.b32.xlu0 %v4855, 32
        %v4933 = vpop.permute.xlu0 %4932
        %4934 = vrot.lane.b32.xlu0 %v4856, 32
        %v4935 = vpop.permute.xlu0 %4934
        %4936 = vrot.lane.b32.xlu0 %v4857, 32
        %v4937 = vpop.permute.xlu0 %4936
        %4938 = vrot.lane.b32.xlu0 %v4858, 32
        %v4939 = vpop.permute.xlu0 %4938
        %4940 = vrot.lane.b32.xlu0 %v4859, 32
        %v4941 = vpop.permute.xlu0 %4940
        %4942 = vrot.lane.b32.xlu0 %v4860, 32
        %v4943 = vpop.permute.xlu0 %4942
        %4944 = vrot.lane.b32.xlu0 %v4861, 32
        %v4945 = vpop.permute.xlu0 %4944
        %4946 = vrot.lane.b32.xlu0 %v4862, 32
        %v4947 = vpop.permute.xlu0 %4946
        %4948 = vrot.lane.b32.xlu0 %v4863, 32
        %v4949 = vpop.permute.xlu0 %4948
        %4950 = vrot.lane.b32.xlu0 %v4864, 32
        %v4951 = vpop.permute.xlu0 %4950
        %4952 = vrot.lane.b32.xlu0 %v4865, 32
        %v4953 = vpop.permute.xlu0 %4952
        %4954 = vrot.lane.b32.xlu0 %v4866, 32
        %v4955 = vpop.permute.xlu0 %4954
        %4956 = vrot.lane.b32.xlu0 %v4867, 32
        %v4957 = vpop.permute.xlu0 %4956
        %4958 = vrot.lane.b32.xlu0 %v4868, 32
        %v4959 = vpop.permute.xlu0 %4958
        %4960 = vrot.lane.b32.xlu0 %v4869, 32
        %v4961 = vpop.permute.xlu0 %4960
        %4962 = vrot.lane.b32.xlu0 %v4870, 32
        %v4963 = vpop.permute.xlu0 %4962
        %4964 = vrot.lane.b32.xlu0 %v4871, 32
        %v4965 = vpop.permute.xlu0 %4964
        %4966 = vrot.lane.b32.xlu0 %v4872, 32
        %v4967 = vpop.permute.xlu0 %4966
        %4968 = vrot.lane.b32.xlu0 %v4873, 32
        %v4969 = vpop.permute.xlu0 %4968
        %5002 = vst.msk [vmem:[#allocation3] sm:$0xff] %vm620, %v4907
        %5003 = vst.msk [vmem:[#allocation3 + $0x18] sm:$0xff] %vm620, %v4909
        %5004 = vst.msk [vmem:[#allocation3 + $0x30] sm:$0xff] %vm620, %v4911
        %5005 = vst.msk [vmem:[#allocation3 + $0x48] sm:$0xff] %vm620, %v4913
        %5006 = vst.msk [vmem:[#allocation3 + $0x60] sm:$0xff] %vm620, %v4915
        %5007 = vst.msk [vmem:[#allocation3 + $0x78] sm:$0xff] %vm620, %v4917
        %5008 = vst.msk [vmem:[#allocation3 + $0x90] sm:$0xff] %vm620, %v4919
        %5009 = vst.msk [vmem:[#allocation3 + $0xa8] sm:$0xff] %vm620, %v4921
        %5010 = vst.msk [vmem:[#allocation3 + $0xc0] sm:$0xff] %vm620, %v4923
        %5011 = vst.msk [vmem:[#allocation3 + $0xd8] sm:$0xff] %vm620, %v4925
        %5012 = vst.msk [vmem:[#allocation3 + $0xf0] sm:$0xff] %vm620, %v4927
        %5013 = vst.msk [vmem:[#allocation3 + $0x108] sm:$0xff] %vm620, %v4929
        %5014 = vst.msk [vmem:[#allocation3 + $0x120] sm:$0xff] %vm620, %v4931
        %5015 = vst.msk [vmem:[#allocation3 + $0x138] sm:$0xff] %vm620, %v4933
        %5016 = vst.msk [vmem:[#allocation3 + $0x150] sm:$0xff] %vm620, %v4935
        %5017 = vst.msk [vmem:[#allocation3 + $0x168] sm:$0xff] %vm620, %v4937
        %5018 = vst.msk [vmem:[#allocation3 + $0x180] sm:$0xff] %vm620, %v4939
        %5019 = vst.msk [vmem:[#allocation3 + $0x198] sm:$0xff] %vm620, %v4941
        %5020 = vst.msk [vmem:[#allocation3 + $0x1b0] sm:$0xff] %vm620, %v4943
        %5021 = vst.msk [vmem:[#allocation3 + $0x1c8] sm:$0xff] %vm620, %v4945
        %5022 = vst.msk [vmem:[#allocation3 + $0x1e0] sm:$0xff] %vm620, %v4947
        %5023 = vst.msk [vmem:[#allocation3 + $0x1f8] sm:$0xff] %vm620, %v4949
        %5024 = vst.msk [vmem:[#allocation3 + $0x210] sm:$0xff] %vm620, %v4951
        %5025 = vst.msk [vmem:[#allocation3 + $0x228] sm:$0xff] %vm620, %v4953
        %5026 = vst.msk [vmem:[#allocation3 + $0x240] sm:$0xff] %vm620, %v4955
        %5027 = vst.msk [vmem:[#allocation3 + $0x258] sm:$0xff] %vm620, %v4957
        %5028 = vst.msk [vmem:[#allocation3 + $0x270] sm:$0xff] %vm620, %v4959
        %5029 = vst.msk [vmem:[#allocation3 + $0x288] sm:$0xff] %vm620, %v4961
        %5030 = vst.msk [vmem:[#allocation3 + $0x2a0] sm:$0xff] %vm620, %v4963
        %5031 = vst.msk [vmem:[#allocation3 + $0x2b8] sm:$0xff] %vm620, %v4965
        %5032 = vst.msk [vmem:[#allocation3 + $0x2d0] sm:$0xff] %vm620, %v4967
        %5033 = vst.msk [vmem:[#allocation3 + $0x2e8] sm:$0xff] %vm620, %v4969
        %v5034 = vld [vmem:[%s4777 + $0xc] sm:$0xff]
        %v5035 = vld [vmem:[%s4777 + $0x14] sm:$0xff]
        %v5036 = vld [vmem:[%s4777 + $0x2c] sm:$0xff]
        %v5037 = vld [vmem:[%s4777 + $0x34] sm:$0xff]
        %v5038 = vld [vmem:[%s4777 + $0x4c] sm:$0xff]
        %v5039 = vld [vmem:[%s4777 + $0x54] sm:$0xff]
        %v5040 = vld [vmem:[%s4777 + $0x6c] sm:$0xff]
        %v5041 = vld [vmem:[%s4777 + $0x74] sm:$0xff]
        %v5042 = vld [vmem:[%s4777 + $0x8c] sm:$0xff]
        %v5043 = vld [vmem:[%s4777 + $0x94] sm:$0xff]
        %v5044 = vld [vmem:[%s4777 + $0xac] sm:$0xff]
        %v5045 = vld [vmem:[%s4777 + $0xb4] sm:$0xff]
        %v5046 = vld [vmem:[%s4777 + $0xcc] sm:$0xff]
        %v5047 = vld [vmem:[%s4777 + $0xd4] sm:$0xff]
        %v5048 = vld [vmem:[%s4777 + $0xec] sm:$0xff]
        %v5049 = vld [vmem:[%s4777 + $0xf4] sm:$0xff]
        %v5050 = vld [vmem:[%s4777 + $0x10c] sm:$0xff]
        %v5051 = vld [vmem:[%s4777 + $0x114] sm:$0xff]
        %v5052 = vld [vmem:[%s4777 + $0x12c] sm:$0xff]
        %v5053 = vld [vmem:[%s4777 + $0x134] sm:$0xff]
        %v5054 = vld [vmem:[%s4777 + $0x14c] sm:$0xff]
        %v5055 = vld [vmem:[%s4777 + $0x154] sm:$0xff]
        %v5056 = vld [vmem:[%s4777 + $0x16c] sm:$0xff]
        %v5057 = vld [vmem:[%s4777 + $0x174] sm:$0xff]
        %v5058 = vld [vmem:[%s4777 + $0x18c] sm:$0xff]
        %v5059 = vld [vmem:[%s4777 + $0x194] sm:$0xff]
        %v5060 = vld [vmem:[%s4777 + $0x1ac] sm:$0xff]
        %v5061 = vld [vmem:[%s4777 + $0x1b4] sm:$0xff]
        %v5062 = vld [vmem:[%s4777 + $0x1cc] sm:$0xff]
        %v5063 = vld [vmem:[%s4777 + $0x1d4] sm:$0xff]
        %v5064 = vld [vmem:[%s4777 + $0x1ec] sm:$0xff]
        %v5065 = vld [vmem:[%s4777 + $0x1f4] sm:$0xff]
        %5098 = vrot.lane.b32.xlu0 %v5034, 64
        %v5099 = vpop.permute.xlu0 %5098
        %5100 = vrot.lane.b32.xlu0 %v5035, 64
        %v5101 = vpop.permute.xlu0 %5100
        %5102 = vrot.lane.b32.xlu0 %v5036, 64
        %v5103 = vpop.permute.xlu0 %5102
        %5104 = vrot.lane.b32.xlu0 %v5037, 64
        %v5105 = vpop.permute.xlu0 %5104
        %5106 = vrot.lane.b32.xlu0 %v5038, 64
        %v5107 = vpop.permute.xlu0 %5106
        %5108 = vrot.lane.b32.xlu0 %v5039, 64
        %v5109 = vpop.permute.xlu0 %5108
        %5110 = vrot.lane.b32.xlu0 %v5040, 64
        %v5111 = vpop.permute.xlu0 %5110
        %5112 = vrot.lane.b32.xlu0 %v5041, 64
        %v5113 = vpop.permute.xlu0 %5112
        %5114 = vrot.lane.b32.xlu0 %v5042, 64
        %v5115 = vpop.permute.xlu0 %5114
        %5116 = vrot.lane.b32.xlu0 %v5043, 64
        %v5117 = vpop.permute.xlu0 %5116
        %5118 = vrot.lane.b32.xlu0 %v5044, 64
        %v5119 = vpop.permute.xlu0 %5118
        %5120 = vrot.lane.b32.xlu0 %v5045, 64
        %v5121 = vpop.permute.xlu0 %5120
        %5122 = vrot.lane.b32.xlu0 %v5046, 64
        %v5123 = vpop.permute.xlu0 %5122
        %5124 = vrot.lane.b32.xlu0 %v5047, 64
        %v5125 = vpop.permute.xlu0 %5124
        %5126 = vrot.lane.b32.xlu0 %v5048, 64
        %v5127 = vpop.permute.xlu0 %5126
        %5128 = vrot.lane.b32.xlu0 %v5049, 64
        %v5129 = vpop.permute.xlu0 %5128
        %5130 = vrot.lane.b32.xlu0 %v5050, 64
        %v5131 = vpop.permute.xlu0 %5130
        %5132 = vrot.lane.b32.xlu0 %v5051, 64
        %v5133 = vpop.permute.xlu0 %5132
        %5134 = vrot.lane.b32.xlu0 %v5052, 64
        %v5135 = vpop.permute.xlu0 %5134
        %5136 = vrot.lane.b32.xlu0 %v5053, 64
        %v5137 = vpop.permute.xlu0 %5136
        %5138 = vrot.lane.b32.xlu0 %v5054, 64
        %v5139 = vpop.permute.xlu0 %5138
        %5140 = vrot.lane.b32.xlu0 %v5055, 64
        %v5141 = vpop.permute.xlu0 %5140
        %5142 = vrot.lane.b32.xlu0 %v5056, 64
        %v5143 = vpop.permute.xlu0 %5142
        %5144 = vrot.lane.b32.xlu0 %v5057, 64
        %v5145 = vpop.permute.xlu0 %5144
        %5146 = vrot.lane.b32.xlu0 %v5058, 64
        %v5147 = vpop.permute.xlu0 %5146
        %5148 = vrot.lane.b32.xlu0 %v5059, 64
        %v5149 = vpop.permute.xlu0 %5148
        %5150 = vrot.lane.b32.xlu0 %v5060, 64
        %v5151 = vpop.permute.xlu0 %5150
        %5152 = vrot.lane.b32.xlu0 %v5061, 64
        %v5153 = vpop.permute.xlu0 %5152
        %5154 = vrot.lane.b32.xlu0 %v5062, 64
        %v5155 = vpop.permute.xlu0 %5154
        %5156 = vrot.lane.b32.xlu0 %v5063, 64
        %v5157 = vpop.permute.xlu0 %5156
        %5158 = vrot.lane.b32.xlu0 %v5064, 64
        %v5159 = vpop.permute.xlu0 %5158
        %5160 = vrot.lane.b32.xlu0 %v5065, 64
        %v5161 = vpop.permute.xlu0 %5160
        %5194 = vst.msk [vmem:[#allocation3] sm:$0xff] %vm813, %v5099
        %5195 = vst.msk [vmem:[#allocation3 + $0x18] sm:$0xff] %vm813, %v5101
        %5196 = vst.msk [vmem:[#allocation3 + $0x30] sm:$0xff] %vm813, %v5103
        %5197 = vst.msk [vmem:[#allocation3 + $0x48] sm:$0xff] %vm813, %v5105
        %5198 = vst.msk [vmem:[#allocation3 + $0x60] sm:$0xff] %vm813, %v5107
        %5199 = vst.msk [vmem:[#allocation3 + $0x78] sm:$0xff] %vm813, %v5109
        %5200 = vst.msk [vmem:[#allocation3 + $0x90] sm:$0xff] %vm813, %v5111
        %5201 = vst.msk [vmem:[#allocation3 + $0xa8] sm:$0xff] %vm813, %v5113
        %5202 = vst.msk [vmem:[#allocation3 + $0xc0] sm:$0xff] %vm813, %v5115
        %5203 = vst.msk [vmem:[#allocation3 + $0xd8] sm:$0xff] %vm813, %v5117
        %5204 = vst.msk [vmem:[#allocation3 + $0xf0] sm:$0xff] %vm813, %v5119
        %5205 = vst.msk [vmem:[#allocation3 + $0x108] sm:$0xff] %vm813, %v5121
        %5206 = vst.msk [vmem:[#allocation3 + $0x120] sm:$0xff] %vm813, %v5123
        %5207 = vst.msk [vmem:[#allocation3 + $0x138] sm:$0xff] %vm813, %v5125
        %5208 = vst.msk [vmem:[#allocation3 + $0x150] sm:$0xff] %vm813, %v5127
        %5209 = vst.msk [vmem:[#allocation3 + $0x168] sm:$0xff] %vm813, %v5129
        %5210 = vst.msk [vmem:[#allocation3 + $0x180] sm:$0xff] %vm813, %v5131
        %5211 = vst.msk [vmem:[#allocation3 + $0x198] sm:$0xff] %vm813, %v5133
        %5212 = vst.msk [vmem:[#allocation3 + $0x1b0] sm:$0xff] %vm813, %v5135
        %5213 = vst.msk [vmem:[#allocation3 + $0x1c8] sm:$0xff] %vm813, %v5137
        %5214 = vst.msk [vmem:[#allocation3 + $0x1e0] sm:$0xff] %vm813, %v5139
        %5215 = vst.msk [vmem:[#allocation3 + $0x1f8] sm:$0xff] %vm813, %v5141
        %5216 = vst.msk [vmem:[#allocation3 + $0x210] sm:$0xff] %vm813, %v5143
        %5217 = vst.msk [vmem:[#allocation3 + $0x228] sm:$0xff] %vm813, %v5145
        %5218 = vst.msk [vmem:[#allocation3 + $0x240] sm:$0xff] %vm813, %v5147
        %5219 = vst.msk [vmem:[#allocation3 + $0x258] sm:$0xff] %vm813, %v5149
        %5220 = vst.msk [vmem:[#allocation3 + $0x270] sm:$0xff] %vm813, %v5151
        %5221 = vst.msk [vmem:[#allocation3 + $0x288] sm:$0xff] %vm813, %v5153
        %5222 = vst.msk [vmem:[#allocation3 + $0x2a0] sm:$0xff] %vm813, %v5155
        %5223 = vst.msk [vmem:[#allocation3 + $0x2b8] sm:$0xff] %vm813, %v5157
        %5224 = vst.msk [vmem:[#allocation3 + $0x2d0] sm:$0xff] %vm813, %v5159
        %5225 = vst.msk [vmem:[#allocation3 + $0x2e8] sm:$0xff] %vm813, %v5161
        %v5226 = vld [vmem:[%s362 + $0x4] sm:$0xff]
        %v5227 = vld [vmem:[%s362 + $0xc] sm:$0xff]
        %v5228 = vld [vmem:[%s362 + $0x24] sm:$0xff]
        %v5229 = vld [vmem:[%s362 + $0x2c] sm:$0xff]
        %v5230 = vld [vmem:[%s362 + $0x44] sm:$0xff]
        %v5231 = vld [vmem:[%s362 + $0x4c] sm:$0xff]
        %v5232 = vld [vmem:[%s362 + $0x64] sm:$0xff]
        %v5233 = vld [vmem:[%s362 + $0x6c] sm:$0xff]
        %v5234 = vld [vmem:[%s362 + $0x84] sm:$0xff]
        %v5235 = vld [vmem:[%s362 + $0x8c] sm:$0xff]
        %v5236 = vld [vmem:[%s362 + $0xa4] sm:$0xff]
        %v5237 = vld [vmem:[%s362 + $0xac] sm:$0xff]
        %v5238 = vld [vmem:[%s362 + $0xc4] sm:$0xff]
        %v5239 = vld [vmem:[%s362 + $0xcc] sm:$0xff]
        %v5240 = vld [vmem:[%s362 + $0xe4] sm:$0xff]
        %v5241 = vld [vmem:[%s362 + $0xec] sm:$0xff]
        %v5242 = vld [vmem:[%s362 + $0x104] sm:$0xff]
        %v5243 = vld [vmem:[%s362 + $0x10c] sm:$0xff]
        %v5244 = vld [vmem:[%s362 + $0x124] sm:$0xff]
        %v5245 = vld [vmem:[%s362 + $0x12c] sm:$0xff]
        %v5246 = vld [vmem:[%s362 + $0x144] sm:$0xff]
        %v5247 = vld [vmem:[%s362 + $0x14c] sm:$0xff]
        %v5248 = vld [vmem:[%s362 + $0x164] sm:$0xff]
        %v5249 = vld [vmem:[%s362 + $0x16c] sm:$0xff]
        %v5250 = vld [vmem:[%s362 + $0x184] sm:$0xff]
        %v5251 = vld [vmem:[%s362 + $0x18c] sm:$0xff]
        %v5252 = vld [vmem:[%s362 + $0x1a4] sm:$0xff]
        %v5253 = vld [vmem:[%s362 + $0x1ac] sm:$0xff]
        %v5254 = vld [vmem:[%s362 + $0x1c4] sm:$0xff]
        %v5255 = vld [vmem:[%s362 + $0x1cc] sm:$0xff]
        %v5256 = vld [vmem:[%s362 + $0x1e4] sm:$0xff]
        %v5257 = vld [vmem:[%s362 + $0x1ec] sm:$0xff]
        %5290 = vrot.lane.b32.xlu0 %v5226, 96
        %v5291 = vpop.permute.xlu0 %5290
        %5292 = vrot.lane.b32.xlu0 %v5227, 96
        %v5293 = vpop.permute.xlu0 %5292
        %5294 = vrot.lane.b32.xlu0 %v5228, 96
        %v5295 = vpop.permute.xlu0 %5294
        %5296 = vrot.lane.b32.xlu0 %v5229, 96
        %v5297 = vpop.permute.xlu0 %5296
        %5298 = vrot.lane.b32.xlu0 %v5230, 96
        %v5299 = vpop.permute.xlu0 %5298
        %5300 = vrot.lane.b32.xlu0 %v5231, 96
        %v5301 = vpop.permute.xlu0 %5300
        %5302 = vrot.lane.b32.xlu0 %v5232, 96
        %v5303 = vpop.permute.xlu0 %5302
        %5304 = vrot.lane.b32.xlu0 %v5233, 96
        %v5305 = vpop.permute.xlu0 %5304
        %5306 = vrot.lane.b32.xlu0 %v5234, 96
        %v5307 = vpop.permute.xlu0 %5306
        %5308 = vrot.lane.b32.xlu0 %v5235, 96
        %v5309 = vpop.permute.xlu0 %5308
        %5310 = vrot.lane.b32.xlu0 %v5236, 96
        %v5311 = vpop.permute.xlu0 %5310
        %5312 = vrot.lane.b32.xlu0 %v5237, 96
        %v5313 = vpop.permute.xlu0 %5312
        %5314 = vrot.lane.b32.xlu0 %v5238, 96
        %v5315 = vpop.permute.xlu0 %5314
        %5316 = vrot.lane.b32.xlu0 %v5239, 96
        %v5317 = vpop.permute.xlu0 %5316
        %5318 = vrot.lane.b32.xlu0 %v5240, 96
        %v5319 = vpop.permute.xlu0 %5318
        %5320 = vrot.lane.b32.xlu0 %v5241, 96
        %v5321 = vpop.permute.xlu0 %5320
        %5322 = vrot.lane.b32.xlu0 %v5242, 96
        %v5323 = vpop.permute.xlu0 %5322
        %5324 = vrot.lane.b32.xlu0 %v5243, 96
        %v5325 = vpop.permute.xlu0 %5324
        %5326 = vrot.lane.b32.xlu0 %v5244, 96
        %v5327 = vpop.permute.xlu0 %5326
        %5328 = vrot.lane.b32.xlu0 %v5245, 96
        %v5329 = vpop.permute.xlu0 %5328
        %5330 = vrot.lane.b32.xlu0 %v5246, 96
        %v5331 = vpop.permute.xlu0 %5330
        %5332 = vrot.lane.b32.xlu0 %v5247, 96
        %v5333 = vpop.permute.xlu0 %5332
        %5334 = vrot.lane.b32.xlu0 %v5248, 96
        %v5335 = vpop.permute.xlu0 %5334
        %5336 = vrot.lane.b32.xlu0 %v5249, 96
        %v5337 = vpop.permute.xlu0 %5336
        %5338 = vrot.lane.b32.xlu0 %v5250, 96
        %v5339 = vpop.permute.xlu0 %5338
        %5340 = vrot.lane.b32.xlu0 %v5251, 96
        %v5341 = vpop.permute.xlu0 %5340
        %5342 = vrot.lane.b32.xlu0 %v5252, 96
        %v5343 = vpop.permute.xlu0 %5342
        %5344 = vrot.lane.b32.xlu0 %v5253, 96
        %v5345 = vpop.permute.xlu0 %5344
        %5346 = vrot.lane.b32.xlu0 %v5254, 96
        %v5347 = vpop.permute.xlu0 %5346
        %5348 = vrot.lane.b32.xlu0 %v5255, 96
        %v5349 = vpop.permute.xlu0 %5348
        %5350 = vrot.lane.b32.xlu0 %v5256, 96
        %v5351 = vpop.permute.xlu0 %5350
        %5352 = vrot.lane.b32.xlu0 %v5257, 96
        %v5353 = vpop.permute.xlu0 %5352
        %5386 = vst.msk [vmem:[#allocation3] sm:$0xff] %vm1006, %v5291
        %5387 = vst.msk [vmem:[#allocation3 + $0x18] sm:$0xff] %vm1006, %v5293
        %5388 = vst.msk [vmem:[#allocation3 + $0x30] sm:$0xff] %vm1006, %v5295
        %5389 = vst.msk [vmem:[#allocation3 + $0x48] sm:$0xff] %vm1006, %v5297
        %5390 = vst.msk [vmem:[#allocation3 + $0x60] sm:$0xff] %vm1006, %v5299
        %5391 = vst.msk [vmem:[#allocation3 + $0x78] sm:$0xff] %vm1006, %v5301
        %5392 = vst.msk [vmem:[#allocation3 + $0x90] sm:$0xff] %vm1006, %v5303
        %5393 = vst.msk [vmem:[#allocation3 + $0xa8] sm:$0xff] %vm1006, %v5305
        %5394 = vst.msk [vmem:[#allocation3 + $0xc0] sm:$0xff] %vm1006, %v5307
        %5395 = vst.msk [vmem:[#allocation3 + $0xd8] sm:$0xff] %vm1006, %v5309
        %5396 = vst.msk [vmem:[#allocation3 + $0xf0] sm:$0xff] %vm1006, %v5311
        %5397 = vst.msk [vmem:[#allocation3 + $0x108] sm:$0xff] %vm1006, %v5313
        %5398 = vst.msk [vmem:[#allocation3 + $0x120] sm:$0xff] %vm1006, %v5315
        %5399 = vst.msk [vmem:[#allocation3 + $0x138] sm:$0xff] %vm1006, %v5317
        %5400 = vst.msk [vmem:[#allocation3 + $0x150] sm:$0xff] %vm1006, %v5319
        %5401 = vst.msk [vmem:[#allocation3 + $0x168] sm:$0xff] %vm1006, %v5321
        %5402 = vst.msk [vmem:[#allocation3 + $0x180] sm:$0xff] %vm1006, %v5323
        %5403 = vst.msk [vmem:[#allocation3 + $0x198] sm:$0xff] %vm1006, %v5325
        %5404 = vst.msk [vmem:[#allocation3 + $0x1b0] sm:$0xff] %vm1006, %v5327
        %5405 = vst.msk [vmem:[#allocation3 + $0x1c8] sm:$0xff] %vm1006, %v5329
        %5406 = vst.msk [vmem:[#allocation3 + $0x1e0] sm:$0xff] %vm1006, %v5331
        %5407 = vst.msk [vmem:[#allocation3 + $0x1f8] sm:$0xff] %vm1006, %v5333
        %5408 = vst.msk [vmem:[#allocation3 + $0x210] sm:$0xff] %vm1006, %v5335
        %5409 = vst.msk [vmem:[#allocation3 + $0x228] sm:$0xff] %vm1006, %v5337
        %5410 = vst.msk [vmem:[#allocation3 + $0x240] sm:$0xff] %vm1006, %v5339
        %5411 = vst.msk [vmem:[#allocation3 + $0x258] sm:$0xff] %vm1006, %v5341
        %5412 = vst.msk [vmem:[#allocation3 + $0x270] sm:$0xff] %vm1006, %v5343
        %5413 = vst.msk [vmem:[#allocation3 + $0x288] sm:$0xff] %vm1006, %v5345
        %5414 = vst.msk [vmem:[#allocation3 + $0x2a0] sm:$0xff] %vm1006, %v5347
        %5415 = vst.msk [vmem:[#allocation3 + $0x2b8] sm:$0xff] %vm1006, %v5349
        %5416 = vst.msk [vmem:[#allocation3 + $0x2d0] sm:$0xff] %vm1006, %v5351
        %5417 = vst.msk [vmem:[#allocation3 + $0x2e8] sm:$0xff] %vm1006, %v5353
        %v5418 = vld [vmem:[%s362 + $0x8] sm:$0xff]
        %v5419 = vld [vmem:[%s362 + $0x10] sm:$0xff]
        %v5420 = vld [vmem:[%s362 + $0x28] sm:$0xff]
        %v5421 = vld [vmem:[%s362 + $0x30] sm:$0xff]
        %v5422 = vld [vmem:[%s362 + $0x48] sm:$0xff]
        %v5423 = vld [vmem:[%s362 + $0x50] sm:$0xff]
        %v5424 = vld [vmem:[%s362 + $0x68] sm:$0xff]
        %v5425 = vld [vmem:[%s362 + $0x70] sm:$0xff]
        %v5426 = vld [vmem:[%s362 + $0x88] sm:$0xff]
        %v5427 = vld [vmem:[%s362 + $0x90] sm:$0xff]
        %v5428 = vld [vmem:[%s362 + $0xa8] sm:$0xff]
        %v5429 = vld [vmem:[%s362 + $0xb0] sm:$0xff]
        %v5430 = vld [vmem:[%s362 + $0xc8] sm:$0xff]
        %v5431 = vld [vmem:[%s362 + $0xd0] sm:$0xff]
        %v5432 = vld [vmem:[%s362 + $0xe8] sm:$0xff]
        %v5433 = vld [vmem:[%s362 + $0xf0] sm:$0xff]
        %v5434 = vld [vmem:[%s362 + $0x108] sm:$0xff]
        %v5435 = vld [vmem:[%s362 + $0x110] sm:$0xff]
        %v5436 = vld [vmem:[%s362 + $0x128] sm:$0xff]
        %v5437 = vld [vmem:[%s362 + $0x130] sm:$0xff]
        %v5438 = vld [vmem:[%s362 + $0x148] sm:$0xff]
        %v5439 = vld [vmem:[%s362 + $0x150] sm:$0xff]
        %v5440 = vld [vmem:[%s362 + $0x168] sm:$0xff]
        %v5441 = vld [vmem:[%s362 + $0x170] sm:$0xff]
        %v5442 = vld [vmem:[%s362 + $0x188] sm:$0xff]
        %v5443 = vld [vmem:[%s362 + $0x190] sm:$0xff]
        %v5444 = vld [vmem:[%s362 + $0x1a8] sm:$0xff]
        %v5445 = vld [vmem:[%s362 + $0x1b0] sm:$0xff]
        %v5446 = vld [vmem:[%s362 + $0x1c8] sm:$0xff]
        %v5447 = vld [vmem:[%s362 + $0x1d0] sm:$0xff]
        %v5448 = vld [vmem:[%s362 + $0x1e8] sm:$0xff]
        %v5449 = vld [vmem:[%s362 + $0x1f0] sm:$0xff]
        %5450 = vst.msk [vmem:[#allocation3 + $0x8] sm:$0xff] %vm201, %v5418
        %5451 = vst.msk [vmem:[#allocation3 + $0x20] sm:$0xff] %vm201, %v5419
        %5452 = vst.msk [vmem:[#allocation3 + $0x38] sm:$0xff] %vm201, %v5420
        %5453 = vst.msk [vmem:[#allocation3 + $0x50] sm:$0xff] %vm201, %v5421
        %5454 = vst.msk [vmem:[#allocation3 + $0x68] sm:$0xff] %vm201, %v5422
        %5455 = vst.msk [vmem:[#allocation3 + $0x80] sm:$0xff] %vm201, %v5423
        %5456 = vst.msk [vmem:[#allocation3 + $0x98] sm:$0xff] %vm201, %v5424
        %5457 = vst.msk [vmem:[#allocation3 + $0xb0] sm:$0xff] %vm201, %v5425
        %5458 = vst.msk [vmem:[#allocation3 + $0xc8] sm:$0xff] %vm201, %v5426
        %5459 = vst.msk [vmem:[#allocation3 + $0xe0] sm:$0xff] %vm201, %v5427
        %5460 = vst.msk [vmem:[#allocation3 + $0xf8] sm:$0xff] %vm201, %v5428
        %5461 = vst.msk [vmem:[#allocation3 + $0x110] sm:$0xff] %vm201, %v5429
        %5462 = vst.msk [vmem:[#allocation3 + $0x128] sm:$0xff] %vm201, %v5430
        %5463 = vst.msk [vmem:[#allocation3 + $0x140] sm:$0xff] %vm201, %v5431
        %5464 = vst.msk [vmem:[#allocation3 + $0x158] sm:$0xff] %vm201, %v5432
        %5465 = vst.msk [vmem:[#allocation3 + $0x170] sm:$0xff] %vm201, %v5433
        %5466 = vst.msk [vmem:[#allocation3 + $0x188] sm:$0xff] %vm201, %v5434
        %5467 = vst.msk [vmem:[#allocation3 + $0x1a0] sm:$0xff] %vm201, %v5435
        %5468 = vst.msk [vmem:[#allocation3 + $0x1b8] sm:$0xff] %vm201, %v5436
        %5469 = vst.msk [vmem:[#allocation3 + $0x1d0] sm:$0xff] %vm201, %v5437
        %5470 = vst.msk [vmem:[#allocation3 + $0x1e8] sm:$0xff] %vm201, %v5438
        %5471 = vst.msk [vmem:[#allocation3 + $0x200] sm:$0xff] %vm201, %v5439
        %5472 = vst.msk [vmem:[#allocation3 + $0x218] sm:$0xff] %vm201, %v5440
        %5473 = vst.msk [vmem:[#allocation3 + $0x230] sm:$0xff] %vm201, %v5441
        %5474 = vst.msk [vmem:[#allocation3 + $0x248] sm:$0xff] %vm201, %v5442
        %5475 = vst.msk [vmem:[#allocation3 + $0x260] sm:$0xff] %vm201, %v5443
        %5476 = vst.msk [vmem:[#allocation3 + $0x278] sm:$0xff] %vm201, %v5444
        %5477 = vst.msk [vmem:[#allocation3 + $0x290] sm:$0xff] %vm201, %v5445
        %5478 = vst.msk [vmem:[#allocation3 + $0x2a8] sm:$0xff] %vm201, %v5446
        %5479 = vst.msk [vmem:[#allocation3 + $0x2c0] sm:$0xff] %vm201, %v5447
        %5480 = vst.msk [vmem:[#allocation3 + $0x2d8] sm:$0xff] %vm201, %v5448
        %5481 = vst.msk [vmem:[#allocation3 + $0x2f0] sm:$0xff] %vm201, %v5449
        %v5482 = vld [vmem:[%s362 + $0xc] sm:$0xff]
        %v5483 = vld [vmem:[%s362 + $0x14] sm:$0xff]
        %v5484 = vld [vmem:[%s362 + $0x2c] sm:$0xff]
        %v5485 = vld [vmem:[%s362 + $0x34] sm:$0xff]
        %v5486 = vld [vmem:[%s362 + $0x4c] sm:$0xff]
        %v5487 = vld [vmem:[%s362 + $0x54] sm:$0xff]
        %v5488 = vld [vmem:[%s362 + $0x6c] sm:$0xff]
        %v5489 = vld [vmem:[%s362 + $0x74] sm:$0xff]
        %v5490 = vld [vmem:[%s362 + $0x8c] sm:$0xff]
        %v5491 = vld [vmem:[%s362 + $0x94] sm:$0xff]
        %v5492 = vld [vmem:[%s362 + $0xac] sm:$0xff]
        %v5493 = vld [vmem:[%s362 + $0xb4] sm:$0xff]
        %v5494 = vld [vmem:[%s362 + $0xcc] sm:$0xff]
        %v5495 = vld [vmem:[%s362 + $0xd4] sm:$0xff]
        %v5496 = vld [vmem:[%s362 + $0xec] sm:$0xff]
        %v5497 = vld [vmem:[%s362 + $0xf4] sm:$0xff]
        %v5498 = vld [vmem:[%s362 + $0x10c] sm:$0xff]
        %v5499 = vld [vmem:[%s362 + $0x114] sm:$0xff]
        %v5500 = vld [vmem:[%s362 + $0x12c] sm:$0xff]
        %v5501 = vld [vmem:[%s362 + $0x134] sm:$0xff]
        %v5502 = vld [vmem:[%s362 + $0x14c] sm:$0xff]
        %v5503 = vld [vmem:[%s362 + $0x154] sm:$0xff]
        %v5504 = vld [vmem:[%s362 + $0x16c] sm:$0xff]
        %v5505 = vld [vmem:[%s362 + $0x174] sm:$0xff]
        %v5506 = vld [vmem:[%s362 + $0x18c] sm:$0xff]
        %v5507 = vld [vmem:[%s362 + $0x194] sm:$0xff]
        %v5508 = vld [vmem:[%s362 + $0x1ac] sm:$0xff]
        %v5509 = vld [vmem:[%s362 + $0x1b4] sm:$0xff]
        %v5510 = vld [vmem:[%s362 + $0x1cc] sm:$0xff]
        %v5511 = vld [vmem:[%s362 + $0x1d4] sm:$0xff]
        %v5512 = vld [vmem:[%s362 + $0x1ec] sm:$0xff]
        %v5513 = vld [vmem:[%s362 + $0x1f4] sm:$0xff]
        %5546 = vrot.lane.b32.xlu0 %v5482, 32
        %v5547 = vpop.permute.xlu0 %5546
        %5548 = vrot.lane.b32.xlu0 %v5483, 32
        %v5549 = vpop.permute.xlu0 %5548
        %5550 = vrot.lane.b32.xlu0 %v5484, 32
        %v5551 = vpop.permute.xlu0 %5550
        %5552 = vrot.lane.b32.xlu0 %v5485, 32
        %v5553 = vpop.permute.xlu0 %5552
        %5554 = vrot.lane.b32.xlu0 %v5486, 32
        %v5555 = vpop.permute.xlu0 %5554
        %5556 = vrot.lane.b32.xlu0 %v5487, 32
        %v5557 = vpop.permute.xlu0 %5556
        %5558 = vrot.lane.b32.xlu0 %v5488, 32
        %v5559 = vpop.permute.xlu0 %5558
        %5560 = vrot.lane.b32.xlu0 %v5489, 32
        %v5561 = vpop.permute.xlu0 %5560
        %5562 = vrot.lane.b32.xlu0 %v5490, 32
        %v5563 = vpop.permute.xlu0 %5562
        %5564 = vrot.lane.b32.xlu0 %v5491, 32
        %v5565 = vpop.permute.xlu0 %5564
        %5566 = vrot.lane.b32.xlu0 %v5492, 32
        %v5567 = vpop.permute.xlu0 %5566
        %5568 = vrot.lane.b32.xlu0 %v5493, 32
        %v5569 = vpop.permute.xlu0 %5568
        %5570 = vrot.lane.b32.xlu0 %v5494, 32
        %v5571 = vpop.permute.xlu0 %5570
        %5572 = vrot.lane.b32.xlu0 %v5495, 32
        %v5573 = vpop.permute.xlu0 %5572
        %5574 = vrot.lane.b32.xlu0 %v5496, 32
        %v5575 = vpop.permute.xlu0 %5574
        %5576 = vrot.lane.b32.xlu0 %v5497, 32
        %v5577 = vpop.permute.xlu0 %5576
        %5578 = vrot.lane.b32.xlu0 %v5498, 32
        %v5579 = vpop.permute.xlu0 %5578
        %5580 = vrot.lane.b32.xlu0 %v5499, 32
        %v5581 = vpop.permute.xlu0 %5580
        %5582 = vrot.lane.b32.xlu0 %v5500, 32
        %v5583 = vpop.permute.xlu0 %5582
        %5584 = vrot.lane.b32.xlu0 %v5501, 32
        %v5585 = vpop.permute.xlu0 %5584
        %5586 = vrot.lane.b32.xlu0 %v5502, 32
        %v5587 = vpop.permute.xlu0 %5586
        %5588 = vrot.lane.b32.xlu0 %v5503, 32
        %v5589 = vpop.permute.xlu0 %5588
        %5590 = vrot.lane.b32.xlu0 %v5504, 32
        %v5591 = vpop.permute.xlu0 %5590
        %5592 = vrot.lane.b32.xlu0 %v5505, 32
        %v5593 = vpop.permute.xlu0 %5592
        %5594 = vrot.lane.b32.xlu0 %v5506, 32
        %v5595 = vpop.permute.xlu0 %5594
        %5596 = vrot.lane.b32.xlu0 %v5507, 32
        %v5597 = vpop.permute.xlu0 %5596
        %5598 = vrot.lane.b32.xlu0 %v5508, 32
        %v5599 = vpop.permute.xlu0 %5598
        %5600 = vrot.lane.b32.xlu0 %v5509, 32
        %v5601 = vpop.permute.xlu0 %5600
        %5602 = vrot.lane.b32.xlu0 %v5510, 32
        %v5603 = vpop.permute.xlu0 %5602
        %5604 = vrot.lane.b32.xlu0 %v5511, 32
        %v5605 = vpop.permute.xlu0 %5604
        %5606 = vrot.lane.b32.xlu0 %v5512, 32
        %v5607 = vpop.permute.xlu0 %5606
        %5608 = vrot.lane.b32.xlu0 %v5513, 32
        %v5609 = vpop.permute.xlu0 %5608
        %5642 = vst.msk [vmem:[#allocation3 + $0x8] sm:$0xff] %vm620, %v5547
        %5643 = vst.msk [vmem:[#allocation3 + $0x20] sm:$0xff] %vm620, %v5549
        %5644 = vst.msk [vmem:[#allocation3 + $0x38] sm:$0xff] %vm620, %v5551
        %5645 = vst.msk [vmem:[#allocation3 + $0x50] sm:$0xff] %vm620, %v5553
        %5646 = vst.msk [vmem:[#allocation3 + $0x68] sm:$0xff] %vm620, %v5555
        %5647 = vst.msk [vmem:[#allocation3 + $0x80] sm:$0xff] %vm620, %v5557
        %5648 = vst.msk [vmem:[#allocation3 + $0x98] sm:$0xff] %vm620, %v5559
        %5649 = vst.msk [vmem:[#allocation3 + $0xb0] sm:$0xff] %vm620, %v5561
        %5650 = vst.msk [vmem:[#allocation3 + $0xc8] sm:$0xff] %vm620, %v5563
        %5651 = vst.msk [vmem:[#allocation3 + $0xe0] sm:$0xff] %vm620, %v5565
        %5652 = vst.msk [vmem:[#allocation3 + $0xf8] sm:$0xff] %vm620, %v5567
        %5653 = vst.msk [vmem:[#allocation3 + $0x110] sm:$0xff] %vm620, %v5569
        %5654 = vst.msk [vmem:[#allocation3 + $0x128] sm:$0xff] %vm620, %v5571
        %5655 = vst.msk [vmem:[#allocation3 + $0x140] sm:$0xff] %vm620, %v5573
        %5656 = vst.msk [vmem:[#allocation3 + $0x158] sm:$0xff] %vm620, %v5575
        %5657 = vst.msk [vmem:[#allocation3 + $0x170] sm:$0xff] %vm620, %v5577
        %5658 = vst.msk [vmem:[#allocation3 + $0x188] sm:$0xff] %vm620, %v5579
        %5659 = vst.msk [vmem:[#allocation3 + $0x1a0] sm:$0xff] %vm620, %v5581
        %5660 = vst.msk [vmem:[#allocation3 + $0x1b8] sm:$0xff] %vm620, %v5583
        %5661 = vst.msk [vmem:[#allocation3 + $0x1d0] sm:$0xff] %vm620, %v5585
        %5662 = vst.msk [vmem:[#allocation3 + $0x1e8] sm:$0xff] %vm620, %v5587
        %5663 = vst.msk [vmem:[#allocation3 + $0x200] sm:$0xff] %vm620, %v5589
        %5664 = vst.msk [vmem:[#allocation3 + $0x218] sm:$0xff] %vm620, %v5591
        %5665 = vst.msk [vmem:[#allocation3 + $0x230] sm:$0xff] %vm620, %v5593
        %5666 = vst.msk [vmem:[#allocation3 + $0x248] sm:$0xff] %vm620, %v5595
        %5667 = vst.msk [vmem:[#allocation3 + $0x260] sm:$0xff] %vm620, %v5597
        %5668 = vst.msk [vmem:[#allocation3 + $0x278] sm:$0xff] %vm620, %v5599
        %5669 = vst.msk [vmem:[#allocation3 + $0x290] sm:$0xff] %vm620, %v5601
        %5670 = vst.msk [vmem:[#allocation3 + $0x2a8] sm:$0xff] %vm620, %v5603
        %5671 = vst.msk [vmem:[#allocation3 + $0x2c0] sm:$0xff] %vm620, %v5605
        %5672 = vst.msk [vmem:[#allocation3 + $0x2d8] sm:$0xff] %vm620, %v5607
        %5673 = vst.msk [vmem:[#allocation3 + $0x2f0] sm:$0xff] %vm620, %v5609
        %s5674 = scalar_lea.vmem [#allocation2], 384
        %v5675 = vld [vmem:[%s5674 + $0x4] sm:$0xff]
        %v5676 = vld [vmem:[%s5674 + $0xc] sm:$0xff]
        %v5677 = vld [vmem:[%s5674 + $0x24] sm:$0xff]
        %v5678 = vld [vmem:[%s5674 + $0x2c] sm:$0xff]
        %v5679 = vld [vmem:[%s5674 + $0x44] sm:$0xff]
        %v5680 = vld [vmem:[%s5674 + $0x4c] sm:$0xff]
        %v5681 = vld [vmem:[%s5674 + $0x64] sm:$0xff]
        %v5682 = vld [vmem:[%s5674 + $0x6c] sm:$0xff]
        %v5683 = vld [vmem:[%s5674 + $0x84] sm:$0xff]
        %v5684 = vld [vmem:[%s5674 + $0x8c] sm:$0xff]
        %v5685 = vld [vmem:[%s5674 + $0xa4] sm:$0xff]
        %v5686 = vld [vmem:[%s5674 + $0xac] sm:$0xff]
        %v5687 = vld [vmem:[%s5674 + $0xc4] sm:$0xff]
        %v5688 = vld [vmem:[%s5674 + $0xcc] sm:$0xff]
        %v5689 = vld [vmem:[%s5674 + $0xe4] sm:$0xff]
        %v5690 = vld [vmem:[%s5674 + $0xec] sm:$0xff]
        %v5691 = vld [vmem:[%s5674 + $0x104] sm:$0xff]
        %v5692 = vld [vmem:[%s5674 + $0x10c] sm:$0xff]
        %v5693 = vld [vmem:[%s5674 + $0x124] sm:$0xff]
        %v5694 = vld [vmem:[%s5674 + $0x12c] sm:$0xff]
        %v5695 = vld [vmem:[%s5674 + $0x144] sm:$0xff]
        %v5696 = vld [vmem:[%s5674 + $0x14c] sm:$0xff]
        %v5697 = vld [vmem:[%s5674 + $0x164] sm:$0xff]
        %v5698 = vld [vmem:[%s5674 + $0x16c] sm:$0xff]
        %v5699 = vld [vmem:[%s5674 + $0x184] sm:$0xff]
        %v5700 = vld [vmem:[%s5674 + $0x18c] sm:$0xff]
        %v5701 = vld [vmem:[%s5674 + $0x1a4] sm:$0xff]
        %v5702 = vld [vmem:[%s5674 + $0x1ac] sm:$0xff]
        %v5703 = vld [vmem:[%s5674 + $0x1c4] sm:$0xff]
        %v5704 = vld [vmem:[%s5674 + $0x1cc] sm:$0xff]
        %v5705 = vld [vmem:[%s5674 + $0x1e4] sm:$0xff]
        %v5706 = vld [vmem:[%s5674 + $0x1ec] sm:$0xff]
        %5739 = vrot.lane.b32.xlu0 %v5675, 64
        %v5740 = vpop.permute.xlu0 %5739
        %5741 = vrot.lane.b32.xlu0 %v5676, 64
        %v5742 = vpop.permute.xlu0 %5741
        %5743 = vrot.lane.b32.xlu0 %v5677, 64
        %v5744 = vpop.permute.xlu0 %5743
        %5745 = vrot.lane.b32.xlu0 %v5678, 64
        %v5746 = vpop.permute.xlu0 %5745
        %5747 = vrot.lane.b32.xlu0 %v5679, 64
        %v5748 = vpop.permute.xlu0 %5747
        %5749 = vrot.lane.b32.xlu0 %v5680, 64
        %v5750 = vpop.permute.xlu0 %5749
        %5751 = vrot.lane.b32.xlu0 %v5681, 64
        %v5752 = vpop.permute.xlu0 %5751
        %5753 = vrot.lane.b32.xlu0 %v5682, 64
        %v5754 = vpop.permute.xlu0 %5753
        %5755 = vrot.lane.b32.xlu0 %v5683, 64
        %v5756 = vpop.permute.xlu0 %5755
        %5757 = vrot.lane.b32.xlu0 %v5684, 64
        %v5758 = vpop.permute.xlu0 %5757
        %5759 = vrot.lane.b32.xlu0 %v5685, 64
        %v5760 = vpop.permute.xlu0 %5759
        %5761 = vrot.lane.b32.xlu0 %v5686, 64
        %v5762 = vpop.permute.xlu0 %5761
        %5763 = vrot.lane.b32.xlu0 %v5687, 64
        %v5764 = vpop.permute.xlu0 %5763
        %5765 = vrot.lane.b32.xlu0 %v5688, 64
        %v5766 = vpop.permute.xlu0 %5765
        %5767 = vrot.lane.b32.xlu0 %v5689, 64
        %v5768 = vpop.permute.xlu0 %5767
        %5769 = vrot.lane.b32.xlu0 %v5690, 64
        %v5770 = vpop.permute.xlu0 %5769
        %5771 = vrot.lane.b32.xlu0 %v5691, 64
        %v5772 = vpop.permute.xlu0 %5771
        %5773 = vrot.lane.b32.xlu0 %v5692, 64
        %v5774 = vpop.permute.xlu0 %5773
        %5775 = vrot.lane.b32.xlu0 %v5693, 64
        %v5776 = vpop.permute.xlu0 %5775
        %5777 = vrot.lane.b32.xlu0 %v5694, 64
        %v5778 = vpop.permute.xlu0 %5777
        %5779 = vrot.lane.b32.xlu0 %v5695, 64
        %v5780 = vpop.permute.xlu0 %5779
        %5781 = vrot.lane.b32.xlu0 %v5696, 64
        %v5782 = vpop.permute.xlu0 %5781
        %5783 = vrot.lane.b32.xlu0 %v5697, 64
        %v5784 = vpop.permute.xlu0 %5783
        %5785 = vrot.lane.b32.xlu0 %v5698, 64
        %v5786 = vpop.permute.xlu0 %5785
        %5787 = vrot.lane.b32.xlu0 %v5699, 64
        %v5788 = vpop.permute.xlu0 %5787
        %5789 = vrot.lane.b32.xlu0 %v5700, 64
        %v5790 = vpop.permute.xlu0 %5789
        %5791 = vrot.lane.b32.xlu0 %v5701, 64
        %v5792 = vpop.permute.xlu0 %5791
        %5793 = vrot.lane.b32.xlu0 %v5702, 64
        %v5794 = vpop.permute.xlu0 %5793
        %5795 = vrot.lane.b32.xlu0 %v5703, 64
        %v5796 = vpop.permute.xlu0 %5795
        %5797 = vrot.lane.b32.xlu0 %v5704, 64
        %v5798 = vpop.permute.xlu0 %5797
        %5799 = vrot.lane.b32.xlu0 %v5705, 64
        %v5800 = vpop.permute.xlu0 %5799
        %5801 = vrot.lane.b32.xlu0 %v5706, 64
        %v5802 = vpop.permute.xlu0 %5801
        %5835 = vst.msk [vmem:[#allocation3 + $0x8] sm:$0xff] %vm813, %v5740
        %5836 = vst.msk [vmem:[#allocation3 + $0x20] sm:$0xff] %vm813, %v5742
        %5837 = vst.msk [vmem:[#allocation3 + $0x38] sm:$0xff] %vm813, %v5744
        %5838 = vst.msk [vmem:[#allocation3 + $0x50] sm:$0xff] %vm813, %v5746
        %5839 = vst.msk [vmem:[#allocation3 + $0x68] sm:$0xff] %vm813, %v5748
        %5840 = vst.msk [vmem:[#allocation3 + $0x80] sm:$0xff] %vm813, %v5750
        %5841 = vst.msk [vmem:[#allocation3 + $0x98] sm:$0xff] %vm813, %v5752
        %5842 = vst.msk [vmem:[#allocation3 + $0xb0] sm:$0xff] %vm813, %v5754
        %5843 = vst.msk [vmem:[#allocation3 + $0xc8] sm:$0xff] %vm813, %v5756
        %5844 = vst.msk [vmem:[#allocation3 + $0xe0] sm:$0xff] %vm813, %v5758
        %5845 = vst.msk [vmem:[#allocation3 + $0xf8] sm:$0xff] %vm813, %v5760
        %5846 = vst.msk [vmem:[#allocation3 + $0x110] sm:$0xff] %vm813, %v5762
        %5847 = vst.msk [vmem:[#allocation3 + $0x128] sm:$0xff] %vm813, %v5764
        %5848 = vst.msk [vmem:[#allocation3 + $0x140] sm:$0xff] %vm813, %v5766
        %5849 = vst.msk [vmem:[#allocation3 + $0x158] sm:$0xff] %vm813, %v5768
        %5850 = vst.msk [vmem:[#allocation3 + $0x170] sm:$0xff] %vm813, %v5770
        %5851 = vst.msk [vmem:[#allocation3 + $0x188] sm:$0xff] %vm813, %v5772
        %5852 = vst.msk [vmem:[#allocation3 + $0x1a0] sm:$0xff] %vm813, %v5774
        %5853 = vst.msk [vmem:[#allocation3 + $0x1b8] sm:$0xff] %vm813, %v5776
        %5854 = vst.msk [vmem:[#allocation3 + $0x1d0] sm:$0xff] %vm813, %v5778
        %5855 = vst.msk [vmem:[#allocation3 + $0x1e8] sm:$0xff] %vm813, %v5780
        %5856 = vst.msk [vmem:[#allocation3 + $0x200] sm:$0xff] %vm813, %v5782
        %5857 = vst.msk [vmem:[#allocation3 + $0x218] sm:$0xff] %vm813, %v5784
        %5858 = vst.msk [vmem:[#allocation3 + $0x230] sm:$0xff] %vm813, %v5786
        %5859 = vst.msk [vmem:[#allocation3 + $0x248] sm:$0xff] %vm813, %v5788
        %5860 = vst.msk [vmem:[#allocation3 + $0x260] sm:$0xff] %vm813, %v5790
        %5861 = vst.msk [vmem:[#allocation3 + $0x278] sm:$0xff] %vm813, %v5792
        %5862 = vst.msk [vmem:[#allocation3 + $0x290] sm:$0xff] %vm813, %v5794
        %5863 = vst.msk [vmem:[#allocation3 + $0x2a8] sm:$0xff] %vm813, %v5796
        %5864 = vst.msk [vmem:[#allocation3 + $0x2c0] sm:$0xff] %vm813, %v5798
        %5865 = vst.msk [vmem:[#allocation3 + $0x2d8] sm:$0xff] %vm813, %v5800
        %5866 = vst.msk [vmem:[#allocation3 + $0x2f0] sm:$0xff] %vm813, %v5802
        %v5867 = vld [vmem:[%s5674 + $0x8] sm:$0xff]
        %v5868 = vld [vmem:[%s5674 + $0x10] sm:$0xff]
        %v5869 = vld [vmem:[%s5674 + $0x28] sm:$0xff]
        %v5870 = vld [vmem:[%s5674 + $0x30] sm:$0xff]
        %v5871 = vld [vmem:[%s5674 + $0x48] sm:$0xff]
        %v5872 = vld [vmem:[%s5674 + $0x50] sm:$0xff]
        %v5873 = vld [vmem:[%s5674 + $0x68] sm:$0xff]
        %v5874 = vld [vmem:[%s5674 + $0x70] sm:$0xff]
        %v5875 = vld [vmem:[%s5674 + $0x88] sm:$0xff]
        %v5876 = vld [vmem:[%s5674 + $0x90] sm:$0xff]
        %v5877 = vld [vmem:[%s5674 + $0xa8] sm:$0xff]
        %v5878 = vld [vmem:[%s5674 + $0xb0] sm:$0xff]
        %v5879 = vld [vmem:[%s5674 + $0xc8] sm:$0xff]
        %v5880 = vld [vmem:[%s5674 + $0xd0] sm:$0xff]
        %v5881 = vld [vmem:[%s5674 + $0xe8] sm:$0xff]
        %v5882 = vld [vmem:[%s5674 + $0xf0] sm:$0xff]
        %v5883 = vld [vmem:[%s5674 + $0x108] sm:$0xff]
        %v5884 = vld [vmem:[%s5674 + $0x110] sm:$0xff]
        %v5885 = vld [vmem:[%s5674 + $0x128] sm:$0xff]
        %v5886 = vld [vmem:[%s5674 + $0x130] sm:$0xff]
        %v5887 = vld [vmem:[%s5674 + $0x148] sm:$0xff]
        %v5888 = vld [vmem:[%s5674 + $0x150] sm:$0xff]
        %v5889 = vld [vmem:[%s5674 + $0x168] sm:$0xff]
        %v5890 = vld [vmem:[%s5674 + $0x170] sm:$0xff]
        %v5891 = vld [vmem:[%s5674 + $0x188] sm:$0xff]
        %v5892 = vld [vmem:[%s5674 + $0x190] sm:$0xff]
        %v5893 = vld [vmem:[%s5674 + $0x1a8] sm:$0xff]
        %v5894 = vld [vmem:[%s5674 + $0x1b0] sm:$0xff]
        %v5895 = vld [vmem:[%s5674 + $0x1c8] sm:$0xff]
        %v5896 = vld [vmem:[%s5674 + $0x1d0] sm:$0xff]
        %v5897 = vld [vmem:[%s5674 + $0x1e8] sm:$0xff]
        %v5898 = vld [vmem:[%s5674 + $0x1f0] sm:$0xff]
        %5931 = vrot.lane.b32.xlu0 %v5867, 96
        %v5932 = vpop.permute.xlu0 %5931
        %5933 = vrot.lane.b32.xlu0 %v5868, 96
        %v5934 = vpop.permute.xlu0 %5933
        %5935 = vrot.lane.b32.xlu0 %v5869, 96
        %v5936 = vpop.permute.xlu0 %5935
        %5937 = vrot.lane.b32.xlu0 %v5870, 96
        %v5938 = vpop.permute.xlu0 %5937
        %5939 = vrot.lane.b32.xlu0 %v5871, 96
        %v5940 = vpop.permute.xlu0 %5939
        %5941 = vrot.lane.b32.xlu0 %v5872, 96
        %v5942 = vpop.permute.xlu0 %5941
        %5943 = vrot.lane.b32.xlu0 %v5873, 96
        %v5944 = vpop.permute.xlu0 %5943
        %5945 = vrot.lane.b32.xlu0 %v5874, 96
        %v5946 = vpop.permute.xlu0 %5945
        %5947 = vrot.lane.b32.xlu0 %v5875, 96
        %v5948 = vpop.permute.xlu0 %5947
        %5949 = vrot.lane.b32.xlu0 %v5876, 96
        %v5950 = vpop.permute.xlu0 %5949
        %5951 = vrot.lane.b32.xlu0 %v5877, 96
        %v5952 = vpop.permute.xlu0 %5951
        %5953 = vrot.lane.b32.xlu0 %v5878, 96
        %v5954 = vpop.permute.xlu0 %5953
        %5955 = vrot.lane.b32.xlu0 %v5879, 96
        %v5956 = vpop.permute.xlu0 %5955
        %5957 = vrot.lane.b32.xlu0 %v5880, 96
        %v5958 = vpop.permute.xlu0 %5957
        %5959 = vrot.lane.b32.xlu0 %v5881, 96
        %v5960 = vpop.permute.xlu0 %5959
        %5961 = vrot.lane.b32.xlu0 %v5882, 96
        %v5962 = vpop.permute.xlu0 %5961
        %5963 = vrot.lane.b32.xlu0 %v5883, 96
        %v5964 = vpop.permute.xlu0 %5963
        %5965 = vrot.lane.b32.xlu0 %v5884, 96
        %v5966 = vpop.permute.xlu0 %5965
        %5967 = vrot.lane.b32.xlu0 %v5885, 96
        %v5968 = vpop.permute.xlu0 %5967
        %5969 = vrot.lane.b32.xlu0 %v5886, 96
        %v5970 = vpop.permute.xlu0 %5969
        %5971 = vrot.lane.b32.xlu0 %v5887, 96
        %v5972 = vpop.permute.xlu0 %5971
        %5973 = vrot.lane.b32.xlu0 %v5888, 96
        %v5974 = vpop.permute.xlu0 %5973
        %5975 = vrot.lane.b32.xlu0 %v5889, 96
        %v5976 = vpop.permute.xlu0 %5975
        %5977 = vrot.lane.b32.xlu0 %v5890, 96
        %v5978 = vpop.permute.xlu0 %5977
        %5979 = vrot.lane.b32.xlu0 %v5891, 96
        %v5980 = vpop.permute.xlu0 %5979
        %5981 = vrot.lane.b32.xlu0 %v5892, 96
        %v5982 = vpop.permute.xlu0 %5981
        %5983 = vrot.lane.b32.xlu0 %v5893, 96
        %v5984 = vpop.permute.xlu0 %5983
        %5985 = vrot.lane.b32.xlu0 %v5894, 96
        %v5986 = vpop.permute.xlu0 %5985
        %5987 = vrot.lane.b32.xlu0 %v5895, 96
        %v5988 = vpop.permute.xlu0 %5987
        %5989 = vrot.lane.b32.xlu0 %v5896, 96
        %v5990 = vpop.permute.xlu0 %5989
        %5991 = vrot.lane.b32.xlu0 %v5897, 96
        %v5992 = vpop.permute.xlu0 %5991
        %5993 = vrot.lane.b32.xlu0 %v5898, 96
        %v5994 = vpop.permute.xlu0 %5993
        %6027 = vst.msk [vmem:[#allocation3 + $0x8] sm:$0xff] %vm1006, %v5932
        %6028 = vst.msk [vmem:[#allocation3 + $0x20] sm:$0xff] %vm1006, %v5934
        %6029 = vst.msk [vmem:[#allocation3 + $0x38] sm:$0xff] %vm1006, %v5936
        %6030 = vst.msk [vmem:[#allocation3 + $0x50] sm:$0xff] %vm1006, %v5938
        %6031 = vst.msk [vmem:[#allocation3 + $0x68] sm:$0xff] %vm1006, %v5940
        %6032 = vst.msk [vmem:[#allocation3 + $0x80] sm:$0xff] %vm1006, %v5942
        %6033 = vst.msk [vmem:[#allocation3 + $0x98] sm:$0xff] %vm1006, %v5944
        %6034 = vst.msk [vmem:[#allocation3 + $0xb0] sm:$0xff] %vm1006, %v5946
        %6035 = vst.msk [vmem:[#allocation3 + $0xc8] sm:$0xff] %vm1006, %v5948
        %6036 = vst.msk [vmem:[#allocation3 + $0xe0] sm:$0xff] %vm1006, %v5950
        %6037 = vst.msk [vmem:[#allocation3 + $0xf8] sm:$0xff] %vm1006, %v5952
        %6038 = vst.msk [vmem:[#allocation3 + $0x110] sm:$0xff] %vm1006, %v5954
        %6039 = vst.msk [vmem:[#allocation3 + $0x128] sm:$0xff] %vm1006, %v5956
        %6040 = vst.msk [vmem:[#allocation3 + $0x140] sm:$0xff] %vm1006, %v5958
        %6041 = vst.msk [vmem:[#allocation3 + $0x158] sm:$0xff] %vm1006, %v5960
        %6042 = vst.msk [vmem:[#allocation3 + $0x170] sm:$0xff] %vm1006, %v5962
        %6043 = vst.msk [vmem:[#allocation3 + $0x188] sm:$0xff] %vm1006, %v5964
        %6044 = vst.msk [vmem:[#allocation3 + $0x1a0] sm:$0xff] %vm1006, %v5966
        %6045 = vst.msk [vmem:[#allocation3 + $0x1b8] sm:$0xff] %vm1006, %v5968
        %6046 = vst.msk [vmem:[#allocation3 + $0x1d0] sm:$0xff] %vm1006, %v5970
        %6047 = vst.msk [vmem:[#allocation3 + $0x1e8] sm:$0xff] %vm1006, %v5972
        %6048 = vst.msk [vmem:[#allocation3 + $0x200] sm:$0xff] %vm1006, %v5974
        %6049 = vst.msk [vmem:[#allocation3 + $0x218] sm:$0xff] %vm1006, %v5976
        %6050 = vst.msk [vmem:[#allocation3 + $0x230] sm:$0xff] %vm1006, %v5978
        %6051 = vst.msk [vmem:[#allocation3 + $0x248] sm:$0xff] %vm1006, %v5980
        %6052 = vst.msk [vmem:[#allocation3 + $0x260] sm:$0xff] %vm1006, %v5982
        %6053 = vst.msk [vmem:[#allocation3 + $0x278] sm:$0xff] %vm1006, %v5984
        %6054 = vst.msk [vmem:[#allocation3 + $0x290] sm:$0xff] %vm1006, %v5986
        %6055 = vst.msk [vmem:[#allocation3 + $0x2a8] sm:$0xff] %vm1006, %v5988
        %6056 = vst.msk [vmem:[#allocation3 + $0x2c0] sm:$0xff] %vm1006, %v5990
        %6057 = vst.msk [vmem:[#allocation3 + $0x2d8] sm:$0xff] %vm1006, %v5992
        %6058 = vst.msk [vmem:[#allocation3 + $0x2f0] sm:$0xff] %vm1006, %v5994
        %v6059 = vld [vmem:[%s5674 + $0xc] sm:$0xff]
        %v6060 = vld [vmem:[%s5674 + $0x14] sm:$0xff]
        %v6061 = vld [vmem:[%s5674 + $0x2c] sm:$0xff]
        %v6062 = vld [vmem:[%s5674 + $0x34] sm:$0xff]
        %v6063 = vld [vmem:[%s5674 + $0x4c] sm:$0xff]
        %v6064 = vld [vmem:[%s5674 + $0x54] sm:$0xff]
        %v6065 = vld [vmem:[%s5674 + $0x6c] sm:$0xff]
        %v6066 = vld [vmem:[%s5674 + $0x74] sm:$0xff]
        %v6067 = vld [vmem:[%s5674 + $0x8c] sm:$0xff]
        %v6068 = vld [vmem:[%s5674 + $0x94] sm:$0xff]
        %v6069 = vld [vmem:[%s5674 + $0xac] sm:$0xff]
        %v6070 = vld [vmem:[%s5674 + $0xb4] sm:$0xff]
        %v6071 = vld [vmem:[%s5674 + $0xcc] sm:$0xff]
        %v6072 = vld [vmem:[%s5674 + $0xd4] sm:$0xff]
        %v6073 = vld [vmem:[%s5674 + $0xec] sm:$0xff]
        %v6074 = vld [vmem:[%s5674 + $0xf4] sm:$0xff]
        %v6075 = vld [vmem:[%s5674 + $0x10c] sm:$0xff]
        %v6076 = vld [vmem:[%s5674 + $0x114] sm:$0xff]
        %v6077 = vld [vmem:[%s5674 + $0x12c] sm:$0xff]
        %v6078 = vld [vmem:[%s5674 + $0x134] sm:$0xff]
        %v6079 = vld [vmem:[%s5674 + $0x14c] sm:$0xff]
        %v6080 = vld [vmem:[%s5674 + $0x154] sm:$0xff]
        %v6081 = vld [vmem:[%s5674 + $0x16c] sm:$0xff]
        %v6082 = vld [vmem:[%s5674 + $0x174] sm:$0xff]
        %v6083 = vld [vmem:[%s5674 + $0x18c] sm:$0xff]
        %v6084 = vld [vmem:[%s5674 + $0x194] sm:$0xff]
        %v6085 = vld [vmem:[%s5674 + $0x1ac] sm:$0xff]
        %v6086 = vld [vmem:[%s5674 + $0x1b4] sm:$0xff]
        %v6087 = vld [vmem:[%s5674 + $0x1cc] sm:$0xff]
        %v6088 = vld [vmem:[%s5674 + $0x1d4] sm:$0xff]
        %v6089 = vld [vmem:[%s5674 + $0x1ec] sm:$0xff]
        %v6090 = vld [vmem:[%s5674 + $0x1f4] sm:$0xff]
        %6091 = vst.msk [vmem:[#allocation3 + $0x10] sm:$0xff] %vm201, %v6059
        %6092 = vst.msk [vmem:[#allocation3 + $0x28] sm:$0xff] %vm201, %v6060
        %6093 = vst.msk [vmem:[#allocation3 + $0x40] sm:$0xff] %vm201, %v6061
        %6094 = vst.msk [vmem:[#allocation3 + $0x58] sm:$0xff] %vm201, %v6062
        %6095 = vst.msk [vmem:[#allocation3 + $0x70] sm:$0xff] %vm201, %v6063
        %6096 = vst.msk [vmem:[#allocation3 + $0x88] sm:$0xff] %vm201, %v6064
        %6097 = vst.msk [vmem:[#allocation3 + $0xa0] sm:$0xff] %vm201, %v6065
        %6098 = vst.msk [vmem:[#allocation3 + $0xb8] sm:$0xff] %vm201, %v6066
        %6099 = vst.msk [vmem:[#allocation3 + $0xd0] sm:$0xff] %vm201, %v6067
        %6100 = vst.msk [vmem:[#allocation3 + $0xe8] sm:$0xff] %vm201, %v6068
        %6101 = vst.msk [vmem:[#allocation3 + $0x100] sm:$0xff] %vm201, %v6069
        %6102 = vst.msk [vmem:[#allocation3 + $0x118] sm:$0xff] %vm201, %v6070
        %6103 = vst.msk [vmem:[#allocation3 + $0x130] sm:$0xff] %vm201, %v6071
        %6104 = vst.msk [vmem:[#allocation3 + $0x148] sm:$0xff] %vm201, %v6072
        %6105 = vst.msk [vmem:[#allocation3 + $0x160] sm:$0xff] %vm201, %v6073
        %6106 = vst.msk [vmem:[#allocation3 + $0x178] sm:$0xff] %vm201, %v6074
        %6107 = vst.msk [vmem:[#allocation3 + $0x190] sm:$0xff] %vm201, %v6075
        %6108 = vst.msk [vmem:[#allocation3 + $0x1a8] sm:$0xff] %vm201, %v6076
        %6109 = vst.msk [vmem:[#allocation3 + $0x1c0] sm:$0xff] %vm201, %v6077
        %6110 = vst.msk [vmem:[#allocation3 + $0x1d8] sm:$0xff] %vm201, %v6078
        %6111 = vst.msk [vmem:[#allocation3 + $0x1f0] sm:$0xff] %vm201, %v6079
        %6112 = vst.msk [vmem:[#allocation3 + $0x208] sm:$0xff] %vm201, %v6080
        %6113 = vst.msk [vmem:[#allocation3 + $0x220] sm:$0xff] %vm201, %v6081
        %6114 = vst.msk [vmem:[#allocation3 + $0x238] sm:$0xff] %vm201, %v6082
        %6115 = vst.msk [vmem:[#allocation3 + $0x250] sm:$0xff] %vm201, %v6083
        %6116 = vst.msk [vmem:[#allocation3 + $0x268] sm:$0xff] %vm201, %v6084
        %6117 = vst.msk [vmem:[#allocation3 + $0x280] sm:$0xff] %vm201, %v6085
        %6118 = vst.msk [vmem:[#allocation3 + $0x298] sm:$0xff] %vm201, %v6086
        %6119 = vst.msk [vmem:[#allocation3 + $0x2b0] sm:$0xff] %vm201, %v6087
        %6120 = vst.msk [vmem:[#allocation3 + $0x2c8] sm:$0xff] %vm201, %v6088
        %6121 = vst.msk [vmem:[#allocation3 + $0x2e0] sm:$0xff] %vm201, %v6089
        %6122 = vst.msk [vmem:[#allocation3 + $0x2f8] sm:$0xff] %vm201, %v6090
        %v6123 = vld [vmem:[#allocation3] sm:$0xff]
        %v6124 = vld [vmem:[#allocation3 + $0x8] sm:$0xff]
        %v6125 = vld [vmem:[#allocation3 + $0x10] sm:$0xff]
        %v6126 = vld [vmem:[#allocation3 + $0x18] sm:$0xff]
        %v6127 = vld [vmem:[#allocation3 + $0x20] sm:$0xff]
        %v6128 = vld [vmem:[#allocation3 + $0x28] sm:$0xff]
        %v6129 = vld [vmem:[#allocation3 + $0x30] sm:$0xff]
        %v6130 = vld [vmem:[#allocation3 + $0x38] sm:$0xff]
        %v6131 = vld [vmem:[#allocation3 + $0x40] sm:$0xff]
        %v6132 = vld [vmem:[#allocation3 + $0x48] sm:$0xff]
        %v6133 = vld [vmem:[#allocation3 + $0x50] sm:$0xff]
        %v6134 = vld [vmem:[#allocation3 + $0x58] sm:$0xff]
        %v6135 = vld [vmem:[#allocation3 + $0x60] sm:$0xff]
        %v6136 = vld [vmem:[#allocation3 + $0x68] sm:$0xff]
        %v6137 = vld [vmem:[#allocation3 + $0x70] sm:$0xff]
        %v6138 = vld [vmem:[#allocation3 + $0x78] sm:$0xff]
        %v6139 = vld [vmem:[#allocation3 + $0x80] sm:$0xff]
        %v6140 = vld [vmem:[#allocation3 + $0x88] sm:$0xff]
        %v6141 = vld [vmem:[#allocation3 + $0x90] sm:$0xff]
        %v6142 = vld [vmem:[#allocation3 + $0x98] sm:$0xff]
        %v6143 = vld [vmem:[#allocation3 + $0xa0] sm:$0xff]
        %v6144 = vld [vmem:[#allocation3 + $0xa8] sm:$0xff]
        %v6145 = vld [vmem:[#allocation3 + $0xb0] sm:$0xff]
        %v6146 = vld [vmem:[#allocation3 + $0xb8] sm:$0xff]
        %v6147 = vld [vmem:[#allocation3 + $0xc0] sm:$0xff]
        %v6148 = vld [vmem:[#allocation3 + $0xc8] sm:$0xff]
        %v6149 = vld [vmem:[#allocation3 + $0xd0] sm:$0xff]
        %v6150 = vld [vmem:[#allocation3 + $0xd8] sm:$0xff]
        %v6151 = vld [vmem:[#allocation3 + $0xe0] sm:$0xff]
        %v6152 = vld [vmem:[#allocation3 + $0xe8] sm:$0xff]
        %v6153 = vld [vmem:[#allocation3 + $0xf0] sm:$0xff]
        %v6154 = vld [vmem:[#allocation3 + $0xf8] sm:$0xff]
        %v6155 = vld [vmem:[#allocation3 + $0x100] sm:$0xff]
        %v6156 = vld [vmem:[#allocation3 + $0x108] sm:$0xff]
        %v6157 = vld [vmem:[#allocation3 + $0x110] sm:$0xff]
        %v6158 = vld [vmem:[#allocation3 + $0x118] sm:$0xff]
        %v6159 = vld [vmem:[#allocation3 + $0x120] sm:$0xff]
        %v6160 = vld [vmem:[#allocation3 + $0x128] sm:$0xff]
        %v6161 = vld [vmem:[#allocation3 + $0x130] sm:$0xff]
        %v6162 = vld [vmem:[#allocation3 + $0x138] sm:$0xff]
        %v6163 = vld [vmem:[#allocation3 + $0x140] sm:$0xff]
        %v6164 = vld [vmem:[#allocation3 + $0x148] sm:$0xff]
        %v6165 = vld [vmem:[#allocation3 + $0x150] sm:$0xff]
        %v6166 = vld [vmem:[#allocation3 + $0x158] sm:$0xff]
        %v6167 = vld [vmem:[#allocation3 + $0x160] sm:$0xff]
        %v6168 = vld [vmem:[#allocation3 + $0x168] sm:$0xff]
        %v6169 = vld [vmem:[#allocation3 + $0x170] sm:$0xff]
        %v6170 = vld [vmem:[#allocation3 + $0x178] sm:$0xff]
        %v6171 = vld [vmem:[#allocation3 + $0x180] sm:$0xff]
        %v6172 = vld [vmem:[#allocation3 + $0x188] sm:$0xff]
        %v6173 = vld [vmem:[#allocation3 + $0x190] sm:$0xff]
        %v6174 = vld [vmem:[#allocation3 + $0x198] sm:$0xff]
        %v6175 = vld [vmem:[#allocation3 + $0x1a0] sm:$0xff]
        %v6176 = vld [vmem:[#allocation3 + $0x1a8] sm:$0xff]
        %v6177 = vld [vmem:[#allocation3 + $0x1b0] sm:$0xff]
        %v6178 = vld [vmem:[#allocation3 + $0x1b8] sm:$0xff]
        %v6179 = vld [vmem:[#allocation3 + $0x1c0] sm:$0xff]
        %v6180 = vld [vmem:[#allocation3 + $0x1c8] sm:$0xff]
        %v6181 = vld [vmem:[#allocation3 + $0x1d0] sm:$0xff]
        %v6182 = vld [vmem:[#allocation3 + $0x1d8] sm:$0xff]
        %v6183 = vld [vmem:[#allocation3 + $0x1e0] sm:$0xff]
        %v6184 = vld [vmem:[#allocation3 + $0x1e8] sm:$0xff]
        %v6185 = vld [vmem:[#allocation3 + $0x1f0] sm:$0xff]
        %v6186 = vld [vmem:[#allocation3 + $0x1f8] sm:$0xff]
        %v6187 = vld [vmem:[#allocation3 + $0x200] sm:$0xff]
        %v6188 = vld [vmem:[#allocation3 + $0x208] sm:$0xff]
        %v6189 = vld [vmem:[#allocation3 + $0x210] sm:$0xff]
        %v6190 = vld [vmem:[#allocation3 + $0x218] sm:$0xff]
        %v6191 = vld [vmem:[#allocation3 + $0x220] sm:$0xff]
        %v6192 = vld [vmem:[#allocation3 + $0x228] sm:$0xff]
        %v6193 = vld [vmem:[#allocation3 + $0x230] sm:$0xff]
        %v6194 = vld [vmem:[#allocation3 + $0x238] sm:$0xff]
        %v6195 = vld [vmem:[#allocation3 + $0x240] sm:$0xff]
        %v6196 = vld [vmem:[#allocation3 + $0x248] sm:$0xff]
        %v6197 = vld [vmem:[#allocation3 + $0x250] sm:$0xff]
        %v6198 = vld [vmem:[#allocation3 + $0x258] sm:$0xff]
        %v6199 = vld [vmem:[#allocation3 + $0x260] sm:$0xff]
        %v6200 = vld [vmem:[#allocation3 + $0x268] sm:$0xff]
        %v6201 = vld [vmem:[#allocation3 + $0x270] sm:$0xff]
        %v6202 = vld [vmem:[#allocation3 + $0x278] sm:$0xff]
        %v6203 = vld [vmem:[#allocation3 + $0x280] sm:$0xff]
        %v6204 = vld [vmem:[#allocation3 + $0x288] sm:$0xff]
        %v6205 = vld [vmem:[#allocation3 + $0x290] sm:$0xff]
        %v6206 = vld [vmem:[#allocation3 + $0x298] sm:$0xff]
        %v6207 = vld [vmem:[#allocation3 + $0x2a0] sm:$0xff]
        %v6208 = vld [vmem:[#allocation3 + $0x2a8] sm:$0xff]
        %v6209 = vld [vmem:[#allocation3 + $0x2b0] sm:$0xff]
        %v6210 = vld [vmem:[#allocation3 + $0x2b8] sm:$0xff]
        %v6211 = vld [vmem:[#allocation3 + $0x2c0] sm:$0xff]
        %v6212 = vld [vmem:[#allocation3 + $0x2c8] sm:$0xff]
        %v6213 = vld [vmem:[#allocation3 + $0x2d0] sm:$0xff]
        %v6214 = vld [vmem:[#allocation3 + $0x2d8] sm:$0xff]
        %v6215 = vld [vmem:[#allocation3 + $0x2e0] sm:$0xff]
        %v6216 = vld [vmem:[#allocation3 + $0x2e8] sm:$0xff]
        %v6217 = vld [vmem:[#allocation3 + $0x2f0] sm:$0xff]
        %v6218 = vld [vmem:[#allocation3 + $0x2f8] sm:$0xff]
        %s6219 = scalar_lea.vmem %s1, 576
        %v6220 = vld [vmem:[%s6219] sm:$0xff]
        %v6221 = vld [vmem:[%s6219 + $0x8] sm:$0xff]
        %v6222 = vld [vmem:[%s6219 + $0x10] sm:$0xff]
        %v6223 = vld [vmem:[%s6219 + $0x18] sm:$0xff]
        %v6224 = vld [vmem:[%s6219 + $0x20] sm:$0xff]
        %v6225 = vld [vmem:[%s6219 + $0x28] sm:$0xff]
        %v6226 = vld [vmem:[%s6219 + $0x30] sm:$0xff]
        %v6227 = vld [vmem:[%s6219 + $0x38] sm:$0xff]
        %v6228 = vld [vmem:[%s6219 + $0x40] sm:$0xff]
        %v6229 = vld [vmem:[%s6219 + $0x48] sm:$0xff]
        %v6230 = vld [vmem:[%s6219 + $0x50] sm:$0xff]
        %v6231 = vld [vmem:[%s6219 + $0x58] sm:$0xff]
        %v6232 = vld [vmem:[%s6219 + $0x60] sm:$0xff]
        %v6233 = vld [vmem:[%s6219 + $0x68] sm:$0xff]
        %v6234 = vld [vmem:[%s6219 + $0x70] sm:$0xff]
        %v6235 = vld [vmem:[%s6219 + $0x78] sm:$0xff]
        %v6236 = vld [vmem:[%s6219 + $0x80] sm:$0xff]
        %v6237 = vld [vmem:[%s6219 + $0x88] sm:$0xff]
        %v6238 = vld [vmem:[%s6219 + $0x90] sm:$0xff]
        %v6239 = vld [vmem:[%s6219 + $0x98] sm:$0xff]
        %v6240 = vld [vmem:[%s6219 + $0xa0] sm:$0xff]
        %v6241 = vld [vmem:[%s6219 + $0xa8] sm:$0xff]
        %v6242 = vld [vmem:[%s6219 + $0xb0] sm:$0xff]
        %v6243 = vld [vmem:[%s6219 + $0xb8] sm:$0xff]
        %v6244 = vld [vmem:[%s6219 + $0xc0] sm:$0xff]
        %v6245 = vld [vmem:[%s6219 + $0xc8] sm:$0xff]
        %v6246 = vld [vmem:[%s6219 + $0xd0] sm:$0xff]
        %v6247 = vld [vmem:[%s6219 + $0xd8] sm:$0xff]
        %v6248 = vld [vmem:[%s6219 + $0xe0] sm:$0xff]
        %v6249 = vld [vmem:[%s6219 + $0xe8] sm:$0xff]
        %v6250 = vld [vmem:[%s6219 + $0xf0] sm:$0xff]
        %v6251 = vld [vmem:[%s6219 + $0xf8] sm:$0xff]
        %v6252 = vld [vmem:[%s6219 + $0x100] sm:$0xff]
        %v6253 = vld [vmem:[%s6219 + $0x108] sm:$0xff]
        %v6254 = vld [vmem:[%s6219 + $0x110] sm:$0xff]
        %v6255 = vld [vmem:[%s6219 + $0x118] sm:$0xff]
        %v6256 = vld [vmem:[%s2 + $0x2] sm:$0x1]
        %v6257 = vlaneseq
        %v6258 = vshrl.u32 %v6257, 7
        %v6259 = vsub.s32 0, %v6258
        %v6260 = vrot.slane %v6256, %v6259
        %v6262 = vsel %vm201, %v6125, 0
        %v6265 = vsel %vm201, %v6128, 0
        %v6268 = vsel %vm201, %v6131, 0
        %v6271 = vsel %vm201, %v6134, 0
        %v6274 = vsel %vm201, %v6137, 0
        %v6277 = vsel %vm201, %v6140, 0
        %v6280 = vsel %vm201, %v6143, 0
        %v6283 = vsel %vm201, %v6146, 0
        %v6286 = vsel %vm201, %v6149, 0
        %v6289 = vsel %vm201, %v6152, 0
        %v6292 = vsel %vm201, %v6155, 0
        %v6295 = vsel %vm201, %v6158, 0
        %v6298 = vsel %vm201, %v6161, 0
        %v6301 = vsel %vm201, %v6164, 0
        %v6304 = vsel %vm201, %v6167, 0
        %v6307 = vsel %vm201, %v6170, 0
        %v6310 = vsel %vm201, %v6173, 0
        %v6313 = vsel %vm201, %v6176, 0
        %v6316 = vsel %vm201, %v6179, 0
        %v6319 = vsel %vm201, %v6182, 0
        %v6322 = vsel %vm201, %v6185, 0
        %v6325 = vsel %vm201, %v6188, 0
        %v6328 = vsel %vm201, %v6191, 0
        %v6331 = vsel %vm201, %v6194, 0
        %v6334 = vsel %vm201, %v6197, 0
        %v6337 = vsel %vm201, %v6200, 0
        %v6340 = vsel %vm201, %v6203, 0
        %v6343 = vsel %vm201, %v6206, 0
        %v6346 = vsel %vm201, %v6209, 0
        %v6349 = vsel %vm201, %v6212, 0
        %v6352 = vsel %vm201, %v6215, 0
        %v6355 = vsel %vm201, %v6218, 0
        %6357 = vmatprep.subr.mxu0 0.0
        %6358 = vmatpush1.msra.mxu0 %v6235
        %6359 = vmatprep.subr.mxu0 0.0
        %6360 = vmatpush1.msra.mxu0 %v6234
        %6361 = vmatprep.subr.mxu0 0.0
        %6362 = vmatpush1.msra.mxu0 %v6233
        %6363 = vmatprep.subr.mxu0 0.0
        %6364 = vmatpush1.msra.mxu0 %v6232
        %6365 = vmatprep.subr.mxu0 0.0
        %6366 = vmatpush1.msra.mxu0 %v6231
        %6367 = vmatprep.subr.mxu0 0.0
        %6368 = vmatpush1.msra.mxu0 %v6230
        %6369 = vmatprep.subr.mxu0 0.0
        %6370 = vmatpush1.msra.mxu0 %v6229
        %6371 = vmatprep.subr.mxu0 0.0
        %6372 = vmatpush1.msra.mxu0 %v6228
        %6373 = vmatprep.subr.mxu0 0.0
        %6374 = vmatpush1.msra.mxu0 %v6227
        %6375 = vmatprep.subr.mxu0 0.0
        %6376 = vmatpush1.msra.mxu0 %v6226
        %6377 = vmatprep.subr.mxu0 0.0
        %6378 = vmatpush1.msra.mxu0 %v6225
        %6379 = vmatprep.subr.mxu0 0.0
        %6380 = vmatpush1.msra.mxu0 %v6224
        %6381 = vmatprep.subr.mxu0 0.0
        %6382 = vmatpush1.msra.mxu0 %v6223
        %6383 = vmatprep.subr.mxu0 0.0
        %6384 = vmatpush1.msra.mxu0 %v6222
        %6385 = vmatprep.subr.mxu0 0.0
        %6386 = vmatpush1.msra.mxu0 %v6221
        %6387 = vmatprep.subr.mxu0 0.0
        %6388 = vmatpush1.msra.mxu0 %v6220
        %6389 = vmatprep.subr.mxu0 0.0
        %6390 = vmatpush2.msra.mxu0 %v6251
        %6391 = vmatprep.subr.mxu0 0.0
        %6392 = vmatpush2.msra.mxu0 %v6250
        %6393 = vmatprep.subr.mxu0 0.0
        %6394 = vmatpush2.msra.mxu0 %v6249
        %6395 = vmatprep.subr.mxu0 0.0
        %6396 = vmatpush2.msra.mxu0 %v6248
        %6397 = vmatprep.subr.mxu0 0.0
        %6398 = vmatpush2.msra.mxu0 %v6247
        %6399 = vmatprep.subr.mxu0 0.0
        %6400 = vmatpush2.msra.mxu0 %v6246
        %6401 = vmatprep.subr.mxu0 0.0
        %6402 = vmatpush2.msra.mxu0 %v6245
        %6403 = vmatprep.subr.mxu0 0.0
        %6404 = vmatpush2.msra.mxu0 %v6244
        %6405 = vmatprep.subr.mxu0 0.0
        %6406 = vmatpush2.msra.mxu0 %v6243
        %6407 = vmatprep.subr.mxu0 0.0
        %6408 = vmatpush2.msra.mxu0 %v6242
        %6409 = vmatprep.subr.mxu0 0.0
        %6410 = vmatpush2.msra.mxu0 %v6241
        %6411 = vmatprep.subr.mxu0 0.0
        %6412 = vmatpush2.msra.mxu0 %v6240
        %6413 = vmatprep.subr.mxu0 0.0
        %6414 = vmatpush2.msra.mxu0 %v6239
        %6415 = vmatprep.subr.mxu0 0.0
        %6416 = vmatpush2.msra.mxu0 %v6238
        %6417 = vmatprep.subr.mxu0 0.0
        %6418 = vmatpush2.msra.mxu0 %v6237
        %6419 = vmatprep.subr.mxu0 0.0
        %6420 = vmatpush2.msra.mxu0 %v6236
        %6421 = vmatprep.mubr.f32.mxu0 %v6124
        %6422 = vmatmul.mubr.f32.gmra.mxu0 %v6123
        %v6423 = vpop.f32.mrf.mxu0
        %v6424 = vadd.f32 %v6260, %v6423
        %v6425 = vpop.f32.mrf.mxu0
        %6426 = vmatprep.mubr.f32.mxu0 %v6127
        %6427 = vmatmul.mubr.f32.gmra.mxu0 %v6126
        %v6428 = vpop.f32.mrf.mxu0
        %v6429 = vadd.f32 %v6260, %v6428
        %v6430 = vpop.f32.mrf.mxu0
        %6431 = vmatprep.mubr.f32.mxu0 %v6130
        %6432 = vmatmul.mubr.f32.gmra.mxu0 %v6129
        %v6433 = vpop.f32.mrf.mxu0
        %v6434 = vadd.f32 %v6260, %v6433
        %v6435 = vpop.f32.mrf.mxu0
        %6436 = vmatprep.mubr.f32.mxu0 %v6133
        %6437 = vmatmul.mubr.f32.gmra.mxu0 %v6132
        %v6438 = vpop.f32.mrf.mxu0
        %v6439 = vadd.f32 %v6260, %v6438
        %v6440 = vpop.f32.mrf.mxu0
        %6441 = vmatprep.mubr.f32.mxu0 %v6136
        %6442 = vmatmul.mubr.f32.gmra.mxu0 %v6135
        %v6443 = vpop.f32.mrf.mxu0
        %v6444 = vadd.f32 %v6260, %v6443
        %v6445 = vpop.f32.mrf.mxu0
        %6446 = vmatprep.mubr.f32.mxu0 %v6139
        %6447 = vmatmul.mubr.f32.gmra.mxu0 %v6138
        %v6448 = vpop.f32.mrf.mxu0
        %v6449 = vadd.f32 %v6260, %v6448
        %v6450 = vpop.f32.mrf.mxu0
        %6451 = vmatprep.mubr.f32.mxu0 %v6142
        %6452 = vmatmul.mubr.f32.gmra.mxu0 %v6141
        %v6453 = vpop.f32.mrf.mxu0
        %v6454 = vadd.f32 %v6260, %v6453
        %v6455 = vpop.f32.mrf.mxu0
        %6456 = vmatprep.mubr.f32.mxu0 %v6145
        %6457 = vmatmul.mubr.f32.gmra.mxu0 %v6144
        %v6458 = vpop.f32.mrf.mxu0
        %v6459 = vadd.f32 %v6260, %v6458
        %v6460 = vpop.f32.mrf.mxu0
        %6461 = vmatprep.mubr.f32.mxu0 %v6148
        %6462 = vmatmul.mubr.f32.gmra.mxu0 %v6147
        %v6463 = vpop.f32.mrf.mxu0
        %v6464 = vadd.f32 %v6260, %v6463
        %v6465 = vpop.f32.mrf.mxu0
        %6466 = vmatprep.mubr.f32.mxu0 %v6151
        %6467 = vmatmul.mubr.f32.gmra.mxu0 %v6150
        %v6468 = vpop.f32.mrf.mxu0
        %v6469 = vadd.f32 %v6260, %v6468
        %v6470 = vpop.f32.mrf.mxu0
        %6471 = vmatprep.mubr.f32.mxu0 %v6154
        %6472 = vmatmul.mubr.f32.gmra.mxu0 %v6153
        %v6473 = vpop.f32.mrf.mxu0
        %v6474 = vadd.f32 %v6260, %v6473
        %v6475 = vpop.f32.mrf.mxu0
        %6476 = vmatprep.mubr.f32.mxu0 %v6157
        %6477 = vmatmul.mubr.f32.gmra.mxu0 %v6156
        %v6478 = vpop.f32.mrf.mxu0
        %v6479 = vadd.f32 %v6260, %v6478
        %v6480 = vpop.f32.mrf.mxu0
        %6481 = vmatprep.mubr.f32.mxu0 %v6160
        %6482 = vmatmul.mubr.f32.gmra.mxu0 %v6159
        %v6483 = vpop.f32.mrf.mxu0
        %v6484 = vadd.f32 %v6260, %v6483
        %v6485 = vpop.f32.mrf.mxu0
        %6486 = vmatprep.mubr.f32.mxu0 %v6163
        %6487 = vmatmul.mubr.f32.gmra.mxu0 %v6162
        %v6488 = vpop.f32.mrf.mxu0
        %v6489 = vadd.f32 %v6260, %v6488
        %v6490 = vpop.f32.mrf.mxu0
        %6491 = vmatprep.mubr.f32.mxu0 %v6166
        %6492 = vmatmul.mubr.f32.gmra.mxu0 %v6165
        %v6493 = vpop.f32.mrf.mxu0
        %v6494 = vadd.f32 %v6260, %v6493
        %v6495 = vpop.f32.mrf.mxu0
        %6496 = vmatprep.mubr.f32.mxu0 %v6169
        %6497 = vmatmul.mubr.f32.gmra.mxu0 %v6168
        %v6498 = vpop.f32.mrf.mxu0
        %v6499 = vadd.f32 %v6260, %v6498
        %v6500 = vpop.f32.mrf.mxu0
        %6501 = vmatprep.mubr.f32.mxu0 %v6172
        %6502 = vmatmul.mubr.f32.gmra.mxu0 %v6171
        %v6503 = vpop.f32.mrf.mxu0
        %v6504 = vadd.f32 %v6260, %v6503
        %v6505 = vpop.f32.mrf.mxu0
        %6506 = vmatprep.mubr.f32.mxu0 %v6175
        %6507 = vmatmul.mubr.f32.gmra.mxu0 %v6174
        %v6508 = vpop.f32.mrf.mxu0
        %v6509 = vadd.f32 %v6260, %v6508
        %v6510 = vpop.f32.mrf.mxu0
        %6511 = vmatprep.mubr.f32.mxu0 %v6178
        %6512 = vmatmul.mubr.f32.gmra.mxu0 %v6177
        %v6513 = vpop.f32.mrf.mxu0
        %v6514 = vadd.f32 %v6260, %v6513
        %v6515 = vpop.f32.mrf.mxu0
        %6516 = vmatprep.mubr.f32.mxu0 %v6181
        %6517 = vmatmul.mubr.f32.gmra.mxu0 %v6180
        %v6518 = vpop.f32.mrf.mxu0
        %v6519 = vadd.f32 %v6260, %v6518
        %v6520 = vpop.f32.mrf.mxu0
        %6521 = vmatprep.mubr.f32.mxu0 %v6184
        %6522 = vmatmul.mubr.f32.gmra.mxu0 %v6183
        %v6523 = vpop.f32.mrf.mxu0
        %v6524 = vadd.f32 %v6260, %v6523
        %v6525 = vpop.f32.mrf.mxu0
        %6526 = vmatprep.mubr.f32.mxu0 %v6187
        %6527 = vmatmul.mubr.f32.gmra.mxu0 %v6186
        %v6528 = vpop.f32.mrf.mxu0
        %v6529 = vadd.f32 %v6260, %v6528
        %v6530 = vpop.f32.mrf.mxu0
        %6531 = vmatprep.mubr.f32.mxu0 %v6190
        %6532 = vmatmul.mubr.f32.gmra.mxu0 %v6189
        %v6533 = vpop.f32.mrf.mxu0
        %v6534 = vadd.f32 %v6260, %v6533
        %v6535 = vpop.f32.mrf.mxu0
        %6536 = vmatprep.mubr.f32.mxu0 %v6193
        %6537 = vmatmul.mubr.f32.gmra.mxu0 %v6192
        %v6538 = vpop.f32.mrf.mxu0
        %v6539 = vadd.f32 %v6260, %v6538
        %v6540 = vpop.f32.mrf.mxu0
        %6541 = vmatprep.mubr.f32.mxu0 %v6196
        %6542 = vmatmul.mubr.f32.gmra.mxu0 %v6195
        %v6543 = vpop.f32.mrf.mxu0
        %v6544 = vadd.f32 %v6260, %v6543
        %v6545 = vpop.f32.mrf.mxu0
        %6546 = vmatprep.mubr.f32.mxu0 %v6199
        %6547 = vmatmul.mubr.f32.gmra.mxu0 %v6198
        %v6548 = vpop.f32.mrf.mxu0
        %v6549 = vadd.f32 %v6260, %v6548
        %v6550 = vpop.f32.mrf.mxu0
        %6551 = vmatprep.mubr.f32.mxu0 %v6202
        %6552 = vmatmul.mubr.f32.gmra.mxu0 %v6201
        %v6553 = vpop.f32.mrf.mxu0
        %v6554 = vadd.f32 %v6260, %v6553
        %v6555 = vpop.f32.mrf.mxu0
        %6556 = vmatprep.mubr.f32.mxu0 %v6205
        %6557 = vmatmul.mubr.f32.gmra.mxu0 %v6204
        %v6558 = vpop.f32.mrf.mxu0
        %v6559 = vadd.f32 %v6260, %v6558
        %v6560 = vpop.f32.mrf.mxu0
        %6561 = vmatprep.mubr.f32.mxu0 %v6208
        %6562 = vmatmul.mubr.f32.gmra.mxu0 %v6207
        %v6563 = vpop.f32.mrf.mxu0
        %v6564 = vadd.f32 %v6260, %v6563
        %v6565 = vpop.f32.mrf.mxu0
        %6566 = vmatprep.mubr.f32.mxu0 %v6211
        %6567 = vmatmul.mubr.f32.gmra.mxu0 %v6210
        %v6568 = vpop.f32.mrf.mxu0
        %v6569 = vadd.f32 %v6260, %v6568
        %v6570 = vpop.f32.mrf.mxu0
        %6571 = vmatprep.mubr.f32.mxu0 %v6214
        %6572 = vmatmul.mubr.f32.gmra.mxu0 %v6213
        %v6573 = vpop.f32.mrf.mxu0
        %v6574 = vadd.f32 %v6260, %v6573
        %v6575 = vpop.f32.mrf.mxu0
        %6576 = vmatprep.mubr.f32.mxu0 %v6217
        %6577 = vmatmul.mubr.f32.gmra.mxu0 %v6216
        %v6578 = vpop.f32.mrf.mxu0
        %v6579 = vadd.f32 %v6260, %v6578
        %v6580 = vpop.f32.mrf.mxu0
        %6581 = vdwg.mxu0
        %6582 = vmatprep.subr.mxu0 0.0
        %6583 = vmatpush1.msra.mxu0 0.0
        %6584 = vmatprep.subr.mxu0 0.0
        %6585 = vmatpush1.msra.mxu0 0.0
        %6586 = vmatprep.subr.mxu0 0.0
        %6587 = vmatpush1.msra.mxu0 0.0
        %6588 = vmatprep.subr.mxu0 0.0
        %6589 = vmatpush1.msra.mxu0 0.0
        %6590 = vmatprep.subr.mxu0 0.0
        %6591 = vmatpush1.msra.mxu0 0.0
        %6592 = vmatprep.subr.mxu0 0.0
        %6593 = vmatpush1.msra.mxu0 0.0
        %6594 = vmatprep.subr.mxu0 0.0
        %6595 = vmatpush1.msra.mxu0 0.0
        %6596 = vmatprep.subr.mxu0 0.0
        %6597 = vmatpush1.msra.mxu0 0.0
        %6598 = vmatprep.subr.mxu0 0.0
        %6599 = vmatpush1.msra.mxu0 0.0
        %6600 = vmatprep.subr.mxu0 0.0
        %6601 = vmatpush1.msra.mxu0 0.0
        %6602 = vmatprep.subr.mxu0 0.0
        %6603 = vmatpush1.msra.mxu0 0.0
        %6604 = vmatprep.subr.mxu0 0.0
        %6605 = vmatpush1.msra.mxu0 0.0
        %6606 = vmatprep.subr.mxu0 0.0
        %6607 = vmatpush1.msra.mxu0 %v6255
        %6608 = vmatprep.subr.mxu0 0.0
        %6609 = vmatpush1.msra.mxu0 %v6254
        %6610 = vmatprep.subr.mxu0 0.0
        %6611 = vmatpush1.msra.mxu0 %v6253
        %6612 = vmatprep.subr.mxu0 0.0
        %6613 = vmatpush1.msra.mxu0 %v6252
        %6614 = vmatprep.subr.mxu0 0.0
        %6615 = vmatpush2.msra.mxu0 0.0
        %6616 = vmatprep.subr.mxu0 0.0
        %6617 = vmatpush2.msra.mxu0 0.0
        %6618 = vmatprep.subr.mxu0 0.0
        %6619 = vmatpush2.msra.mxu0 0.0
        %6620 = vmatprep.subr.mxu0 0.0
        %6621 = vmatpush2.msra.mxu0 0.0
        %6622 = vmatprep.subr.mxu0 0.0
        %6623 = vmatpush2.msra.mxu0 0.0
        %6624 = vmatprep.subr.mxu0 0.0
        %6625 = vmatpush2.msra.mxu0 0.0
        %6626 = vmatprep.subr.mxu0 0.0
        %6627 = vmatpush2.msra.mxu0 0.0
        %6628 = vmatprep.subr.mxu0 0.0
        %6629 = vmatpush2.msra.mxu0 0.0
        %6630 = vmatprep.subr.mxu0 0.0
        %6631 = vmatpush2.msra.mxu0 0.0
        %6632 = vmatprep.subr.mxu0 0.0
        %6633 = vmatpush2.msra.mxu0 0.0
        %6634 = vmatprep.subr.mxu0 0.0
        %6635 = vmatpush2.msra.mxu0 0.0
        %6636 = vmatprep.subr.mxu0 0.0
        %6637 = vmatpush2.msra.mxu0 0.0
        %6638 = vmatprep.subr.mxu0 0.0
        %6639 = vmatpush2.msra.mxu0 0.0
        %6640 = vmatprep.subr.mxu0 0.0
        %6641 = vmatpush2.msra.mxu0 0.0
        %6642 = vmatprep.subr.mxu0 0.0
        %6643 = vmatpush2.msra.mxu0 0.0
        %6644 = vmatprep.subr.mxu0 0.0
        %6645 = vmatpush2.msra.mxu0 0.0
        %6646 = vmatprep.mubr.f32.mxu0 0.0
        %6647 = vmatmul.mubr.f32.gmra.mxu0 %v6262
        %v6648 = vpop.f32.mrf.mxu0
        %v6649 = vadd.f32 %v6424, %v6648
        %v6650 = vpop.f32.mrf.mxu0
        %6651 = vmatprep.mubr.f32.mxu0 0.0
        %6652 = vmatmul.mubr.f32.gmra.mxu0 %v6265
        %v6653 = vpop.f32.mrf.mxu0
        %v6654 = vadd.f32 %v6429, %v6653
        %v6655 = vpop.f32.mrf.mxu0
        %6656 = vmatprep.mubr.f32.mxu0 0.0
        %6657 = vmatmul.mubr.f32.gmra.mxu0 %v6268
        %v6658 = vpop.f32.mrf.mxu0
        %v6659 = vadd.f32 %v6434, %v6658
        %v6660 = vpop.f32.mrf.mxu0
        %6661 = vmatprep.mubr.f32.mxu0 0.0
        %6662 = vmatmul.mubr.f32.gmra.mxu0 %v6271
        %v6663 = vpop.f32.mrf.mxu0
        %v6664 = vadd.f32 %v6439, %v6663
        %v6665 = vpop.f32.mrf.mxu0
        %6666 = vmatprep.mubr.f32.mxu0 0.0
        %6667 = vmatmul.mubr.f32.gmra.mxu0 %v6274
        %v6668 = vpop.f32.mrf.mxu0
        %v6669 = vadd.f32 %v6444, %v6668
        %v6670 = vpop.f32.mrf.mxu0
        %6671 = vmatprep.mubr.f32.mxu0 0.0
        %6672 = vmatmul.mubr.f32.gmra.mxu0 %v6277
        %v6673 = vpop.f32.mrf.mxu0
        %v6674 = vadd.f32 %v6449, %v6673
        %v6675 = vpop.f32.mrf.mxu0
        %6676 = vmatprep.mubr.f32.mxu0 0.0
        %6677 = vmatmul.mubr.f32.gmra.mxu0 %v6280
        %v6678 = vpop.f32.mrf.mxu0
        %v6679 = vadd.f32 %v6454, %v6678
        %v6680 = vpop.f32.mrf.mxu0
        %6681 = vmatprep.mubr.f32.mxu0 0.0
        %6682 = vmatmul.mubr.f32.gmra.mxu0 %v6283
        %v6683 = vpop.f32.mrf.mxu0
        %v6684 = vadd.f32 %v6459, %v6683
        %v6685 = vpop.f32.mrf.mxu0
        %6686 = vmatprep.mubr.f32.mxu0 0.0
        %6687 = vmatmul.mubr.f32.gmra.mxu0 %v6286
        %v6688 = vpop.f32.mrf.mxu0
        %v6689 = vadd.f32 %v6464, %v6688
        %v6690 = vpop.f32.mrf.mxu0
        %6691 = vmatprep.mubr.f32.mxu0 0.0
        %6692 = vmatmul.mubr.f32.gmra.mxu0 %v6289
        %v6693 = vpop.f32.mrf.mxu0
        %v6694 = vadd.f32 %v6469, %v6693
        %v6695 = vpop.f32.mrf.mxu0
        %6696 = vmatprep.mubr.f32.mxu0 0.0
        %6697 = vmatmul.mubr.f32.gmra.mxu0 %v6292
        %v6698 = vpop.f32.mrf.mxu0
        %v6699 = vadd.f32 %v6474, %v6698
        %v6700 = vpop.f32.mrf.mxu0
        %6701 = vmatprep.mubr.f32.mxu0 0.0
        %6702 = vmatmul.mubr.f32.gmra.mxu0 %v6295
        %v6703 = vpop.f32.mrf.mxu0
        %v6704 = vadd.f32 %v6479, %v6703
        %v6705 = vpop.f32.mrf.mxu0
        %6706 = vmatprep.mubr.f32.mxu0 0.0
        %6707 = vmatmul.mubr.f32.gmra.mxu0 %v6298
        %v6708 = vpop.f32.mrf.mxu0
        %v6709 = vadd.f32 %v6484, %v6708
        %v6710 = vpop.f32.mrf.mxu0
        %6711 = vmatprep.mubr.f32.mxu0 0.0
        %6712 = vmatmul.mubr.f32.gmra.mxu0 %v6301
        %v6713 = vpop.f32.mrf.mxu0
        %v6714 = vadd.f32 %v6489, %v6713
        %v6715 = vpop.f32.mrf.mxu0
        %6716 = vmatprep.mubr.f32.mxu0 0.0
        %6717 = vmatmul.mubr.f32.gmra.mxu0 %v6304
        %v6718 = vpop.f32.mrf.mxu0
        %v6719 = vadd.f32 %v6494, %v6718
        %v6720 = vpop.f32.mrf.mxu0
        %6721 = vmatprep.mubr.f32.mxu0 0.0
        %6722 = vmatmul.mubr.f32.gmra.mxu0 %v6307
        %v6723 = vpop.f32.mrf.mxu0
        %v6724 = vadd.f32 %v6499, %v6723
        %v6725 = vpop.f32.mrf.mxu0
        %6726 = vmatprep.mubr.f32.mxu0 0.0
        %6727 = vmatmul.mubr.f32.gmra.mxu0 %v6310
        %v6728 = vpop.f32.mrf.mxu0
        %v6729 = vadd.f32 %v6504, %v6728
        %v6730 = vpop.f32.mrf.mxu0
        %6731 = vmatprep.mubr.f32.mxu0 0.0
        %6732 = vmatmul.mubr.f32.gmra.mxu0 %v6313
        %v6733 = vpop.f32.mrf.mxu0
        %v6734 = vadd.f32 %v6509, %v6733
        %v6735 = vpop.f32.mrf.mxu0
        %6736 = vmatprep.mubr.f32.mxu0 0.0
        %6737 = vmatmul.mubr.f32.gmra.mxu0 %v6316
        %v6738 = vpop.f32.mrf.mxu0
        %v6739 = vadd.f32 %v6514, %v6738
        %v6740 = vpop.f32.mrf.mxu0
        %6741 = vmatprep.mubr.f32.mxu0 0.0
        %6742 = vmatmul.mubr.f32.gmra.mxu0 %v6319
        %v6743 = vpop.f32.mrf.mxu0
        %v6744 = vadd.f32 %v6519, %v6743
        %v6745 = vpop.f32.mrf.mxu0
        %6746 = vmatprep.mubr.f32.mxu0 0.0
        %6747 = vmatmul.mubr.f32.gmra.mxu0 %v6322
        %v6748 = vpop.f32.mrf.mxu0
        %v6749 = vadd.f32 %v6524, %v6748
        %v6750 = vpop.f32.mrf.mxu0
        %6751 = vmatprep.mubr.f32.mxu0 0.0
        %6752 = vmatmul.mubr.f32.gmra.mxu0 %v6325
        %v6753 = vpop.f32.mrf.mxu0
        %v6754 = vadd.f32 %v6529, %v6753
        %v6755 = vpop.f32.mrf.mxu0
        %6756 = vmatprep.mubr.f32.mxu0 0.0
        %6757 = vmatmul.mubr.f32.gmra.mxu0 %v6328
        %v6758 = vpop.f32.mrf.mxu0
        %v6759 = vadd.f32 %v6534, %v6758
        %v6760 = vpop.f32.mrf.mxu0
        %6761 = vmatprep.mubr.f32.mxu0 0.0
        %6762 = vmatmul.mubr.f32.gmra.mxu0 %v6331
        %v6763 = vpop.f32.mrf.mxu0
        %v6764 = vadd.f32 %v6539, %v6763
        %v6765 = vpop.f32.mrf.mxu0
        %6766 = vmatprep.mubr.f32.mxu0 0.0
        %6767 = vmatmul.mubr.f32.gmra.mxu0 %v6334
        %v6768 = vpop.f32.mrf.mxu0
        %v6769 = vadd.f32 %v6544, %v6768
        %v6770 = vpop.f32.mrf.mxu0
        %6771 = vmatprep.mubr.f32.mxu0 0.0
        %6772 = vmatmul.mubr.f32.gmra.mxu0 %v6337
        %v6773 = vpop.f32.mrf.mxu0
        %v6774 = vadd.f32 %v6549, %v6773
        %v6775 = vpop.f32.mrf.mxu0
        %6776 = vmatprep.mubr.f32.mxu0 0.0
        %6777 = vmatmul.mubr.f32.gmra.mxu0 %v6340
        %v6778 = vpop.f32.mrf.mxu0
        %v6779 = vadd.f32 %v6554, %v6778
        %v6780 = vpop.f32.mrf.mxu0
        %6781 = vmatprep.mubr.f32.mxu0 0.0
        %6782 = vmatmul.mubr.f32.gmra.mxu0 %v6343
        %v6783 = vpop.f32.mrf.mxu0
        %v6784 = vadd.f32 %v6559, %v6783
        %v6785 = vpop.f32.mrf.mxu0
        %6786 = vmatprep.mubr.f32.mxu0 0.0
        %6787 = vmatmul.mubr.f32.gmra.mxu0 %v6346
        %v6788 = vpop.f32.mrf.mxu0
        %v6789 = vadd.f32 %v6564, %v6788
        %v6790 = vpop.f32.mrf.mxu0
        %6791 = vmatprep.mubr.f32.mxu0 0.0
        %6792 = vmatmul.mubr.f32.gmra.mxu0 %v6349
        %v6793 = vpop.f32.mrf.mxu0
        %v6794 = vadd.f32 %v6569, %v6793
        %v6795 = vpop.f32.mrf.mxu0
        %6796 = vmatprep.mubr.f32.mxu0 0.0
        %6797 = vmatmul.mubr.f32.gmra.mxu0 %v6352
        %v6798 = vpop.f32.mrf.mxu0
        %v6799 = vadd.f32 %v6574, %v6798
        %v6800 = vpop.f32.mrf.mxu0
        %6801 = vmatprep.mubr.f32.mxu0 0.0
        %6802 = vmatmul.mubr.f32.gmra.mxu0 %v6355
        %v6803 = vpop.f32.mrf.mxu0
        %v6804 = vadd.f32 %v6579, %v6803
        %v6805 = vpop.f32.mrf.mxu0
        %6806 = vdwg.mxu0
        %v6807 = vmax.f32 %v6649, 0.0
        %v6808 = vmax.f32 %v6654, 0.0
        %v6809 = vmax.f32 %v6659, 0.0
        %v6810 = vmax.f32 %v6664, 0.0
        %v6811 = vmax.f32 %v6669, 0.0
        %v6812 = vmax.f32 %v6674, 0.0
        %v6813 = vmax.f32 %v6679, 0.0
        %v6814 = vmax.f32 %v6684, 0.0
        %v6815 = vmax.f32 %v6689, 0.0
        %v6816 = vmax.f32 %v6694, 0.0
        %v6817 = vmax.f32 %v6699, 0.0
        %v6818 = vmax.f32 %v6704, 0.0
        %v6819 = vmax.f32 %v6709, 0.0
        %v6820 = vmax.f32 %v6714, 0.0
        %v6821 = vmax.f32 %v6719, 0.0
        %v6822 = vmax.f32 %v6724, 0.0
        %v6823 = vmax.f32 %v6729, 0.0
        %v6824 = vmax.f32 %v6734, 0.0
        %v6825 = vmax.f32 %v6739, 0.0
        %v6826 = vmax.f32 %v6744, 0.0
        %v6827 = vmax.f32 %v6749, 0.0
        %v6828 = vmax.f32 %v6754, 0.0
        %v6829 = vmax.f32 %v6759, 0.0
        %v6830 = vmax.f32 %v6764, 0.0
        %v6831 = vmax.f32 %v6769, 0.0
        %v6832 = vmax.f32 %v6774, 0.0
        %v6833 = vmax.f32 %v6779, 0.0
        %v6834 = vmax.f32 %v6784, 0.0
        %v6835 = vmax.f32 %v6789, 0.0
        %v6836 = vmax.f32 %v6794, 0.0
        %v6837 = vmax.f32 %v6799, 0.0
        %v6838 = vmax.f32 %v6804, 0.0
        %v6839 = vld [vmem:[%s163] sm:$0xff]
        %v6840 = vld [vmem:[%s163 + $0x8] sm:$0xff]
        %v6841 = vld [vmem:[%s163 + $0x10] sm:$0xff]
        %v6842 = vld [vmem:[%s163 + $0x18] sm:$0xff]
        %v6843 = vld [vmem:[%s163 + $0x20] sm:$0xff]
        %v6844 = vld [vmem:[%s163 + $0x28] sm:$0xff]
        %v6845 = vld [vmem:[%s163 + $0x30] sm:$0xff]
        %v6846 = vld [vmem:[%s163 + $0x38] sm:$0xff]
        %v6847 = vld [vmem:[%s163 + $0x40] sm:$0xff]
        %v6848 = vld [vmem:[%s163 + $0x48] sm:$0xff]
        %v6849 = vld [vmem:[%s163 + $0x50] sm:$0xff]
        %v6850 = vld [vmem:[%s163 + $0x58] sm:$0xff]
        %v6851 = vld [vmem:[%s163 + $0x60] sm:$0xff]
        %v6852 = vld [vmem:[%s163 + $0x68] sm:$0xff]
        %v6853 = vld [vmem:[%s163 + $0x70] sm:$0xff]
        %v6854 = vld [vmem:[%s163 + $0x78] sm:$0xff]
        %v6855 = vld [vmem:[%s163 + $0x80] sm:$0xff]
        %v6856 = vld [vmem:[%s163 + $0x88] sm:$0xff]
        %v6857 = vld [vmem:[%s163 + $0x90] sm:$0xff]
        %v6858 = vld [vmem:[%s163 + $0x98] sm:$0xff]
        %v6859 = vld [vmem:[%s163 + $0xa0] sm:$0xff]
        %v6860 = vld [vmem:[%s163 + $0xa8] sm:$0xff]
        %v6861 = vld [vmem:[%s163 + $0xb0] sm:$0xff]
        %v6862 = vld [vmem:[%s163 + $0xb8] sm:$0xff]
        %v6863 = vld [vmem:[%s163 + $0xc0] sm:$0xff]
        %v6864 = vld [vmem:[%s163 + $0xc8] sm:$0xff]
        %v6865 = vld [vmem:[%s163 + $0xd0] sm:$0xff]
        %v6866 = vld [vmem:[%s163 + $0xd8] sm:$0xff]
        %v6867 = vld [vmem:[%s163 + $0xe0] sm:$0xff]
        %v6868 = vld [vmem:[%s163 + $0xe8] sm:$0xff]
        %v6869 = vld [vmem:[%s163 + $0xf0] sm:$0xff]
        %v6870 = vld [vmem:[%s163 + $0xf8] sm:$0xff]
        %v6871 = vadd.f32 %v6839, %v6807
        %v6872 = vadd.f32 %v6840, %v6808
        %v6873 = vadd.f32 %v6841, %v6809
        %v6874 = vadd.f32 %v6842, %v6810
        %v6875 = vadd.f32 %v6843, %v6811
        %v6876 = vadd.f32 %v6844, %v6812
        %v6877 = vadd.f32 %v6845, %v6813
        %v6878 = vadd.f32 %v6846, %v6814
        %v6879 = vadd.f32 %v6847, %v6815
        %v6880 = vadd.f32 %v6848, %v6816
        %v6881 = vadd.f32 %v6849, %v6817
        %v6882 = vadd.f32 %v6850, %v6818
        %v6883 = vadd.f32 %v6851, %v6819
        %v6884 = vadd.f32 %v6852, %v6820
        %v6885 = vadd.f32 %v6853, %v6821
        %v6886 = vadd.f32 %v6854, %v6822
        %v6887 = vadd.f32 %v6855, %v6823
        %v6888 = vadd.f32 %v6856, %v6824
        %v6889 = vadd.f32 %v6857, %v6825
        %v6890 = vadd.f32 %v6858, %v6826
        %v6891 = vadd.f32 %v6859, %v6827
        %v6892 = vadd.f32 %v6860, %v6828
        %v6893 = vadd.f32 %v6861, %v6829
        %v6894 = vadd.f32 %v6862, %v6830
        %v6895 = vadd.f32 %v6863, %v6831
        %v6896 = vadd.f32 %v6864, %v6832
        %v6897 = vadd.f32 %v6865, %v6833
        %v6898 = vadd.f32 %v6866, %v6834
        %v6899 = vadd.f32 %v6867, %v6835
        %v6900 = vadd.f32 %v6868, %v6836
        %v6901 = vadd.f32 %v6869, %v6837
        %v6902 = vadd.f32 %v6870, %v6838
        %6903 = vst.msk [vmem:[%s163] sm:$0xff] %vm201, %v6871
        %6904 = vst.msk [vmem:[%s163 + $0x8] sm:$0xff] %vm201, %v6872
        %6905 = vst.msk [vmem:[%s163 + $0x10] sm:$0xff] %vm201, %v6873
        %6906 = vst.msk [vmem:[%s163 + $0x18] sm:$0xff] %vm201, %v6874
        %6907 = vst.msk [vmem:[%s163 + $0x20] sm:$0xff] %vm201, %v6875
        %6908 = vst.msk [vmem:[%s163 + $0x28] sm:$0xff] %vm201, %v6876
        %6909 = vst.msk [vmem:[%s163 + $0x30] sm:$0xff] %vm201, %v6877
        %6910 = vst.msk [vmem:[%s163 + $0x38] sm:$0xff] %vm201, %v6878
        %6911 = vst.msk [vmem:[%s163 + $0x40] sm:$0xff] %vm201, %v6879
        %6912 = vst.msk [vmem:[%s163 + $0x48] sm:$0xff] %vm201, %v6880
        %6913 = vst.msk [vmem:[%s163 + $0x50] sm:$0xff] %vm201, %v6881
        %6914 = vst.msk [vmem:[%s163 + $0x58] sm:$0xff] %vm201, %v6882
        %6915 = vst.msk [vmem:[%s163 + $0x60] sm:$0xff] %vm201, %v6883
        %6916 = vst.msk [vmem:[%s163 + $0x68] sm:$0xff] %vm201, %v6884
        %6917 = vst.msk [vmem:[%s163 + $0x70] sm:$0xff] %vm201, %v6885
        %6918 = vst.msk [vmem:[%s163 + $0x78] sm:$0xff] %vm201, %v6886
        %6919 = vst.msk [vmem:[%s163 + $0x80] sm:$0xff] %vm201, %v6887
        %6920 = vst.msk [vmem:[%s163 + $0x88] sm:$0xff] %vm201, %v6888
        %6921 = vst.msk [vmem:[%s163 + $0x90] sm:$0xff] %vm201, %v6889
        %6922 = vst.msk [vmem:[%s163 + $0x98] sm:$0xff] %vm201, %v6890
        %6923 = vst.msk [vmem:[%s163 + $0xa0] sm:$0xff] %vm201, %v6891
        %6924 = vst.msk [vmem:[%s163 + $0xa8] sm:$0xff] %vm201, %v6892
        %6925 = vst.msk [vmem:[%s163 + $0xb0] sm:$0xff] %vm201, %v6893
        %6926 = vst.msk [vmem:[%s163 + $0xb8] sm:$0xff] %vm201, %v6894
        %6927 = vst.msk [vmem:[%s163 + $0xc0] sm:$0xff] %vm201, %v6895
        %6928 = vst.msk [vmem:[%s163 + $0xc8] sm:$0xff] %vm201, %v6896
        %6929 = vst.msk [vmem:[%s163 + $0xd0] sm:$0xff] %vm201, %v6897
        %6930 = vst.msk [vmem:[%s163 + $0xd8] sm:$0xff] %vm201, %v6898
        %6931 = vst.msk [vmem:[%s163 + $0xe0] sm:$0xff] %vm201, %v6899
        %6932 = vst.msk [vmem:[%s163 + $0xe8] sm:$0xff] %vm201, %v6900
        %6933 = vst.msk [vmem:[%s163 + $0xf0] sm:$0xff] %vm201, %v6901
        %6934 = vst.msk [vmem:[%s163 + $0xf8] sm:$0xff] %vm201, %v6902
        %6935 = vst.msk [vmem:[%s362 + $0x8] sm:$0xff] %vm201, %v6807
        %6936 = vst.msk [vmem:[%s362 + $0x10] sm:$0xff] %vm201, %v6808
        %6937 = vst.msk [vmem:[%s362 + $0x28] sm:$0xff] %vm201, %v6809
        %6938 = vst.msk [vmem:[%s362 + $0x30] sm:$0xff] %vm201, %v6810
        %6939 = vst.msk [vmem:[%s362 + $0x48] sm:$0xff] %vm201, %v6811
        %6940 = vst.msk [vmem:[%s362 + $0x50] sm:$0xff] %vm201, %v6812
        %6941 = vst.msk [vmem:[%s362 + $0x68] sm:$0xff] %vm201, %v6813
        %6942 = vst.msk [vmem:[%s362 + $0x70] sm:$0xff] %vm201, %v6814
        %6943 = vst.msk [vmem:[%s362 + $0x88] sm:$0xff] %vm201, %v6815
        %6944 = vst.msk [vmem:[%s362 + $0x90] sm:$0xff] %vm201, %v6816
        %6945 = vst.msk [vmem:[%s362 + $0xa8] sm:$0xff] %vm201, %v6817
        %6946 = vst.msk [vmem:[%s362 + $0xb0] sm:$0xff] %vm201, %v6818
        %6947 = vst.msk [vmem:[%s362 + $0xc8] sm:$0xff] %vm201, %v6819
        %6948 = vst.msk [vmem:[%s362 + $0xd0] sm:$0xff] %vm201, %v6820
        %6949 = vst.msk [vmem:[%s362 + $0xe8] sm:$0xff] %vm201, %v6821
        %6950 = vst.msk [vmem:[%s362 + $0xf0] sm:$0xff] %vm201, %v6822
        %6951 = vst.msk [vmem:[%s362 + $0x108] sm:$0xff] %vm201, %v6823
        %6952 = vst.msk [vmem:[%s362 + $0x110] sm:$0xff] %vm201, %v6824
        %6953 = vst.msk [vmem:[%s362 + $0x128] sm:$0xff] %vm201, %v6825
        %6954 = vst.msk [vmem:[%s362 + $0x130] sm:$0xff] %vm201, %v6826
        %6955 = vst.msk [vmem:[%s362 + $0x148] sm:$0xff] %vm201, %v6827
        %6956 = vst.msk [vmem:[%s362 + $0x150] sm:$0xff] %vm201, %v6828
        %6957 = vst.msk [vmem:[%s362 + $0x168] sm:$0xff] %vm201, %v6829
        %6958 = vst.msk [vmem:[%s362 + $0x170] sm:$0xff] %vm201, %v6830
        %6959 = vst.msk [vmem:[%s362 + $0x188] sm:$0xff] %vm201, %v6831
        %6960 = vst.msk [vmem:[%s362 + $0x190] sm:$0xff] %vm201, %v6832
        %6961 = vst.msk [vmem:[%s362 + $0x1a8] sm:$0xff] %vm201, %v6833
        %6962 = vst.msk [vmem:[%s362 + $0x1b0] sm:$0xff] %vm201, %v6834
        %6963 = vst.msk [vmem:[%s362 + $0x1c8] sm:$0xff] %vm201, %v6835
        %6964 = vst.msk [vmem:[%s362 + $0x1d0] sm:$0xff] %vm201, %v6836
        %6965 = vst.msk [vmem:[%s362 + $0x1e8] sm:$0xff] %vm201, %v6837
        %6966 = vst.msk [vmem:[%s362 + $0x1f0] sm:$0xff] %vm201, %v6838
        %v6967 = vld [vmem:[#allocation2] sm:$0xff]
        %v6968 = vld [vmem:[#allocation2 + $0x8] sm:$0xff]
        %v6969 = vld [vmem:[#allocation2 + $0x20] sm:$0xff]
        %v6970 = vld [vmem:[#allocation2 + $0x28] sm:$0xff]
        %v6971 = vld [vmem:[#allocation2 + $0x40] sm:$0xff]
        %v6972 = vld [vmem:[#allocation2 + $0x48] sm:$0xff]
        %v6973 = vld [vmem:[#allocation2 + $0x60] sm:$0xff]
        %v6974 = vld [vmem:[#allocation2 + $0x68] sm:$0xff]
        %v6975 = vld [vmem:[#allocation2 + $0x80] sm:$0xff]
        %v6976 = vld [vmem:[#allocation2 + $0x88] sm:$0xff]
        %v6977 = vld [vmem:[#allocation2 + $0xa0] sm:$0xff]
        %v6978 = vld [vmem:[#allocation2 + $0xa8] sm:$0xff]
        %v6979 = vld [vmem:[#allocation2 + $0xc0] sm:$0xff]
        %v6980 = vld [vmem:[#allocation2 + $0xc8] sm:$0xff]
        %v6981 = vld [vmem:[#allocation2 + $0xe0] sm:$0xff]
        %v6982 = vld [vmem:[#allocation2 + $0xe8] sm:$0xff]
        %v6983 = vld [vmem:[#allocation2 + $0x100] sm:$0xff]
        %v6984 = vld [vmem:[#allocation2 + $0x108] sm:$0xff]
        %v6985 = vld [vmem:[#allocation2 + $0x120] sm:$0xff]
        %v6986 = vld [vmem:[#allocation2 + $0x128] sm:$0xff]
        %v6987 = vld [vmem:[#allocation2 + $0x140] sm:$0xff]
        %v6988 = vld [vmem:[#allocation2 + $0x148] sm:$0xff]
        %v6989 = vld [vmem:[#allocation2 + $0x160] sm:$0xff]
        %v6990 = vld [vmem:[#allocation2 + $0x168] sm:$0xff]
        %v6991 = vld [vmem:[#allocation2 + $0x180] sm:$0xff]
        %v6992 = vld [vmem:[#allocation2 + $0x188] sm:$0xff]
        %v6993 = vld [vmem:[#allocation2 + $0x1a0] sm:$0xff]
        %v6994 = vld [vmem:[#allocation2 + $0x1a8] sm:$0xff]
        %v6995 = vld [vmem:[#allocation2 + $0x1c0] sm:$0xff]
        %v6996 = vld [vmem:[#allocation2 + $0x1c8] sm:$0xff]
        %v6997 = vld [vmem:[#allocation2 + $0x1e0] sm:$0xff]
        %v6998 = vld [vmem:[#allocation2 + $0x1e8] sm:$0xff]
        %6999 = vst.msk [vmem:[#allocation3] sm:$0xff] %vm201, %v6967
        %7000 = vst.msk [vmem:[#allocation3 + $0x18] sm:$0xff] %vm201, %v6968
        %7001 = vst.msk [vmem:[#allocation3 + $0x30] sm:$0xff] %vm201, %v6969
        %7002 = vst.msk [vmem:[#allocation3 + $0x48] sm:$0xff] %vm201, %v6970
        %7003 = vst.msk [vmem:[#allocation3 + $0x60] sm:$0xff] %vm201, %v6971
        %7004 = vst.msk [vmem:[#allocation3 + $0x78] sm:$0xff] %vm201, %v6972
        %7005 = vst.msk [vmem:[#allocation3 + $0x90] sm:$0xff] %vm201, %v6973
        %7006 = vst.msk [vmem:[#allocation3 + $0xa8] sm:$0xff] %vm201, %v6974
        %7007 = vst.msk [vmem:[#allocation3 + $0xc0] sm:$0xff] %vm201, %v6975
        %7008 = vst.msk [vmem:[#allocation3 + $0xd8] sm:$0xff] %vm201, %v6976
        %7009 = vst.msk [vmem:[#allocation3 + $0xf0] sm:$0xff] %vm201, %v6977
        %7010 = vst.msk [vmem:[#allocation3 + $0x108] sm:$0xff] %vm201, %v6978
        %7011 = vst.msk [vmem:[#allocation3 + $0x120] sm:$0xff] %vm201, %v6979
        %7012 = vst.msk [vmem:[#allocation3 + $0x138] sm:$0xff] %vm201, %v6980
        %7013 = vst.msk [vmem:[#allocation3 + $0x150] sm:$0xff] %vm201, %v6981
        %7014 = vst.msk [vmem:[#allocation3 + $0x168] sm:$0xff] %vm201, %v6982
        %7015 = vst.msk [vmem:[#allocation3 + $0x180] sm:$0xff] %vm201, %v6983
        %7016 = vst.msk [vmem:[#allocation3 + $0x198] sm:$0xff] %vm201, %v6984
        %7017 = vst.msk [vmem:[#allocation3 + $0x1b0] sm:$0xff] %vm201, %v6985
        %7018 = vst.msk [vmem:[#allocation3 + $0x1c8] sm:$0xff] %vm201, %v6986
        %7019 = vst.msk [vmem:[#allocation3 + $0x1e0] sm:$0xff] %vm201, %v6987
        %7020 = vst.msk [vmem:[#allocation3 + $0x1f8] sm:$0xff] %vm201, %v6988
        %7021 = vst.msk [vmem:[#allocation3 + $0x210] sm:$0xff] %vm201, %v6989
        %7022 = vst.msk [vmem:[#allocation3 + $0x228] sm:$0xff] %vm201, %v6990
        %7023 = vst.msk [vmem:[#allocation3 + $0x240] sm:$0xff] %vm201, %v6991
        %7024 = vst.msk [vmem:[#allocation3 + $0x258] sm:$0xff] %vm201, %v6992
        %7025 = vst.msk [vmem:[#allocation3 + $0x270] sm:$0xff] %vm201, %v6993
        %7026 = vst.msk [vmem:[#allocation3 + $0x288] sm:$0xff] %vm201, %v6994
        %7027 = vst.msk [vmem:[#allocation3 + $0x2a0] sm:$0xff] %vm201, %v6995
        %7028 = vst.msk [vmem:[#allocation3 + $0x2b8] sm:$0xff] %vm201, %v6996
        %7029 = vst.msk [vmem:[#allocation3 + $0x2d0] sm:$0xff] %vm201, %v6997
        %7030 = vst.msk [vmem:[#allocation3 + $0x2e8] sm:$0xff] %vm201, %v6998
        %v7031 = vld [vmem:[#allocation2 + $0x8] sm:$0xff]
        %v7032 = vld [vmem:[#allocation2 + $0x10] sm:$0xff]
        %v7033 = vld [vmem:[#allocation2 + $0x28] sm:$0xff]
        %v7034 = vld [vmem:[#allocation2 + $0x30] sm:$0xff]
        %v7035 = vld [vmem:[#allocation2 + $0x48] sm:$0xff]
        %v7036 = vld [vmem:[#allocation2 + $0x50] sm:$0xff]
        %v7037 = vld [vmem:[#allocation2 + $0x68] sm:$0xff]
        %v7038 = vld [vmem:[#allocation2 + $0x70] sm:$0xff]
        %v7039 = vld [vmem:[#allocation2 + $0x88] sm:$0xff]
        %v7040 = vld [vmem:[#allocation2 + $0x90] sm:$0xff]
        %v7041 = vld [vmem:[#allocation2 + $0xa8] sm:$0xff]
        %v7042 = vld [vmem:[#allocation2 + $0xb0] sm:$0xff]
        %v7043 = vld [vmem:[#allocation2 + $0xc8] sm:$0xff]
        %v7044 = vld [vmem:[#allocation2 + $0xd0] sm:$0xff]
        %v7045 = vld [vmem:[#allocation2 + $0xe8] sm:$0xff]
        %v7046 = vld [vmem:[#allocation2 + $0xf0] sm:$0xff]
        %v7047 = vld [vmem:[#allocation2 + $0x108] sm:$0xff]
        %v7048 = vld [vmem:[#allocation2 + $0x110] sm:$0xff]
        %v7049 = vld [vmem:[#allocation2 + $0x128] sm:$0xff]
        %v7050 = vld [vmem:[#allocation2 + $0x130] sm:$0xff]
        %v7051 = vld [vmem:[#allocation2 + $0x148] sm:$0xff]
        %v7052 = vld [vmem:[#allocation2 + $0x150] sm:$0xff]
        %v7053 = vld [vmem:[#allocation2 + $0x168] sm:$0xff]
        %v7054 = vld [vmem:[#allocation2 + $0x170] sm:$0xff]
        %v7055 = vld [vmem:[#allocation2 + $0x188] sm:$0xff]
        %v7056 = vld [vmem:[#allocation2 + $0x190] sm:$0xff]
        %v7057 = vld [vmem:[#allocation2 + $0x1a8] sm:$0xff]
        %v7058 = vld [vmem:[#allocation2 + $0x1b0] sm:$0xff]
        %v7059 = vld [vmem:[#allocation2 + $0x1c8] sm:$0xff]
        %v7060 = vld [vmem:[#allocation2 + $0x1d0] sm:$0xff]
        %v7061 = vld [vmem:[#allocation2 + $0x1e8] sm:$0xff]
        %v7062 = vld [vmem:[#allocation2 + $0x1f0] sm:$0xff]
        %7095 = vrot.lane.b32.xlu0 %v7031, 32
        %v7096 = vpop.permute.xlu0 %7095
        %7097 = vrot.lane.b32.xlu0 %v7032, 32
        %v7098 = vpop.permute.xlu0 %7097
        %7099 = vrot.lane.b32.xlu0 %v7033, 32
        %v7100 = vpop.permute.xlu0 %7099
        %7101 = vrot.lane.b32.xlu0 %v7034, 32
        %v7102 = vpop.permute.xlu0 %7101
        %7103 = vrot.lane.b32.xlu0 %v7035, 32
        %v7104 = vpop.permute.xlu0 %7103
        %7105 = vrot.lane.b32.xlu0 %v7036, 32
        %v7106 = vpop.permute.xlu0 %7105
        %7107 = vrot.lane.b32.xlu0 %v7037, 32
        %v7108 = vpop.permute.xlu0 %7107
        %7109 = vrot.lane.b32.xlu0 %v7038, 32
        %v7110 = vpop.permute.xlu0 %7109
        %7111 = vrot.lane.b32.xlu0 %v7039, 32
        %v7112 = vpop.permute.xlu0 %7111
        %7113 = vrot.lane.b32.xlu0 %v7040, 32
        %v7114 = vpop.permute.xlu0 %7113
        %7115 = vrot.lane.b32.xlu0 %v7041, 32
        %v7116 = vpop.permute.xlu0 %7115
        %7117 = vrot.lane.b32.xlu0 %v7042, 32
        %v7118 = vpop.permute.xlu0 %7117
        %7119 = vrot.lane.b32.xlu0 %v7043, 32
        %v7120 = vpop.permute.xlu0 %7119
        %7121 = vrot.lane.b32.xlu0 %v7044, 32
        %v7122 = vpop.permute.xlu0 %7121
        %7123 = vrot.lane.b32.xlu0 %v7045, 32
        %v7124 = vpop.permute.xlu0 %7123
        %7125 = vrot.lane.b32.xlu0 %v7046, 32
        %v7126 = vpop.permute.xlu0 %7125
        %7127 = vrot.lane.b32.xlu0 %v7047, 32
        %v7128 = vpop.permute.xlu0 %7127
        %7129 = vrot.lane.b32.xlu0 %v7048, 32
        %v7130 = vpop.permute.xlu0 %7129
        %7131 = vrot.lane.b32.xlu0 %v7049, 32
        %v7132 = vpop.permute.xlu0 %7131
        %7133 = vrot.lane.b32.xlu0 %v7050, 32
        %v7134 = vpop.permute.xlu0 %7133
        %7135 = vrot.lane.b32.xlu0 %v7051, 32
        %v7136 = vpop.permute.xlu0 %7135
        %7137 = vrot.lane.b32.xlu0 %v7052, 32
        %v7138 = vpop.permute.xlu0 %7137
        %7139 = vrot.lane.b32.xlu0 %v7053, 32
        %v7140 = vpop.permute.xlu0 %7139
        %7141 = vrot.lane.b32.xlu0 %v7054, 32
        %v7142 = vpop.permute.xlu0 %7141
        %7143 = vrot.lane.b32.xlu0 %v7055, 32
        %v7144 = vpop.permute.xlu0 %7143
        %7145 = vrot.lane.b32.xlu0 %v7056, 32
        %v7146 = vpop.permute.xlu0 %7145
        %7147 = vrot.lane.b32.xlu0 %v7057, 32
        %v7148 = vpop.permute.xlu0 %7147
        %7149 = vrot.lane.b32.xlu0 %v7058, 32
        %v7150 = vpop.permute.xlu0 %7149
        %7151 = vrot.lane.b32.xlu0 %v7059, 32
        %v7152 = vpop.permute.xlu0 %7151
        %7153 = vrot.lane.b32.xlu0 %v7060, 32
        %v7154 = vpop.permute.xlu0 %7153
        %7155 = vrot.lane.b32.xlu0 %v7061, 32
        %v7156 = vpop.permute.xlu0 %7155
        %7157 = vrot.lane.b32.xlu0 %v7062, 32
        %v7158 = vpop.permute.xlu0 %7157
        %7191 = vst.msk [vmem:[#allocation3] sm:$0xff] %vm620, %v7096
        %7192 = vst.msk [vmem:[#allocation3 + $0x18] sm:$0xff] %vm620, %v7098
        %7193 = vst.msk [vmem:[#allocation3 + $0x30] sm:$0xff] %vm620, %v7100
        %7194 = vst.msk [vmem:[#allocation3 + $0x48] sm:$0xff] %vm620, %v7102
        %7195 = vst.msk [vmem:[#allocation3 + $0x60] sm:$0xff] %vm620, %v7104
        %7196 = vst.msk [vmem:[#allocation3 + $0x78] sm:$0xff] %vm620, %v7106
        %7197 = vst.msk [vmem:[#allocation3 + $0x90] sm:$0xff] %vm620, %v7108
        %7198 = vst.msk [vmem:[#allocation3 + $0xa8] sm:$0xff] %vm620, %v7110
        %7199 = vst.msk [vmem:[#allocation3 + $0xc0] sm:$0xff] %vm620, %v7112
        %7200 = vst.msk [vmem:[#allocation3 + $0xd8] sm:$0xff] %vm620, %v7114
        %7201 = vst.msk [vmem:[#allocation3 + $0xf0] sm:$0xff] %vm620, %v7116
        %7202 = vst.msk [vmem:[#allocation3 + $0x108] sm:$0xff] %vm620, %v7118
        %7203 = vst.msk [vmem:[#allocation3 + $0x120] sm:$0xff] %vm620, %v7120
        %7204 = vst.msk [vmem:[#allocation3 + $0x138] sm:$0xff] %vm620, %v7122
        %7205 = vst.msk [vmem:[#allocation3 + $0x150] sm:$0xff] %vm620, %v7124
        %7206 = vst.msk [vmem:[#allocation3 + $0x168] sm:$0xff] %vm620, %v7126
        %7207 = vst.msk [vmem:[#allocation3 + $0x180] sm:$0xff] %vm620, %v7128
        %7208 = vst.msk [vmem:[#allocation3 + $0x198] sm:$0xff] %vm620, %v7130
        %7209 = vst.msk [vmem:[#allocation3 + $0x1b0] sm:$0xff] %vm620, %v7132
        %7210 = vst.msk [vmem:[#allocation3 + $0x1c8] sm:$0xff] %vm620, %v7134
        %7211 = vst.msk [vmem:[#allocation3 + $0x1e0] sm:$0xff] %vm620, %v7136
        %7212 = vst.msk [vmem:[#allocation3 + $0x1f8] sm:$0xff] %vm620, %v7138
        %7213 = vst.msk [vmem:[#allocation3 + $0x210] sm:$0xff] %vm620, %v7140
        %7214 = vst.msk [vmem:[#allocation3 + $0x228] sm:$0xff] %vm620, %v7142
        %7215 = vst.msk [vmem:[#allocation3 + $0x240] sm:$0xff] %vm620, %v7144
        %7216 = vst.msk [vmem:[#allocation3 + $0x258] sm:$0xff] %vm620, %v7146
        %7217 = vst.msk [vmem:[#allocation3 + $0x270] sm:$0xff] %vm620, %v7148
        %7218 = vst.msk [vmem:[#allocation3 + $0x288] sm:$0xff] %vm620, %v7150
        %7219 = vst.msk [vmem:[#allocation3 + $0x2a0] sm:$0xff] %vm620, %v7152
        %7220 = vst.msk [vmem:[#allocation3 + $0x2b8] sm:$0xff] %vm620, %v7154
        %7221 = vst.msk [vmem:[#allocation3 + $0x2d0] sm:$0xff] %vm620, %v7156
        %7222 = vst.msk [vmem:[#allocation3 + $0x2e8] sm:$0xff] %vm620, %v7158
        %v7223 = vld [vmem:[#allocation2 + $0x10] sm:$0xff]
        %v7224 = vld [vmem:[#allocation2 + $0x18] sm:$0xff]
        %v7225 = vld [vmem:[#allocation2 + $0x30] sm:$0xff]
        %v7226 = vld [vmem:[#allocation2 + $0x38] sm:$0xff]
        %v7227 = vld [vmem:[#allocation2 + $0x50] sm:$0xff]
        %v7228 = vld [vmem:[#allocation2 + $0x58] sm:$0xff]
        %v7229 = vld [vmem:[#allocation2 + $0x70] sm:$0xff]
        %v7230 = vld [vmem:[#allocation2 + $0x78] sm:$0xff]
        %v7231 = vld [vmem:[#allocation2 + $0x90] sm:$0xff]
        %v7232 = vld [vmem:[#allocation2 + $0x98] sm:$0xff]
        %v7233 = vld [vmem:[#allocation2 + $0xb0] sm:$0xff]
        %v7234 = vld [vmem:[#allocation2 + $0xb8] sm:$0xff]
        %v7235 = vld [vmem:[#allocation2 + $0xd0] sm:$0xff]
        %v7236 = vld [vmem:[#allocation2 + $0xd8] sm:$0xff]
        %v7237 = vld [vmem:[#allocation2 + $0xf0] sm:$0xff]
        %v7238 = vld [vmem:[#allocation2 + $0xf8] sm:$0xff]
        %v7239 = vld [vmem:[#allocation2 + $0x110] sm:$0xff]
        %v7240 = vld [vmem:[#allocation2 + $0x118] sm:$0xff]
        %v7241 = vld [vmem:[#allocation2 + $0x130] sm:$0xff]
        %v7242 = vld [vmem:[#allocation2 + $0x138] sm:$0xff]
        %v7243 = vld [vmem:[#allocation2 + $0x150] sm:$0xff]
        %v7244 = vld [vmem:[#allocation2 + $0x158] sm:$0xff]
        %v7245 = vld [vmem:[#allocation2 + $0x170] sm:$0xff]
        %v7246 = vld [vmem:[#allocation2 + $0x178] sm:$0xff]
        %v7247 = vld [vmem:[#allocation2 + $0x190] sm:$0xff]
        %v7248 = vld [vmem:[#allocation2 + $0x198] sm:$0xff]
        %v7249 = vld [vmem:[#allocation2 + $0x1b0] sm:$0xff]
        %v7250 = vld [vmem:[#allocation2 + $0x1b8] sm:$0xff]
        %v7251 = vld [vmem:[#allocation2 + $0x1d0] sm:$0xff]
        %v7252 = vld [vmem:[#allocation2 + $0x1d8] sm:$0xff]
        %v7253 = vld [vmem:[#allocation2 + $0x1f0] sm:$0xff]
        %v7254 = vld [vmem:[#allocation2 + $0x1f8] sm:$0xff]
        %7287 = vrot.lane.b32.xlu0 %v7223, 64
        %v7288 = vpop.permute.xlu0 %7287
        %7289 = vrot.lane.b32.xlu0 %v7224, 64
        %v7290 = vpop.permute.xlu0 %7289
        %7291 = vrot.lane.b32.xlu0 %v7225, 64
        %v7292 = vpop.permute.xlu0 %7291
        %7293 = vrot.lane.b32.xlu0 %v7226, 64
        %v7294 = vpop.permute.xlu0 %7293
        %7295 = vrot.lane.b32.xlu0 %v7227, 64
        %v7296 = vpop.permute.xlu0 %7295
        %7297 = vrot.lane.b32.xlu0 %v7228, 64
        %v7298 = vpop.permute.xlu0 %7297
        %7299 = vrot.lane.b32.xlu0 %v7229, 64
        %v7300 = vpop.permute.xlu0 %7299
        %7301 = vrot.lane.b32.xlu0 %v7230, 64
        %v7302 = vpop.permute.xlu0 %7301
        %7303 = vrot.lane.b32.xlu0 %v7231, 64
        %v7304 = vpop.permute.xlu0 %7303
        %7305 = vrot.lane.b32.xlu0 %v7232, 64
        %v7306 = vpop.permute.xlu0 %7305
        %7307 = vrot.lane.b32.xlu0 %v7233, 64
        %v7308 = vpop.permute.xlu0 %7307
        %7309 = vrot.lane.b32.xlu0 %v7234, 64
        %v7310 = vpop.permute.xlu0 %7309
        %7311 = vrot.lane.b32.xlu0 %v7235, 64
        %v7312 = vpop.permute.xlu0 %7311
        %7313 = vrot.lane.b32.xlu0 %v7236, 64
        %v7314 = vpop.permute.xlu0 %7313
        %7315 = vrot.lane.b32.xlu0 %v7237, 64
        %v7316 = vpop.permute.xlu0 %7315
        %7317 = vrot.lane.b32.xlu0 %v7238, 64
        %v7318 = vpop.permute.xlu0 %7317
        %7319 = vrot.lane.b32.xlu0 %v7239, 64
        %v7320 = vpop.permute.xlu0 %7319
        %7321 = vrot.lane.b32.xlu0 %v7240, 64
        %v7322 = vpop.permute.xlu0 %7321
        %7323 = vrot.lane.b32.xlu0 %v7241, 64
        %v7324 = vpop.permute.xlu0 %7323
        %7325 = vrot.lane.b32.xlu0 %v7242, 64
        %v7326 = vpop.permute.xlu0 %7325
        %7327 = vrot.lane.b32.xlu0 %v7243, 64
        %v7328 = vpop.permute.xlu0 %7327
        %7329 = vrot.lane.b32.xlu0 %v7244, 64
        %v7330 = vpop.permute.xlu0 %7329
        %7331 = vrot.lane.b32.xlu0 %v7245, 64
        %v7332 = vpop.permute.xlu0 %7331
        %7333 = vrot.lane.b32.xlu0 %v7246, 64
        %v7334 = vpop.permute.xlu0 %7333
        %7335 = vrot.lane.b32.xlu0 %v7247, 64
        %v7336 = vpop.permute.xlu0 %7335
        %7337 = vrot.lane.b32.xlu0 %v7248, 64
        %v7338 = vpop.permute.xlu0 %7337
        %7339 = vrot.lane.b32.xlu0 %v7249, 64
        %v7340 = vpop.permute.xlu0 %7339
        %7341 = vrot.lane.b32.xlu0 %v7250, 64
        %v7342 = vpop.permute.xlu0 %7341
        %7343 = vrot.lane.b32.xlu0 %v7251, 64
        %v7344 = vpop.permute.xlu0 %7343
        %7345 = vrot.lane.b32.xlu0 %v7252, 64
        %v7346 = vpop.permute.xlu0 %7345
        %7347 = vrot.lane.b32.xlu0 %v7253, 64
        %v7348 = vpop.permute.xlu0 %7347
        %7349 = vrot.lane.b32.xlu0 %v7254, 64
        %v7350 = vpop.permute.xlu0 %7349
        %7383 = vst.msk [vmem:[#allocation3] sm:$0xff] %vm813, %v7288
        %7384 = vst.msk [vmem:[#allocation3 + $0x18] sm:$0xff] %vm813, %v7290
        %7385 = vst.msk [vmem:[#allocation3 + $0x30] sm:$0xff] %vm813, %v7292
        %7386 = vst.msk [vmem:[#allocation3 + $0x48] sm:$0xff] %vm813, %v7294
        %7387 = vst.msk [vmem:[#allocation3 + $0x60] sm:$0xff] %vm813, %v7296
        %7388 = vst.msk [vmem:[#allocation3 + $0x78] sm:$0xff] %vm813, %v7298
        %7389 = vst.msk [vmem:[#allocation3 + $0x90] sm:$0xff] %vm813, %v7300
        %7390 = vst.msk [vmem:[#allocation3 + $0xa8] sm:$0xff] %vm813, %v7302
        %7391 = vst.msk [vmem:[#allocation3 + $0xc0] sm:$0xff] %vm813, %v7304
        %7392 = vst.msk [vmem:[#allocation3 + $0xd8] sm:$0xff] %vm813, %v7306
        %7393 = vst.msk [vmem:[#allocation3 + $0xf0] sm:$0xff] %vm813, %v7308
        %7394 = vst.msk [vmem:[#allocation3 + $0x108] sm:$0xff] %vm813, %v7310
        %7395 = vst.msk [vmem:[#allocation3 + $0x120] sm:$0xff] %vm813, %v7312
        %7396 = vst.msk [vmem:[#allocation3 + $0x138] sm:$0xff] %vm813, %v7314
        %7397 = vst.msk [vmem:[#allocation3 + $0x150] sm:$0xff] %vm813, %v7316
        %7398 = vst.msk [vmem:[#allocation3 + $0x168] sm:$0xff] %vm813, %v7318
        %7399 = vst.msk [vmem:[#allocation3 + $0x180] sm:$0xff] %vm813, %v7320
        %7400 = vst.msk [vmem:[#allocation3 + $0x198] sm:$0xff] %vm813, %v7322
        %7401 = vst.msk [vmem:[#allocation3 + $0x1b0] sm:$0xff] %vm813, %v7324
        %7402 = vst.msk [vmem:[#allocation3 + $0x1c8] sm:$0xff] %vm813, %v7326
        %7403 = vst.msk [vmem:[#allocation3 + $0x1e0] sm:$0xff] %vm813, %v7328
        %7404 = vst.msk [vmem:[#allocation3 + $0x1f8] sm:$0xff] %vm813, %v7330
        %7405 = vst.msk [vmem:[#allocation3 + $0x210] sm:$0xff] %vm813, %v7332
        %7406 = vst.msk [vmem:[#allocation3 + $0x228] sm:$0xff] %vm813, %v7334
        %7407 = vst.msk [vmem:[#allocation3 + $0x240] sm:$0xff] %vm813, %v7336
        %7408 = vst.msk [vmem:[#allocation3 + $0x258] sm:$0xff] %vm813, %v7338
        %7409 = vst.msk [vmem:[#allocation3 + $0x270] sm:$0xff] %vm813, %v7340
        %7410 = vst.msk [vmem:[#allocation3 + $0x288] sm:$0xff] %vm813, %v7342
        %7411 = vst.msk [vmem:[#allocation3 + $0x2a0] sm:$0xff] %vm813, %v7344
        %7412 = vst.msk [vmem:[#allocation3 + $0x2b8] sm:$0xff] %vm813, %v7346
        %7413 = vst.msk [vmem:[#allocation3 + $0x2d0] sm:$0xff] %vm813, %v7348
        %7414 = vst.msk [vmem:[#allocation3 + $0x2e8] sm:$0xff] %vm813, %v7350
        %v7415 = vld [vmem:[%s362] sm:$0xff]
        %v7416 = vld [vmem:[%s362 + $0x8] sm:$0xff]
        %v7417 = vld [vmem:[%s362 + $0x20] sm:$0xff]
        %v7418 = vld [vmem:[%s362 + $0x28] sm:$0xff]
        %v7419 = vld [vmem:[%s362 + $0x40] sm:$0xff]
        %v7420 = vld [vmem:[%s362 + $0x48] sm:$0xff]
        %v7421 = vld [vmem:[%s362 + $0x60] sm:$0xff]
        %v7422 = vld [vmem:[%s362 + $0x68] sm:$0xff]
        %v7423 = vld [vmem:[%s362 + $0x80] sm:$0xff]
        %v7424 = vld [vmem:[%s362 + $0x88] sm:$0xff]
        %v7425 = vld [vmem:[%s362 + $0xa0] sm:$0xff]
        %v7426 = vld [vmem:[%s362 + $0xa8] sm:$0xff]
        %v7427 = vld [vmem:[%s362 + $0xc0] sm:$0xff]
        %v7428 = vld [vmem:[%s362 + $0xc8] sm:$0xff]
        %v7429 = vld [vmem:[%s362 + $0xe0] sm:$0xff]
        %v7430 = vld [vmem:[%s362 + $0xe8] sm:$0xff]
        %v7431 = vld [vmem:[%s362 + $0x100] sm:$0xff]
        %v7432 = vld [vmem:[%s362 + $0x108] sm:$0xff]
        %v7433 = vld [vmem:[%s362 + $0x120] sm:$0xff]
        %v7434 = vld [vmem:[%s362 + $0x128] sm:$0xff]
        %v7435 = vld [vmem:[%s362 + $0x140] sm:$0xff]
        %v7436 = vld [vmem:[%s362 + $0x148] sm:$0xff]
        %v7437 = vld [vmem:[%s362 + $0x160] sm:$0xff]
        %v7438 = vld [vmem:[%s362 + $0x168] sm:$0xff]
        %v7439 = vld [vmem:[%s362 + $0x180] sm:$0xff]
        %v7440 = vld [vmem:[%s362 + $0x188] sm:$0xff]
        %v7441 = vld [vmem:[%s362 + $0x1a0] sm:$0xff]
        %v7442 = vld [vmem:[%s362 + $0x1a8] sm:$0xff]
        %v7443 = vld [vmem:[%s362 + $0x1c0] sm:$0xff]
        %v7444 = vld [vmem:[%s362 + $0x1c8] sm:$0xff]
        %v7445 = vld [vmem:[%s362 + $0x1e0] sm:$0xff]
        %v7446 = vld [vmem:[%s362 + $0x1e8] sm:$0xff]
        %7479 = vrot.lane.b32.xlu0 %v7415, 96
        %v7480 = vpop.permute.xlu0 %7479
        %7481 = vrot.lane.b32.xlu0 %v7416, 96
        %v7482 = vpop.permute.xlu0 %7481
        %7483 = vrot.lane.b32.xlu0 %v7417, 96
        %v7484 = vpop.permute.xlu0 %7483
        %7485 = vrot.lane.b32.xlu0 %v7418, 96
        %v7486 = vpop.permute.xlu0 %7485
        %7487 = vrot.lane.b32.xlu0 %v7419, 96
        %v7488 = vpop.permute.xlu0 %7487
        %7489 = vrot.lane.b32.xlu0 %v7420, 96
        %v7490 = vpop.permute.xlu0 %7489
        %7491 = vrot.lane.b32.xlu0 %v7421, 96
        %v7492 = vpop.permute.xlu0 %7491
        %7493 = vrot.lane.b32.xlu0 %v7422, 96
        %v7494 = vpop.permute.xlu0 %7493
        %7495 = vrot.lane.b32.xlu0 %v7423, 96
        %v7496 = vpop.permute.xlu0 %7495
        %7497 = vrot.lane.b32.xlu0 %v7424, 96
        %v7498 = vpop.permute.xlu0 %7497
        %7499 = vrot.lane.b32.xlu0 %v7425, 96
        %v7500 = vpop.permute.xlu0 %7499
        %7501 = vrot.lane.b32.xlu0 %v7426, 96
        %v7502 = vpop.permute.xlu0 %7501
        %7503 = vrot.lane.b32.xlu0 %v7427, 96
        %v7504 = vpop.permute.xlu0 %7503
        %7505 = vrot.lane.b32.xlu0 %v7428, 96
        %v7506 = vpop.permute.xlu0 %7505
        %7507 = vrot.lane.b32.xlu0 %v7429, 96
        %v7508 = vpop.permute.xlu0 %7507
        %7509 = vrot.lane.b32.xlu0 %v7430, 96
        %v7510 = vpop.permute.xlu0 %7509
        %7511 = vrot.lane.b32.xlu0 %v7431, 96
        %v7512 = vpop.permute.xlu0 %7511
        %7513 = vrot.lane.b32.xlu0 %v7432, 96
        %v7514 = vpop.permute.xlu0 %7513
        %7515 = vrot.lane.b32.xlu0 %v7433, 96
        %v7516 = vpop.permute.xlu0 %7515
        %7517 = vrot.lane.b32.xlu0 %v7434, 96
        %v7518 = vpop.permute.xlu0 %7517
        %7519 = vrot.lane.b32.xlu0 %v7435, 96
        %v7520 = vpop.permute.xlu0 %7519
        %7521 = vrot.lane.b32.xlu0 %v7436, 96
        %v7522 = vpop.permute.xlu0 %7521
        %7523 = vrot.lane.b32.xlu0 %v7437, 96
        %v7524 = vpop.permute.xlu0 %7523
        %7525 = vrot.lane.b32.xlu0 %v7438, 96
        %v7526 = vpop.permute.xlu0 %7525
        %7527 = vrot.lane.b32.xlu0 %v7439, 96
        %v7528 = vpop.permute.xlu0 %7527
        %7529 = vrot.lane.b32.xlu0 %v7440, 96
        %v7530 = vpop.permute.xlu0 %7529
        %7531 = vrot.lane.b32.xlu0 %v7441, 96
        %v7532 = vpop.permute.xlu0 %7531
        %7533 = vrot.lane.b32.xlu0 %v7442, 96
        %v7534 = vpop.permute.xlu0 %7533
        %7535 = vrot.lane.b32.xlu0 %v7443, 96
        %v7536 = vpop.permute.xlu0 %7535
        %7537 = vrot.lane.b32.xlu0 %v7444, 96
        %v7538 = vpop.permute.xlu0 %7537
        %7539 = vrot.lane.b32.xlu0 %v7445, 96
        %v7540 = vpop.permute.xlu0 %7539
        %7541 = vrot.lane.b32.xlu0 %v7446, 96
        %v7542 = vpop.permute.xlu0 %7541
        %7575 = vst.msk [vmem:[#allocation3] sm:$0xff] %vm1006, %v7480
        %7576 = vst.msk [vmem:[#allocation3 + $0x18] sm:$0xff] %vm1006, %v7482
        %7577 = vst.msk [vmem:[#allocation3 + $0x30] sm:$0xff] %vm1006, %v7484
        %7578 = vst.msk [vmem:[#allocation3 + $0x48] sm:$0xff] %vm1006, %v7486
        %7579 = vst.msk [vmem:[#allocation3 + $0x60] sm:$0xff] %vm1006, %v7488
        %7580 = vst.msk [vmem:[#allocation3 + $0x78] sm:$0xff] %vm1006, %v7490
        %7581 = vst.msk [vmem:[#allocation3 + $0x90] sm:$0xff] %vm1006, %v7492
        %7582 = vst.msk [vmem:[#allocation3 + $0xa8] sm:$0xff] %vm1006, %v7494
        %7583 = vst.msk [vmem:[#allocation3 + $0xc0] sm:$0xff] %vm1006, %v7496
        %7584 = vst.msk [vmem:[#allocation3 + $0xd8] sm:$0xff] %vm1006, %v7498
        %7585 = vst.msk [vmem:[#allocation3 + $0xf0] sm:$0xff] %vm1006, %v7500
        %7586 = vst.msk [vmem:[#allocation3 + $0x108] sm:$0xff] %vm1006, %v7502
        %7587 = vst.msk [vmem:[#allocation3 + $0x120] sm:$0xff] %vm1006, %v7504
        %7588 = vst.msk [vmem:[#allocation3 + $0x138] sm:$0xff] %vm1006, %v7506
        %7589 = vst.msk [vmem:[#allocation3 + $0x150] sm:$0xff] %vm1006, %v7508
        %7590 = vst.msk [vmem:[#allocation3 + $0x168] sm:$0xff] %vm1006, %v7510
        %7591 = vst.msk [vmem:[#allocation3 + $0x180] sm:$0xff] %vm1006, %v7512
        %7592 = vst.msk [vmem:[#allocation3 + $0x198] sm:$0xff] %vm1006, %v7514
        %7593 = vst.msk [vmem:[#allocation3 + $0x1b0] sm:$0xff] %vm1006, %v7516
        %7594 = vst.msk [vmem:[#allocation3 + $0x1c8] sm:$0xff] %vm1006, %v7518
        %7595 = vst.msk [vmem:[#allocation3 + $0x1e0] sm:$0xff] %vm1006, %v7520
        %7596 = vst.msk [vmem:[#allocation3 + $0x1f8] sm:$0xff] %vm1006, %v7522
        %7597 = vst.msk [vmem:[#allocation3 + $0x210] sm:$0xff] %vm1006, %v7524
        %7598 = vst.msk [vmem:[#allocation3 + $0x228] sm:$0xff] %vm1006, %v7526
        %7599 = vst.msk [vmem:[#allocation3 + $0x240] sm:$0xff] %vm1006, %v7528
        %7600 = vst.msk [vmem:[#allocation3 + $0x258] sm:$0xff] %vm1006, %v7530
        %7601 = vst.msk [vmem:[#allocation3 + $0x270] sm:$0xff] %vm1006, %v7532
        %7602 = vst.msk [vmem:[#allocation3 + $0x288] sm:$0xff] %vm1006, %v7534
        %7603 = vst.msk [vmem:[#allocation3 + $0x2a0] sm:$0xff] %vm1006, %v7536
        %7604 = vst.msk [vmem:[#allocation3 + $0x2b8] sm:$0xff] %vm1006, %v7538
        %7605 = vst.msk [vmem:[#allocation3 + $0x2d0] sm:$0xff] %vm1006, %v7540
        %7606 = vst.msk [vmem:[#allocation3 + $0x2e8] sm:$0xff] %vm1006, %v7542
        %v7607 = vld [vmem:[%s362 + $0x8] sm:$0xff]
        %v7608 = vld [vmem:[%s362 + $0x10] sm:$0xff]
        %v7609 = vld [vmem:[%s362 + $0x28] sm:$0xff]
        %v7610 = vld [vmem:[%s362 + $0x30] sm:$0xff]
        %v7611 = vld [vmem:[%s362 + $0x48] sm:$0xff]
        %v7612 = vld [vmem:[%s362 + $0x50] sm:$0xff]
        %v7613 = vld [vmem:[%s362 + $0x68] sm:$0xff]
        %v7614 = vld [vmem:[%s362 + $0x70] sm:$0xff]
        %v7615 = vld [vmem:[%s362 + $0x88] sm:$0xff]
        %v7616 = vld [vmem:[%s362 + $0x90] sm:$0xff]
        %v7617 = vld [vmem:[%s362 + $0xa8] sm:$0xff]
        %v7618 = vld [vmem:[%s362 + $0xb0] sm:$0xff]
        %v7619 = vld [vmem:[%s362 + $0xc8] sm:$0xff]
        %v7620 = vld [vmem:[%s362 + $0xd0] sm:$0xff]
        %v7621 = vld [vmem:[%s362 + $0xe8] sm:$0xff]
        %v7622 = vld [vmem:[%s362 + $0xf0] sm:$0xff]
        %v7623 = vld [vmem:[%s362 + $0x108] sm:$0xff]
        %v7624 = vld [vmem:[%s362 + $0x110] sm:$0xff]
        %v7625 = vld [vmem:[%s362 + $0x128] sm:$0xff]
        %v7626 = vld [vmem:[%s362 + $0x130] sm:$0xff]
        %v7627 = vld [vmem:[%s362 + $0x148] sm:$0xff]
        %v7628 = vld [vmem:[%s362 + $0x150] sm:$0xff]
        %v7629 = vld [vmem:[%s362 + $0x168] sm:$0xff]
        %v7630 = vld [vmem:[%s362 + $0x170] sm:$0xff]
        %v7631 = vld [vmem:[%s362 + $0x188] sm:$0xff]
        %v7632 = vld [vmem:[%s362 + $0x190] sm:$0xff]
        %v7633 = vld [vmem:[%s362 + $0x1a8] sm:$0xff]
        %v7634 = vld [vmem:[%s362 + $0x1b0] sm:$0xff]
        %v7635 = vld [vmem:[%s362 + $0x1c8] sm:$0xff]
        %v7636 = vld [vmem:[%s362 + $0x1d0] sm:$0xff]
        %v7637 = vld [vmem:[%s362 + $0x1e8] sm:$0xff]
        %v7638 = vld [vmem:[%s362 + $0x1f0] sm:$0xff]
        %7639 = vst.msk [vmem:[#allocation3 + $0x8] sm:$0xff] %vm201, %v7607
        %7640 = vst.msk [vmem:[#allocation3 + $0x20] sm:$0xff] %vm201, %v7608
        %7641 = vst.msk [vmem:[#allocation3 + $0x38] sm:$0xff] %vm201, %v7609
        %7642 = vst.msk [vmem:[#allocation3 + $0x50] sm:$0xff] %vm201, %v7610
        %7643 = vst.msk [vmem:[#allocation3 + $0x68] sm:$0xff] %vm201, %v7611
        %7644 = vst.msk [vmem:[#allocation3 + $0x80] sm:$0xff] %vm201, %v7612
        %7645 = vst.msk [vmem:[#allocation3 + $0x98] sm:$0xff] %vm201, %v7613
        %7646 = vst.msk [vmem:[#allocation3 + $0xb0] sm:$0xff] %vm201, %v7614
        %7647 = vst.msk [vmem:[#allocation3 + $0xc8] sm:$0xff] %vm201, %v7615
        %7648 = vst.msk [vmem:[#allocation3 + $0xe0] sm:$0xff] %vm201, %v7616
        %7649 = vst.msk [vmem:[#allocation3 + $0xf8] sm:$0xff] %vm201, %v7617
        %7650 = vst.msk [vmem:[#allocation3 + $0x110] sm:$0xff] %vm201, %v7618
        %7651 = vst.msk [vmem:[#allocation3 + $0x128] sm:$0xff] %vm201, %v7619
        %7652 = vst.msk [vmem:[#allocation3 + $0x140] sm:$0xff] %vm201, %v7620
        %7653 = vst.msk [vmem:[#allocation3 + $0x158] sm:$0xff] %vm201, %v7621
        %7654 = vst.msk [vmem:[#allocation3 + $0x170] sm:$0xff] %vm201, %v7622
        %7655 = vst.msk [vmem:[#allocation3 + $0x188] sm:$0xff] %vm201, %v7623
        %7656 = vst.msk [vmem:[#allocation3 + $0x1a0] sm:$0xff] %vm201, %v7624
        %7657 = vst.msk [vmem:[#allocation3 + $0x1b8] sm:$0xff] %vm201, %v7625
        %7658 = vst.msk [vmem:[#allocation3 + $0x1d0] sm:$0xff] %vm201, %v7626
        %7659 = vst.msk [vmem:[#allocation3 + $0x1e8] sm:$0xff] %vm201, %v7627
        %7660 = vst.msk [vmem:[#allocation3 + $0x200] sm:$0xff] %vm201, %v7628
        %7661 = vst.msk [vmem:[#allocation3 + $0x218] sm:$0xff] %vm201, %v7629
        %7662 = vst.msk [vmem:[#allocation3 + $0x230] sm:$0xff] %vm201, %v7630
        %7663 = vst.msk [vmem:[#allocation3 + $0x248] sm:$0xff] %vm201, %v7631
        %7664 = vst.msk [vmem:[#allocation3 + $0x260] sm:$0xff] %vm201, %v7632
        %7665 = vst.msk [vmem:[#allocation3 + $0x278] sm:$0xff] %vm201, %v7633
        %7666 = vst.msk [vmem:[#allocation3 + $0x290] sm:$0xff] %vm201, %v7634
        %7667 = vst.msk [vmem:[#allocation3 + $0x2a8] sm:$0xff] %vm201, %v7635
        %7668 = vst.msk [vmem:[#allocation3 + $0x2c0] sm:$0xff] %vm201, %v7636
        %7669 = vst.msk [vmem:[#allocation3 + $0x2d8] sm:$0xff] %vm201, %v7637
        %7670 = vst.msk [vmem:[#allocation3 + $0x2f0] sm:$0xff] %vm201, %v7638
        %v7671 = vld [vmem:[%s362 + $0x10] sm:$0xff]
        %v7672 = vld [vmem:[%s362 + $0x18] sm:$0xff]
        %v7673 = vld [vmem:[%s362 + $0x30] sm:$0xff]
        %v7674 = vld [vmem:[%s362 + $0x38] sm:$0xff]
        %v7675 = vld [vmem:[%s362 + $0x50] sm:$0xff]
        %v7676 = vld [vmem:[%s362 + $0x58] sm:$0xff]
        %v7677 = vld [vmem:[%s362 + $0x70] sm:$0xff]
        %v7678 = vld [vmem:[%s362 + $0x78] sm:$0xff]
        %v7679 = vld [vmem:[%s362 + $0x90] sm:$0xff]
        %v7680 = vld [vmem:[%s362 + $0x98] sm:$0xff]
        %v7681 = vld [vmem:[%s362 + $0xb0] sm:$0xff]
        %v7682 = vld [vmem:[%s362 + $0xb8] sm:$0xff]
        %v7683 = vld [vmem:[%s362 + $0xd0] sm:$0xff]
        %v7684 = vld [vmem:[%s362 + $0xd8] sm:$0xff]
        %v7685 = vld [vmem:[%s362 + $0xf0] sm:$0xff]
        %v7686 = vld [vmem:[%s362 + $0xf8] sm:$0xff]
        %v7687 = vld [vmem:[%s362 + $0x110] sm:$0xff]
        %v7688 = vld [vmem:[%s362 + $0x118] sm:$0xff]
        %v7689 = vld [vmem:[%s362 + $0x130] sm:$0xff]
        %v7690 = vld [vmem:[%s362 + $0x138] sm:$0xff]
        %v7691 = vld [vmem:[%s362 + $0x150] sm:$0xff]
        %v7692 = vld [vmem:[%s362 + $0x158] sm:$0xff]
        %v7693 = vld [vmem:[%s362 + $0x170] sm:$0xff]
        %v7694 = vld [vmem:[%s362 + $0x178] sm:$0xff]
        %v7695 = vld [vmem:[%s362 + $0x190] sm:$0xff]
        %v7696 = vld [vmem:[%s362 + $0x198] sm:$0xff]
        %v7697 = vld [vmem:[%s362 + $0x1b0] sm:$0xff]
        %v7698 = vld [vmem:[%s362 + $0x1b8] sm:$0xff]
        %v7699 = vld [vmem:[%s362 + $0x1d0] sm:$0xff]
        %v7700 = vld [vmem:[%s362 + $0x1d8] sm:$0xff]
        %v7701 = vld [vmem:[%s362 + $0x1f0] sm:$0xff]
        %v7702 = vld [vmem:[%s362 + $0x1f8] sm:$0xff]
        %7735 = vrot.lane.b32.xlu0 %v7671, 32
        %v7736 = vpop.permute.xlu0 %7735
        %7737 = vrot.lane.b32.xlu0 %v7672, 32
        %v7738 = vpop.permute.xlu0 %7737
        %7739 = vrot.lane.b32.xlu0 %v7673, 32
        %v7740 = vpop.permute.xlu0 %7739
        %7741 = vrot.lane.b32.xlu0 %v7674, 32
        %v7742 = vpop.permute.xlu0 %7741
        %7743 = vrot.lane.b32.xlu0 %v7675, 32
        %v7744 = vpop.permute.xlu0 %7743
        %7745 = vrot.lane.b32.xlu0 %v7676, 32
        %v7746 = vpop.permute.xlu0 %7745
        %7747 = vrot.lane.b32.xlu0 %v7677, 32
        %v7748 = vpop.permute.xlu0 %7747
        %7749 = vrot.lane.b32.xlu0 %v7678, 32
        %v7750 = vpop.permute.xlu0 %7749
        %7751 = vrot.lane.b32.xlu0 %v7679, 32
        %v7752 = vpop.permute.xlu0 %7751
        %7753 = vrot.lane.b32.xlu0 %v7680, 32
        %v7754 = vpop.permute.xlu0 %7753
        %7755 = vrot.lane.b32.xlu0 %v7681, 32
        %v7756 = vpop.permute.xlu0 %7755
        %7757 = vrot.lane.b32.xlu0 %v7682, 32
        %v7758 = vpop.permute.xlu0 %7757
        %7759 = vrot.lane.b32.xlu0 %v7683, 32
        %v7760 = vpop.permute.xlu0 %7759
        %7761 = vrot.lane.b32.xlu0 %v7684, 32
        %v7762 = vpop.permute.xlu0 %7761
        %7763 = vrot.lane.b32.xlu0 %v7685, 32
        %v7764 = vpop.permute.xlu0 %7763
        %7765 = vrot.lane.b32.xlu0 %v7686, 32
        %v7766 = vpop.permute.xlu0 %7765
        %7767 = vrot.lane.b32.xlu0 %v7687, 32
        %v7768 = vpop.permute.xlu0 %7767
        %7769 = vrot.lane.b32.xlu0 %v7688, 32
        %v7770 = vpop.permute.xlu0 %7769
        %7771 = vrot.lane.b32.xlu0 %v7689, 32
        %v7772 = vpop.permute.xlu0 %7771
        %7773 = vrot.lane.b32.xlu0 %v7690, 32
        %v7774 = vpop.permute.xlu0 %7773
        %7775 = vrot.lane.b32.xlu0 %v7691, 32
        %v7776 = vpop.permute.xlu0 %7775
        %7777 = vrot.lane.b32.xlu0 %v7692, 32
        %v7778 = vpop.permute.xlu0 %7777
        %7779 = vrot.lane.b32.xlu0 %v7693, 32
        %v7780 = vpop.permute.xlu0 %7779
        %7781 = vrot.lane.b32.xlu0 %v7694, 32
        %v7782 = vpop.permute.xlu0 %7781
        %7783 = vrot.lane.b32.xlu0 %v7695, 32
        %v7784 = vpop.permute.xlu0 %7783
        %7785 = vrot.lane.b32.xlu0 %v7696, 32
        %v7786 = vpop.permute.xlu0 %7785
        %7787 = vrot.lane.b32.xlu0 %v7697, 32
        %v7788 = vpop.permute.xlu0 %7787
        %7789 = vrot.lane.b32.xlu0 %v7698, 32
        %v7790 = vpop.permute.xlu0 %7789
        %7791 = vrot.lane.b32.xlu0 %v7699, 32
        %v7792 = vpop.permute.xlu0 %7791
        %7793 = vrot.lane.b32.xlu0 %v7700, 32
        %v7794 = vpop.permute.xlu0 %7793
        %7795 = vrot.lane.b32.xlu0 %v7701, 32
        %v7796 = vpop.permute.xlu0 %7795
        %7797 = vrot.lane.b32.xlu0 %v7702, 32
        %v7798 = vpop.permute.xlu0 %7797
        %7831 = vst.msk [vmem:[#allocation3 + $0x8] sm:$0xff] %vm620, %v7736
        %7832 = vst.msk [vmem:[#allocation3 + $0x20] sm:$0xff] %vm620, %v7738
        %7833 = vst.msk [vmem:[#allocation3 + $0x38] sm:$0xff] %vm620, %v7740
        %7834 = vst.msk [vmem:[#allocation3 + $0x50] sm:$0xff] %vm620, %v7742
        %7835 = vst.msk [vmem:[#allocation3 + $0x68] sm:$0xff] %vm620, %v7744
        %7836 = vst.msk [vmem:[#allocation3 + $0x80] sm:$0xff] %vm620, %v7746
        %7837 = vst.msk [vmem:[#allocation3 + $0x98] sm:$0xff] %vm620, %v7748
        %7838 = vst.msk [vmem:[#allocation3 + $0xb0] sm:$0xff] %vm620, %v7750
        %7839 = vst.msk [vmem:[#allocation3 + $0xc8] sm:$0xff] %vm620, %v7752
        %7840 = vst.msk [vmem:[#allocation3 + $0xe0] sm:$0xff] %vm620, %v7754
        %7841 = vst.msk [vmem:[#allocation3 + $0xf8] sm:$0xff] %vm620, %v7756
        %7842 = vst.msk [vmem:[#allocation3 + $0x110] sm:$0xff] %vm620, %v7758
        %7843 = vst.msk [vmem:[#allocation3 + $0x128] sm:$0xff] %vm620, %v7760
        %7844 = vst.msk [vmem:[#allocation3 + $0x140] sm:$0xff] %vm620, %v7762
        %7845 = vst.msk [vmem:[#allocation3 + $0x158] sm:$0xff] %vm620, %v7764
        %7846 = vst.msk [vmem:[#allocation3 + $0x170] sm:$0xff] %vm620, %v7766
        %7847 = vst.msk [vmem:[#allocation3 + $0x188] sm:$0xff] %vm620, %v7768
        %7848 = vst.msk [vmem:[#allocation3 + $0x1a0] sm:$0xff] %vm620, %v7770
        %7849 = vst.msk [vmem:[#allocation3 + $0x1b8] sm:$0xff] %vm620, %v7772
        %7850 = vst.msk [vmem:[#allocation3 + $0x1d0] sm:$0xff] %vm620, %v7774
        %7851 = vst.msk [vmem:[#allocation3 + $0x1e8] sm:$0xff] %vm620, %v7776
        %7852 = vst.msk [vmem:[#allocation3 + $0x200] sm:$0xff] %vm620, %v7778
        %7853 = vst.msk [vmem:[#allocation3 + $0x218] sm:$0xff] %vm620, %v7780
        %7854 = vst.msk [vmem:[#allocation3 + $0x230] sm:$0xff] %vm620, %v7782
        %7855 = vst.msk [vmem:[#allocation3 + $0x248] sm:$0xff] %vm620, %v7784
        %7856 = vst.msk [vmem:[#allocation3 + $0x260] sm:$0xff] %vm620, %v7786
        %7857 = vst.msk [vmem:[#allocation3 + $0x278] sm:$0xff] %vm620, %v7788
        %7858 = vst.msk [vmem:[#allocation3 + $0x290] sm:$0xff] %vm620, %v7790
        %7859 = vst.msk [vmem:[#allocation3 + $0x2a8] sm:$0xff] %vm620, %v7792
        %7860 = vst.msk [vmem:[#allocation3 + $0x2c0] sm:$0xff] %vm620, %v7794
        %7861 = vst.msk [vmem:[#allocation3 + $0x2d8] sm:$0xff] %vm620, %v7796
        %7862 = vst.msk [vmem:[#allocation3 + $0x2f0] sm:$0xff] %vm620, %v7798
        %s7863 = scalar_lea.vmem [#allocation2], 512
        %v7864 = vld [vmem:[%s7863] sm:$0xff]
        %v7865 = vld [vmem:[%s7863 + $0x8] sm:$0xff]
        %v7866 = vld [vmem:[%s7863 + $0x20] sm:$0xff]
        %v7867 = vld [vmem:[%s7863 + $0x28] sm:$0xff]
        %v7868 = vld [vmem:[%s7863 + $0x40] sm:$0xff]
        %v7869 = vld [vmem:[%s7863 + $0x48] sm:$0xff]
        %v7870 = vld [vmem:[%s7863 + $0x60] sm:$0xff]
        %v7871 = vld [vmem:[%s7863 + $0x68] sm:$0xff]
        %v7872 = vld [vmem:[%s7863 + $0x80] sm:$0xff]
        %v7873 = vld [vmem:[%s7863 + $0x88] sm:$0xff]
        %v7874 = vld [vmem:[%s7863 + $0xa0] sm:$0xff]
        %v7875 = vld [vmem:[%s7863 + $0xa8] sm:$0xff]
        %v7876 = vld [vmem:[%s7863 + $0xc0] sm:$0xff]
        %v7877 = vld [vmem:[%s7863 + $0xc8] sm:$0xff]
        %v7878 = vld [vmem:[%s7863 + $0xe0] sm:$0xff]
        %v7879 = vld [vmem:[%s7863 + $0xe8] sm:$0xff]
        %v7880 = vld [vmem:[%s7863 + $0x100] sm:$0xff]
        %v7881 = vld [vmem:[%s7863 + $0x108] sm:$0xff]
        %v7882 = vld [vmem:[%s7863 + $0x120] sm:$0xff]
        %v7883 = vld [vmem:[%s7863 + $0x128] sm:$0xff]
        %v7884 = vld [vmem:[%s7863 + $0x140] sm:$0xff]
        %v7885 = vld [vmem:[%s7863 + $0x148] sm:$0xff]
        %v7886 = vld [vmem:[%s7863 + $0x160] sm:$0xff]
        %v7887 = vld [vmem:[%s7863 + $0x168] sm:$0xff]
        %v7888 = vld [vmem:[%s7863 + $0x180] sm:$0xff]
        %v7889 = vld [vmem:[%s7863 + $0x188] sm:$0xff]
        %v7890 = vld [vmem:[%s7863 + $0x1a0] sm:$0xff]
        %v7891 = vld [vmem:[%s7863 + $0x1a8] sm:$0xff]
        %v7892 = vld [vmem:[%s7863 + $0x1c0] sm:$0xff]
        %v7893 = vld [vmem:[%s7863 + $0x1c8] sm:$0xff]
        %v7894 = vld [vmem:[%s7863 + $0x1e0] sm:$0xff]
        %v7895 = vld [vmem:[%s7863 + $0x1e8] sm:$0xff]
        %7928 = vrot.lane.b32.xlu0 %v7864, 64
        %v7929 = vpop.permute.xlu0 %7928
        %7930 = vrot.lane.b32.xlu0 %v7865, 64
        %v7931 = vpop.permute.xlu0 %7930
        %7932 = vrot.lane.b32.xlu0 %v7866, 64
        %v7933 = vpop.permute.xlu0 %7932
        %7934 = vrot.lane.b32.xlu0 %v7867, 64
        %v7935 = vpop.permute.xlu0 %7934
        %7936 = vrot.lane.b32.xlu0 %v7868, 64
        %v7937 = vpop.permute.xlu0 %7936
        %7938 = vrot.lane.b32.xlu0 %v7869, 64
        %v7939 = vpop.permute.xlu0 %7938
        %7940 = vrot.lane.b32.xlu0 %v7870, 64
        %v7941 = vpop.permute.xlu0 %7940
        %7942 = vrot.lane.b32.xlu0 %v7871, 64
        %v7943 = vpop.permute.xlu0 %7942
        %7944 = vrot.lane.b32.xlu0 %v7872, 64
        %v7945 = vpop.permute.xlu0 %7944
        %7946 = vrot.lane.b32.xlu0 %v7873, 64
        %v7947 = vpop.permute.xlu0 %7946
        %7948 = vrot.lane.b32.xlu0 %v7874, 64
        %v7949 = vpop.permute.xlu0 %7948
        %7950 = vrot.lane.b32.xlu0 %v7875, 64
        %v7951 = vpop.permute.xlu0 %7950
        %7952 = vrot.lane.b32.xlu0 %v7876, 64
        %v7953 = vpop.permute.xlu0 %7952
        %7954 = vrot.lane.b32.xlu0 %v7877, 64
        %v7955 = vpop.permute.xlu0 %7954
        %7956 = vrot.lane.b32.xlu0 %v7878, 64
        %v7957 = vpop.permute.xlu0 %7956
        %7958 = vrot.lane.b32.xlu0 %v7879, 64
        %v7959 = vpop.permute.xlu0 %7958
        %7960 = vrot.lane.b32.xlu0 %v7880, 64
        %v7961 = vpop.permute.xlu0 %7960
        %7962 = vrot.lane.b32.xlu0 %v7881, 64
        %v7963 = vpop.permute.xlu0 %7962
        %7964 = vrot.lane.b32.xlu0 %v7882, 64
        %v7965 = vpop.permute.xlu0 %7964
        %7966 = vrot.lane.b32.xlu0 %v7883, 64
        %v7967 = vpop.permute.xlu0 %7966
        %7968 = vrot.lane.b32.xlu0 %v7884, 64
        %v7969 = vpop.permute.xlu0 %7968
        %7970 = vrot.lane.b32.xlu0 %v7885, 64
        %v7971 = vpop.permute.xlu0 %7970
        %7972 = vrot.lane.b32.xlu0 %v7886, 64
        %v7973 = vpop.permute.xlu0 %7972
        %7974 = vrot.lane.b32.xlu0 %v7887, 64
        %v7975 = vpop.permute.xlu0 %7974
        %7976 = vrot.lane.b32.xlu0 %v7888, 64
        %v7977 = vpop.permute.xlu0 %7976
        %7978 = vrot.lane.b32.xlu0 %v7889, 64
        %v7979 = vpop.permute.xlu0 %7978
        %7980 = vrot.lane.b32.xlu0 %v7890, 64
        %v7981 = vpop.permute.xlu0 %7980
        %7982 = vrot.lane.b32.xlu0 %v7891, 64
        %v7983 = vpop.permute.xlu0 %7982
        %7984 = vrot.lane.b32.xlu0 %v7892, 64
        %v7985 = vpop.permute.xlu0 %7984
        %7986 = vrot.lane.b32.xlu0 %v7893, 64
        %v7987 = vpop.permute.xlu0 %7986
        %7988 = vrot.lane.b32.xlu0 %v7894, 64
        %v7989 = vpop.permute.xlu0 %7988
        %7990 = vrot.lane.b32.xlu0 %v7895, 64
        %v7991 = vpop.permute.xlu0 %7990
        %8024 = vst.msk [vmem:[#allocation3 + $0x8] sm:$0xff] %vm813, %v7929
        %8025 = vst.msk [vmem:[#allocation3 + $0x20] sm:$0xff] %vm813, %v7931
        %8026 = vst.msk [vmem:[#allocation3 + $0x38] sm:$0xff] %vm813, %v7933
        %8027 = vst.msk [vmem:[#allocation3 + $0x50] sm:$0xff] %vm813, %v7935
        %8028 = vst.msk [vmem:[#allocation3 + $0x68] sm:$0xff] %vm813, %v7937
        %8029 = vst.msk [vmem:[#allocation3 + $0x80] sm:$0xff] %vm813, %v7939
        %8030 = vst.msk [vmem:[#allocation3 + $0x98] sm:$0xff] %vm813, %v7941
        %8031 = vst.msk [vmem:[#allocation3 + $0xb0] sm:$0xff] %vm813, %v7943
        %8032 = vst.msk [vmem:[#allocation3 + $0xc8] sm:$0xff] %vm813, %v7945
        %8033 = vst.msk [vmem:[#allocation3 + $0xe0] sm:$0xff] %vm813, %v7947
        %8034 = vst.msk [vmem:[#allocation3 + $0xf8] sm:$0xff] %vm813, %v7949
        %8035 = vst.msk [vmem:[#allocation3 + $0x110] sm:$0xff] %vm813, %v7951
        %8036 = vst.msk [vmem:[#allocation3 + $0x128] sm:$0xff] %vm813, %v7953
        %8037 = vst.msk [vmem:[#allocation3 + $0x140] sm:$0xff] %vm813, %v7955
        %8038 = vst.msk [vmem:[#allocation3 + $0x158] sm:$0xff] %vm813, %v7957
        %8039 = vst.msk [vmem:[#allocation3 + $0x170] sm:$0xff] %vm813, %v7959
        %8040 = vst.msk [vmem:[#allocation3 + $0x188] sm:$0xff] %vm813, %v7961
        %8041 = vst.msk [vmem:[#allocation3 + $0x1a0] sm:$0xff] %vm813, %v7963
        %8042 = vst.msk [vmem:[#allocation3 + $0x1b8] sm:$0xff] %vm813, %v7965
        %8043 = vst.msk [vmem:[#allocation3 + $0x1d0] sm:$0xff] %vm813, %v7967
        %8044 = vst.msk [vmem:[#allocation3 + $0x1e8] sm:$0xff] %vm813, %v7969
        %8045 = vst.msk [vmem:[#allocation3 + $0x200] sm:$0xff] %vm813, %v7971
        %8046 = vst.msk [vmem:[#allocation3 + $0x218] sm:$0xff] %vm813, %v7973
        %8047 = vst.msk [vmem:[#allocation3 + $0x230] sm:$0xff] %vm813, %v7975
        %8048 = vst.msk [vmem:[#allocation3 + $0x248] sm:$0xff] %vm813, %v7977
        %8049 = vst.msk [vmem:[#allocation3 + $0x260] sm:$0xff] %vm813, %v7979
        %8050 = vst.msk [vmem:[#allocation3 + $0x278] sm:$0xff] %vm813, %v7981
        %8051 = vst.msk [vmem:[#allocation3 + $0x290] sm:$0xff] %vm813, %v7983
        %8052 = vst.msk [vmem:[#allocation3 + $0x2a8] sm:$0xff] %vm813, %v7985
        %8053 = vst.msk [vmem:[#allocation3 + $0x2c0] sm:$0xff] %vm813, %v7987
        %8054 = vst.msk [vmem:[#allocation3 + $0x2d8] sm:$0xff] %vm813, %v7989
        %8055 = vst.msk [vmem:[#allocation3 + $0x2f0] sm:$0xff] %vm813, %v7991
        %v8056 = vld [vmem:[%s7863 + $0x8] sm:$0xff]
        %v8057 = vld [vmem:[%s7863 + $0x10] sm:$0xff]
        %v8058 = vld [vmem:[%s7863 + $0x28] sm:$0xff]
        %v8059 = vld [vmem:[%s7863 + $0x30] sm:$0xff]
        %v8060 = vld [vmem:[%s7863 + $0x48] sm:$0xff]
        %v8061 = vld [vmem:[%s7863 + $0x50] sm:$0xff]
        %v8062 = vld [vmem:[%s7863 + $0x68] sm:$0xff]
        %v8063 = vld [vmem:[%s7863 + $0x70] sm:$0xff]
        %v8064 = vld [vmem:[%s7863 + $0x88] sm:$0xff]
        %v8065 = vld [vmem:[%s7863 + $0x90] sm:$0xff]
        %v8066 = vld [vmem:[%s7863 + $0xa8] sm:$0xff]
        %v8067 = vld [vmem:[%s7863 + $0xb0] sm:$0xff]
        %v8068 = vld [vmem:[%s7863 + $0xc8] sm:$0xff]
        %v8069 = vld [vmem:[%s7863 + $0xd0] sm:$0xff]
        %v8070 = vld [vmem:[%s7863 + $0xe8] sm:$0xff]
        %v8071 = vld [vmem:[%s7863 + $0xf0] sm:$0xff]
        %v8072 = vld [vmem:[%s7863 + $0x108] sm:$0xff]
        %v8073 = vld [vmem:[%s7863 + $0x110] sm:$0xff]
        %v8074 = vld [vmem:[%s7863 + $0x128] sm:$0xff]
        %v8075 = vld [vmem:[%s7863 + $0x130] sm:$0xff]
        %v8076 = vld [vmem:[%s7863 + $0x148] sm:$0xff]
        %v8077 = vld [vmem:[%s7863 + $0x150] sm:$0xff]
        %v8078 = vld [vmem:[%s7863 + $0x168] sm:$0xff]
        %v8079 = vld [vmem:[%s7863 + $0x170] sm:$0xff]
        %v8080 = vld [vmem:[%s7863 + $0x188] sm:$0xff]
        %v8081 = vld [vmem:[%s7863 + $0x190] sm:$0xff]
        %v8082 = vld [vmem:[%s7863 + $0x1a8] sm:$0xff]
        %v8083 = vld [vmem:[%s7863 + $0x1b0] sm:$0xff]
        %v8084 = vld [vmem:[%s7863 + $0x1c8] sm:$0xff]
        %v8085 = vld [vmem:[%s7863 + $0x1d0] sm:$0xff]
        %v8086 = vld [vmem:[%s7863 + $0x1e8] sm:$0xff]
        %v8087 = vld [vmem:[%s7863 + $0x1f0] sm:$0xff]
        %8120 = vrot.lane.b32.xlu0 %v8056, 96
        %v8121 = vpop.permute.xlu0 %8120
        %8122 = vrot.lane.b32.xlu0 %v8057, 96
        %v8123 = vpop.permute.xlu0 %8122
        %8124 = vrot.lane.b32.xlu0 %v8058, 96
        %v8125 = vpop.permute.xlu0 %8124
        %8126 = vrot.lane.b32.xlu0 %v8059, 96
        %v8127 = vpop.permute.xlu0 %8126
        %8128 = vrot.lane.b32.xlu0 %v8060, 96
        %v8129 = vpop.permute.xlu0 %8128
        %8130 = vrot.lane.b32.xlu0 %v8061, 96
        %v8131 = vpop.permute.xlu0 %8130
        %8132 = vrot.lane.b32.xlu0 %v8062, 96
        %v8133 = vpop.permute.xlu0 %8132
        %8134 = vrot.lane.b32.xlu0 %v8063, 96
        %v8135 = vpop.permute.xlu0 %8134
        %8136 = vrot.lane.b32.xlu0 %v8064, 96
        %v8137 = vpop.permute.xlu0 %8136
        %8138 = vrot.lane.b32.xlu0 %v8065, 96
        %v8139 = vpop.permute.xlu0 %8138
        %8140 = vrot.lane.b32.xlu0 %v8066, 96
        %v8141 = vpop.permute.xlu0 %8140
        %8142 = vrot.lane.b32.xlu0 %v8067, 96
        %v8143 = vpop.permute.xlu0 %8142
        %8144 = vrot.lane.b32.xlu0 %v8068, 96
        %v8145 = vpop.permute.xlu0 %8144
        %8146 = vrot.lane.b32.xlu0 %v8069, 96
        %v8147 = vpop.permute.xlu0 %8146
        %8148 = vrot.lane.b32.xlu0 %v8070, 96
        %v8149 = vpop.permute.xlu0 %8148
        %8150 = vrot.lane.b32.xlu0 %v8071, 96
        %v8151 = vpop.permute.xlu0 %8150
        %8152 = vrot.lane.b32.xlu0 %v8072, 96
        %v8153 = vpop.permute.xlu0 %8152
        %8154 = vrot.lane.b32.xlu0 %v8073, 96
        %v8155 = vpop.permute.xlu0 %8154
        %8156 = vrot.lane.b32.xlu0 %v8074, 96
        %v8157 = vpop.permute.xlu0 %8156
        %8158 = vrot.lane.b32.xlu0 %v8075, 96
        %v8159 = vpop.permute.xlu0 %8158
        %8160 = vrot.lane.b32.xlu0 %v8076, 96
        %v8161 = vpop.permute.xlu0 %8160
        %8162 = vrot.lane.b32.xlu0 %v8077, 96
        %v8163 = vpop.permute.xlu0 %8162
        %8164 = vrot.lane.b32.xlu0 %v8078, 96
        %v8165 = vpop.permute.xlu0 %8164
        %8166 = vrot.lane.b32.xlu0 %v8079, 96
        %v8167 = vpop.permute.xlu0 %8166
        %8168 = vrot.lane.b32.xlu0 %v8080, 96
        %v8169 = vpop.permute.xlu0 %8168
        %8170 = vrot.lane.b32.xlu0 %v8081, 96
        %v8171 = vpop.permute.xlu0 %8170
        %8172 = vrot.lane.b32.xlu0 %v8082, 96
        %v8173 = vpop.permute.xlu0 %8172
        %8174 = vrot.lane.b32.xlu0 %v8083, 96
        %v8175 = vpop.permute.xlu0 %8174
        %8176 = vrot.lane.b32.xlu0 %v8084, 96
        %v8177 = vpop.permute.xlu0 %8176
        %8178 = vrot.lane.b32.xlu0 %v8085, 96
        %v8179 = vpop.permute.xlu0 %8178
        %8180 = vrot.lane.b32.xlu0 %v8086, 96
        %v8181 = vpop.permute.xlu0 %8180
        %8182 = vrot.lane.b32.xlu0 %v8087, 96
        %v8183 = vpop.permute.xlu0 %8182
        %8216 = vst.msk [vmem:[#allocation3 + $0x8] sm:$0xff] %vm1006, %v8121
        %8217 = vst.msk [vmem:[#allocation3 + $0x20] sm:$0xff] %vm1006, %v8123
        %8218 = vst.msk [vmem:[#allocation3 + $0x38] sm:$0xff] %vm1006, %v8125
        %8219 = vst.msk [vmem:[#allocation3 + $0x50] sm:$0xff] %vm1006, %v8127
        %8220 = vst.msk [vmem:[#allocation3 + $0x68] sm:$0xff] %vm1006, %v8129
        %8221 = vst.msk [vmem:[#allocation3 + $0x80] sm:$0xff] %vm1006, %v8131
        %8222 = vst.msk [vmem:[#allocation3 + $0x98] sm:$0xff] %vm1006, %v8133
        %8223 = vst.msk [vmem:[#allocation3 + $0xb0] sm:$0xff] %vm1006, %v8135
        %8224 = vst.msk [vmem:[#allocation3 + $0xc8] sm:$0xff] %vm1006, %v8137
        %8225 = vst.msk [vmem:[#allocation3 + $0xe0] sm:$0xff] %vm1006, %v8139
        %8226 = vst.msk [vmem:[#allocation3 + $0xf8] sm:$0xff] %vm1006, %v8141
        %8227 = vst.msk [vmem:[#allocation3 + $0x110] sm:$0xff] %vm1006, %v8143
        %8228 = vst.msk [vmem:[#allocation3 + $0x128] sm:$0xff] %vm1006, %v8145
        %8229 = vst.msk [vmem:[#allocation3 + $0x140] sm:$0xff] %vm1006, %v8147
        %8230 = vst.msk [vmem:[#allocation3 + $0x158] sm:$0xff] %vm1006, %v8149
        %8231 = vst.msk [vmem:[#allocation3 + $0x170] sm:$0xff] %vm1006, %v8151
        %8232 = vst.msk [vmem:[#allocation3 + $0x188] sm:$0xff] %vm1006, %v8153
        %8233 = vst.msk [vmem:[#allocation3 + $0x1a0] sm:$0xff] %vm1006, %v8155
        %8234 = vst.msk [vmem:[#allocation3 + $0x1b8] sm:$0xff] %vm1006, %v8157
        %8235 = vst.msk [vmem:[#allocation3 + $0x1d0] sm:$0xff] %vm1006, %v8159
        %8236 = vst.msk [vmem:[#allocation3 + $0x1e8] sm:$0xff] %vm1006, %v8161
        %8237 = vst.msk [vmem:[#allocation3 + $0x200] sm:$0xff] %vm1006, %v8163
        %8238 = vst.msk [vmem:[#allocation3 + $0x218] sm:$0xff] %vm1006, %v8165
        %8239 = vst.msk [vmem:[#allocation3 + $0x230] sm:$0xff] %vm1006, %v8167
        %8240 = vst.msk [vmem:[#allocation3 + $0x248] sm:$0xff] %vm1006, %v8169
        %8241 = vst.msk [vmem:[#allocation3 + $0x260] sm:$0xff] %vm1006, %v8171
        %8242 = vst.msk [vmem:[#allocation3 + $0x278] sm:$0xff] %vm1006, %v8173
        %8243 = vst.msk [vmem:[#allocation3 + $0x290] sm:$0xff] %vm1006, %v8175
        %8244 = vst.msk [vmem:[#allocation3 + $0x2a8] sm:$0xff] %vm1006, %v8177
        %8245 = vst.msk [vmem:[#allocation3 + $0x2c0] sm:$0xff] %vm1006, %v8179
        %8246 = vst.msk [vmem:[#allocation3 + $0x2d8] sm:$0xff] %vm1006, %v8181
        %8247 = vst.msk [vmem:[#allocation3 + $0x2f0] sm:$0xff] %vm1006, %v8183
        %v8248 = vld [vmem:[%s7863 + $0x10] sm:$0xff]
        %v8249 = vld [vmem:[%s7863 + $0x18] sm:$0xff]
        %v8250 = vld [vmem:[%s7863 + $0x30] sm:$0xff]
        %v8251 = vld [vmem:[%s7863 + $0x38] sm:$0xff]
        %v8252 = vld [vmem:[%s7863 + $0x50] sm:$0xff]
        %v8253 = vld [vmem:[%s7863 + $0x58] sm:$0xff]
        %v8254 = vld [vmem:[%s7863 + $0x70] sm:$0xff]
        %v8255 = vld [vmem:[%s7863 + $0x78] sm:$0xff]
        %v8256 = vld [vmem:[%s7863 + $0x90] sm:$0xff]
        %v8257 = vld [vmem:[%s7863 + $0x98] sm:$0xff]
        %v8258 = vld [vmem:[%s7863 + $0xb0] sm:$0xff]
        %v8259 = vld [vmem:[%s7863 + $0xb8] sm:$0xff]
        %v8260 = vld [vmem:[%s7863 + $0xd0] sm:$0xff]
        %v8261 = vld [vmem:[%s7863 + $0xd8] sm:$0xff]
        %v8262 = vld [vmem:[%s7863 + $0xf0] sm:$0xff]
        %v8263 = vld [vmem:[%s7863 + $0xf8] sm:$0xff]
        %v8264 = vld [vmem:[%s7863 + $0x110] sm:$0xff]
        %v8265 = vld [vmem:[%s7863 + $0x118] sm:$0xff]
        %v8266 = vld [vmem:[%s7863 + $0x130] sm:$0xff]
        %v8267 = vld [vmem:[%s7863 + $0x138] sm:$0xff]
        %v8268 = vld [vmem:[%s7863 + $0x150] sm:$0xff]
        %v8269 = vld [vmem:[%s7863 + $0x158] sm:$0xff]
        %v8270 = vld [vmem:[%s7863 + $0x170] sm:$0xff]
        %v8271 = vld [vmem:[%s7863 + $0x178] sm:$0xff]
        %v8272 = vld [vmem:[%s7863 + $0x190] sm:$0xff]
        %v8273 = vld [vmem:[%s7863 + $0x198] sm:$0xff]
        %v8274 = vld [vmem:[%s7863 + $0x1b0] sm:$0xff]
        %v8275 = vld [vmem:[%s7863 + $0x1b8] sm:$0xff]
        %v8276 = vld [vmem:[%s7863 + $0x1d0] sm:$0xff]
        %v8277 = vld [vmem:[%s7863 + $0x1d8] sm:$0xff]
        %v8278 = vld [vmem:[%s7863 + $0x1f0] sm:$0xff]
        %v8279 = vld [vmem:[%s7863 + $0x1f8] sm:$0xff]
        %8280 = vst.msk [vmem:[#allocation3 + $0x10] sm:$0xff] %vm201, %v8248
        %8281 = vst.msk [vmem:[#allocation3 + $0x28] sm:$0xff] %vm201, %v8249
        %8282 = vst.msk [vmem:[#allocation3 + $0x40] sm:$0xff] %vm201, %v8250
        %8283 = vst.msk [vmem:[#allocation3 + $0x58] sm:$0xff] %vm201, %v8251
        %8284 = vst.msk [vmem:[#allocation3 + $0x70] sm:$0xff] %vm201, %v8252
        %8285 = vst.msk [vmem:[#allocation3 + $0x88] sm:$0xff] %vm201, %v8253
        %8286 = vst.msk [vmem:[#allocation3 + $0xa0] sm:$0xff] %vm201, %v8254
        %8287 = vst.msk [vmem:[#allocation3 + $0xb8] sm:$0xff] %vm201, %v8255
        %8288 = vst.msk [vmem:[#allocation3 + $0xd0] sm:$0xff] %vm201, %v8256
        %8289 = vst.msk [vmem:[#allocation3 + $0xe8] sm:$0xff] %vm201, %v8257
        %8290 = vst.msk [vmem:[#allocation3 + $0x100] sm:$0xff] %vm201, %v8258
        %8291 = vst.msk [vmem:[#allocation3 + $0x118] sm:$0xff] %vm201, %v8259
        %8292 = vst.msk [vmem:[#allocation3 + $0x130] sm:$0xff] %vm201, %v8260
        %8293 = vst.msk [vmem:[#allocation3 + $0x148] sm:$0xff] %vm201, %v8261
        %8294 = vst.msk [vmem:[#allocation3 + $0x160] sm:$0xff] %vm201, %v8262
        %8295 = vst.msk [vmem:[#allocation3 + $0x178] sm:$0xff] %vm201, %v8263
        %8296 = vst.msk [vmem:[#allocation3 + $0x190] sm:$0xff] %vm201, %v8264
        %8297 = vst.msk [vmem:[#allocation3 + $0x1a8] sm:$0xff] %vm201, %v8265
        %8298 = vst.msk [vmem:[#allocation3 + $0x1c0] sm:$0xff] %vm201, %v8266
        %8299 = vst.msk [vmem:[#allocation3 + $0x1d8] sm:$0xff] %vm201, %v8267
        %8300 = vst.msk [vmem:[#allocation3 + $0x1f0] sm:$0xff] %vm201, %v8268
        %8301 = vst.msk [vmem:[#allocation3 + $0x208] sm:$0xff] %vm201, %v8269
        %8302 = vst.msk [vmem:[#allocation3 + $0x220] sm:$0xff] %vm201, %v8270
        %8303 = vst.msk [vmem:[#allocation3 + $0x238] sm:$0xff] %vm201, %v8271
        %8304 = vst.msk [vmem:[#allocation3 + $0x250] sm:$0xff] %vm201, %v8272
        %8305 = vst.msk [vmem:[#allocation3 + $0x268] sm:$0xff] %vm201, %v8273
        %8306 = vst.msk [vmem:[#allocation3 + $0x280] sm:$0xff] %vm201, %v8274
        %8307 = vst.msk [vmem:[#allocation3 + $0x298] sm:$0xff] %vm201, %v8275
        %8308 = vst.msk [vmem:[#allocation3 + $0x2b0] sm:$0xff] %vm201, %v8276
        %8309 = vst.msk [vmem:[#allocation3 + $0x2c8] sm:$0xff] %vm201, %v8277
        %8310 = vst.msk [vmem:[#allocation3 + $0x2e0] sm:$0xff] %vm201, %v8278
        %8311 = vst.msk [vmem:[#allocation3 + $0x2f8] sm:$0xff] %vm201, %v8279
        %v8312 = vld [vmem:[#allocation3] sm:$0xff]
        %v8313 = vld [vmem:[#allocation3 + $0x8] sm:$0xff]
        %v8314 = vld [vmem:[#allocation3 + $0x10] sm:$0xff]
        %v8315 = vld [vmem:[#allocation3 + $0x18] sm:$0xff]
        %v8316 = vld [vmem:[#allocation3 + $0x20] sm:$0xff]
        %v8317 = vld [vmem:[#allocation3 + $0x28] sm:$0xff]
        %v8318 = vld [vmem:[#allocation3 + $0x30] sm:$0xff]
        %v8319 = vld [vmem:[#allocation3 + $0x38] sm:$0xff]
        %v8320 = vld [vmem:[#allocation3 + $0x40] sm:$0xff]
        %v8321 = vld [vmem:[#allocation3 + $0x48] sm:$0xff]
        %v8322 = vld [vmem:[#allocation3 + $0x50] sm:$0xff]
        %v8323 = vld [vmem:[#allocation3 + $0x58] sm:$0xff]
        %v8324 = vld [vmem:[#allocation3 + $0x60] sm:$0xff]
        %v8325 = vld [vmem:[#allocation3 + $0x68] sm:$0xff]
        %v8326 = vld [vmem:[#allocation3 + $0x70] sm:$0xff]
        %v8327 = vld [vmem:[#allocation3 + $0x78] sm:$0xff]
        %v8328 = vld [vmem:[#allocation3 + $0x80] sm:$0xff]
        %v8329 = vld [vmem:[#allocation3 + $0x88] sm:$0xff]
        %v8330 = vld [vmem:[#allocation3 + $0x90] sm:$0xff]
        %v8331 = vld [vmem:[#allocation3 + $0x98] sm:$0xff]
        %v8332 = vld [vmem:[#allocation3 + $0xa0] sm:$0xff]
        %v8333 = vld [vmem:[#allocation3 + $0xa8] sm:$0xff]
        %v8334 = vld [vmem:[#allocation3 + $0xb0] sm:$0xff]
        %v8335 = vld [vmem:[#allocation3 + $0xb8] sm:$0xff]
        %v8336 = vld [vmem:[#allocation3 + $0xc0] sm:$0xff]
        %v8337 = vld [vmem:[#allocation3 + $0xc8] sm:$0xff]
        %v8338 = vld [vmem:[#allocation3 + $0xd0] sm:$0xff]
        %v8339 = vld [vmem:[#allocation3 + $0xd8] sm:$0xff]
        %v8340 = vld [vmem:[#allocation3 + $0xe0] sm:$0xff]
        %v8341 = vld [vmem:[#allocation3 + $0xe8] sm:$0xff]
        %v8342 = vld [vmem:[#allocation3 + $0xf0] sm:$0xff]
        %v8343 = vld [vmem:[#allocation3 + $0xf8] sm:$0xff]
        %v8344 = vld [vmem:[#allocation3 + $0x100] sm:$0xff]
        %v8345 = vld [vmem:[#allocation3 + $0x108] sm:$0xff]
        %v8346 = vld [vmem:[#allocation3 + $0x110] sm:$0xff]
        %v8347 = vld [vmem:[#allocation3 + $0x118] sm:$0xff]
        %v8348 = vld [vmem:[#allocation3 + $0x120] sm:$0xff]
        %v8349 = vld [vmem:[#allocation3 + $0x128] sm:$0xff]
        %v8350 = vld [vmem:[#allocation3 + $0x130] sm:$0xff]
        %v8351 = vld [vmem:[#allocation3 + $0x138] sm:$0xff]
        %v8352 = vld [vmem:[#allocation3 + $0x140] sm:$0xff]
        %v8353 = vld [vmem:[#allocation3 + $0x148] sm:$0xff]
        %v8354 = vld [vmem:[#allocation3 + $0x150] sm:$0xff]
        %v8355 = vld [vmem:[#allocation3 + $0x158] sm:$0xff]
        %v8356 = vld [vmem:[#allocation3 + $0x160] sm:$0xff]
        %v8357 = vld [vmem:[#allocation3 + $0x168] sm:$0xff]
        %v8358 = vld [vmem:[#allocation3 + $0x170] sm:$0xff]
        %v8359 = vld [vmem:[#allocation3 + $0x178] sm:$0xff]
        %v8360 = vld [vmem:[#allocation3 + $0x180] sm:$0xff]
        %v8361 = vld [vmem:[#allocation3 + $0x188] sm:$0xff]
        %v8362 = vld [vmem:[#allocation3 + $0x190] sm:$0xff]
        %v8363 = vld [vmem:[#allocation3 + $0x198] sm:$0xff]
        %v8364 = vld [vmem:[#allocation3 + $0x1a0] sm:$0xff]
        %v8365 = vld [vmem:[#allocation3 + $0x1a8] sm:$0xff]
        %v8366 = vld [vmem:[#allocation3 + $0x1b0] sm:$0xff]
        %v8367 = vld [vmem:[#allocation3 + $0x1b8] sm:$0xff]
        %v8368 = vld [vmem:[#allocation3 + $0x1c0] sm:$0xff]
        %v8369 = vld [vmem:[#allocation3 + $0x1c8] sm:$0xff]
        %v8370 = vld [vmem:[#allocation3 + $0x1d0] sm:$0xff]
        %v8371 = vld [vmem:[#allocation3 + $0x1d8] sm:$0xff]
        %v8372 = vld [vmem:[#allocation3 + $0x1e0] sm:$0xff]
        %v8373 = vld [vmem:[#allocation3 + $0x1e8] sm:$0xff]
        %v8374 = vld [vmem:[#allocation3 + $0x1f0] sm:$0xff]
        %v8375 = vld [vmem:[#allocation3 + $0x1f8] sm:$0xff]
        %v8376 = vld [vmem:[#allocation3 + $0x200] sm:$0xff]
        %v8377 = vld [vmem:[#allocation3 + $0x208] sm:$0xff]
        %v8378 = vld [vmem:[#allocation3 + $0x210] sm:$0xff]
        %v8379 = vld [vmem:[#allocation3 + $0x218] sm:$0xff]
        %v8380 = vld [vmem:[#allocation3 + $0x220] sm:$0xff]
        %v8381 = vld [vmem:[#allocation3 + $0x228] sm:$0xff]
        %v8382 = vld [vmem:[#allocation3 + $0x230] sm:$0xff]
        %v8383 = vld [vmem:[#allocation3 + $0x238] sm:$0xff]
        %v8384 = vld [vmem:[#allocation3 + $0x240] sm:$0xff]
        %v8385 = vld [vmem:[#allocation3 + $0x248] sm:$0xff]
        %v8386 = vld [vmem:[#allocation3 + $0x250] sm:$0xff]
        %v8387 = vld [vmem:[#allocation3 + $0x258] sm:$0xff]
        %v8388 = vld [vmem:[#allocation3 + $0x260] sm:$0xff]
        %v8389 = vld [vmem:[#allocation3 + $0x268] sm:$0xff]
        %v8390 = vld [vmem:[#allocation3 + $0x270] sm:$0xff]
        %v8391 = vld [vmem:[#allocation3 + $0x278] sm:$0xff]
        %v8392 = vld [vmem:[#allocation3 + $0x280] sm:$0xff]
        %v8393 = vld [vmem:[#allocation3 + $0x288] sm:$0xff]
        %v8394 = vld [vmem:[#allocation3 + $0x290] sm:$0xff]
        %v8395 = vld [vmem:[#allocation3 + $0x298] sm:$0xff]
        %v8396 = vld [vmem:[#allocation3 + $0x2a0] sm:$0xff]
        %v8397 = vld [vmem:[#allocation3 + $0x2a8] sm:$0xff]
        %v8398 = vld [vmem:[#allocation3 + $0x2b0] sm:$0xff]
        %v8399 = vld [vmem:[#allocation3 + $0x2b8] sm:$0xff]
        %v8400 = vld [vmem:[#allocation3 + $0x2c0] sm:$0xff]
        %v8401 = vld [vmem:[#allocation3 + $0x2c8] sm:$0xff]
        %v8402 = vld [vmem:[#allocation3 + $0x2d0] sm:$0xff]
        %v8403 = vld [vmem:[#allocation3 + $0x2d8] sm:$0xff]
        %v8404 = vld [vmem:[#allocation3 + $0x2e0] sm:$0xff]
        %v8405 = vld [vmem:[#allocation3 + $0x2e8] sm:$0xff]
        %v8406 = vld [vmem:[#allocation3 + $0x2f0] sm:$0xff]
        %v8407 = vld [vmem:[#allocation3 + $0x2f8] sm:$0xff]
        %s8408 = scalar_lea.vmem %s1, 864
        %v8409 = vld [vmem:[%s8408] sm:$0xff]
        %v8410 = vld [vmem:[%s8408 + $0x8] sm:$0xff]
        %v8411 = vld [vmem:[%s8408 + $0x10] sm:$0xff]
        %v8412 = vld [vmem:[%s8408 + $0x18] sm:$0xff]
        %v8413 = vld [vmem:[%s8408 + $0x20] sm:$0xff]
        %v8414 = vld [vmem:[%s8408 + $0x28] sm:$0xff]
        %v8415 = vld [vmem:[%s8408 + $0x30] sm:$0xff]
        %v8416 = vld [vmem:[%s8408 + $0x38] sm:$0xff]
        %v8417 = vld [vmem:[%s8408 + $0x40] sm:$0xff]
        %v8418 = vld [vmem:[%s8408 + $0x48] sm:$0xff]
        %v8419 = vld [vmem:[%s8408 + $0x50] sm:$0xff]
        %v8420 = vld [vmem:[%s8408 + $0x58] sm:$0xff]
        %v8421 = vld [vmem:[%s8408 + $0x60] sm:$0xff]
        %v8422 = vld [vmem:[%s8408 + $0x68] sm:$0xff]
        %v8423 = vld [vmem:[%s8408 + $0x70] sm:$0xff]
        %v8424 = vld [vmem:[%s8408 + $0x78] sm:$0xff]
        %v8425 = vld [vmem:[%s8408 + $0x80] sm:$0xff]
        %v8426 = vld [vmem:[%s8408 + $0x88] sm:$0xff]
        %v8427 = vld [vmem:[%s8408 + $0x90] sm:$0xff]
        %v8428 = vld [vmem:[%s8408 + $0x98] sm:$0xff]
        %v8429 = vld [vmem:[%s8408 + $0xa0] sm:$0xff]
        %v8430 = vld [vmem:[%s8408 + $0xa8] sm:$0xff]
        %v8431 = vld [vmem:[%s8408 + $0xb0] sm:$0xff]
        %v8432 = vld [vmem:[%s8408 + $0xb8] sm:$0xff]
        %v8433 = vld [vmem:[%s8408 + $0xc0] sm:$0xff]
        %v8434 = vld [vmem:[%s8408 + $0xc8] sm:$0xff]
        %v8435 = vld [vmem:[%s8408 + $0xd0] sm:$0xff]
        %v8436 = vld [vmem:[%s8408 + $0xd8] sm:$0xff]
        %v8437 = vld [vmem:[%s8408 + $0xe0] sm:$0xff]
        %v8438 = vld [vmem:[%s8408 + $0xe8] sm:$0xff]
        %v8439 = vld [vmem:[%s8408 + $0xf0] sm:$0xff]
        %v8440 = vld [vmem:[%s8408 + $0xf8] sm:$0xff]
        %v8441 = vld [vmem:[%s8408 + $0x100] sm:$0xff]
        %v8442 = vld [vmem:[%s8408 + $0x108] sm:$0xff]
        %v8443 = vld [vmem:[%s8408 + $0x110] sm:$0xff]
        %v8444 = vld [vmem:[%s8408 + $0x118] sm:$0xff]
        %v8445 = vld [vmem:[%s2 + $0x3] sm:$0x1]
        %v8446 = vlaneseq
        %v8447 = vshrl.u32 %v8446, 7
        %v8448 = vsub.s32 0, %v8447
        %v8449 = vrot.slane %v8445, %v8448
        %v8451 = vsel %vm201, %v8314, 0
        %v8454 = vsel %vm201, %v8317, 0
        %v8457 = vsel %vm201, %v8320, 0
        %v8460 = vsel %vm201, %v8323, 0
        %v8463 = vsel %vm201, %v8326, 0
        %v8466 = vsel %vm201, %v8329, 0
        %v8469 = vsel %vm201, %v8332, 0
        %v8472 = vsel %vm201, %v8335, 0
        %v8475 = vsel %vm201, %v8338, 0
        %v8478 = vsel %vm201, %v8341, 0
        %v8481 = vsel %vm201, %v8344, 0
        %v8484 = vsel %vm201, %v8347, 0
        %v8487 = vsel %vm201, %v8350, 0
        %v8490 = vsel %vm201, %v8353, 0
        %v8493 = vsel %vm201, %v8356, 0
        %v8496 = vsel %vm201, %v8359, 0
        %v8499 = vsel %vm201, %v8362, 0
        %v8502 = vsel %vm201, %v8365, 0
        %v8505 = vsel %vm201, %v8368, 0
        %v8508 = vsel %vm201, %v8371, 0
        %v8511 = vsel %vm201, %v8374, 0
        %v8514 = vsel %vm201, %v8377, 0
        %v8517 = vsel %vm201, %v8380, 0
        %v8520 = vsel %vm201, %v8383, 0
        %v8523 = vsel %vm201, %v8386, 0
        %v8526 = vsel %vm201, %v8389, 0
        %v8529 = vsel %vm201, %v8392, 0
        %v8532 = vsel %vm201, %v8395, 0
        %v8535 = vsel %vm201, %v8398, 0
        %v8538 = vsel %vm201, %v8401, 0
        %v8541 = vsel %vm201, %v8404, 0
        %v8544 = vsel %vm201, %v8407, 0
        %8546 = vmatprep.subr.mxu0 0.0
        %8547 = vmatpush1.msra.mxu0 %v8424
        %8548 = vmatprep.subr.mxu0 0.0
        %8549 = vmatpush1.msra.mxu0 %v8423
        %8550 = vmatprep.subr.mxu0 0.0
        %8551 = vmatpush1.msra.mxu0 %v8422
        %8552 = vmatprep.subr.mxu0 0.0
        %8553 = vmatpush1.msra.mxu0 %v8421
        %8554 = vmatprep.subr.mxu0 0.0
        %8555 = vmatpush1.msra.mxu0 %v8420
        %8556 = vmatprep.subr.mxu0 0.0
        %8557 = vmatpush1.msra.mxu0 %v8419
        %8558 = vmatprep.subr.mxu0 0.0
        %8559 = vmatpush1.msra.mxu0 %v8418
        %8560 = vmatprep.subr.mxu0 0.0
        %8561 = vmatpush1.msra.mxu0 %v8417
        %8562 = vmatprep.subr.mxu0 0.0
        %8563 = vmatpush1.msra.mxu0 %v8416
        %8564 = vmatprep.subr.mxu0 0.0
        %8565 = vmatpush1.msra.mxu0 %v8415
        %8566 = vmatprep.subr.mxu0 0.0
        %8567 = vmatpush1.msra.mxu0 %v8414
        %8568 = vmatprep.subr.mxu0 0.0
        %8569 = vmatpush1.msra.mxu0 %v8413
        %8570 = vmatprep.subr.mxu0 0.0
        %8571 = vmatpush1.msra.mxu0 %v8412
        %8572 = vmatprep.subr.mxu0 0.0
        %8573 = vmatpush1.msra.mxu0 %v8411
        %8574 = vmatprep.subr.mxu0 0.0
        %8575 = vmatpush1.msra.mxu0 %v8410
        %8576 = vmatprep.subr.mxu0 0.0
        %8577 = vmatpush1.msra.mxu0 %v8409
        %8578 = vmatprep.subr.mxu0 0.0
        %8579 = vmatpush2.msra.mxu0 %v8440
        %8580 = vmatprep.subr.mxu0 0.0
        %8581 = vmatpush2.msra.mxu0 %v8439
        %8582 = vmatprep.subr.mxu0 0.0
        %8583 = vmatpush2.msra.mxu0 %v8438
        %8584 = vmatprep.subr.mxu0 0.0
        %8585 = vmatpush2.msra.mxu0 %v8437
        %8586 = vmatprep.subr.mxu0 0.0
        %8587 = vmatpush2.msra.mxu0 %v8436
        %8588 = vmatprep.subr.mxu0 0.0
        %8589 = vmatpush2.msra.mxu0 %v8435
        %8590 = vmatprep.subr.mxu0 0.0
        %8591 = vmatpush2.msra.mxu0 %v8434
        %8592 = vmatprep.subr.mxu0 0.0
        %8593 = vmatpush2.msra.mxu0 %v8433
        %8594 = vmatprep.subr.mxu0 0.0
        %8595 = vmatpush2.msra.mxu0 %v8432
        %8596 = vmatprep.subr.mxu0 0.0
        %8597 = vmatpush2.msra.mxu0 %v8431
        %8598 = vmatprep.subr.mxu0 0.0
        %8599 = vmatpush2.msra.mxu0 %v8430
        %8600 = vmatprep.subr.mxu0 0.0
        %8601 = vmatpush2.msra.mxu0 %v8429
        %8602 = vmatprep.subr.mxu0 0.0
        %8603 = vmatpush2.msra.mxu0 %v8428
        %8604 = vmatprep.subr.mxu0 0.0
        %8605 = vmatpush2.msra.mxu0 %v8427
        %8606 = vmatprep.subr.mxu0 0.0
        %8607 = vmatpush2.msra.mxu0 %v8426
        %8608 = vmatprep.subr.mxu0 0.0
        %8609 = vmatpush2.msra.mxu0 %v8425
        %8610 = vmatprep.mubr.f32.mxu0 %v8313
        %8611 = vmatmul.mubr.f32.gmra.mxu0 %v8312
        %v8612 = vpop.f32.mrf.mxu0
        %v8613 = vadd.f32 %v8449, %v8612
        %v8614 = vpop.f32.mrf.mxu0
        %8615 = vmatprep.mubr.f32.mxu0 %v8316
        %8616 = vmatmul.mubr.f32.gmra.mxu0 %v8315
        %v8617 = vpop.f32.mrf.mxu0
        %v8618 = vadd.f32 %v8449, %v8617
        %v8619 = vpop.f32.mrf.mxu0
        %8620 = vmatprep.mubr.f32.mxu0 %v8319
        %8621 = vmatmul.mubr.f32.gmra.mxu0 %v8318
        %v8622 = vpop.f32.mrf.mxu0
        %v8623 = vadd.f32 %v8449, %v8622
        %v8624 = vpop.f32.mrf.mxu0
        %8625 = vmatprep.mubr.f32.mxu0 %v8322
        %8626 = vmatmul.mubr.f32.gmra.mxu0 %v8321
        %v8627 = vpop.f32.mrf.mxu0
        %v8628 = vadd.f32 %v8449, %v8627
        %v8629 = vpop.f32.mrf.mxu0
        %8630 = vmatprep.mubr.f32.mxu0 %v8325
        %8631 = vmatmul.mubr.f32.gmra.mxu0 %v8324
        %v8632 = vpop.f32.mrf.mxu0
        %v8633 = vadd.f32 %v8449, %v8632
        %v8634 = vpop.f32.mrf.mxu0
        %8635 = vmatprep.mubr.f32.mxu0 %v8328
        %8636 = vmatmul.mubr.f32.gmra.mxu0 %v8327
        %v8637 = vpop.f32.mrf.mxu0
        %v8638 = vadd.f32 %v8449, %v8637
        %v8639 = vpop.f32.mrf.mxu0
        %8640 = vmatprep.mubr.f32.mxu0 %v8331
        %8641 = vmatmul.mubr.f32.gmra.mxu0 %v8330
        %v8642 = vpop.f32.mrf.mxu0
        %v8643 = vadd.f32 %v8449, %v8642
        %v8644 = vpop.f32.mrf.mxu0
        %8645 = vmatprep.mubr.f32.mxu0 %v8334
        %8646 = vmatmul.mubr.f32.gmra.mxu0 %v8333
        %v8647 = vpop.f32.mrf.mxu0
        %v8648 = vadd.f32 %v8449, %v8647
        %v8649 = vpop.f32.mrf.mxu0
        %8650 = vmatprep.mubr.f32.mxu0 %v8337
        %8651 = vmatmul.mubr.f32.gmra.mxu0 %v8336
        %v8652 = vpop.f32.mrf.mxu0
        %v8653 = vadd.f32 %v8449, %v8652
        %v8654 = vpop.f32.mrf.mxu0
        %8655 = vmatprep.mubr.f32.mxu0 %v8340
        %8656 = vmatmul.mubr.f32.gmra.mxu0 %v8339
        %v8657 = vpop.f32.mrf.mxu0
        %v8658 = vadd.f32 %v8449, %v8657
        %v8659 = vpop.f32.mrf.mxu0
        %8660 = vmatprep.mubr.f32.mxu0 %v8343
        %8661 = vmatmul.mubr.f32.gmra.mxu0 %v8342
        %v8662 = vpop.f32.mrf.mxu0
        %v8663 = vadd.f32 %v8449, %v8662
        %v8664 = vpop.f32.mrf.mxu0
        %8665 = vmatprep.mubr.f32.mxu0 %v8346
        %8666 = vmatmul.mubr.f32.gmra.mxu0 %v8345
        %v8667 = vpop.f32.mrf.mxu0
        %v8668 = vadd.f32 %v8449, %v8667
        %v8669 = vpop.f32.mrf.mxu0
        %8670 = vmatprep.mubr.f32.mxu0 %v8349
        %8671 = vmatmul.mubr.f32.gmra.mxu0 %v8348
        %v8672 = vpop.f32.mrf.mxu0
        %v8673 = vadd.f32 %v8449, %v8672
        %v8674 = vpop.f32.mrf.mxu0
        %8675 = vmatprep.mubr.f32.mxu0 %v8352
        %8676 = vmatmul.mubr.f32.gmra.mxu0 %v8351
        %v8677 = vpop.f32.mrf.mxu0
        %v8678 = vadd.f32 %v8449, %v8677
        %v8679 = vpop.f32.mrf.mxu0
        %8680 = vmatprep.mubr.f32.mxu0 %v8355
        %8681 = vmatmul.mubr.f32.gmra.mxu0 %v8354
        %v8682 = vpop.f32.mrf.mxu0
        %v8683 = vadd.f32 %v8449, %v8682
        %v8684 = vpop.f32.mrf.mxu0
        %8685 = vmatprep.mubr.f32.mxu0 %v8358
        %8686 = vmatmul.mubr.f32.gmra.mxu0 %v8357
        %v8687 = vpop.f32.mrf.mxu0
        %v8688 = vadd.f32 %v8449, %v8687
        %v8689 = vpop.f32.mrf.mxu0
        %8690 = vmatprep.mubr.f32.mxu0 %v8361
        %8691 = vmatmul.mubr.f32.gmra.mxu0 %v8360
        %v8692 = vpop.f32.mrf.mxu0
        %v8693 = vadd.f32 %v8449, %v8692
        %v8694 = vpop.f32.mrf.mxu0
        %8695 = vmatprep.mubr.f32.mxu0 %v8364
        %8696 = vmatmul.mubr.f32.gmra.mxu0 %v8363
        %v8697 = vpop.f32.mrf.mxu0
        %v8698 = vadd.f32 %v8449, %v8697
        %v8699 = vpop.f32.mrf.mxu0
        %8700 = vmatprep.mubr.f32.mxu0 %v8367
        %8701 = vmatmul.mubr.f32.gmra.mxu0 %v8366
        %v8702 = vpop.f32.mrf.mxu0
        %v8703 = vadd.f32 %v8449, %v8702
        %v8704 = vpop.f32.mrf.mxu0
        %8705 = vmatprep.mubr.f32.mxu0 %v8370
        %8706 = vmatmul.mubr.f32.gmra.mxu0 %v8369
        %v8707 = vpop.f32.mrf.mxu0
        %v8708 = vadd.f32 %v8449, %v8707
        %v8709 = vpop.f32.mrf.mxu0
        %8710 = vmatprep.mubr.f32.mxu0 %v8373
        %8711 = vmatmul.mubr.f32.gmra.mxu0 %v8372
        %v8712 = vpop.f32.mrf.mxu0
        %v8713 = vadd.f32 %v8449, %v8712
        %v8714 = vpop.f32.mrf.mxu0
        %8715 = vmatprep.mubr.f32.mxu0 %v8376
        %8716 = vmatmul.mubr.f32.gmra.mxu0 %v8375
        %v8717 = vpop.f32.mrf.mxu0
        %v8718 = vadd.f32 %v8449, %v8717
        %v8719 = vpop.f32.mrf.mxu0
        %8720 = vmatprep.mubr.f32.mxu0 %v8379
        %8721 = vmatmul.mubr.f32.gmra.mxu0 %v8378
        %v8722 = vpop.f32.mrf.mxu0
        %v8723 = vadd.f32 %v8449, %v8722
        %v8724 = vpop.f32.mrf.mxu0
        %8725 = vmatprep.mubr.f32.mxu0 %v8382
        %8726 = vmatmul.mubr.f32.gmra.mxu0 %v8381
        %v8727 = vpop.f32.mrf.mxu0
        %v8728 = vadd.f32 %v8449, %v8727
        %v8729 = vpop.f32.mrf.mxu0
        %8730 = vmatprep.mubr.f32.mxu0 %v8385
        %8731 = vmatmul.mubr.f32.gmra.mxu0 %v8384
        %v8732 = vpop.f32.mrf.mxu0
        %v8733 = vadd.f32 %v8449, %v8732
        %v8734 = vpop.f32.mrf.mxu0
        %8735 = vmatprep.mubr.f32.mxu0 %v8388
        %8736 = vmatmul.mubr.f32.gmra.mxu0 %v8387
        %v8737 = vpop.f32.mrf.mxu0
        %v8738 = vadd.f32 %v8449, %v8737
        %v8739 = vpop.f32.mrf.mxu0
        %8740 = vmatprep.mubr.f32.mxu0 %v8391
        %8741 = vmatmul.mubr.f32.gmra.mxu0 %v8390
        %v8742 = vpop.f32.mrf.mxu0
        %v8743 = vadd.f32 %v8449, %v8742
        %v8744 = vpop.f32.mrf.mxu0
        %8745 = vmatprep.mubr.f32.mxu0 %v8394
        %8746 = vmatmul.mubr.f32.gmra.mxu0 %v8393
        %v8747 = vpop.f32.mrf.mxu0
        %v8748 = vadd.f32 %v8449, %v8747
        %v8749 = vpop.f32.mrf.mxu0
        %8750 = vmatprep.mubr.f32.mxu0 %v8397
        %8751 = vmatmul.mubr.f32.gmra.mxu0 %v8396
        %v8752 = vpop.f32.mrf.mxu0
        %v8753 = vadd.f32 %v8449, %v8752
        %v8754 = vpop.f32.mrf.mxu0
        %8755 = vmatprep.mubr.f32.mxu0 %v8400
        %8756 = vmatmul.mubr.f32.gmra.mxu0 %v8399
        %v8757 = vpop.f32.mrf.mxu0
        %v8758 = vadd.f32 %v8449, %v8757
        %v8759 = vpop.f32.mrf.mxu0
        %8760 = vmatprep.mubr.f32.mxu0 %v8403
        %8761 = vmatmul.mubr.f32.gmra.mxu0 %v8402
        %v8762 = vpop.f32.mrf.mxu0
        %v8763 = vadd.f32 %v8449, %v8762
        %v8764 = vpop.f32.mrf.mxu0
        %8765 = vmatprep.mubr.f32.mxu0 %v8406
        %8766 = vmatmul.mubr.f32.gmra.mxu0 %v8405
        %v8767 = vpop.f32.mrf.mxu0
        %v8768 = vadd.f32 %v8449, %v8767
        %v8769 = vpop.f32.mrf.mxu0
        %8770 = vdwg.mxu0
        %8771 = vmatprep.subr.mxu0 0.0
        %8772 = vmatpush1.msra.mxu0 0.0
        %8773 = vmatprep.subr.mxu0 0.0
        %8774 = vmatpush1.msra.mxu0 0.0
        %8775 = vmatprep.subr.mxu0 0.0
        %8776 = vmatpush1.msra.mxu0 0.0
        %8777 = vmatprep.subr.mxu0 0.0
        %8778 = vmatpush1.msra.mxu0 0.0
        %8779 = vmatprep.subr.mxu0 0.0
        %8780 = vmatpush1.msra.mxu0 0.0
        %8781 = vmatprep.subr.mxu0 0.0
        %8782 = vmatpush1.msra.mxu0 0.0
        %8783 = vmatprep.subr.mxu0 0.0
        %8784 = vmatpush1.msra.mxu0 0.0
        %8785 = vmatprep.subr.mxu0 0.0
        %8786 = vmatpush1.msra.mxu0 0.0
        %8787 = vmatprep.subr.mxu0 0.0
        %8788 = vmatpush1.msra.mxu0 0.0
        %8789 = vmatprep.subr.mxu0 0.0
        %8790 = vmatpush1.msra.mxu0 0.0
        %8791 = vmatprep.subr.mxu0 0.0
        %8792 = vmatpush1.msra.mxu0 0.0
        %8793 = vmatprep.subr.mxu0 0.0
        %8794 = vmatpush1.msra.mxu0 0.0
        %8795 = vmatprep.subr.mxu0 0.0
        %8796 = vmatpush1.msra.mxu0 %v8444
        %8797 = vmatprep.subr.mxu0 0.0
        %8798 = vmatpush1.msra.mxu0 %v8443
        %8799 = vmatprep.subr.mxu0 0.0
        %8800 = vmatpush1.msra.mxu0 %v8442
        %8801 = vmatprep.subr.mxu0 0.0
        %8802 = vmatpush1.msra.mxu0 %v8441
        %8803 = vmatprep.subr.mxu0 0.0
        %8804 = vmatpush2.msra.mxu0 0.0
        %8805 = vmatprep.subr.mxu0 0.0
        %8806 = vmatpush2.msra.mxu0 0.0
        %8807 = vmatprep.subr.mxu0 0.0
        %8808 = vmatpush2.msra.mxu0 0.0
        %8809 = vmatprep.subr.mxu0 0.0
        %8810 = vmatpush2.msra.mxu0 0.0
        %8811 = vmatprep.subr.mxu0 0.0
        %8812 = vmatpush2.msra.mxu0 0.0
        %8813 = vmatprep.subr.mxu0 0.0
        %8814 = vmatpush2.msra.mxu0 0.0
        %8815 = vmatprep.subr.mxu0 0.0
        %8816 = vmatpush2.msra.mxu0 0.0
        %8817 = vmatprep.subr.mxu0 0.0
        %8818 = vmatpush2.msra.mxu0 0.0
        %8819 = vmatprep.subr.mxu0 0.0
        %8820 = vmatpush2.msra.mxu0 0.0
        %8821 = vmatprep.subr.mxu0 0.0
        %8822 = vmatpush2.msra.mxu0 0.0
        %8823 = vmatprep.subr.mxu0 0.0
        %8824 = vmatpush2.msra.mxu0 0.0
        %8825 = vmatprep.subr.mxu0 0.0
        %8826 = vmatpush2.msra.mxu0 0.0
        %8827 = vmatprep.subr.mxu0 0.0
        %8828 = vmatpush2.msra.mxu0 0.0
        %8829 = vmatprep.subr.mxu0 0.0
        %8830 = vmatpush2.msra.mxu0 0.0
        %8831 = vmatprep.subr.mxu0 0.0
        %8832 = vmatpush2.msra.mxu0 0.0
        %8833 = vmatprep.subr.mxu0 0.0
        %8834 = vmatpush2.msra.mxu0 0.0
        %8835 = vmatprep.mubr.f32.mxu0 0.0
        %8836 = vmatmul.mubr.f32.gmra.mxu0 %v8451
        %v8837 = vpop.f32.mrf.mxu0
        %v8838 = vadd.f32 %v8613, %v8837
        %v8839 = vpop.f32.mrf.mxu0
        %8840 = vmatprep.mubr.f32.mxu0 0.0
        %8841 = vmatmul.mubr.f32.gmra.mxu0 %v8454
        %v8842 = vpop.f32.mrf.mxu0
        %v8843 = vadd.f32 %v8618, %v8842
        %v8844 = vpop.f32.mrf.mxu0
        %8845 = vmatprep.mubr.f32.mxu0 0.0
        %8846 = vmatmul.mubr.f32.gmra.mxu0 %v8457
        %v8847 = vpop.f32.mrf.mxu0
        %v8848 = vadd.f32 %v8623, %v8847
        %v8849 = vpop.f32.mrf.mxu0
        %8850 = vmatprep.mubr.f32.mxu0 0.0
        %8851 = vmatmul.mubr.f32.gmra.mxu0 %v8460
        %v8852 = vpop.f32.mrf.mxu0
        %v8853 = vadd.f32 %v8628, %v8852
        %v8854 = vpop.f32.mrf.mxu0
        %8855 = vmatprep.mubr.f32.mxu0 0.0
        %8856 = vmatmul.mubr.f32.gmra.mxu0 %v8463
        %v8857 = vpop.f32.mrf.mxu0
        %v8858 = vadd.f32 %v8633, %v8857
        %v8859 = vpop.f32.mrf.mxu0
        %8860 = vmatprep.mubr.f32.mxu0 0.0
        %8861 = vmatmul.mubr.f32.gmra.mxu0 %v8466
        %v8862 = vpop.f32.mrf.mxu0
        %v8863 = vadd.f32 %v8638, %v8862
        %v8864 = vpop.f32.mrf.mxu0
        %8865 = vmatprep.mubr.f32.mxu0 0.0
        %8866 = vmatmul.mubr.f32.gmra.mxu0 %v8469
        %v8867 = vpop.f32.mrf.mxu0
        %v8868 = vadd.f32 %v8643, %v8867
        %v8869 = vpop.f32.mrf.mxu0
        %8870 = vmatprep.mubr.f32.mxu0 0.0
        %8871 = vmatmul.mubr.f32.gmra.mxu0 %v8472
        %v8872 = vpop.f32.mrf.mxu0
        %v8873 = vadd.f32 %v8648, %v8872
        %v8874 = vpop.f32.mrf.mxu0
        %8875 = vmatprep.mubr.f32.mxu0 0.0
        %8876 = vmatmul.mubr.f32.gmra.mxu0 %v8475
        %v8877 = vpop.f32.mrf.mxu0
        %v8878 = vadd.f32 %v8653, %v8877
        %v8879 = vpop.f32.mrf.mxu0
        %8880 = vmatprep.mubr.f32.mxu0 0.0
        %8881 = vmatmul.mubr.f32.gmra.mxu0 %v8478
        %v8882 = vpop.f32.mrf.mxu0
        %v8883 = vadd.f32 %v8658, %v8882
        %v8884 = vpop.f32.mrf.mxu0
        %8885 = vmatprep.mubr.f32.mxu0 0.0
        %8886 = vmatmul.mubr.f32.gmra.mxu0 %v8481
        %v8887 = vpop.f32.mrf.mxu0
        %v8888 = vadd.f32 %v8663, %v8887
        %v8889 = vpop.f32.mrf.mxu0
        %8890 = vmatprep.mubr.f32.mxu0 0.0
        %8891 = vmatmul.mubr.f32.gmra.mxu0 %v8484
        %v8892 = vpop.f32.mrf.mxu0
        %v8893 = vadd.f32 %v8668, %v8892
        %v8894 = vpop.f32.mrf.mxu0
        %8895 = vmatprep.mubr.f32.mxu0 0.0
        %8896 = vmatmul.mubr.f32.gmra.mxu0 %v8487
        %v8897 = vpop.f32.mrf.mxu0
        %v8898 = vadd.f32 %v8673, %v8897
        %v8899 = vpop.f32.mrf.mxu0
        %8900 = vmatprep.mubr.f32.mxu0 0.0
        %8901 = vmatmul.mubr.f32.gmra.mxu0 %v8490
        %v8902 = vpop.f32.mrf.mxu0
        %v8903 = vadd.f32 %v8678, %v8902
        %v8904 = vpop.f32.mrf.mxu0
        %8905 = vmatprep.mubr.f32.mxu0 0.0
        %8906 = vmatmul.mubr.f32.gmra.mxu0 %v8493
        %v8907 = vpop.f32.mrf.mxu0
        %v8908 = vadd.f32 %v8683, %v8907
        %v8909 = vpop.f32.mrf.mxu0
        %8910 = vmatprep.mubr.f32.mxu0 0.0
        %8911 = vmatmul.mubr.f32.gmra.mxu0 %v8496
        %v8912 = vpop.f32.mrf.mxu0
        %v8913 = vadd.f32 %v8688, %v8912
        %v8914 = vpop.f32.mrf.mxu0
        %8915 = vmatprep.mubr.f32.mxu0 0.0
        %8916 = vmatmul.mubr.f32.gmra.mxu0 %v8499
        %v8917 = vpop.f32.mrf.mxu0
        %v8918 = vadd.f32 %v8693, %v8917
        %v8919 = vpop.f32.mrf.mxu0
        %8920 = vmatprep.mubr.f32.mxu0 0.0
        %8921 = vmatmul.mubr.f32.gmra.mxu0 %v8502
        %v8922 = vpop.f32.mrf.mxu0
        %v8923 = vadd.f32 %v8698, %v8922
        %v8924 = vpop.f32.mrf.mxu0
        %8925 = vmatprep.mubr.f32.mxu0 0.0
        %8926 = vmatmul.mubr.f32.gmra.mxu0 %v8505
        %v8927 = vpop.f32.mrf.mxu0
        %v8928 = vadd.f32 %v8703, %v8927
        %v8929 = vpop.f32.mrf.mxu0
        %8930 = vmatprep.mubr.f32.mxu0 0.0
        %8931 = vmatmul.mubr.f32.gmra.mxu0 %v8508
        %v8932 = vpop.f32.mrf.mxu0
        %v8933 = vadd.f32 %v8708, %v8932
        %v8934 = vpop.f32.mrf.mxu0
        %8935 = vmatprep.mubr.f32.mxu0 0.0
        %8936 = vmatmul.mubr.f32.gmra.mxu0 %v8511
        %v8937 = vpop.f32.mrf.mxu0
        %v8938 = vadd.f32 %v8713, %v8937
        %v8939 = vpop.f32.mrf.mxu0
        %8940 = vmatprep.mubr.f32.mxu0 0.0
        %8941 = vmatmul.mubr.f32.gmra.mxu0 %v8514
        %v8942 = vpop.f32.mrf.mxu0
        %v8943 = vadd.f32 %v8718, %v8942
        %v8944 = vpop.f32.mrf.mxu0
        %8945 = vmatprep.mubr.f32.mxu0 0.0
        %8946 = vmatmul.mubr.f32.gmra.mxu0 %v8517
        %v8947 = vpop.f32.mrf.mxu0
        %v8948 = vadd.f32 %v8723, %v8947
        %v8949 = vpop.f32.mrf.mxu0
        %8950 = vmatprep.mubr.f32.mxu0 0.0
        %8951 = vmatmul.mubr.f32.gmra.mxu0 %v8520
        %v8952 = vpop.f32.mrf.mxu0
        %v8953 = vadd.f32 %v8728, %v8952
        %v8954 = vpop.f32.mrf.mxu0
        %8955 = vmatprep.mubr.f32.mxu0 0.0
        %8956 = vmatmul.mubr.f32.gmra.mxu0 %v8523
        %v8957 = vpop.f32.mrf.mxu0
        %v8958 = vadd.f32 %v8733, %v8957
        %v8959 = vpop.f32.mrf.mxu0
        %8960 = vmatprep.mubr.f32.mxu0 0.0
        %8961 = vmatmul.mubr.f32.gmra.mxu0 %v8526
        %v8962 = vpop.f32.mrf.mxu0
        %v8963 = vadd.f32 %v8738, %v8962
        %v8964 = vpop.f32.mrf.mxu0
        %8965 = vmatprep.mubr.f32.mxu0 0.0
        %8966 = vmatmul.mubr.f32.gmra.mxu0 %v8529
        %v8967 = vpop.f32.mrf.mxu0
        %v8968 = vadd.f32 %v8743, %v8967
        %v8969 = vpop.f32.mrf.mxu0
        %8970 = vmatprep.mubr.f32.mxu0 0.0
        %8971 = vmatmul.mubr.f32.gmra.mxu0 %v8532
        %v8972 = vpop.f32.mrf.mxu0
        %v8973 = vadd.f32 %v8748, %v8972
        %v8974 = vpop.f32.mrf.mxu0
        %8975 = vmatprep.mubr.f32.mxu0 0.0
        %8976 = vmatmul.mubr.f32.gmra.mxu0 %v8535
        %v8977 = vpop.f32.mrf.mxu0
        %v8978 = vadd.f32 %v8753, %v8977
        %v8979 = vpop.f32.mrf.mxu0
        %8980 = vmatprep.mubr.f32.mxu0 0.0
        %8981 = vmatmul.mubr.f32.gmra.mxu0 %v8538
        %v8982 = vpop.f32.mrf.mxu0
        %v8983 = vadd.f32 %v8758, %v8982
        %v8984 = vpop.f32.mrf.mxu0
        %8985 = vmatprep.mubr.f32.mxu0 0.0
        %8986 = vmatmul.mubr.f32.gmra.mxu0 %v8541
        %v8987 = vpop.f32.mrf.mxu0
        %v8988 = vadd.f32 %v8763, %v8987
        %v8989 = vpop.f32.mrf.mxu0
        %8990 = vmatprep.mubr.f32.mxu0 0.0
        %8991 = vmatmul.mubr.f32.gmra.mxu0 %v8544
        %v8992 = vpop.f32.mrf.mxu0
        %v8993 = vadd.f32 %v8768, %v8992
        %v8994 = vpop.f32.mrf.mxu0
        %8995 = vdwg.mxu0
        %v8996 = vmax.f32 %v8838, 0.0
        %v8997 = vmax.f32 %v8843, 0.0
        %v8998 = vmax.f32 %v8848, 0.0
        %v8999 = vmax.f32 %v8853, 0.0
        %v9000 = vmax.f32 %v8858, 0.0
        %v9001 = vmax.f32 %v8863, 0.0
        %v9002 = vmax.f32 %v8868, 0.0
        %v9003 = vmax.f32 %v8873, 0.0
        %v9004 = vmax.f32 %v8878, 0.0
        %v9005 = vmax.f32 %v8883, 0.0
        %v9006 = vmax.f32 %v8888, 0.0
        %v9007 = vmax.f32 %v8893, 0.0
        %v9008 = vmax.f32 %v8898, 0.0
        %v9009 = vmax.f32 %v8903, 0.0
        %v9010 = vmax.f32 %v8908, 0.0
        %v9011 = vmax.f32 %v8913, 0.0
        %v9012 = vmax.f32 %v8918, 0.0
        %v9013 = vmax.f32 %v8923, 0.0
        %v9014 = vmax.f32 %v8928, 0.0
        %v9015 = vmax.f32 %v8933, 0.0
        %v9016 = vmax.f32 %v8938, 0.0
        %v9017 = vmax.f32 %v8943, 0.0
        %v9018 = vmax.f32 %v8948, 0.0
        %v9019 = vmax.f32 %v8953, 0.0
        %v9020 = vmax.f32 %v8958, 0.0
        %v9021 = vmax.f32 %v8963, 0.0
        %v9022 = vmax.f32 %v8968, 0.0
        %v9023 = vmax.f32 %v8973, 0.0
        %v9024 = vmax.f32 %v8978, 0.0
        %v9025 = vmax.f32 %v8983, 0.0
        %v9026 = vmax.f32 %v8988, 0.0
        %v9027 = vmax.f32 %v8993, 0.0
        %v9028 = vld [vmem:[%s163] sm:$0xff]
        %v9029 = vld [vmem:[%s163 + $0x8] sm:$0xff]
        %v9030 = vld [vmem:[%s163 + $0x10] sm:$0xff]
        %v9031 = vld [vmem:[%s163 + $0x18] sm:$0xff]
        %v9032 = vld [vmem:[%s163 + $0x20] sm:$0xff]
        %v9033 = vld [vmem:[%s163 + $0x28] sm:$0xff]
        %v9034 = vld [vmem:[%s163 + $0x30] sm:$0xff]
        %v9035 = vld [vmem:[%s163 + $0x38] sm:$0xff]
        %v9036 = vld [vmem:[%s163 + $0x40] sm:$0xff]
        %v9037 = vld [vmem:[%s163 + $0x48] sm:$0xff]
        %v9038 = vld [vmem:[%s163 + $0x50] sm:$0xff]
        %v9039 = vld [vmem:[%s163 + $0x58] sm:$0xff]
        %v9040 = vld [vmem:[%s163 + $0x60] sm:$0xff]
        %v9041 = vld [vmem:[%s163 + $0x68] sm:$0xff]
        %v9042 = vld [vmem:[%s163 + $0x70] sm:$0xff]
        %v9043 = vld [vmem:[%s163 + $0x78] sm:$0xff]
        %v9044 = vld [vmem:[%s163 + $0x80] sm:$0xff]
        %v9045 = vld [vmem:[%s163 + $0x88] sm:$0xff]
        %v9046 = vld [vmem:[%s163 + $0x90] sm:$0xff]
        %v9047 = vld [vmem:[%s163 + $0x98] sm:$0xff]
        %v9048 = vld [vmem:[%s163 + $0xa0] sm:$0xff]
        %v9049 = vld [vmem:[%s163 + $0xa8] sm:$0xff]
        %v9050 = vld [vmem:[%s163 + $0xb0] sm:$0xff]
        %v9051 = vld [vmem:[%s163 + $0xb8] sm:$0xff]
        %v9052 = vld [vmem:[%s163 + $0xc0] sm:$0xff]
        %v9053 = vld [vmem:[%s163 + $0xc8] sm:$0xff]
        %v9054 = vld [vmem:[%s163 + $0xd0] sm:$0xff]
        %v9055 = vld [vmem:[%s163 + $0xd8] sm:$0xff]
        %v9056 = vld [vmem:[%s163 + $0xe0] sm:$0xff]
        %v9057 = vld [vmem:[%s163 + $0xe8] sm:$0xff]
        %v9058 = vld [vmem:[%s163 + $0xf0] sm:$0xff]
        %v9059 = vld [vmem:[%s163 + $0xf8] sm:$0xff]
        %v9060 = vadd.f32 %v9028, %v8996
        %v9061 = vadd.f32 %v9029, %v8997
        %v9062 = vadd.f32 %v9030, %v8998
        %v9063 = vadd.f32 %v9031, %v8999
        %v9064 = vadd.f32 %v9032, %v9000
        %v9065 = vadd.f32 %v9033, %v9001
        %v9066 = vadd.f32 %v9034, %v9002
        %v9067 = vadd.f32 %v9035, %v9003
        %v9068 = vadd.f32 %v9036, %v9004
        %v9069 = vadd.f32 %v9037, %v9005
        %v9070 = vadd.f32 %v9038, %v9006
        %v9071 = vadd.f32 %v9039, %v9007
        %v9072 = vadd.f32 %v9040, %v9008
        %v9073 = vadd.f32 %v9041, %v9009
        %v9074 = vadd.f32 %v9042, %v9010
        %v9075 = vadd.f32 %v9043, %v9011
        %v9076 = vadd.f32 %v9044, %v9012
        %v9077 = vadd.f32 %v9045, %v9013
        %v9078 = vadd.f32 %v9046, %v9014
        %v9079 = vadd.f32 %v9047, %v9015
        %v9080 = vadd.f32 %v9048, %v9016
        %v9081 = vadd.f32 %v9049, %v9017
        %v9082 = vadd.f32 %v9050, %v9018
        %v9083 = vadd.f32 %v9051, %v9019
        %v9084 = vadd.f32 %v9052, %v9020
        %v9085 = vadd.f32 %v9053, %v9021
        %v9086 = vadd.f32 %v9054, %v9022
        %v9087 = vadd.f32 %v9055, %v9023
        %v9088 = vadd.f32 %v9056, %v9024
        %v9089 = vadd.f32 %v9057, %v9025
        %v9090 = vadd.f32 %v9058, %v9026
        %v9091 = vadd.f32 %v9059, %v9027
        %9092 = vst.msk [vmem:[%s163] sm:$0xff] %vm201, %v9060
        %9093 = vst.msk [vmem:[%s163 + $0x8] sm:$0xff] %vm201, %v9061
        %9094 = vst.msk [vmem:[%s163 + $0x10] sm:$0xff] %vm201, %v9062
        %9095 = vst.msk [vmem:[%s163 + $0x18] sm:$0xff] %vm201, %v9063
        %9096 = vst.msk [vmem:[%s163 + $0x20] sm:$0xff] %vm201, %v9064
        %9097 = vst.msk [vmem:[%s163 + $0x28] sm:$0xff] %vm201, %v9065
        %9098 = vst.msk [vmem:[%s163 + $0x30] sm:$0xff] %vm201, %v9066
        %9099 = vst.msk [vmem:[%s163 + $0x38] sm:$0xff] %vm201, %v9067
        %9100 = vst.msk [vmem:[%s163 + $0x40] sm:$0xff] %vm201, %v9068
        %9101 = vst.msk [vmem:[%s163 + $0x48] sm:$0xff] %vm201, %v9069
        %9102 = vst.msk [vmem:[%s163 + $0x50] sm:$0xff] %vm201, %v9070
        %9103 = vst.msk [vmem:[%s163 + $0x58] sm:$0xff] %vm201, %v9071
        %9104 = vst.msk [vmem:[%s163 + $0x60] sm:$0xff] %vm201, %v9072
        %9105 = vst.msk [vmem:[%s163 + $0x68] sm:$0xff] %vm201, %v9073
        %9106 = vst.msk [vmem:[%s163 + $0x70] sm:$0xff] %vm201, %v9074
        %9107 = vst.msk [vmem:[%s163 + $0x78] sm:$0xff] %vm201, %v9075
        %9108 = vst.msk [vmem:[%s163 + $0x80] sm:$0xff] %vm201, %v9076
        %9109 = vst.msk [vmem:[%s163 + $0x88] sm:$0xff] %vm201, %v9077
        %9110 = vst.msk [vmem:[%s163 + $0x90] sm:$0xff] %vm201, %v9078
        %9111 = vst.msk [vmem:[%s163 + $0x98] sm:$0xff] %vm201, %v9079
        %9112 = vst.msk [vmem:[%s163 + $0xa0] sm:$0xff] %vm201, %v9080
        %9113 = vst.msk [vmem:[%s163 + $0xa8] sm:$0xff] %vm201, %v9081
        %9114 = vst.msk [vmem:[%s163 + $0xb0] sm:$0xff] %vm201, %v9082
        %9115 = vst.msk [vmem:[%s163 + $0xb8] sm:$0xff] %vm201, %v9083
        %9116 = vst.msk [vmem:[%s163 + $0xc0] sm:$0xff] %vm201, %v9084
        %9117 = vst.msk [vmem:[%s163 + $0xc8] sm:$0xff] %vm201, %v9085
        %9118 = vst.msk [vmem:[%s163 + $0xd0] sm:$0xff] %vm201, %v9086
        %9119 = vst.msk [vmem:[%s163 + $0xd8] sm:$0xff] %vm201, %v9087
        %9120 = vst.msk [vmem:[%s163 + $0xe0] sm:$0xff] %vm201, %v9088
        %9121 = vst.msk [vmem:[%s163 + $0xe8] sm:$0xff] %vm201, %v9089
        %9122 = vst.msk [vmem:[%s163 + $0xf0] sm:$0xff] %vm201, %v9090
        %9123 = vst.msk [vmem:[%s163 + $0xf8] sm:$0xff] %vm201, %v9091
        %s9124 = sand.u32 %s93, 1
        %s9125 = scalar_lea.sflag [#allocation5], %s9124
        %s9126 = sand.u32 %s93, 1
        %s9127 = smul.addr %s9126, 256
        %s9128 = scalar_lea.vmem [#allocation4], %s9127
        // Predicated region
        $region33: #{tpu_custom_call.1} parent=31 // pred_check
          %p9129 = pneg %p103
        $region34: #{tpu_custom_call.1} parent=31 // pred_check_branch
          %9131 = sbr.rel (%p9129) target = $region36
        $region35: #{tpu_custom_call.1} parent=31 // pred_region
          %s9133 = ssub.s32 4096, 4096
          %9134 = vsyncadd %s9125, %s9133
          %s9135 = smul.addr %s17, 32
          %s9136 = smul.addr %s9135, 128
          %s9137 = scalar_lea.hbm %s3, %s9136
          %s9138 = sshll.u32 %s9128, 4
          %s9139 = int_to_ptr.vmem [resolvable:$true] %s9138
          %9144 = dma.vmem_to_hbm [thread:$0]  %s9139, 4096, %s9137, %s9125, 128, 128, 8
        $region36: #{tpu_custom_call.1} parent=31 // pred_fallthru
          _
      $region32: #{tpu_custom_call.1} parent=5 // pred_fallthru
        _
      %p9145 = scmp.le.s32.totalorder 2, %s12
      // Predicated region
      $region37: #{tpu_custom_call.1} parent=5 // pred_check
        %p9146 = pneg %p9145
      $region38: #{tpu_custom_call.1} parent=5 // pred_check_branch
        %9148 = sbr.rel (%p9146) target = $region40
      $region39: #{tpu_custom_call.1} parent=5 // pred_region
        %s9149 = ssub.s32 %s12, 2
        // Predicated region
        $region41: #{tpu_custom_call.1} parent=39 // pred_check
          %p9150 = pneg %p109
        $region42: #{tpu_custom_call.1} parent=39 // pred_check_branch
          %9152 = sbr.rel (%p9150) target = $region44
        $region43: #{tpu_custom_call.1} parent=39 // pred_region
          %s9153 = sand.u32 %s94, 1
          %s9154 = scalar_lea.sflag [#allocation5], %s9153
          %s9155 = sand.u32 %s94, 1
          %s9156 = smul.addr %s9155, 256
          %s9157 = scalar_lea.vmem [#allocation4], %s9156
          %9158 = dma.done %s9154, 4096
        $region44: #{tpu_custom_call.1} parent=39 // pred_fallthru
          _
      $region40: #{tpu_custom_call.1} parent=5 // pred_fallthru
        _
    $region6: #{tpu_custom_call.1} parent=1 // loop_footer
      %s16 = sadd.s32 1, %s12
    $region7: #{tpu_custom_call.1} parent=1 // loop_footer_branch
      %11 = sbr.rel target = $region3
    $region8: #{tpu_custom_call.1} parent=1 // loop_exit
      _
    %9159 = vsyncpa [#allocation5], 1
    %s9160 = scalar_lea.sflag [#allocation5], 1
    %9161 = vsyncpa %s9160, 1

</llo_original>
